<compile_context>
chip_gen: v6e
topology: v6e:2x2x1
jax: 0.10.0
libtpu: 0.0.40
codegen_flags: <defaults>
</compile_context>

<pallas_src>
import jax
import jax.numpy as jnp
import numpy as np
from jax.experimental import pallas as pl
from jax.experimental.pallas import tpu as pltpu

NODES = 16          # `nodes` (PyTorch default 200; small demo size)
NUM_CLASS = 1
C1 = 8              # e2e channels
CE = 48             # e2n channels
SLOPE = 0.33        # LeakyReLU negative slope
BB = 32             # samples packed per grid step -> lane width BB * NODES = 512
LANES = BB * NODES


def _leaky(x):
    # exact for 0 < SLOPE < 1; 2 VPU ops (mul+max) instead of cmp+mul+select
    return jnp.maximum(x, SLOPE * x)


def _mm(a, b):
    return jnp.dot(a, b, preferred_element_type=jnp.float32)


# ------- layout helpers (only broadcasts, leading-dim merges and 2-D matmuls) -------

def _repeat_sublanes(t, n):
    # (R, L) -> (R*n, L) with out[r*n + i, :] = t[r, :]   (cheap sublane broadcast)
    R, L = t.shape
    return jnp.broadcast_to(t[:, None, :], (R, n, L)).reshape(R * n, L)


def _pick_lane_per_block(t, mask_rn, rep):
    # t: (R, BB*N) packed [r, b*N + j]  ->  (R*N, BB) with out[r*N + k, b] = t[r, b*N + k]
    # mask_rn[(r, k), b*N + j] = (j == k);  rep[b*N + j, b'] = (b == b')  (0/1 constants)
    return _mm(_repeat_sublanes(t, NODES) * mask_rn, rep)


def _expand_to_sublanes(t, mask_rn, rep, rept):
    # (R, BB*N) -> (R*N, BB*N) with out[r*N + k, b*N + m] = t[r, b*N + k]
    return _mm(_pick_lane_per_block(t, mask_rn, rep), rept)


# ----------------------------------- kernel -----------------------------------

def brainnet_kernel(ap_ref, aq_ref, mask_c1_ref, mask_ce_ref, rep_ref, rept_ref,
                    w1a_ref, w1b_ref, b1a_ref, b1b_ref,
                    w2a_ref, w2b_ref, b2a_ref, b2b_ref,
                    we2n_ref, be2n_ref,
                    wn2g_ref, bn2g_ref,
                    wl1_ref, bl1_ref, wl2_ref, bl2_ref, wl3_ref, bl3_ref,
                    logit_ref):
    N = NODES
    AP = ap_ref[0]                          # (N, LANES)  AP[r, b*N + j] = A[b, r, j]
    AQ = aq_ref[0]                          # (N, LANES)  AQ[s, b*N + i] = A[b, i, s]
    rep = rep_ref[...]                      # (LANES, BB)
    rept = rept_ref[...]                    # (BB, LANES)
    mask_c1 = mask_c1_ref[...]              # (C1*N, LANES)  precomputed constant
    mask_ce = mask_ce_ref[...]              # (CE*N, LANES)  precomputed constant

    # ---- E2E layer 1: Conv2d(1,C1,(N,1)) + Conv2d(1,C1,(1,N)), row/col broadcast ----
    col1 = _mm(w1a_ref[...], AP) + b1a_ref[...]      # (C1, LANES)  [o, b*N + j]
    row1 = _mm(w1b_ref[...], AQ) + b1b_ref[...]      # (C1, LANES)  [o, b*N + i]
    # x1 in "P" orientation: rows (c, i), lanes (b, j)
    xp1 = _leaky(_repeat_sublanes(col1, N)
                 + _expand_to_sublanes(row1, mask_c1, rep, rept))    # (C1*N, LANES)
    # x1 in "Q" orientation: rows (c, j), lanes (b, i)
    xq1 = _leaky(_expand_to_sublanes(col1, mask_c1, rep, rept)
                 + _repeat_sublanes(row1, N))                        # (C1*N, LANES)

    # ---- E2E layer 2: fused K = C1*N matmuls ----
    col2 = _mm(w2a_ref[...], xp1) + b2a_ref[...]     # (C1, LANES)  [o, b*N + j]
    row2 = _mm(w2b_ref[...], xq1) + b2b_ref[...]     # (C1, LANES)  [o, b*N + i]
    # only the "Q" orientation of x2 is needed downstream (e2n contracts over columns)
    xq2 = _leaky(_expand_to_sublanes(col2, mask_c1, rep, rept)
                 + _repeat_sublanes(row2, N))                        # (C1*N, LANES)

    # ---- e2n: Conv2d(C1, CE, (1, N)) as a single K = C1*N matmul ----
    y = _leaky(_mm(we2n_ref[...], xq2) + be2n_ref[...])              # (CE, LANES) [k, b*N+i]

    # ---- n2g: Conv2d(CE, N, (N, 1)), re-associated so the deep K = CE*N matmul
    #      has a lane-dense (N, LANES) output, then lanes are folded into batch ----
    m_masked = _repeat_sublanes(y, N) * mask_ce                      # (CE*N, LANES)
    tmp = _mm(wn2g_ref[...], m_masked)                               # (N, LANES) [m, b*N+j]
    z = _leaky(_mm(tmp, rep) + bn2g_ref[...])                        # (N, BB)    [m, b]

    # ---- classifier MLP (Dropout == identity at inference) ----
    h1 = _leaky(_mm(wl1_ref[...], z) + bl1_ref[...])                 # (64, BB)
    h2 = _leaky(_mm(wl2_ref[...], h1) + bl2_ref[...])                # (10, BB)
    logits = _mm(wl3_ref[...], h2) + bl3_ref[...]                    # (NUM_CLASS, BB)

    logit_ref[...] = logits[None]                                    # (1, NUM_CLASS, BB)


PARAM_ORDER = ("w1a", "w1b", "b1a", "b1b", "w2a", "w2b", "b2a", "b2b",
               "we2n", "be2n", "wn2g", "bn2g",
               "wl1", "bl1", "wl2", "bl2", "wl3", "bl3")


def init_params(key):
    N = NODES
    ks = jax.random.split(key, 16)

    def w(k, shape, fan_in):
        return jax.random.normal(k, shape, dtype=jnp.float32) / float(fan_in) ** 0.5

    def b(k, shape):
        return 0.1 * jax.random.normal(k, shape, dtype=jnp.float32)

    return dict(
        # E2E(1, 8): conv1xd weight (8,1,N,1) -> (8,N); convdx1 weight (8,1,1,N) -> (8,N)
        w1a=w(ks[0], (C1, N), N), w1b=w(ks[1], (C1, N), N),
        b1a=b(ks[2], (C1, 1)), b1b=b(ks[3], (C1, 1)),
        # E2E(8, 8): (8,8,N,1) -> (8,8,N); (8,8,1,N) -> (8,8,N)
        w2a=w(ks[4], (C1, C1, N), C1 * N), w2b=w(ks[5], (C1, C1, N), C1 * N),
        b2a=b(ks[6], (C1, 1)), b2b=b(ks[7], (C1, 1)),
        # e2n Conv2d(8, 48, (1, N)): (48,8,1,N) -> (48,8,N)
        we2n=w(ks[8], (CE, C1, N), C1 * N), be2n=b(ks[9], (CE, 1)),
        # n2g Conv2d(48, N, (N, 1)): (N,48,N,1) -> (N,48,N)
        wn2g=w(ks[10], (N, CE, N), CE * N), bn2g=b(ks[11], (N, 1)),
        # Linear layers: kaiming_normal-like weights, zero biases (as in __init__)
        wl1=w(ks[12], (64, N), N), bl1=jnp.zeros((64, 1), jnp.float32),
        wl2=w(ks[13], (10, 64), 64), bl2=jnp.zeros((10, 1), jnp.float32),
        wl3=w(ks[14], (NUM_CLASS, 10), 10), bl3=jnp.zeros((NUM_CLASS, 1), jnp.float32),
    )


# ----------------------------------- wrapper -----------------------------------

def _pack_lanes(a):
    # (G*BB, N, N) -> (G, N, BB*N): out[g, r, b*N + c] = a[g*BB + b, r, c]
    N = NODES
    G = a.shape[0] // BB
    return a.reshape(G, BB, N, N).transpose(0, 2, 1, 3).reshape(G, N, BB * N)


def _layout_consts():
    N, L = NODES, LANES
    j_in_block = jnp.arange(L, dtype=jnp.int32) % N
    mask = (jnp.arange(N, dtype=jnp.int32)[:, None] == j_in_block[None, :]).astype(jnp.float32)
    mask_c1 = jnp.tile(mask, (C1, 1))        # (C1*N, L)
    mask_ce = jnp.tile(mask, (CE, 1))        # (CE*N, L)
    blk = jnp.arange(L, dtype=jnp.int32) // N
    rep = (blk[:, None] == jnp.arange(BB, dtype=jnp.int32)[None, :]).astype(jnp.float32)
    return mask_c1, mask_ce, rep, rep.T      # (C1*N,L), (CE*N,L), (L,BB), (BB,L)


def brainnet_apply(x, params):
    """Runs the Pallas kernel; returns (softmax probs, logits), each of shape (B, NUM_CLASS)."""
    N = NODES
    B = x.shape[0]
    xs = x.reshape(B, N, N).astype(jnp.float32)     # A.view(-1, 1, node, node), in_ch == 1

    G = -(-B // BB)                                  # number of batch blocks
    Bp = G * BB
    if Bp != B:                                      # pad batch to a multiple of BB
        xs = jnp.concatenate([xs, jnp.zeros((Bp - B, N, N), jnp.float32)], axis=0)

    ap = _pack_lanes(xs)                             # AP[g, r, b*N + j] = A[b, r, j]
    aq = _pack_lanes(jnp.swapaxes(xs, 1, 2))         # AQ[g, s, b*N + i] = A[b, i, s]
    mask_c1, mask_ce, rep, rept = _layout_consts()
    consts = [mask_c1, mask_ce, rep, rept]

    # pre-flatten the conv weights so every contraction is a single 2-D matmul
    P = dict(params)
    P["w2a"] = params["w2a"].reshape(C1, C1 * N)
    P["w2b"] = params["w2b"].reshape(C1, C1 * N)
    P["we2n"] = params["we2n"].reshape(CE, C1 * N)
    P["wn2g"] = params["wn2g"].reshape(N, CE * N)
    plist = [P[name] for name in PARAM_ORDER]

    def const_spec(shape):
        nd = len(shape)
        return pl.BlockSpec(shape, lambda g, _nd=nd: (0,) * _nd)

    data_spec = pl.BlockSpec((1, N, LANES), lambda g: (g, 0, 0))
    out_spec = pl.BlockSpec((1, NUM_CLASS, BB), lambda g: (g, 0, 0))

    logits_blk = pl.pallas_call(
        brainnet_kernel,
        out_shape=jax.ShapeDtypeStruct((G, NUM_CLASS, BB), jnp.float32),
        grid_spec=pltpu.PrefetchScalarGridSpec(
            num_scalar_prefetch=0,
            grid=(G,),
            in_specs=[data_spec, data_spec]
                     + [const_spec(c.shape) for c in consts]
                     + [const_spec(p.shape) for p in plist],
            out_specs=out_spec,
        ),
        compiler_params=pltpu.CompilerParams(
            dimension_semantics=("parallel",),
            vmem_limit_bytes=32 * 1024 * 1024,
        ),
    )(ap, aq, *consts, *plist)

    logits = logits_blk.transpose(0, 2, 1).reshape(Bp, NUM_CLASS)[:B]
    probs = jax.nn.softmax(logits, axis=-1)          # trivial for NUM_CLASS=1; done host-side
    return probs, logits


def brainnet_forward(x, params):
    """Module-equivalent API: returns (softmax(x), None)."""
    probs, _ = brainnet_apply(x, params)
    return probs, None


# ------------------------------ pure-JAX reference ------------------------------

def ref_forward(x, P):
    """Pure-JAX reference of the PyTorch forward (eval mode). Returns (softmax, logits)."""
    B = x.shape[0]
    N = NODES
    A = x.reshape(B, N, N).astype(jnp.float32)
    lk = lambda v: jnp.where(v >= 0, v, SLOPE * v)
    with jax.default_matmul_precision("highest"):
        col1 = jnp.einsum('or,brj->boj', P['w1a'], A) + P['b1a'][None]
        row1 = jnp.einsum('os,bis->boi', P['w1b'], A) + P['b1b'][None]
        x1 = lk(col1[:, :, None, :] + row1[:, :, :, None])
        col2 = jnp.einsum('ocr,bcrj->boj', P['w2a'], x1) + P['b2a'][None]
        row2 = jnp.einsum('ocs,bcis->boi', P['w2b'], x1) + P['b2b'][None]
        x2 = lk(col2[:, :, None, :] + row2[:, :, :, None])
        y = lk(jnp.einsum('kcs,bcis->bki', P['we2n'], x2) + P['be2n'][None])
        z = lk(jnp.einsum('mki,bki->bm', P['wn2g'], y) + P['bn2g'][:, 0][None])
        h1 = lk(z @ P['wl1'].T + P['bl1'][:, 0][None])
        h2 = lk(h1 @ P['wl2'].T + P['bl2'][:, 0][None])
        logits = h2 @ P['wl3'].T + P['bl3'][:, 0][None]
    return jax.nn.softmax(logits, axis=-1), logits


if __name__ == "__main__":
    key = jax.random.PRNGKey(0)
    kx, kp = jax.random.split(key)
    B = 64                                            # two grid steps of BB = 32 samples each
    x = jax.random.normal(kx, (B, 1, NODES, NODES), dtype=jnp.float32)
    params = init_params(kp)

    probs, logits = brainnet_apply(x, params)
    probs = jax.block_until_ready(probs)
    assert probs.shape == (B, NUM_CLASS) and logits.shape == (B, NUM_CLASS)

    ref_p, ref_l = ref_forward(x, params)
    # logits give a meaningful end-to-end numerical check (softmax over 1 class is constant 1)
    np.testing.assert_allclose(np.asarray(logits), np.asarray(ref_l), rtol=2e-3, atol=2e-3)
    np.testing.assert_allclose(np.asarray(probs), np.asarray(ref_p), rtol=1e-6, atol=1e-6)

    out, aux = brainnet_forward(x, params)            # module-equivalent (softmax, None) API
    out = jax.block_until_ready(out)
    assert aux is None and out.shape == (B, NUM_CLASS)

    print("KERNEL_OK")
</pallas_src>

<mosaic_0001>
module attributes {stable_mosaic.version = 11 : i64} {
  func.func @brainnet_kernel(%arg0: i32, %arg1: memref<1x16x512xf32, #tpu.memory_space<vmem>>, %arg2: memref<1x16x512xf32, #tpu.memory_space<vmem>>, %arg3: memref<128x512xf32, #tpu.memory_space<vmem>>, %arg4: memref<768x512xf32, #tpu.memory_space<vmem>>, %arg5: memref<512x32xf32, #tpu.memory_space<vmem>>, %arg6: memref<32x512xf32, #tpu.memory_space<vmem>>, %arg7: memref<8x16xf32, #tpu.memory_space<vmem>>, %arg8: memref<8x16xf32, #tpu.memory_space<vmem>>, %arg9: memref<8x1xf32, #tpu.memory_space<vmem>>, %arg10: memref<8x1xf32, #tpu.memory_space<vmem>>, %arg11: memref<8x128xf32, #tpu.memory_space<vmem>>, %arg12: memref<8x128xf32, #tpu.memory_space<vmem>>, %arg13: memref<8x1xf32, #tpu.memory_space<vmem>>, %arg14: memref<8x1xf32, #tpu.memory_space<vmem>>, %arg15: memref<48x128xf32, #tpu.memory_space<vmem>>, %arg16: memref<48x1xf32, #tpu.memory_space<vmem>>, %arg17: memref<16x768xf32, #tpu.memory_space<vmem>>, %arg18: memref<16x1xf32, #tpu.memory_space<vmem>>, %arg19: memref<64x16xf32, #tpu.memory_space<vmem>>, %arg20: memref<64x1xf32, #tpu.memory_space<vmem>>, %arg21: memref<10x64xf32, #tpu.memory_space<vmem>>, %arg22: memref<10x1xf32, #tpu.memory_space<vmem>>, %arg23: memref<1x10xf32, #tpu.memory_space<vmem>>, %arg24: memref<1x1xf32, #tpu.memory_space<vmem>>, %arg25: memref<1x1x32xf32, #tpu.memory_space<vmem>>) attributes {dimension_semantics = [#tpu.dimension_semantics<parallel>], iteration_bounds = array<i64: 2>, scalar_prefetch = 0 : i64, scratch_operands = 0 : i64, tpu.core_type = #tpu.core_type<tc>, window_params = [{transform_indices = @transform_0, window_bounds = array<i64: 1, 16, 512>}, {transform_indices = @transform_1, window_bounds = array<i64: 1, 16, 512>}, {pipeline_mode = #tpu.pipeline_mode<synchronous>, transform_indices = @transform_2, window_bounds = array<i64: 128, 512>}, {pipeline_mode = #tpu.pipeline_mode<synchronous>, transform_indices = @transform_3, window_bounds = array<i64: 768, 512>}, {pipeline_mode = #tpu.pipeline_mode<synchronous>, transform_indices = @transform_4, window_bounds = array<i64: 512, 32>}, {pipeline_mode = #tpu.pipeline_mode<synchronous>, transform_indices = @transform_5, window_bounds = array<i64: 32, 512>}, {pipeline_mode = #tpu.pipeline_mode<synchronous>, transform_indices = @transform_6, window_bounds = array<i64: 8, 16>}, {pipeline_mode = #tpu.pipeline_mode<synchronous>, transform_indices = @transform_7, window_bounds = array<i64: 8, 16>}, {pipeline_mode = #tpu.pipeline_mode<synchronous>, transform_indices = @transform_8, window_bounds = array<i64: 8, 1>}, {pipeline_mode = #tpu.pipeline_mode<synchronous>, transform_indices = @transform_9, window_bounds = array<i64: 8, 1>}, {pipeline_mode = #tpu.pipeline_mode<synchronous>, transform_indices = @transform_10, window_bounds = array<i64: 8, 128>}, {pipeline_mode = #tpu.pipeline_mode<synchronous>, transform_indices = @transform_11, window_bounds = array<i64: 8, 128>}, {pipeline_mode = #tpu.pipeline_mode<synchronous>, transform_indices = @transform_12, window_bounds = array<i64: 8, 1>}, {pipeline_mode = #tpu.pipeline_mode<synchronous>, transform_indices = @transform_13, window_bounds = array<i64: 8, 1>}, {pipeline_mode = #tpu.pipeline_mode<synchronous>, transform_indices = @transform_14, window_bounds = array<i64: 48, 128>}, {pipeline_mode = #tpu.pipeline_mode<synchronous>, transform_indices = @transform_15, window_bounds = array<i64: 48, 1>}, {pipeline_mode = #tpu.pipeline_mode<synchronous>, transform_indices = @transform_16, window_bounds = array<i64: 16, 768>}, {pipeline_mode = #tpu.pipeline_mode<synchronous>, transform_indices = @transform_17, window_bounds = array<i64: 16, 1>}, {pipeline_mode = #tpu.pipeline_mode<synchronous>, transform_indices = @transform_18, window_bounds = array<i64: 64, 16>}, {pipeline_mode = #tpu.pipeline_mode<synchronous>, transform_indices = @transform_19, window_bounds = array<i64: 64, 1>}, {pipeline_mode = #tpu.pipeline_mode<synchronous>, transform_indices = @transform_20, window_bounds = array<i64: 10, 64>}, {pipeline_mode = #tpu.pipeline_mode<synchronous>, transform_indices = @transform_21, window_bounds = array<i64: 10, 1>}, {pipeline_mode = #tpu.pipeline_mode<synchronous>, transform_indices = @transform_22, window_bounds = array<i64: 1, 10>}, {pipeline_mode = #tpu.pipeline_mode<synchronous>, transform_indices = @transform_23, window_bounds = array<i64: 1, 1>}, {transform_indices = @transform_24, window_bounds = array<i64: 1, 1, 32>}]} {
    %c0 = arith.constant 0 : index
    %c0_0 = arith.constant 0 : index
    %c0_1 = arith.constant 0 : index
    %0 = vector.load %arg1[%c0, %c0_0, %c0_1] : memref<1x16x512xf32, #tpu.memory_space<vmem>>, vector<1x16x512xf32>
    %1 = vector.shape_cast %0 : vector<1x16x512xf32> to vector<16x512xf32>
    %c0_2 = arith.constant 0 : index
    %c0_3 = arith.constant 0 : index
    %c0_4 = arith.constant 0 : index
    %2 = vector.load %arg2[%c0_2, %c0_3, %c0_4] : memref<1x16x512xf32, #tpu.memory_space<vmem>>, vector<1x16x512xf32>
    %3 = vector.shape_cast %2 : vector<1x16x512xf32> to vector<16x512xf32>
    %c0_5 = arith.constant 0 : index
    %c0_6 = arith.constant 0 : index
    %4 = vector.load %arg5[%c0_5, %c0_6] : memref<512x32xf32, #tpu.memory_space<vmem>>, vector<512x32xf32>
    %c0_7 = arith.constant 0 : index
    %c0_8 = arith.constant 0 : index
    %5 = vector.load %arg6[%c0_7, %c0_8] : memref<32x512xf32, #tpu.memory_space<vmem>>, vector<32x512xf32>
    %c0_9 = arith.constant 0 : index
    %c0_10 = arith.constant 0 : index
    %6 = vector.load %arg3[%c0_9, %c0_10] : memref<128x512xf32, #tpu.memory_space<vmem>>, vector<128x512xf32>
    %c0_11 = arith.constant 0 : index
    %c0_12 = arith.constant 0 : index
    %7 = vector.load %arg4[%c0_11, %c0_12] : memref<768x512xf32, #tpu.memory_space<vmem>>, vector<768x512xf32>
    %c0_13 = arith.constant 0 : index
    %c0_14 = arith.constant 0 : index
    %8 = vector.load %arg7[%c0_13, %c0_14] : memref<8x16xf32, #tpu.memory_space<vmem>>, vector<8x16xf32>
    %cst = arith.constant dense<0.000000e+00> : vector<8x512xf32>
    %9 = tpu.matmul %8, %1, %cst {dimension_numbers = #tpu.dot_dimension_numbers<[1], [0], [0], [1], [0, 0, 1, 1], [], []>} : vector<8x16xf32>, vector<16x512xf32>, vector<8x512xf32> -> vector<8x512xf32>
    %c0_15 = arith.constant 0 : index
    %c0_16 = arith.constant 0 : index
    %10 = vector.load %arg9[%c0_15, %c0_16] : memref<8x1xf32, #tpu.memory_space<vmem>>, vector<8x1xf32>
    %11 = vector.broadcast %10 : vector<8x1xf32> to vector<8x512xf32>
    %12 = arith.addf %9, %11 : vector<8x512xf32>
    %c0_17 = arith.constant 0 : index
    %c0_18 = arith.constant 0 : index
    %13 = vector.load %arg8[%c0_17, %c0_18] : memref<8x16xf32, #tpu.memory_space<vmem>>, vector<8x16xf32>
    %cst_19 = arith.constant dense<0.000000e+00> : vector<8x512xf32>
    %14 = tpu.matmul %13, %3, %cst_19 {dimension_numbers = #tpu.dot_dimension_numbers<[1], [0], [0], [1], [0, 0, 1, 1], [], []>} : vector<8x16xf32>, vector<16x512xf32>, vector<8x512xf32> -> vector<8x512xf32>
    %c0_20 = arith.constant 0 : index
    %c0_21 = arith.constant 0 : index
    %15 = vector.load %arg10[%c0_20, %c0_21] : memref<8x1xf32, #tpu.memory_space<vmem>>, vector<8x1xf32>
    %16 = vector.broadcast %15 : vector<8x1xf32> to vector<8x512xf32>
    %17 = arith.addf %14, %16 : vector<8x512xf32>
    %18 = vector.shape_cast %12 : vector<8x512xf32> to vector<8x1x512xf32>
    %19 = vector.shape_cast %18 : vector<8x1x512xf32> to vector<8x1x512xf32>
    %20 = vector.broadcast %19 : vector<8x1x512xf32> to vector<8x16x512xf32>
    %21 = vector.shape_cast %20 : vector<8x16x512xf32> to vector<128x512xf32>
    %22 = vector.shape_cast %17 : vector<8x512xf32> to vector<8x1x512xf32>
    %23 = vector.shape_cast %22 : vector<8x1x512xf32> to vector<8x1x512xf32>
    %24 = vector.broadcast %23 : vector<8x1x512xf32> to vector<8x16x512xf32>
    %25 = vector.shape_cast %24 : vector<8x16x512xf32> to vector<128x512xf32>
    %26 = arith.mulf %25, %6 : vector<128x512xf32>
    %cst_22 = arith.constant dense<0.000000e+00> : vector<128x32xf32>
    %27 = tpu.matmul %26, %4, %cst_22 {dimension_numbers = #tpu.dot_dimension_numbers<[1], [0], [0], [1], [0, 0, 1, 1], [], []>} : vector<128x512xf32>, vector<512x32xf32>, vector<128x32xf32> -> vector<128x32xf32>
    %cst_23 = arith.constant dense<0.000000e+00> : vector<128x512xf32>
    %28 = tpu.matmul %27, %5, %cst_23 {dimension_numbers = #tpu.dot_dimension_numbers<[1], [0], [0], [1], [0, 0, 1, 1], [], []>} : vector<128x32xf32>, vector<32x512xf32>, vector<128x512xf32> -> vector<128x512xf32>
    %29 = arith.addf %21, %28 : vector<128x512xf32>
    %cst_24 = arith.constant 3.300000e-01 : f32
    %30 = vector.broadcast %cst_24 : f32 to vector<128x512xf32>
    %31 = arith.mulf %30, %29 : vector<128x512xf32>
    %32 = arith.maximumf %29, %31 : vector<128x512xf32>
    %33 = vector.shape_cast %12 : vector<8x512xf32> to vector<8x1x512xf32>
    %34 = vector.shape_cast %33 : vector<8x1x512xf32> to vector<8x1x512xf32>
    %35 = vector.broadcast %34 : vector<8x1x512xf32> to vector<8x16x512xf32>
    %36 = vector.shape_cast %35 : vector<8x16x512xf32> to vector<128x512xf32>
    %37 = arith.mulf %36, %6 : vector<128x512xf32>
    %cst_25 = arith.constant dense<0.000000e+00> : vector<128x32xf32>
    %38 = tpu.matmul %37, %4, %cst_25 {dimension_numbers = #tpu.dot_dimension_numbers<[1], [0], [0], [1], [0, 0, 1, 1], [], []>} : vector<128x512xf32>, vector<512x32xf32>, vector<128x32xf32> -> vector<128x32xf32>
    %cst_26 = arith.constant dense<0.000000e+00> : vector<128x512xf32>
    %39 = tpu.matmul %38, %5, %cst_26 {dimension_numbers = #tpu.dot_dimension_numbers<[1], [0], [0], [1], [0, 0, 1, 1], [], []>} : vector<128x32xf32>, vector<32x512xf32>, vector<128x512xf32> -> vector<128x512xf32>
    %40 = vector.shape_cast %17 : vector<8x512xf32> to vector<8x1x512xf32>
    %41 = vector.shape_cast %40 : vector<8x1x512xf32> to vector<8x1x512xf32>
    %42 = vector.broadcast %41 : vector<8x1x512xf32> to vector<8x16x512xf32>
    %43 = vector.shape_cast %42 : vector<8x16x512xf32> to vector<128x512xf32>
    %44 = arith.addf %39, %43 : vector<128x512xf32>
    %cst_27 = arith.constant 3.300000e-01 : f32
    %45 = vector.broadcast %cst_27 : f32 to vector<128x512xf32>
    %46 = arith.mulf %45, %44 : vector<128x512xf32>
    %47 = arith.maximumf %44, %46 : vector<128x512xf32>
    %c0_28 = arith.constant 0 : index
    %c0_29 = arith.constant 0 : index
    %48 = vector.load %arg11[%c0_28, %c0_29] : memref<8x128xf32, #tpu.memory_space<vmem>>, vector<8x128xf32>
    %cst_30 = arith.constant dense<0.000000e+00> : vector<8x512xf32>
    %49 = tpu.matmul %48, %32, %cst_30 {dimension_numbers = #tpu.dot_dimension_numbers<[1], [0], [0], [1], [0, 0, 1, 1], [], []>} : vector<8x128xf32>, vector<128x512xf32>, vector<8x512xf32> -> vector<8x512xf32>
    %c0_31 = arith.constant 0 : index
    %c0_32 = arith.constant 0 : index
    %50 = vector.load %arg13[%c0_31, %c0_32] : memref<8x1xf32, #tpu.memory_space<vmem>>, vector<8x1xf32>
    %51 = vector.broadcast %50 : vector<8x1xf32> to vector<8x512xf32>
    %52 = arith.addf %49, %51 : vector<8x512xf32>
    %c0_33 = arith.constant 0 : index
    %c0_34 = arith.constant 0 : index
    %53 = vector.load %arg12[%c0_33, %c0_34] : memref<8x128xf32, #tpu.memory_space<vmem>>, vector<8x128xf32>
    %cst_35 = arith.constant dense<0.000000e+00> : vector<8x512xf32>
    %54 = tpu.matmul %53, %47, %cst_35 {dimension_numbers = #tpu.dot_dimension_numbers<[1], [0], [0], [1], [0, 0, 1, 1], [], []>} : vector<8x128xf32>, vector<128x512xf32>, vector<8x512xf32> -> vector<8x512xf32>
    %c0_36 = arith.constant 0 : index
    %c0_37 = arith.constant 0 : index
    %55 = vector.load %arg14[%c0_36, %c0_37] : memref<8x1xf32, #tpu.memory_space<vmem>>, vector<8x1xf32>
    %56 = vector.broadcast %55 : vector<8x1xf32> to vector<8x512xf32>
    %57 = arith.addf %54, %56 : vector<8x512xf32>
    %58 = vector.shape_cast %52 : vector<8x512xf32> to vector<8x1x512xf32>
    %59 = vector.shape_cast %58 : vector<8x1x512xf32> to vector<8x1x512xf32>
    %60 = vector.broadcast %59 : vector<8x1x512xf32> to vector<8x16x512xf32>
    %61 = vector.shape_cast %60 : vector<8x16x512xf32> to vector<128x512xf32>
    %62 = arith.mulf %61, %6 : vector<128x512xf32>
    %cst_38 = arith.constant dense<0.000000e+00> : vector<128x32xf32>
    %63 = tpu.matmul %62, %4, %cst_38 {dimension_numbers = #tpu.dot_dimension_numbers<[1], [0], [0], [1], [0, 0, 1, 1], [], []>} : vector<128x512xf32>, vector<512x32xf32>, vector<128x32xf32> -> vector<128x32xf32>
    %cst_39 = arith.constant dense<0.000000e+00> : vector<128x512xf32>
    %64 = tpu.matmul %63, %5, %cst_39 {dimension_numbers = #tpu.dot_dimension_numbers<[1], [0], [0], [1], [0, 0, 1, 1], [], []>} : vector<128x32xf32>, vector<32x512xf32>, vector<128x512xf32> -> vector<128x512xf32>
    %65 = vector.shape_cast %57 : vector<8x512xf32> to vector<8x1x512xf32>
    %66 = vector.shape_cast %65 : vector<8x1x512xf32> to vector<8x1x512xf32>
    %67 = vector.broadcast %66 : vector<8x1x512xf32> to vector<8x16x512xf32>
    %68 = vector.shape_cast %67 : vector<8x16x512xf32> to vector<128x512xf32>
    %69 = arith.addf %64, %68 : vector<128x512xf32>
    %cst_40 = arith.constant 3.300000e-01 : f32
    %70 = vector.broadcast %cst_40 : f32 to vector<128x512xf32>
    %71 = arith.mulf %70, %69 : vector<128x512xf32>
    %72 = arith.maximumf %69, %71 : vector<128x512xf32>
    %c0_41 = arith.constant 0 : index
    %c0_42 = arith.constant 0 : index
    %73 = vector.load %arg15[%c0_41, %c0_42] : memref<48x128xf32, #tpu.memory_space<vmem>>, vector<48x128xf32>
    %cst_43 = arith.constant dense<0.000000e+00> : vector<48x512xf32>
    %74 = tpu.matmul %73, %72, %cst_43 {dimension_numbers = #tpu.dot_dimension_numbers<[1], [0], [0], [1], [0, 0, 1, 1], [], []>} : vector<48x128xf32>, vector<128x512xf32>, vector<48x512xf32> -> vector<48x512xf32>
    %c0_44 = arith.constant 0 : index
    %c0_45 = arith.constant 0 : index
    %75 = vector.load %arg16[%c0_44, %c0_45] : memref<48x1xf32, #tpu.memory_space<vmem>>, vector<48x1xf32>
    %76 = vector.broadcast %75 : vector<48x1xf32> to vector<48x512xf32>
    %77 = arith.addf %74, %76 : vector<48x512xf32>
    %cst_46 = arith.constant 3.300000e-01 : f32
    %78 = vector.broadcast %cst_46 : f32 to vector<48x512xf32>
    %79 = arith.mulf %78, %77 : vector<48x512xf32>
    %80 = arith.maximumf %77, %79 : vector<48x512xf32>
    %81 = vector.shape_cast %80 : vector<48x512xf32> to vector<48x1x512xf32>
    %82 = vector.shape_cast %81 : vector<48x1x512xf32> to vector<48x1x512xf32>
    %83 = vector.broadcast %82 : vector<48x1x512xf32> to vector<48x16x512xf32>
    %84 = vector.shape_cast %83 : vector<48x16x512xf32> to vector<768x512xf32>
    %85 = arith.mulf %84, %7 : vector<768x512xf32>
    %c0_47 = arith.constant 0 : index
    %c0_48 = arith.constant 0 : index
    %86 = vector.load %arg17[%c0_47, %c0_48] : memref<16x768xf32, #tpu.memory_space<vmem>>, vector<16x768xf32>
    %cst_49 = arith.constant dense<0.000000e+00> : vector<16x512xf32>
    %87 = tpu.matmul %86, %85, %cst_49 {dimension_numbers = #tpu.dot_dimension_numbers<[1], [0], [0], [1], [0, 0, 1, 1], [], []>} : vector<16x768xf32>, vector<768x512xf32>, vector<16x512xf32> -> vector<16x512xf32>
    %cst_50 = arith.constant dense<0.000000e+00> : vector<16x32xf32>
    %88 = tpu.matmul %87, %4, %cst_50 {dimension_numbers = #tpu.dot_dimension_numbers<[1], [0], [0], [1], [0, 0, 1, 1], [], []>} : vector<16x512xf32>, vector<512x32xf32>, vector<16x32xf32> -> vector<16x32xf32>
    %c0_51 = arith.constant 0 : index
    %c0_52 = arith.constant 0 : index
    %89 = vector.load %arg18[%c0_51, %c0_52] : memref<16x1xf32, #tpu.memory_space<vmem>>, vector<16x1xf32>
    %90 = vector.broadcast %89 : vector<16x1xf32> to vector<16x32xf32>
    %91 = arith.addf %88, %90 : vector<16x32xf32>
    %cst_53 = arith.constant 3.300000e-01 : f32
    %92 = vector.broadcast %cst_53 : f32 to vector<16x32xf32>
    %93 = arith.mulf %92, %91 : vector<16x32xf32>
    %94 = arith.maximumf %91, %93 : vector<16x32xf32>
    %c0_54 = arith.constant 0 : index
    %c0_55 = arith.constant 0 : index
    %95 = vector.load %arg19[%c0_54, %c0_55] : memref<64x16xf32, #tpu.memory_space<vmem>>, vector<64x16xf32>
    %cst_56 = arith.constant dense<0.000000e+00> : vector<64x32xf32>
    %96 = tpu.matmul %95, %94, %cst_56 {dimension_numbers = #tpu.dot_dimension_numbers<[1], [0], [0], [1], [0, 0, 1, 1], [], []>} : vector<64x16xf32>, vector<16x32xf32>, vector<64x32xf32> -> vector<64x32xf32>
    %c0_57 = arith.constant 0 : index
    %c0_58 = arith.constant 0 : index
    %97 = vector.load %arg20[%c0_57, %c0_58] : memref<64x1xf32, #tpu.memory_space<vmem>>, vector<64x1xf32>
    %98 = vector.broadcast %97 : vector<64x1xf32> to vector<64x32xf32>
    %99 = arith.addf %96, %98 : vector<64x32xf32>
    %cst_59 = arith.constant 3.300000e-01 : f32
    %100 = vector.broadcast %cst_59 : f32 to vector<64x32xf32>
    %101 = arith.mulf %100, %99 : vector<64x32xf32>
    %102 = arith.maximumf %99, %101 : vector<64x32xf32>
    %c0_60 = arith.constant 0 : index
    %c0_61 = arith.constant 0 : index
    %103 = vector.load %arg21[%c0_60, %c0_61] : memref<10x64xf32, #tpu.memory_space<vmem>>, vector<10x64xf32>
    %cst_62 = arith.constant dense<0.000000e+00> : vector<10x32xf32>
    %104 = tpu.matmul %103, %102, %cst_62 {dimension_numbers = #tpu.dot_dimension_numbers<[1], [0], [0], [1], [0, 0, 1, 1], [], []>} : vector<10x64xf32>, vector<64x32xf32>, vector<10x32xf32> -> vector<10x32xf32>
    %c0_63 = arith.constant 0 : index
    %c0_64 = arith.constant 0 : index
    %105 = vector.load %arg22[%c0_63, %c0_64] : memref<10x1xf32, #tpu.memory_space<vmem>>, vector<10x1xf32>
    %106 = vector.broadcast %105 : vector<10x1xf32> to vector<10x32xf32>
    %107 = arith.addf %104, %106 : vector<10x32xf32>
    %cst_65 = arith.constant 3.300000e-01 : f32
    %108 = vector.broadcast %cst_65 : f32 to vector<10x32xf32>
    %109 = arith.mulf %108, %107 : vector<10x32xf32>
    %110 = arith.maximumf %107, %109 : vector<10x32xf32>
    %c0_66 = arith.constant 0 : index
    %c0_67 = arith.constant 0 : index
    %111 = vector.load %arg23[%c0_66, %c0_67] : memref<1x10xf32, #tpu.memory_space<vmem>>, vector<1x10xf32>
    %cst_68 = arith.constant dense<0.000000e+00> : vector<1x32xf32>
    %112 = tpu.matmul %111, %110, %cst_68 {dimension_numbers = #tpu.dot_dimension_numbers<[1], [0], [0], [1], [0, 0, 1, 1], [], []>} : vector<1x10xf32>, vector<10x32xf32>, vector<1x32xf32> -> vector<1x32xf32>
    %c0_69 = arith.constant 0 : index
    %c0_70 = arith.constant 0 : index
    %113 = vector.load %arg24[%c0_69, %c0_70] : memref<1x1xf32, #tpu.memory_space<vmem>>, vector<1x1xf32>
    %114 = vector.broadcast %113 : vector<1x1xf32> to vector<1x32xf32>
    %115 = arith.addf %112, %114 : vector<1x32xf32>
    %116 = vector.shape_cast %115 : vector<1x32xf32> to vector<1x1x32xf32>
    %c0_71 = arith.constant 0 : index
    %c0_72 = arith.constant 0 : index
    %c0_73 = arith.constant 0 : index
    %117 = vector.load %arg25[%c0_71, %c0_72, %c0_73] : memref<1x1x32xf32, #tpu.memory_space<vmem>>, vector<1x1x32xf32>
    tpu.vector_store %arg25[%c0_71, %c0_72, %c0_73], %116 {strides = array<i32>} : memref<1x1x32xf32, #tpu.memory_space<vmem>>, vector<1x1x32xf32>,
    return
  }
  func.func @transform_0(%arg0: i32) -> (i32, i32, i32) {
    %c0_i32 = arith.constant 0 : i32
    %c0_i32_0 = arith.constant 0 : i32
    %c0_i32_1 = arith.constant 0 : i32
    return %arg0, %c0_i32, %c0_i32_0 : i32, i32, i32
  }
  func.func @transform_1(%arg0: i32) -> (i32, i32, i32) {
    %c0_i32 = arith.constant 0 : i32
    %c0_i32_0 = arith.constant 0 : i32
    %c0_i32_1 = arith.constant 0 : i32
    return %arg0, %c0_i32, %c0_i32_0 : i32, i32, i32
  }
  func.func @transform_2(%arg0: i32) -> (i32, i32) {
    %c0_i32 = arith.constant 0 : i32
    %c0_i32_0 = arith.constant 0 : i32
    %c0_i32_1 = arith.constant 0 : i32
    return %c0_i32, %c0_i32_0 : i32, i32
  }
  func.func @transform_3(%arg0: i32) -> (i32, i32) {
    %c0_i32 = arith.constant 0 : i32
    %c0_i32_0 = arith.constant 0 : i32
    %c0_i32_1 = arith.constant 0 : i32
    return %c0_i32, %c0_i32_0 : i32, i32
  }
  func.func @transform_4(%arg0: i32) -> (i32, i32) {
    %c0_i32 = arith.constant 0 : i32
    %c0_i32_0 = arith.constant 0 : i32
    %c0_i32_1 = arith.constant 0 : i32
    return %c0_i32, %c0_i32_0 : i32, i32
  }
  func.func @transform_5(%arg0: i32) -> (i32, i32) {
    %c0_i32 = arith.constant 0 : i32
    %c0_i32_0 = arith.constant 0 : i32
    %c0_i32_1 = arith.constant 0 : i32
    return %c0_i32, %c0_i32_0 : i32, i32
  }
  func.func @transform_6(%arg0: i32) -> (i32, i32) {
    %c0_i32 = arith.constant 0 : i32
    %c0_i32_0 = arith.constant 0 : i32
    %c0_i32_1 = arith.constant 0 : i32
    return %c0_i32, %c0_i32_0 : i32, i32
  }
  func.func @transform_7(%arg0: i32) -> (i32, i32) {
    %c0_i32 = arith.constant 0 : i32
    %c0_i32_0 = arith.constant 0 : i32
    %c0_i32_1 = arith.constant 0 : i32
    return %c0_i32, %c0_i32_0 : i32, i32
  }
  func.func @transform_8(%arg0: i32) -> (i32, i32) {
    %c0_i32 = arith.constant 0 : i32
    %c0_i32_0 = arith.constant 0 : i32
    %c0_i32_1 = arith.constant 0 : i32
    return %c0_i32, %c0_i32_0 : i32, i32
  }
  func.func @transform_9(%arg0: i32) -> (i32, i32) {
    %c0_i32 = arith.constant 0 : i32
    %c0_i32_0 = arith.constant 0 : i32
    %c0_i32_1 = arith.constant 0 : i32
    return %c0_i32, %c0_i32_0 : i32, i32
  }
  func.func @transform_10(%arg0: i32) -> (i32, i32) {
    %c0_i32 = arith.constant 0 : i32
    %c0_i32_0 = arith.constant 0 : i32
    %c0_i32_1 = arith.constant 0 : i32
    return %c0_i32, %c0_i32_0 : i32, i32
  }
  func.func @transform_11(%arg0: i32) -> (i32, i32) {
    %c0_i32 = arith.constant 0 : i32
    %c0_i32_0 = arith.constant 0 : i32
    %c0_i32_1 = arith.constant 0 : i32
    return %c0_i32, %c0_i32_0 : i32, i32
  }
  func.func @transform_12(%arg0: i32) -> (i32, i32) {
    %c0_i32 = arith.constant 0 : i32
    %c0_i32_0 = arith.constant 0 : i32
    %c0_i32_1 = arith.constant 0 : i32
    return %c0_i32, %c0_i32_0 : i32, i32
  }
  func.func @transform_13(%arg0: i32) -> (i32, i32) {
    %c0_i32 = arith.constant 0 : i32
    %c0_i32_0 = arith.constant 0 : i32
    %c0_i32_1 = arith.constant 0 : i32
    return %c0_i32, %c0_i32_0 : i32, i32
  }
  func.func @transform_14(%arg0: i32) -> (i32, i32) {
    %c0_i32 = arith.constant 0 : i32
    %c0_i32_0 = arith.constant 0 : i32
    %c0_i32_1 = arith.constant 0 : i32
    return %c0_i32, %c0_i32_0 : i32, i32
  }
  func.func @transform_15(%arg0: i32) -> (i32, i32) {
    %c0_i32 = arith.constant 0 : i32
    %c0_i32_0 = arith.constant 0 : i32
    %c0_i32_1 = arith.constant 0 : i32
    return %c0_i32, %c0_i32_0 : i32, i32
  }
  func.func @transform_16(%arg0: i32) -> (i32, i32) {
    %c0_i32 = arith.constant 0 : i32
    %c0_i32_0 = arith.constant 0 : i32
    %c0_i32_1 = arith.constant 0 : i32
    return %c0_i32, %c0_i32_0 : i32, i32
  }
  func.func @transform_17(%arg0: i32) -> (i32, i32) {
    %c0_i32 = arith.constant 0 : i32
    %c0_i32_0 = arith.constant 0 : i32
    %c0_i32_1 = arith.constant 0 : i32
    return %c0_i32, %c0_i32_0 : i32, i32
  }
  func.func @transform_18(%arg0: i32) -> (i32, i32) {
    %c0_i32 = arith.constant 0 : i32
    %c0_i32_0 = arith.constant 0 : i32
    %c0_i32_1 = arith.constant 0 : i32
    return %c0_i32, %c0_i32_0 : i32, i32
  }
  func.func @transform_19(%arg0: i32) -> (i32, i32) {
    %c0_i32 = arith.constant 0 : i32
    %c0_i32_0 = arith.constant 0 : i32
    %c0_i32_1 = arith.constant 0 : i32
    return %c0_i32, %c0_i32_0 : i32, i32
  }
  func.func @transform_20(%arg0: i32) -> (i32, i32) {
    %c0_i32 = arith.constant 0 : i32
    %c0_i32_0 = arith.constant 0 : i32
    %c0_i32_1 = arith.constant 0 : i32
    return %c0_i32, %c0_i32_0 : i32, i32
  }
  func.func @transform_21(%arg0: i32) -> (i32, i32) {
    %c0_i32 = arith.constant 0 : i32
    %c0_i32_0 = arith.constant 0 : i32
    %c0_i32_1 = arith.constant 0 : i32
    return %c0_i32, %c0_i32_0 : i32, i32
  }
  func.func @transform_22(%arg0: i32) -> (i32, i32) {
    %c0_i32 = arith.constant 0 : i32
    %c0_i32_0 = arith.constant 0 : i32
    %c0_i32_1 = arith.constant 0 : i32
    return %c0_i32, %c0_i32_0 : i32, i32
  }
  func.func @transform_23(%arg0: i32) -> (i32, i32) {
    %c0_i32 = arith.constant 0 : i32
    %c0_i32_0 = arith.constant 0 : i32
    %c0_i32_1 = arith.constant 0 : i32
    return %c0_i32, %c0_i32_0 : i32, i32
  }
  func.func @transform_24(%arg0: i32) -> (i32, i32, i32) {
    %c0_i32 = arith.constant 0 : i32
    %c0_i32_0 = arith.constant 0 : i32
    %c0_i32_1 = arith.constant 0 : i32
    return %arg0, %c0_i32, %c0_i32_0 : i32, i32, i32
  }
}

</mosaic_0001>

<llo_original>
// kernel: tpu_custom_call.1
$region0: #{tpu_custom_call.1}
  #allocation0 [shape = 'u32[]', space=smem, size = 0x4, offset = 0x4, fixed_abs, tag = 'smem constant byte address 0x4 - core index']
  #allocation1 [shape = 'u32[144,128]{1,0:T(1,128)}', space=vmem, size = 0x12000, scoped, tag = 'internal scratch']
  #allocation2 [shape = 'f32[1,1]{1,0:T(1,128)S(1)}', space=vmem, size = 0x200, scoped, tag = 'scoped memory for tpu_custom_call.1']
  %s0 = inlined_call_operand.hbm [shape: f32[2,16,512], index: 0, kind: input, shape index: {}]
  %s1 = inlined_call_operand.hbm [shape: f32[2,16,512], index: 1, kind: input, shape index: {}]
  %s2 = inlined_call_operand.hbm [shape: f32[128,512], index: 2, kind: input, shape index: {}]
  %s3 = inlined_call_operand.hbm [shape: f32[768,512], index: 3, kind: input, shape index: {}]
  %s4 = inlined_call_operand.vmem [shape: f32[512,32], index: 4, kind: input, shape index: {}]
  %s5 = inlined_call_operand.hbm [shape: f32[32,512], index: 5, kind: input, shape index: {}]
  %s6 = inlined_call_operand.hbm [shape: f32[8,16], index: 6, kind: input, shape index: {}]
  %s7 = inlined_call_operand.hbm [shape: f32[8,16], index: 7, kind: input, shape index: {}]
  %s8 = inlined_call_operand.vmem [shape: f32[8,1], index: 8, kind: input, shape index: {}]
  %s9 = inlined_call_operand.vmem [shape: f32[8,1], index: 9, kind: input, shape index: {}]
  %s10 = inlined_call_operand.hbm [shape: f32[8,128], index: 10, kind: input, shape index: {}]
  %s11 = inlined_call_operand.hbm [shape: f32[8,128], index: 11, kind: input, shape index: {}]
  %s12 = inlined_call_operand.vmem [shape: f32[8,1], index: 12, kind: input, shape index: {}]
  %s13 = inlined_call_operand.vmem [shape: f32[8,1], index: 13, kind: input, shape index: {}]
  %s14 = inlined_call_operand.hbm [shape: f32[48,128], index: 14, kind: input, shape index: {}]
  %s15 = inlined_call_operand.vmem [shape: f32[48,1], index: 15, kind: input, shape index: {}]
  %s16 = inlined_call_operand.hbm [shape: f32[16,768], index: 16, kind: input, shape index: {}]
  %s17 = inlined_call_operand.vmem [shape: f32[16,1], index: 17, kind: input, shape index: {}]
  %s18 = inlined_call_operand.vmem [shape: f32[64,16], index: 18, kind: input, shape index: {}]
  %s19 = inlined_call_operand.vmem [shape: f32[64,1], index: 19, kind: input, shape index: {}]
  %s20 = inlined_call_operand.hbm [shape: f32[10,64], index: 20, kind: input, shape index: {}]
  %s21 = inlined_call_operand.vmem [shape: f32[10,1], index: 21, kind: input, shape index: {}]
  %s22 = inlined_call_operand.hbm [shape: f32[1,10], index: 22, kind: input, shape index: {}]
  %s23 = inlined_call_operand.<no memory space> [shape: f32[1,1], index: 23, kind: input, shape index: {}]
  %s24 = inlined_call_operand.hbm [shape: f32[2,1,32], index: 24, kind: output, shape index: {}]
  %s25 = sld [smem:[#allocation0]]
  $region181: #{tpu_custom_call.1} parent=0
    _
  %s27 = ssub.s32 1, %s25
  %s28 = scalar_select 0, %s27, %s25
  %v29 = vstv %s23
  %30 = vst [vmem:[#allocation2] sm:$0x1] %v29
  $region1: #{tpu_custom_call.1} parent=0
    #allocation3 [shape = 'u8[65536]{0}', space=vmem, size = 0x10000, scoped, tag = 'input window, operand 0']
    #allocation4 [shape = 's32[2]{0}', space=sflag, size = 0x8, scoped, tag = 'scoped memory for tpu_custom_call.1']
    #allocation5 [shape = 's32[2]{0}', space=sflag, size = 0x8, scoped, tag = 'scoped memory for tpu_custom_call.1']
    #allocation6 [shape = 'u8[65536]{0}', space=vmem, size = 0x10000, scoped, tag = 'input window, operand 1']
    #allocation7 [shape = 's32[2]{0}', space=sflag, size = 0x8, scoped, tag = 'scoped memory for tpu_custom_call.1']
    #allocation8 [shape = 'u8[262144]{0}', space=vmem, size = 0x40000, scoped, tag = 'input window, operand 2, single buffered']
    #allocation9 [shape = 'u8[1572864]{0}', space=vmem, size = 0x180000, scoped, tag = 'input window, operand 3, single buffered']
    #allocation10 [shape = 's32[1]{0}', space=sflag, size = 0x4, scoped, tag = 'scoped memory for tpu_custom_call.1']
    #allocation11 [shape = 'u8[65536]{0}', space=vmem, size = 0x10000, scoped, tag = 'input window, operand 5, single buffered']
    #allocation12 [shape = 'u8[4096]{0}', space=vmem, size = 0x1000, scoped, tag = 'input window, operand 6, single buffered']
    #allocation13 [shape = 's32[1]{0}', space=sflag, size = 0x4, scoped, tag = 'scoped memory for tpu_custom_call.1']
    #allocation14 [shape = 'u8[4096]{0}', space=vmem, size = 0x1000, scoped, tag = 'input window, operand 7, single buffered']
    #allocation15 [shape = 'u8[4096]{0}', space=vmem, size = 0x1000, scoped, tag = 'input window, operand 10, single buffered']
    #allocation16 [shape = 's32[1]{0}', space=sflag, size = 0x4, scoped, tag = 'scoped memory for tpu_custom_call.1']
    #allocation17 [shape = 'u8[4096]{0}', space=vmem, size = 0x1000, scoped, tag = 'input window, operand 11, single buffered']
    #allocation18 [shape = 'u8[24576]{0}', space=vmem, size = 0x6000, scoped, tag = 'input window, operand 14, single buffered']
    #allocation19 [shape = 's32[1]{0}', space=sflag, size = 0x4, scoped, tag = 'scoped memory for tpu_custom_call.1']
    #allocation20 [shape = 'u8[49152]{0}', space=vmem, size = 0xc000, scoped, tag = 'input window, operand 16, single buffered']
    #allocation21 [shape = 'u8[8192]{0}', space=vmem, size = 0x2000, scoped, tag = 'input window, operand 20, single buffered']
    #allocation22 [shape = 's32[1]{0}', space=sflag, size = 0x4, scoped, tag = 'scoped memory for tpu_custom_call.1']
    #allocation23 [shape = 'u8[512]{0}', space=vmem, size = 0x400, scoped, tag = 'input window, operand 22, single buffered']
    #allocation24 [shape = 'u8[1024]{0}', space=vmem, size = 0x400, scoped, tag = 'output window, operand 0']
    %31 = vsyncpa [#allocation4], 0
    %s32 = scalar_lea.sflag [#allocation4], 1
    %33 = vsyncpa %s32, 0
    %34 = vsyncpa [#allocation7], 0
    %s35 = scalar_lea.sflag [#allocation7], 1
    %36 = vsyncpa %s35, 0
    %37 = vsyncpa [#allocation10], 0
    %38 = vsyncpa [#allocation13], 0
    %39 = vsyncpa [#allocation16], 0
    %40 = vsyncpa [#allocation19], 0
    %41 = vsyncpa [#allocation22], 0
    %42 = vsyncpa [#allocation5], 0
    %s43 = scalar_lea.sflag [#allocation5], 1
    %44 = vsyncpa %s43, 0
    loop: start=0, step=1, limit=4
    $region2: #{tpu_custom_call.1} parent=1 // loop_pre_header
      _
    $region3: #{tpu_custom_call.1} parent=1 // loop_header
      %s46 = sphi 0, %s50
      %p47 = scmp.ge.s32.totalorder %s46, 4
      %s56 = sphi 0, %s58
      %s59 = sphi 0, %s56
      %s60 = sphi 0, %s59
      %s76 = sphi 0, %s60
      %s82 = sphi 0, %s84
      %s85 = sphi 0, %s82
      %s86 = sphi 0, %s85
      %s102 = sphi 0, %s86
      %s106 = sphi 0, %s106
      %s108 = sphi 0, %s106
      %s109 = sphi 0, %s108
      %s123 = sphi 0, %s109
      %s127 = sphi 0, %s127
      %s129 = sphi 0, %s127
      %s130 = sphi 0, %s129
      %s144 = sphi 0, %s130
      %s148 = sphi 0, %s148
      %s150 = sphi 0, %s148
      %s151 = sphi 0, %s150
      %s165 = sphi 0, %s151
      %s169 = sphi 0, %s169
      %s171 = sphi 0, %s169
      %s172 = sphi 0, %s171
      %s186 = sphi 0, %s172
      %s190 = sphi 0, %s190
      %s192 = sphi 0, %s190
      %s193 = sphi 0, %s192
      %s207 = sphi 0, %s193
      %s211 = sphi 0, %s211
      %s213 = sphi 0, %s211
      %s214 = sphi 0, %s213
      %s228 = sphi 0, %s214
      %s232 = sphi 0, %s232
      %s234 = sphi 0, %s232
      %s235 = sphi 0, %s234
      %s249 = sphi 0, %s235
      %s253 = sphi 0, %s253
      %s255 = sphi 0, %s253
      %s256 = sphi 0, %s255
      %s270 = sphi 0, %s256
      %s274 = sphi 0, %s274
      %s276 = sphi 0, %s274
      %s277 = sphi 0, %s276
      %s291 = sphi 0, %s277
      %s295 = sphi 0, %s295
      %s297 = sphi 0, %s295
      %s298 = sphi 0, %s297
      %s312 = sphi 0, %s298
      %s316 = sphi 0, %s316
      %s318 = sphi 0, %s316
      %s319 = sphi 0, %s318
      %s333 = sphi 0, %s319
      %s337 = sphi 0, %s337
      %s339 = sphi 0, %s337
      %s340 = sphi 0, %s339
      %s354 = sphi 0, %s340
      %s358 = sphi 0, %s358
      %s360 = sphi 0, %s358
      %s361 = sphi 0, %s360
      %s375 = sphi 0, %s361
      %s379 = sphi 0, %s379
      %s381 = sphi 0, %s379
      %s382 = sphi 0, %s381
      %s396 = sphi 0, %s382
      %s400 = sphi 0, %s400
      %s402 = sphi 0, %s400
      %s403 = sphi 0, %s402
      %s417 = sphi 0, %s403
      %s421 = sphi 0, %s421
      %s423 = sphi 0, %s421
      %s424 = sphi 0, %s423
      %s438 = sphi 0, %s424
      %s442 = sphi 0, %s442
      %s444 = sphi 0, %s442
      %s445 = sphi 0, %s444
      %s459 = sphi 0, %s445
      %s463 = sphi 0, %s463
      %s465 = sphi 0, %s463
      %s466 = sphi 0, %s465
      %s480 = sphi 0, %s466
      %s484 = sphi 0, %s484
      %s486 = sphi 0, %s484
      %s487 = sphi 0, %s486
      %s501 = sphi 0, %s487
      %s505 = sphi 0, %s505
      %s507 = sphi 0, %s505
      %s508 = sphi 0, %s507
      %s522 = sphi 0, %s508
      %s526 = sphi 0, %s526
      %s528 = sphi 0, %s526
      %s529 = sphi 0, %s528
      %s543 = sphi 0, %s529
      %s547 = sphi 0, %s547
      %s549 = sphi 0, %s547
      %s550 = sphi 0, %s549
      %s564 = sphi 0, %s550
      %s570 = sphi 0, %s572
      %s573 = sphi 0, %s570
      %s574 = sphi 0, %s573
      %s590 = sphi 0, %s574
    $region4: #{tpu_custom_call.1} parent=1 // loop_header_branch
      %49 = sbr.rel (%p47) target = $region8
    $region5: #{tpu_custom_call.1} parent=1 // loop_body
      %s51 = ssub.s32 %s46, 1
      %s52 = ssub.s32 %s46, 2
      %s53 = sadd.s32 %s46, 1
      %s54 = ssub.s32 %s46, %s53
      %p55 = scmp.eq.s32.totalorder %s54, 0
      %s57 = sadd.s32 %s56, 1
      %s58 = scalar_select %p55, %s56, %s57
      %p61 = pneg %p55
      %p62 = scmp.eq.s32.totalorder %s46, 1
      %p63 = por %p61, %p62
      %p64 = scmp.ne.s32.totalorder %s56, %s59
      %p65 = scmp.eq.s32.totalorder %s46, 0
      %p66 = por %p64, %p65
      %p67 = scmp.ne.s32.totalorder %s56, %s59
      %p68 = scmp.eq.s32.totalorder %s51, 1
      %p69 = por %p67, %p68
      %p70 = scmp.ne.s32.totalorder %s59, %s60
      %p71 = scmp.eq.s32.totalorder %s51, 0
      %p72 = por %p70, %p71
      %p73 = scmp.ne.s32.totalorder %s59, %s60
      %p74 = scmp.eq.s32.totalorder %s52, 1
      %p75 = por %p73, %p74
      %p77 = scmp.ne.s32.totalorder %s60, %s76
      %p78 = scmp.eq.s32.totalorder %s52, 0
      %p79 = por %p77, %p78
      %s80 = ssub.s32 %s46, %s53
      %p81 = scmp.eq.s32.totalorder %s80, 0
      %s83 = sadd.s32 %s82, 1
      %s84 = scalar_select %p81, %s82, %s83
      %p87 = pneg %p81
      %p88 = scmp.eq.s32.totalorder %s46, 1
      %p89 = por %p87, %p88
      %p90 = scmp.ne.s32.totalorder %s82, %s85
      %p91 = scmp.eq.s32.totalorder %s46, 0
      %p92 = por %p90, %p91
      %p93 = scmp.ne.s32.totalorder %s82, %s85
      %p94 = scmp.eq.s32.totalorder %s51, 1
      %p95 = por %p93, %p94
      %p96 = scmp.ne.s32.totalorder %s85, %s86
      %p97 = scmp.eq.s32.totalorder %s51, 0
      %p98 = por %p96, %p97
      %p99 = scmp.ne.s32.totalorder %s85, %s86
      %p100 = scmp.eq.s32.totalorder %s52, 1
      %p101 = por %p99, %p100
      %p103 = scmp.ne.s32.totalorder %s86, %s102
      %p104 = scmp.eq.s32.totalorder %s52, 0
      %p105 = por %p103, %p104
      %s107 = sadd.s32 %s106, 1
      %p110 = scmp.eq.s32.totalorder %s46, 1
      %p111 = scmp.ne.s32.totalorder %s106, %s108
      %p112 = scmp.eq.s32.totalorder %s46, 0
      %p113 = por %p111, %p112
      %p114 = scmp.ne.s32.totalorder %s106, %s108
      %p115 = scmp.eq.s32.totalorder %s51, 1
      %p116 = por %p114, %p115
      %p117 = scmp.ne.s32.totalorder %s108, %s109
      %p118 = scmp.eq.s32.totalorder %s51, 0
      %p119 = por %p117, %p118
      %p120 = scmp.ne.s32.totalorder %s108, %s109
      %p121 = scmp.eq.s32.totalorder %s52, 1
      %p122 = por %p120, %p121
      %p124 = scmp.ne.s32.totalorder %s109, %s123
      %p125 = scmp.eq.s32.totalorder %s52, 0
      %p126 = por %p124, %p125
      %s128 = sadd.s32 %s127, 1
      %p131 = scmp.eq.s32.totalorder %s46, 1
      %p132 = scmp.ne.s32.totalorder %s127, %s129
      %p133 = scmp.eq.s32.totalorder %s46, 0
      %p134 = por %p132, %p133
      %p135 = scmp.ne.s32.totalorder %s127, %s129
      %p136 = scmp.eq.s32.totalorder %s51, 1
      %p137 = por %p135, %p136
      %p138 = scmp.ne.s32.totalorder %s129, %s130
      %p139 = scmp.eq.s32.totalorder %s51, 0
      %p140 = por %p138, %p139
      %p141 = scmp.ne.s32.totalorder %s129, %s130
      %p142 = scmp.eq.s32.totalorder %s52, 1
      %p143 = por %p141, %p142
      %p145 = scmp.ne.s32.totalorder %s130, %s144
      %p146 = scmp.eq.s32.totalorder %s52, 0
      %p147 = por %p145, %p146
      %s149 = sadd.s32 %s148, 1
      %p152 = scmp.eq.s32.totalorder %s46, 1
      %p153 = scmp.ne.s32.totalorder %s148, %s150
      %p154 = scmp.eq.s32.totalorder %s46, 0
      %p155 = por %p153, %p154
      %p156 = scmp.ne.s32.totalorder %s148, %s150
      %p157 = scmp.eq.s32.totalorder %s51, 1
      %p158 = por %p156, %p157
      %p159 = scmp.ne.s32.totalorder %s150, %s151
      %p160 = scmp.eq.s32.totalorder %s51, 0
      %p161 = por %p159, %p160
      %p162 = scmp.ne.s32.totalorder %s150, %s151
      %p163 = scmp.eq.s32.totalorder %s52, 1
      %p164 = por %p162, %p163
      %p166 = scmp.ne.s32.totalorder %s151, %s165
      %p167 = scmp.eq.s32.totalorder %s52, 0
      %p168 = por %p166, %p167
      %s170 = sadd.s32 %s169, 1
      %p173 = scmp.eq.s32.totalorder %s46, 1
      %p174 = scmp.ne.s32.totalorder %s169, %s171
      %p175 = scmp.eq.s32.totalorder %s46, 0
      %p176 = por %p174, %p175
      %p177 = scmp.ne.s32.totalorder %s169, %s171
      %p178 = scmp.eq.s32.totalorder %s51, 1
      %p179 = por %p177, %p178
      %p180 = scmp.ne.s32.totalorder %s171, %s172
      %p181 = scmp.eq.s32.totalorder %s51, 0
      %p182 = por %p180, %p181
      %p183 = scmp.ne.s32.totalorder %s171, %s172
      %p184 = scmp.eq.s32.totalorder %s52, 1
      %p185 = por %p183, %p184
      %p187 = scmp.ne.s32.totalorder %s172, %s186
      %p188 = scmp.eq.s32.totalorder %s52, 0
      %p189 = por %p187, %p188
      %s191 = sadd.s32 %s190, 1
      %p194 = scmp.eq.s32.totalorder %s46, 1
      %p195 = scmp.ne.s32.totalorder %s190, %s192
      %p196 = scmp.eq.s32.totalorder %s46, 0
      %p197 = por %p195, %p196
      %p198 = scmp.ne.s32.totalorder %s190, %s192
      %p199 = scmp.eq.s32.totalorder %s51, 1
      %p200 = por %p198, %p199
      %p201 = scmp.ne.s32.totalorder %s192, %s193
      %p202 = scmp.eq.s32.totalorder %s51, 0
      %p203 = por %p201, %p202
      %p204 = scmp.ne.s32.totalorder %s192, %s193
      %p205 = scmp.eq.s32.totalorder %s52, 1
      %p206 = por %p204, %p205
      %p208 = scmp.ne.s32.totalorder %s193, %s207
      %p209 = scmp.eq.s32.totalorder %s52, 0
      %p210 = por %p208, %p209
      %s212 = sadd.s32 %s211, 1
      %p215 = scmp.eq.s32.totalorder %s46, 1
      %p216 = scmp.ne.s32.totalorder %s211, %s213
      %p217 = scmp.eq.s32.totalorder %s46, 0
      %p218 = por %p216, %p217
      %p219 = scmp.ne.s32.totalorder %s211, %s213
      %p220 = scmp.eq.s32.totalorder %s51, 1
      %p221 = por %p219, %p220
      %p222 = scmp.ne.s32.totalorder %s213, %s214
      %p223 = scmp.eq.s32.totalorder %s51, 0
      %p224 = por %p222, %p223
      %p225 = scmp.ne.s32.totalorder %s213, %s214
      %p226 = scmp.eq.s32.totalorder %s52, 1
      %p227 = por %p225, %p226
      %p229 = scmp.ne.s32.totalorder %s214, %s228
      %p230 = scmp.eq.s32.totalorder %s52, 0
      %p231 = por %p229, %p230
      %s233 = sadd.s32 %s232, 1
      %p236 = scmp.eq.s32.totalorder %s46, 1
      %p237 = scmp.ne.s32.totalorder %s232, %s234
      %p238 = scmp.eq.s32.totalorder %s46, 0
      %p239 = por %p237, %p238
      %p240 = scmp.ne.s32.totalorder %s232, %s234
      %p241 = scmp.eq.s32.totalorder %s51, 1
      %p242 = por %p240, %p241
      %p243 = scmp.ne.s32.totalorder %s234, %s235
      %p244 = scmp.eq.s32.totalorder %s51, 0
      %p245 = por %p243, %p244
      %p246 = scmp.ne.s32.totalorder %s234, %s235
      %p247 = scmp.eq.s32.totalorder %s52, 1
      %p248 = por %p246, %p247
      %p250 = scmp.ne.s32.totalorder %s235, %s249
      %p251 = scmp.eq.s32.totalorder %s52, 0
      %p252 = por %p250, %p251
      %s254 = sadd.s32 %s253, 1
      %p257 = scmp.eq.s32.totalorder %s46, 1
      %p258 = scmp.ne.s32.totalorder %s253, %s255
      %p259 = scmp.eq.s32.totalorder %s46, 0
      %p260 = por %p258, %p259
      %p261 = scmp.ne.s32.totalorder %s253, %s255
      %p262 = scmp.eq.s32.totalorder %s51, 1
      %p263 = por %p261, %p262
      %p264 = scmp.ne.s32.totalorder %s255, %s256
      %p265 = scmp.eq.s32.totalorder %s51, 0
      %p266 = por %p264, %p265
      %p267 = scmp.ne.s32.totalorder %s255, %s256
      %p268 = scmp.eq.s32.totalorder %s52, 1
      %p269 = por %p267, %p268
      %p271 = scmp.ne.s32.totalorder %s256, %s270
      %p272 = scmp.eq.s32.totalorder %s52, 0
      %p273 = por %p271, %p272
      %s275 = sadd.s32 %s274, 1
      %p278 = scmp.eq.s32.totalorder %s46, 1
      %p279 = scmp.ne.s32.totalorder %s274, %s276
      %p280 = scmp.eq.s32.totalorder %s46, 0
      %p281 = por %p279, %p280
      %p282 = scmp.ne.s32.totalorder %s274, %s276
      %p283 = scmp.eq.s32.totalorder %s51, 1
      %p284 = por %p282, %p283
      %p285 = scmp.ne.s32.totalorder %s276, %s277
      %p286 = scmp.eq.s32.totalorder %s51, 0
      %p287 = por %p285, %p286
      %p288 = scmp.ne.s32.totalorder %s276, %s277
      %p289 = scmp.eq.s32.totalorder %s52, 1
      %p290 = por %p288, %p289
      %p292 = scmp.ne.s32.totalorder %s277, %s291
      %p293 = scmp.eq.s32.totalorder %s52, 0
      %p294 = por %p292, %p293
      %s296 = sadd.s32 %s295, 1
      %p299 = scmp.eq.s32.totalorder %s46, 1
      %p300 = scmp.ne.s32.totalorder %s295, %s297
      %p301 = scmp.eq.s32.totalorder %s46, 0
      %p302 = por %p300, %p301
      %p303 = scmp.ne.s32.totalorder %s295, %s297
      %p304 = scmp.eq.s32.totalorder %s51, 1
      %p305 = por %p303, %p304
      %p306 = scmp.ne.s32.totalorder %s297, %s298
      %p307 = scmp.eq.s32.totalorder %s51, 0
      %p308 = por %p306, %p307
      %p309 = scmp.ne.s32.totalorder %s297, %s298
      %p310 = scmp.eq.s32.totalorder %s52, 1
      %p311 = por %p309, %p310
      %p313 = scmp.ne.s32.totalorder %s298, %s312
      %p314 = scmp.eq.s32.totalorder %s52, 0
      %p315 = por %p313, %p314
      %s317 = sadd.s32 %s316, 1
      %p320 = scmp.eq.s32.totalorder %s46, 1
      %p321 = scmp.ne.s32.totalorder %s316, %s318
      %p322 = scmp.eq.s32.totalorder %s46, 0
      %p323 = por %p321, %p322
      %p324 = scmp.ne.s32.totalorder %s316, %s318
      %p325 = scmp.eq.s32.totalorder %s51, 1
      %p326 = por %p324, %p325
      %p327 = scmp.ne.s32.totalorder %s318, %s319
      %p328 = scmp.eq.s32.totalorder %s51, 0
      %p329 = por %p327, %p328
      %p330 = scmp.ne.s32.totalorder %s318, %s319
      %p331 = scmp.eq.s32.totalorder %s52, 1
      %p332 = por %p330, %p331
      %p334 = scmp.ne.s32.totalorder %s319, %s333
      %p335 = scmp.eq.s32.totalorder %s52, 0
      %p336 = por %p334, %p335
      %s338 = sadd.s32 %s337, 1
      %p341 = scmp.eq.s32.totalorder %s46, 1
      %p342 = scmp.ne.s32.totalorder %s337, %s339
      %p343 = scmp.eq.s32.totalorder %s46, 0
      %p344 = por %p342, %p343
      %p345 = scmp.ne.s32.totalorder %s337, %s339
      %p346 = scmp.eq.s32.totalorder %s51, 1
      %p347 = por %p345, %p346
      %p348 = scmp.ne.s32.totalorder %s339, %s340
      %p349 = scmp.eq.s32.totalorder %s51, 0
      %p350 = por %p348, %p349
      %p351 = scmp.ne.s32.totalorder %s339, %s340
      %p352 = scmp.eq.s32.totalorder %s52, 1
      %p353 = por %p351, %p352
      %p355 = scmp.ne.s32.totalorder %s340, %s354
      %p356 = scmp.eq.s32.totalorder %s52, 0
      %p357 = por %p355, %p356
      %s359 = sadd.s32 %s358, 1
      %p362 = scmp.eq.s32.totalorder %s46, 1
      %p363 = scmp.ne.s32.totalorder %s358, %s360
      %p364 = scmp.eq.s32.totalorder %s46, 0
      %p365 = por %p363, %p364
      %p366 = scmp.ne.s32.totalorder %s358, %s360
      %p367 = scmp.eq.s32.totalorder %s51, 1
      %p368 = por %p366, %p367
      %p369 = scmp.ne.s32.totalorder %s360, %s361
      %p370 = scmp.eq.s32.totalorder %s51, 0
      %p371 = por %p369, %p370
      %p372 = scmp.ne.s32.totalorder %s360, %s361
      %p373 = scmp.eq.s32.totalorder %s52, 1
      %p374 = por %p372, %p373
      %p376 = scmp.ne.s32.totalorder %s361, %s375
      %p377 = scmp.eq.s32.totalorder %s52, 0
      %p378 = por %p376, %p377
      %s380 = sadd.s32 %s379, 1
      %p383 = scmp.eq.s32.totalorder %s46, 1
      %p384 = scmp.ne.s32.totalorder %s379, %s381
      %p385 = scmp.eq.s32.totalorder %s46, 0
      %p386 = por %p384, %p385
      %p387 = scmp.ne.s32.totalorder %s379, %s381
      %p388 = scmp.eq.s32.totalorder %s51, 1
      %p389 = por %p387, %p388
      %p390 = scmp.ne.s32.totalorder %s381, %s382
      %p391 = scmp.eq.s32.totalorder %s51, 0
      %p392 = por %p390, %p391
      %p393 = scmp.ne.s32.totalorder %s381, %s382
      %p394 = scmp.eq.s32.totalorder %s52, 1
      %p395 = por %p393, %p394
      %p397 = scmp.ne.s32.totalorder %s382, %s396
      %p398 = scmp.eq.s32.totalorder %s52, 0
      %p399 = por %p397, %p398
      %s401 = sadd.s32 %s400, 1
      %p404 = scmp.eq.s32.totalorder %s46, 1
      %p405 = scmp.ne.s32.totalorder %s400, %s402
      %p406 = scmp.eq.s32.totalorder %s46, 0
      %p407 = por %p405, %p406
      %p408 = scmp.ne.s32.totalorder %s400, %s402
      %p409 = scmp.eq.s32.totalorder %s51, 1
      %p410 = por %p408, %p409
      %p411 = scmp.ne.s32.totalorder %s402, %s403
      %p412 = scmp.eq.s32.totalorder %s51, 0
      %p413 = por %p411, %p412
      %p414 = scmp.ne.s32.totalorder %s402, %s403
      %p415 = scmp.eq.s32.totalorder %s52, 1
      %p416 = por %p414, %p415
      %p418 = scmp.ne.s32.totalorder %s403, %s417
      %p419 = scmp.eq.s32.totalorder %s52, 0
      %p420 = por %p418, %p419
      %s422 = sadd.s32 %s421, 1
      %p425 = scmp.eq.s32.totalorder %s46, 1
      %p426 = scmp.ne.s32.totalorder %s421, %s423
      %p427 = scmp.eq.s32.totalorder %s46, 0
      %p428 = por %p426, %p427
      %p429 = scmp.ne.s32.totalorder %s421, %s423
      %p430 = scmp.eq.s32.totalorder %s51, 1
      %p431 = por %p429, %p430
      %p432 = scmp.ne.s32.totalorder %s423, %s424
      %p433 = scmp.eq.s32.totalorder %s51, 0
      %p434 = por %p432, %p433
      %p435 = scmp.ne.s32.totalorder %s423, %s424
      %p436 = scmp.eq.s32.totalorder %s52, 1
      %p437 = por %p435, %p436
      %p439 = scmp.ne.s32.totalorder %s424, %s438
      %p440 = scmp.eq.s32.totalorder %s52, 0
      %p441 = por %p439, %p440
      %s443 = sadd.s32 %s442, 1
      %p446 = scmp.eq.s32.totalorder %s46, 1
      %p447 = scmp.ne.s32.totalorder %s442, %s444
      %p448 = scmp.eq.s32.totalorder %s46, 0
      %p449 = por %p447, %p448
      %p450 = scmp.ne.s32.totalorder %s442, %s444
      %p451 = scmp.eq.s32.totalorder %s51, 1
      %p452 = por %p450, %p451
      %p453 = scmp.ne.s32.totalorder %s444, %s445
      %p454 = scmp.eq.s32.totalorder %s51, 0
      %p455 = por %p453, %p454
      %p456 = scmp.ne.s32.totalorder %s444, %s445
      %p457 = scmp.eq.s32.totalorder %s52, 1
      %p458 = por %p456, %p457
      %p460 = scmp.ne.s32.totalorder %s445, %s459
      %p461 = scmp.eq.s32.totalorder %s52, 0
      %p462 = por %p460, %p461
      %s464 = sadd.s32 %s463, 1
      %p467 = scmp.eq.s32.totalorder %s46, 1
      %p468 = scmp.ne.s32.totalorder %s463, %s465
      %p469 = scmp.eq.s32.totalorder %s46, 0
      %p470 = por %p468, %p469
      %p471 = scmp.ne.s32.totalorder %s463, %s465
      %p472 = scmp.eq.s32.totalorder %s51, 1
      %p473 = por %p471, %p472
      %p474 = scmp.ne.s32.totalorder %s465, %s466
      %p475 = scmp.eq.s32.totalorder %s51, 0
      %p476 = por %p474, %p475
      %p477 = scmp.ne.s32.totalorder %s465, %s466
      %p478 = scmp.eq.s32.totalorder %s52, 1
      %p479 = por %p477, %p478
      %p481 = scmp.ne.s32.totalorder %s466, %s480
      %p482 = scmp.eq.s32.totalorder %s52, 0
      %p483 = por %p481, %p482
      %s485 = sadd.s32 %s484, 1
      %p488 = scmp.eq.s32.totalorder %s46, 1
      %p489 = scmp.ne.s32.totalorder %s484, %s486
      %p490 = scmp.eq.s32.totalorder %s46, 0
      %p491 = por %p489, %p490
      %p492 = scmp.ne.s32.totalorder %s484, %s486
      %p493 = scmp.eq.s32.totalorder %s51, 1
      %p494 = por %p492, %p493
      %p495 = scmp.ne.s32.totalorder %s486, %s487
      %p496 = scmp.eq.s32.totalorder %s51, 0
      %p497 = por %p495, %p496
      %p498 = scmp.ne.s32.totalorder %s486, %s487
      %p499 = scmp.eq.s32.totalorder %s52, 1
      %p500 = por %p498, %p499
      %p502 = scmp.ne.s32.totalorder %s487, %s501
      %p503 = scmp.eq.s32.totalorder %s52, 0
      %p504 = por %p502, %p503
      %s506 = sadd.s32 %s505, 1
      %p509 = scmp.eq.s32.totalorder %s46, 1
      %p510 = scmp.ne.s32.totalorder %s505, %s507
      %p511 = scmp.eq.s32.totalorder %s46, 0
      %p512 = por %p510, %p511
      %p513 = scmp.ne.s32.totalorder %s505, %s507
      %p514 = scmp.eq.s32.totalorder %s51, 1
      %p515 = por %p513, %p514
      %p516 = scmp.ne.s32.totalorder %s507, %s508
      %p517 = scmp.eq.s32.totalorder %s51, 0
      %p518 = por %p516, %p517
      %p519 = scmp.ne.s32.totalorder %s507, %s508
      %p520 = scmp.eq.s32.totalorder %s52, 1
      %p521 = por %p519, %p520
      %p523 = scmp.ne.s32.totalorder %s508, %s522
      %p524 = scmp.eq.s32.totalorder %s52, 0
      %p525 = por %p523, %p524
      %s527 = sadd.s32 %s526, 1
      %p530 = scmp.eq.s32.totalorder %s46, 1
      %p531 = scmp.ne.s32.totalorder %s526, %s528
      %p532 = scmp.eq.s32.totalorder %s46, 0
      %p533 = por %p531, %p532
      %p534 = scmp.ne.s32.totalorder %s526, %s528
      %p535 = scmp.eq.s32.totalorder %s51, 1
      %p536 = por %p534, %p535
      %p537 = scmp.ne.s32.totalorder %s528, %s529
      %p538 = scmp.eq.s32.totalorder %s51, 0
      %p539 = por %p537, %p538
      %p540 = scmp.ne.s32.totalorder %s528, %s529
      %p541 = scmp.eq.s32.totalorder %s52, 1
      %p542 = por %p540, %p541
      %p544 = scmp.ne.s32.totalorder %s529, %s543
      %p545 = scmp.eq.s32.totalorder %s52, 0
      %p546 = por %p544, %p545
      %s548 = sadd.s32 %s547, 1
      %p551 = scmp.eq.s32.totalorder %s46, 1
      %p552 = scmp.ne.s32.totalorder %s547, %s549
      %p553 = scmp.eq.s32.totalorder %s46, 0
      %p554 = por %p552, %p553
      %p555 = scmp.ne.s32.totalorder %s547, %s549
      %p556 = scmp.eq.s32.totalorder %s51, 1
      %p557 = por %p555, %p556
      %p558 = scmp.ne.s32.totalorder %s549, %s550
      %p559 = scmp.eq.s32.totalorder %s51, 0
      %p560 = por %p558, %p559
      %p561 = scmp.ne.s32.totalorder %s549, %s550
      %p562 = scmp.eq.s32.totalorder %s52, 1
      %p563 = por %p561, %p562
      %p565 = scmp.ne.s32.totalorder %s550, %s564
      %p566 = scmp.eq.s32.totalorder %s52, 0
      %p567 = por %p565, %p566
      %s568 = ssub.s32 %s46, %s53
      %p569 = scmp.eq.s32.totalorder %s568, 0
      %s571 = sadd.s32 %s570, 1
      %s572 = scalar_select %p569, %s570, %s571
      %p575 = pneg %p569
      %p576 = scmp.eq.s32.totalorder %s46, 1
      %p577 = por %p575, %p576
      %p578 = scmp.ne.s32.totalorder %s570, %s573
      %p579 = scmp.eq.s32.totalorder %s46, 0
      %p580 = por %p578, %p579
      %p581 = scmp.ne.s32.totalorder %s570, %s573
      %p582 = scmp.eq.s32.totalorder %s51, 1
      %p583 = por %p581, %p582
      %p584 = scmp.ne.s32.totalorder %s573, %s574
      %p585 = scmp.eq.s32.totalorder %s51, 0
      %p586 = por %p584, %p585
      %p587 = scmp.ne.s32.totalorder %s573, %s574
      %p588 = scmp.eq.s32.totalorder %s52, 1
      %p589 = por %p587, %p588
      %p591 = scmp.ne.s32.totalorder %s574, %s590
      %p592 = scmp.eq.s32.totalorder %s52, 0
      %p593 = por %p591, %p592
      %p594 = scmp.le.s32.totalorder 1, %s46
      %p595 = scmp.lt.s32.totalorder %s46, 3
      %p596 = pnand %p594, %p595
      %p597 = pneg %p596
      // Predicated region
      $region9: #{tpu_custom_call.1} parent=5 // pred_check
        _
      $region10: #{tpu_custom_call.1} parent=5 // pred_check_branch
        %599 = sbr.rel (%p596) target = $region12
      $region11: #{tpu_custom_call.1} parent=5 // pred_region
        %s600 = ssub.s32 %s46, 1
        // Predicated region
        $region13: #{tpu_custom_call.1} parent=11 // pred_check
          %p601 = pneg %p119
        $region14: #{tpu_custom_call.1} parent=11 // pred_check_branch
          %603 = sbr.rel (%p601) target = $region16
        $region15: #{tpu_custom_call.1} parent=11 // pred_region
          %s605 = ssub.s32 8192, 8192
          %606 = vsyncadd [#allocation7], %s605
          %s607 = sshll.u32 [#allocation8], 4
          %s608 = int_to_ptr.vmem [resolvable:$true] %s607
          %613 = dma.hbm_to_vmem [thread:$0]  %s2, 8192, %s608, [#allocation7], 512, 512, 32
        $region16: #{tpu_custom_call.1} parent=11 // pred_fallthru
          _
        // Predicated region
        $region17: #{tpu_custom_call.1} parent=11 // pred_check
          %p614 = pneg %p140
        $region18: #{tpu_custom_call.1} parent=11 // pred_check_branch
          %616 = sbr.rel (%p614) target = $region20
        $region19: #{tpu_custom_call.1} parent=11 // pred_region
          %s618 = ssub.s32 49152, 49152
          %619 = vsyncadd [#allocation10], %s618
          %s620 = sshll.u32 [#allocation9], 4
          %s621 = int_to_ptr.vmem [resolvable:$true] %s620
          %626 = dma.hbm_to_vmem [thread:$0]  %s3, 49152, %s621, [#allocation10], 512, 512, 32
        $region20: #{tpu_custom_call.1} parent=11 // pred_fallthru
          _
        // Predicated region
        $region21: #{tpu_custom_call.1} parent=11 // pred_check
          %p627 = pneg %p161
        $region22: #{tpu_custom_call.1} parent=11 // pred_check_branch
          %629 = sbr.rel (%p627) target = $region24
        $region23: #{tpu_custom_call.1} parent=11 // pred_region
          _
        $region24: #{tpu_custom_call.1} parent=11 // pred_fallthru
          _
        // Predicated region
        $region25: #{tpu_custom_call.1} parent=11 // pred_check
          %p630 = pneg %p182
        $region26: #{tpu_custom_call.1} parent=11 // pred_check_branch
          %632 = sbr.rel (%p630) target = $region28
        $region27: #{tpu_custom_call.1} parent=11 // pred_region
          %s634 = ssub.s32 2048, 2048
          %635 = vsyncadd [#allocation10], %s634
          %s636 = sshll.u32 [#allocation11], 4
          %s637 = int_to_ptr.vmem [resolvable:$true] %s636
          %642 = dma.hbm_to_vmem [thread:$0]  %s5, 2048, %s637, [#allocation10], 512, 512, 32
        $region28: #{tpu_custom_call.1} parent=11 // pred_fallthru
          _
        // Predicated region
        $region29: #{tpu_custom_call.1} parent=11 // pred_check
          %p643 = pneg %p203
        $region30: #{tpu_custom_call.1} parent=11 // pred_check_branch
          %645 = sbr.rel (%p643) target = $region32
        $region31: #{tpu_custom_call.1} parent=11 // pred_region
          %s647 = ssub.s32 128, 128
          %648 = vsyncadd [#allocation13], %s647
          %s650 = sshll.u32 [#allocation12], 4
          %s651 = int_to_ptr.vmem [resolvable:$true] %s650
          %653 = dma.hbm_to_vmem [thread:$0]  %s6, 128, %s651, [#allocation13]
        $region32: #{tpu_custom_call.1} parent=11 // pred_fallthru
          _
        // Predicated region
        $region33: #{tpu_custom_call.1} parent=11 // pred_check
          %p654 = pneg %p224
        $region34: #{tpu_custom_call.1} parent=11 // pred_check_branch
          %656 = sbr.rel (%p654) target = $region36
        $region35: #{tpu_custom_call.1} parent=11 // pred_region
          %s658 = ssub.s32 128, 128
          %659 = vsyncadd [#allocation13], %s658
          %s661 = sshll.u32 [#allocation14], 4
          %s662 = int_to_ptr.vmem [resolvable:$true] %s661
          %664 = dma.hbm_to_vmem [thread:$0]  %s7, 128, %s662, [#allocation13]
        $region36: #{tpu_custom_call.1} parent=11 // pred_fallthru
          _
        // Predicated region
        $region37: #{tpu_custom_call.1} parent=11 // pred_check
          %p665 = pneg %p245
        $region38: #{tpu_custom_call.1} parent=11 // pred_check_branch
          %667 = sbr.rel (%p665) target = $region40
        $region39: #{tpu_custom_call.1} parent=11 // pred_region
          _
        $region40: #{tpu_custom_call.1} parent=11 // pred_fallthru
          _
        // Predicated region
        $region41: #{tpu_custom_call.1} parent=11 // pred_check
          %p668 = pneg %p266
        $region42: #{tpu_custom_call.1} parent=11 // pred_check_branch
          %670 = sbr.rel (%p668) target = $region44
        $region43: #{tpu_custom_call.1} parent=11 // pred_region
          _
        $region44: #{tpu_custom_call.1} parent=11 // pred_fallthru
          _
        // Predicated region
        $region45: #{tpu_custom_call.1} parent=11 // pred_check
          %p671 = pneg %p287
        $region46: #{tpu_custom_call.1} parent=11 // pred_check_branch
          %673 = sbr.rel (%p671) target = $region48
        $region47: #{tpu_custom_call.1} parent=11 // pred_region
          %s675 = ssub.s32 128, 128
          %676 = vsyncadd [#allocation16], %s675
          %s678 = sshll.u32 [#allocation15], 4
          %s679 = int_to_ptr.vmem [resolvable:$true] %s678
          %681 = dma.hbm_to_vmem [thread:$0]  %s10, 128, %s679, [#allocation16]
        $region48: #{tpu_custom_call.1} parent=11 // pred_fallthru
          _
        // Predicated region
        $region49: #{tpu_custom_call.1} parent=11 // pred_check
          %p682 = pneg %p308
        $region50: #{tpu_custom_call.1} parent=11 // pred_check_branch
          %684 = sbr.rel (%p682) target = $region52
        $region51: #{tpu_custom_call.1} parent=11 // pred_region
          %s686 = ssub.s32 128, 128
          %687 = vsyncadd [#allocation16], %s686
          %s689 = sshll.u32 [#allocation17], 4
          %s690 = int_to_ptr.vmem [resolvable:$true] %s689
          %692 = dma.hbm_to_vmem [thread:$0]  %s11, 128, %s690, [#allocation16]
        $region52: #{tpu_custom_call.1} parent=11 // pred_fallthru
          _
        // Predicated region
        $region53: #{tpu_custom_call.1} parent=11 // pred_check
          %p693 = pneg %p329
        $region54: #{tpu_custom_call.1} parent=11 // pred_check_branch
          %695 = sbr.rel (%p693) target = $region56
        $region55: #{tpu_custom_call.1} parent=11 // pred_region
          _
        $region56: #{tpu_custom_call.1} parent=11 // pred_fallthru
          _
        // Predicated region
        $region57: #{tpu_custom_call.1} parent=11 // pred_check
          %p696 = pneg %p350
        $region58: #{tpu_custom_call.1} parent=11 // pred_check_branch
          %698 = sbr.rel (%p696) target = $region60
        $region59: #{tpu_custom_call.1} parent=11 // pred_region
          _
        $region60: #{tpu_custom_call.1} parent=11 // pred_fallthru
          _
        // Predicated region
        $region61: #{tpu_custom_call.1} parent=11 // pred_check
          %p699 = pneg %p371
        $region62: #{tpu_custom_call.1} parent=11 // pred_check_branch
          %701 = sbr.rel (%p699) target = $region64
        $region63: #{tpu_custom_call.1} parent=11 // pred_region
          %s703 = ssub.s32 768, 768
          %704 = vsyncadd [#allocation19], %s703
          %s705 = sshll.u32 [#allocation18], 4
          %s706 = int_to_ptr.vmem [resolvable:$true] %s705
          %711 = dma.hbm_to_vmem [thread:$0]  %s14, 768, %s706, [#allocation19], 128, 128, 8
        $region64: #{tpu_custom_call.1} parent=11 // pred_fallthru
          _
        // Predicated region
        $region65: #{tpu_custom_call.1} parent=11 // pred_check
          %p712 = pneg %p392
        $region66: #{tpu_custom_call.1} parent=11 // pred_check_branch
          %714 = sbr.rel (%p712) target = $region68
        $region67: #{tpu_custom_call.1} parent=11 // pred_region
          _
        $region68: #{tpu_custom_call.1} parent=11 // pred_fallthru
          _
        // Predicated region
        $region69: #{tpu_custom_call.1} parent=11 // pred_check
          %p715 = pneg %p413
        $region70: #{tpu_custom_call.1} parent=11 // pred_check_branch
          %717 = sbr.rel (%p715) target = $region72
        $region71: #{tpu_custom_call.1} parent=11 // pred_region
          %s719 = ssub.s32 1536, 1536
          %720 = vsyncadd [#allocation19], %s719
          %s721 = sshll.u32 [#allocation20], 4
          %s722 = int_to_ptr.vmem [resolvable:$true] %s721
          %727 = dma.hbm_to_vmem [thread:$0]  %s16, 1536, %s722, [#allocation19], 768, 768, 48
        $region72: #{tpu_custom_call.1} parent=11 // pred_fallthru
          _
        // Predicated region
        $region73: #{tpu_custom_call.1} parent=11 // pred_check
          %p728 = pneg %p434
        $region74: #{tpu_custom_call.1} parent=11 // pred_check_branch
          %730 = sbr.rel (%p728) target = $region76
        $region75: #{tpu_custom_call.1} parent=11 // pred_region
          _
        $region76: #{tpu_custom_call.1} parent=11 // pred_fallthru
          _
        // Predicated region
        $region77: #{tpu_custom_call.1} parent=11 // pred_check
          %p731 = pneg %p455
        $region78: #{tpu_custom_call.1} parent=11 // pred_check_branch
          %733 = sbr.rel (%p731) target = $region80
        $region79: #{tpu_custom_call.1} parent=11 // pred_region
          _
        $region80: #{tpu_custom_call.1} parent=11 // pred_fallthru
          _
        // Predicated region
        $region81: #{tpu_custom_call.1} parent=11 // pred_check
          %p734 = pneg %p476
        $region82: #{tpu_custom_call.1} parent=11 // pred_check_branch
          %736 = sbr.rel (%p734) target = $region84
        $region83: #{tpu_custom_call.1} parent=11 // pred_region
          _
        $region84: #{tpu_custom_call.1} parent=11 // pred_fallthru
          _
        // Predicated region
        $region85: #{tpu_custom_call.1} parent=11 // pred_check
          %p737 = pneg %p497
        $region86: #{tpu_custom_call.1} parent=11 // pred_check_branch
          %739 = sbr.rel (%p737) target = $region88
        $region87: #{tpu_custom_call.1} parent=11 // pred_region
          %s741 = ssub.s32 256, 256
          %742 = vsyncadd [#allocation22], %s741
          %s743 = sshll.u32 [#allocation21], 4
          %s744 = int_to_ptr.vmem [resolvable:$true] %s743
          %749 = dma.hbm_to_vmem [thread:$0]  %s20, 256, %s744, [#allocation22], 128, 128, 8
        $region88: #{tpu_custom_call.1} parent=11 // pred_fallthru
          _
        // Predicated region
        $region89: #{tpu_custom_call.1} parent=11 // pred_check
          %p750 = pneg %p518
        $region90: #{tpu_custom_call.1} parent=11 // pred_check_branch
          %752 = sbr.rel (%p750) target = $region92
        $region91: #{tpu_custom_call.1} parent=11 // pred_region
          _
        $region92: #{tpu_custom_call.1} parent=11 // pred_fallthru
          _
        // Predicated region
        $region93: #{tpu_custom_call.1} parent=11 // pred_check
          %p753 = pneg %p539
        $region94: #{tpu_custom_call.1} parent=11 // pred_check_branch
          %755 = sbr.rel (%p753) target = $region96
        $region95: #{tpu_custom_call.1} parent=11 // pred_region
          %s757 = ssub.s32 16, 16
          %758 = vsyncadd [#allocation22], %s757
          %s760 = sshll.u32 [#allocation23], 4
          %s761 = int_to_ptr.vmem [resolvable:$true] %s760
          %763 = dma.hbm_to_vmem [thread:$0]  %s22, 16, %s761, [#allocation22]
        $region96: #{tpu_custom_call.1} parent=11 // pred_fallthru
          _
        // Predicated region
        $region97: #{tpu_custom_call.1} parent=11 // pred_check
          %p764 = pneg %p560
        $region98: #{tpu_custom_call.1} parent=11 // pred_check_branch
          %766 = sbr.rel (%p764) target = $region100
        $region99: #{tpu_custom_call.1} parent=11 // pred_region
          _
        $region100: #{tpu_custom_call.1} parent=11 // pred_fallthru
          _
      $region12: #{tpu_custom_call.1} parent=5 // pred_fallthru
        _
      %p767 = scmp.lt.s32.totalorder %s46, 2
      // Predicated region
      $region101: #{tpu_custom_call.1} parent=5 // pred_check
        %p768 = pneg %p767
      $region102: #{tpu_custom_call.1} parent=5 // pred_check_branch
        %770 = sbr.rel (%p768) target = $region104
      $region103: #{tpu_custom_call.1} parent=5 // pred_region
        // Predicated region
        $region105: #{tpu_custom_call.1} parent=103 // pred_check
          %p771 = pneg %p66
        $region106: #{tpu_custom_call.1} parent=103 // pred_check_branch
          %773 = sbr.rel (%p771) target = $region108
        $region107: #{tpu_custom_call.1} parent=103 // pred_region
          %s774 = sand.u32 %s56, 1
          %s775 = scalar_lea.sflag [#allocation4], %s774
          %s776 = sand.u32 %s56, 1
          %s777 = smul.addr %s776, 64
          %s778 = scalar_lea.vmem [#allocation3], %s777
          %s780 = ssub.s32 1024, 1024
          %781 = vsyncadd %s775, %s780
          %s782 = smul.addr %s46, 8
          %s783 = smul.addr %s782, 128
          %s784 = scalar_lea.hbm %s0, %s783
          %s785 = sshll.u32 %s778, 4
          %s786 = int_to_ptr.vmem [resolvable:$true] %s785
          %791 = dma.hbm_to_vmem [thread:$0]  %s784, 1024, %s786, %s775, 512, 512, 32
        $region108: #{tpu_custom_call.1} parent=103 // pred_fallthru
          _
        // Predicated region
        $region109: #{tpu_custom_call.1} parent=103 // pred_check
          %p792 = pneg %p92
        $region110: #{tpu_custom_call.1} parent=103 // pred_check_branch
          %794 = sbr.rel (%p792) target = $region112
        $region111: #{tpu_custom_call.1} parent=103 // pred_region
          %s795 = sand.u32 %s46, 1
          %s796 = scalar_lea.sflag [#allocation7], %s795
          %s797 = sand.u32 %s82, 1
          %s798 = smul.addr %s797, 64
          %s799 = scalar_lea.vmem [#allocation6], %s798
          %s801 = ssub.s32 1024, 1024
          %802 = vsyncadd %s796, %s801
          %s803 = smul.addr %s46, 8
          %s804 = smul.addr %s803, 128
          %s805 = scalar_lea.hbm %s1, %s804
          %s806 = sshll.u32 %s799, 4
          %s807 = int_to_ptr.vmem [resolvable:$true] %s806
          %812 = dma.hbm_to_vmem [thread:$0]  %s805, 1024, %s807, %s796, 512, 512, 32
        $region112: #{tpu_custom_call.1} parent=103 // pred_fallthru
          _
      $region104: #{tpu_custom_call.1} parent=5 // pred_fallthru
        _
      %p813 = scmp.le.s32.totalorder 1, %s46
      %p814 = scmp.lt.s32.totalorder %s46, 3
      %p815 = pnand %p813, %p814
      %p816 = pneg %p815
      // Predicated region
      $region113: #{tpu_custom_call.1} parent=5 // pred_check
        _
      $region114: #{tpu_custom_call.1} parent=5 // pred_check_branch
        %818 = sbr.rel (%p815) target = $region116
      $region115: #{tpu_custom_call.1} parent=5 // pred_region
        %s819 = ssub.s32 %s46, 1
        %s820 = sand.u32 %s59, 1
        %s821 = scalar_lea.sflag [#allocation4], %s820
        %s822 = sand.u32 %s59, 1
        %s823 = smul.addr %s822, 64
        %s824 = scalar_lea.vmem [#allocation3], %s823
        // Predicated region
        $region117: #{tpu_custom_call.1} parent=115 // pred_check
          %p825 = pneg %p72
        $region118: #{tpu_custom_call.1} parent=115 // pred_check_branch
          %827 = sbr.rel (%p825) target = $region120
        $region119: #{tpu_custom_call.1} parent=115 // pred_region
          %828 = dma.done %s821, 1024
        $region120: #{tpu_custom_call.1} parent=115 // pred_fallthru
          _
        %s829 = sand.u32 %s51, 1
        %s830 = scalar_lea.sflag [#allocation7], %s829
        %s831 = sand.u32 %s85, 1
        %s832 = smul.addr %s831, 64
        %s833 = scalar_lea.vmem [#allocation6], %s832
        // Predicated region
        $region121: #{tpu_custom_call.1} parent=115 // pred_check
          %p834 = pneg %p98
        $region122: #{tpu_custom_call.1} parent=115 // pred_check_branch
          %836 = sbr.rel (%p834) target = $region124
        $region123: #{tpu_custom_call.1} parent=115 // pred_region
          %837 = dma.done %s830, 1024
        $region124: #{tpu_custom_call.1} parent=115 // pred_fallthru
          _
        // Predicated region
        $region125: #{tpu_custom_call.1} parent=115 // pred_check
          %p838 = pneg %p119
        $region126: #{tpu_custom_call.1} parent=115 // pred_check_branch
          %840 = sbr.rel (%p838) target = $region128
        $region127: #{tpu_custom_call.1} parent=115 // pred_region
          %841 = dma.done [#allocation7], 8192
        $region128: #{tpu_custom_call.1} parent=115 // pred_fallthru
          _
        // Predicated region
        $region129: #{tpu_custom_call.1} parent=115 // pred_check
          %p842 = pneg %p140
        $region130: #{tpu_custom_call.1} parent=115 // pred_check_branch
          %844 = sbr.rel (%p842) target = $region132
        $region131: #{tpu_custom_call.1} parent=115 // pred_region
          %845 = dma.done [#allocation10], 49152
        $region132: #{tpu_custom_call.1} parent=115 // pred_fallthru
          _
        // Predicated region
        $region133: #{tpu_custom_call.1} parent=115 // pred_check
          %p846 = pneg %p182
        $region134: #{tpu_custom_call.1} parent=115 // pred_check_branch
          %848 = sbr.rel (%p846) target = $region136
        $region135: #{tpu_custom_call.1} parent=115 // pred_region
          %849 = dma.done [#allocation10], 2048
        $region136: #{tpu_custom_call.1} parent=115 // pred_fallthru
          _
        // Predicated region
        $region137: #{tpu_custom_call.1} parent=115 // pred_check
          %p850 = pneg %p203
        $region138: #{tpu_custom_call.1} parent=115 // pred_check_branch
          %852 = sbr.rel (%p850) target = $region140
        $region139: #{tpu_custom_call.1} parent=115 // pred_region
          %853 = dma.done [#allocation13], 128
        $region140: #{tpu_custom_call.1} parent=115 // pred_fallthru
          _
        // Predicated region
        $region141: #{tpu_custom_call.1} parent=115 // pred_check
          %p854 = pneg %p224
        $region142: #{tpu_custom_call.1} parent=115 // pred_check_branch
          %856 = sbr.rel (%p854) target = $region144
        $region143: #{tpu_custom_call.1} parent=115 // pred_region
          %857 = dma.done [#allocation13], 128
        $region144: #{tpu_custom_call.1} parent=115 // pred_fallthru
          _
        // Predicated region
        $region145: #{tpu_custom_call.1} parent=115 // pred_check
          %p858 = pneg %p287
        $region146: #{tpu_custom_call.1} parent=115 // pred_check_branch
          %860 = sbr.rel (%p858) target = $region148
        $region147: #{tpu_custom_call.1} parent=115 // pred_region
          %861 = dma.done [#allocation16], 128
        $region148: #{tpu_custom_call.1} parent=115 // pred_fallthru
          _
        // Predicated region
        $region149: #{tpu_custom_call.1} parent=115 // pred_check
          %p862 = pneg %p308
        $region150: #{tpu_custom_call.1} parent=115 // pred_check_branch
          %864 = sbr.rel (%p862) target = $region152
        $region151: #{tpu_custom_call.1} parent=115 // pred_region
          %865 = dma.done [#allocation16], 128
        $region152: #{tpu_custom_call.1} parent=115 // pred_fallthru
          _
        // Predicated region
        $region153: #{tpu_custom_call.1} parent=115 // pred_check
          %p866 = pneg %p371
        $region154: #{tpu_custom_call.1} parent=115 // pred_check_branch
          %868 = sbr.rel (%p866) target = $region156
        $region155: #{tpu_custom_call.1} parent=115 // pred_region
          %869 = dma.done [#allocation19], 768
        $region156: #{tpu_custom_call.1} parent=115 // pred_fallthru
          _
        // Predicated region
        $region157: #{tpu_custom_call.1} parent=115 // pred_check
          %p870 = pneg %p413
        $region158: #{tpu_custom_call.1} parent=115 // pred_check_branch
          %872 = sbr.rel (%p870) target = $region160
        $region159: #{tpu_custom_call.1} parent=115 // pred_region
          %873 = dma.done [#allocation19], 1536
        $region160: #{tpu_custom_call.1} parent=115 // pred_fallthru
          _
        // Predicated region
        $region161: #{tpu_custom_call.1} parent=115 // pred_check
          %p874 = pneg %p497
        $region162: #{tpu_custom_call.1} parent=115 // pred_check_branch
          %876 = sbr.rel (%p874) target = $region164
        $region163: #{tpu_custom_call.1} parent=115 // pred_region
          %877 = dma.done [#allocation22], 256
        $region164: #{tpu_custom_call.1} parent=115 // pred_fallthru
          _
        // Predicated region
        $region165: #{tpu_custom_call.1} parent=115 // pred_check
          %p878 = pneg %p539
        $region166: #{tpu_custom_call.1} parent=115 // pred_check_branch
          %880 = sbr.rel (%p878) target = $region168
        $region167: #{tpu_custom_call.1} parent=115 // pred_region
          %881 = dma.done [#allocation22], 16
        $region168: #{tpu_custom_call.1} parent=115 // pred_fallthru
          _
        %s882 = sand.u32 %s59, 1
        %s883 = scalar_lea.sflag [#allocation4], %s882
        %s884 = sand.u32 %s59, 1
        %s885 = smul.addr %s884, 64
        %s886 = scalar_lea.vmem [#allocation3], %s885
        %p887 = pneg %p72
        %p888 = pneg %p69
        %s889 = sand.u32 %s51, 1
        %s890 = scalar_lea.sflag [#allocation7], %s889
        %s891 = sand.u32 %s85, 1
        %s892 = smul.addr %s891, 64
        %s893 = scalar_lea.vmem [#allocation6], %s892
        %p894 = pneg %p98
        %p895 = pneg %p95
        %p896 = pneg %p119
        %p897 = pneg %p116
        %p898 = pneg %p140
        %p899 = pneg %p137
        %p900 = pneg %p161
        %p901 = pneg %p158
        %p902 = pneg %p182
        %p903 = pneg %p179
        %p904 = pneg %p203
        %p905 = pneg %p200
        %p906 = pneg %p224
        %p907 = pneg %p221
        %p908 = pneg %p245
        %p909 = pneg %p242
        %p910 = pneg %p266
        %p911 = pneg %p263
        %p912 = pneg %p287
        %p913 = pneg %p284
        %p914 = pneg %p308
        %p915 = pneg %p305
        %p916 = pneg %p329
        %p917 = pneg %p326
        %p918 = pneg %p350
        %p919 = pneg %p347
        %p920 = pneg %p371
        %p921 = pneg %p368
        %p922 = pneg %p392
        %p923 = pneg %p389
        %p924 = pneg %p413
        %p925 = pneg %p410
        %p926 = pneg %p434
        %p927 = pneg %p431
        %p928 = pneg %p455
        %p929 = pneg %p452
        %p930 = pneg %p476
        %p931 = pneg %p473
        %p932 = pneg %p497
        %p933 = pneg %p494
        %p934 = pneg %p518
        %p935 = pneg %p515
        %p936 = pneg %p539
        %p937 = pneg %p536
        %p938 = pneg %p560
        %p939 = pneg %p557
        %p940 = pneg %p586
        %p941 = pneg %p583
        %s942 = sand.u32 %s573, 1
        %s943 = scalar_lea.sflag [#allocation5], %s942
        %s944 = sand.u32 %s573, 1
        %s945 = scalar_lea.vmem [#allocation24], %s944
        %v946 = vld [vmem:[%s824] sm:$0xff]
        %v947 = vld [vmem:[%s824 + $0x8] sm:$0xff]
        %v948 = vld [vmem:[%s824 + $0x10] sm:$0xff]
        %v949 = vld [vmem:[%s824 + $0x18] sm:$0xff]
        %v950 = vld [vmem:[%s824 + $0x20] sm:$0xff]
        %v951 = vld [vmem:[%s824 + $0x28] sm:$0xff]
        %v952 = vld [vmem:[%s824 + $0x30] sm:$0xff]
        %v953 = vld [vmem:[%s824 + $0x38] sm:$0xff]
        %v954 = vld [vmem:[%s833] sm:$0xff]
        %v955 = vld [vmem:[%s833 + $0x8] sm:$0xff]
        %v956 = vld [vmem:[%s833 + $0x10] sm:$0xff]
        %v957 = vld [vmem:[%s833 + $0x18] sm:$0xff]
        %v958 = vld [vmem:[%s833 + $0x20] sm:$0xff]
        %v959 = vld [vmem:[%s833 + $0x28] sm:$0xff]
        %v960 = vld [vmem:[%s833 + $0x30] sm:$0xff]
        %v961 = vld [vmem:[%s833 + $0x38] sm:$0xff]
        %v962 = vld [vmem:[%s4] sm:$0xff]
        %v963 = vld [vmem:[%s4 + $0x8] sm:$0xff]
        %v964 = vld [vmem:[%s4 + $0x10] sm:$0xff]
        %v965 = vld [vmem:[%s4 + $0x18] sm:$0xff]
        %v966 = vld [vmem:[%s4 + $0x20] sm:$0xff]
        %v967 = vld [vmem:[%s4 + $0x28] sm:$0xff]
        %v968 = vld [vmem:[%s4 + $0x30] sm:$0xff]
        %v969 = vld [vmem:[%s4 + $0x38] sm:$0xff]
        %v970 = vld [vmem:[%s4 + $0x40] sm:$0xff]
        %v971 = vld [vmem:[%s4 + $0x48] sm:$0xff]
        %v972 = vld [vmem:[%s4 + $0x50] sm:$0xff]
        %v973 = vld [vmem:[%s4 + $0x58] sm:$0xff]
        %v974 = vld [vmem:[%s4 + $0x60] sm:$0xff]
        %v975 = vld [vmem:[%s4 + $0x68] sm:$0xff]
        %v976 = vld [vmem:[%s4 + $0x70] sm:$0xff]
        %v977 = vld [vmem:[%s4 + $0x78] sm:$0xff]
        %v978 = vld [vmem:[%s4 + $0x80] sm:$0xff]
        %v979 = vld [vmem:[%s4 + $0x88] sm:$0xff]
        %v980 = vld [vmem:[%s4 + $0x90] sm:$0xff]
        %v981 = vld [vmem:[%s4 + $0x98] sm:$0xff]
        %v982 = vld [vmem:[%s4 + $0xa0] sm:$0xff]
        %v983 = vld [vmem:[%s4 + $0xa8] sm:$0xff]
        %v984 = vld [vmem:[%s4 + $0xb0] sm:$0xff]
        %v985 = vld [vmem:[%s4 + $0xb8] sm:$0xff]
        %v986 = vld [vmem:[%s4 + $0xc0] sm:$0xff]
        %v987 = vld [vmem:[%s4 + $0xc8] sm:$0xff]
        %v988 = vld [vmem:[%s4 + $0xd0] sm:$0xff]
        %v989 = vld [vmem:[%s4 + $0xd8] sm:$0xff]
        %v990 = vld [vmem:[%s4 + $0xe0] sm:$0xff]
        %v991 = vld [vmem:[%s4 + $0xe8] sm:$0xff]
        %v992 = vld [vmem:[%s4 + $0xf0] sm:$0xff]
        %v993 = vld [vmem:[%s4 + $0xf8] sm:$0xff]
        %v994 = vld [vmem:[%s4 + $0x100] sm:$0xff]
        %v995 = vld [vmem:[%s4 + $0x108] sm:$0xff]
        %v996 = vld [vmem:[%s4 + $0x110] sm:$0xff]
        %v997 = vld [vmem:[%s4 + $0x118] sm:$0xff]
        %v998 = vld [vmem:[%s4 + $0x120] sm:$0xff]
        %v999 = vld [vmem:[%s4 + $0x128] sm:$0xff]
        %v1000 = vld [vmem:[%s4 + $0x130] sm:$0xff]
        %v1001 = vld [vmem:[%s4 + $0x138] sm:$0xff]
        %v1002 = vld [vmem:[%s4 + $0x140] sm:$0xff]
        %v1003 = vld [vmem:[%s4 + $0x148] sm:$0xff]
        %v1004 = vld [vmem:[%s4 + $0x150] sm:$0xff]
        %v1005 = vld [vmem:[%s4 + $0x158] sm:$0xff]
        %v1006 = vld [vmem:[%s4 + $0x160] sm:$0xff]
        %v1007 = vld [vmem:[%s4 + $0x168] sm:$0xff]
        %v1008 = vld [vmem:[%s4 + $0x170] sm:$0xff]
        %v1009 = vld [vmem:[%s4 + $0x178] sm:$0xff]
        %v1010 = vld [vmem:[%s4 + $0x180] sm:$0xff]
        %v1011 = vld [vmem:[%s4 + $0x188] sm:$0xff]
        %v1012 = vld [vmem:[%s4 + $0x190] sm:$0xff]
        %v1013 = vld [vmem:[%s4 + $0x198] sm:$0xff]
        %v1014 = vld [vmem:[%s4 + $0x1a0] sm:$0xff]
        %v1015 = vld [vmem:[%s4 + $0x1a8] sm:$0xff]
        %v1016 = vld [vmem:[%s4 + $0x1b0] sm:$0xff]
        %v1017 = vld [vmem:[%s4 + $0x1b8] sm:$0xff]
        %v1018 = vld [vmem:[%s4 + $0x1c0] sm:$0xff]
        %v1019 = vld [vmem:[%s4 + $0x1c8] sm:$0xff]
        %v1020 = vld [vmem:[%s4 + $0x1d0] sm:$0xff]
        %v1021 = vld [vmem:[%s4 + $0x1d8] sm:$0xff]
        %v1022 = vld [vmem:[%s4 + $0x1e0] sm:$0xff]
        %v1023 = vld [vmem:[%s4 + $0x1e8] sm:$0xff]
        %v1024 = vld [vmem:[%s4 + $0x1f0] sm:$0xff]
        %v1025 = vld [vmem:[%s4 + $0x1f8] sm:$0xff]
        %v1026 = vld [vmem:[#allocation11] sm:$0xff]
        %v1027 = vld [vmem:[#allocation11 + $0x8] sm:$0xff]
        %v1028 = vld [vmem:[#allocation11 + $0x10] sm:$0xff]
        %v1029 = vld [vmem:[#allocation11 + $0x18] sm:$0xff]
        %v1030 = vld [vmem:[#allocation11 + $0x20] sm:$0xff]
        %v1031 = vld [vmem:[#allocation11 + $0x28] sm:$0xff]
        %v1032 = vld [vmem:[#allocation11 + $0x30] sm:$0xff]
        %v1033 = vld [vmem:[#allocation11 + $0x38] sm:$0xff]
        %v1034 = vld [vmem:[#allocation11 + $0x40] sm:$0xff]
        %v1035 = vld [vmem:[#allocation11 + $0x48] sm:$0xff]
        %v1036 = vld [vmem:[#allocation11 + $0x50] sm:$0xff]
        %v1037 = vld [vmem:[#allocation11 + $0x58] sm:$0xff]
        %v1038 = vld [vmem:[#allocation11 + $0x60] sm:$0xff]
        %v1039 = vld [vmem:[#allocation11 + $0x68] sm:$0xff]
        %v1040 = vld [vmem:[#allocation11 + $0x70] sm:$0xff]
        %v1041 = vld [vmem:[#allocation11 + $0x78] sm:$0xff]
        %v1042 = vld [vmem:[#allocation8] sm:$0xff]
        %v1043 = vld [vmem:[#allocation8 + $0x8] sm:$0xff]
        %v1044 = vld [vmem:[#allocation8 + $0x10] sm:$0xff]
        %v1045 = vld [vmem:[#allocation8 + $0x18] sm:$0xff]
        %v1046 = vld [vmem:[#allocation8 + $0x20] sm:$0xff]
        %v1047 = vld [vmem:[#allocation8 + $0x28] sm:$0xff]
        %v1048 = vld [vmem:[#allocation8 + $0x30] sm:$0xff]
        %v1049 = vld [vmem:[#allocation8 + $0x38] sm:$0xff]
        %v1050 = vld [vmem:[#allocation8 + $0x40] sm:$0xff]
        %v1051 = vld [vmem:[#allocation8 + $0x48] sm:$0xff]
        %v1052 = vld [vmem:[#allocation8 + $0x50] sm:$0xff]
        %v1053 = vld [vmem:[#allocation8 + $0x58] sm:$0xff]
        %v1054 = vld [vmem:[#allocation8 + $0x60] sm:$0xff]
        %v1055 = vld [vmem:[#allocation8 + $0x68] sm:$0xff]
        %v1056 = vld [vmem:[#allocation8 + $0x70] sm:$0xff]
        %v1057 = vld [vmem:[#allocation8 + $0x78] sm:$0xff]
        %v1058 = vld [vmem:[#allocation8 + $0x80] sm:$0xff]
        %v1059 = vld [vmem:[#allocation8 + $0x88] sm:$0xff]
        %v1060 = vld [vmem:[#allocation8 + $0x90] sm:$0xff]
        %v1061 = vld [vmem:[#allocation8 + $0x98] sm:$0xff]
        %v1062 = vld [vmem:[#allocation8 + $0xa0] sm:$0xff]
        %v1063 = vld [vmem:[#allocation8 + $0xa8] sm:$0xff]
        %v1064 = vld [vmem:[#allocation8 + $0xb0] sm:$0xff]
        %v1065 = vld [vmem:[#allocation8 + $0xb8] sm:$0xff]
        %v1066 = vld [vmem:[#allocation8 + $0xc0] sm:$0xff]
        %v1067 = vld [vmem:[#allocation8 + $0xc8] sm:$0xff]
        %v1068 = vld [vmem:[#allocation8 + $0xd0] sm:$0xff]
        %v1069 = vld [vmem:[#allocation8 + $0xd8] sm:$0xff]
        %v1070 = vld [vmem:[#allocation8 + $0xe0] sm:$0xff]
        %v1071 = vld [vmem:[#allocation8 + $0xe8] sm:$0xff]
        %v1072 = vld [vmem:[#allocation8 + $0xf0] sm:$0xff]
        %v1073 = vld [vmem:[#allocation8 + $0xf8] sm:$0xff]
        %v1074 = vld [vmem:[#allocation8 + $0x100] sm:$0xff]
        %v1075 = vld [vmem:[#allocation8 + $0x108] sm:$0xff]
        %v1076 = vld [vmem:[#allocation8 + $0x110] sm:$0xff]
        %v1077 = vld [vmem:[#allocation8 + $0x118] sm:$0xff]
        %v1078 = vld [vmem:[#allocation8 + $0x120] sm:$0xff]
        %v1079 = vld [vmem:[#allocation8 + $0x128] sm:$0xff]
        %v1080 = vld [vmem:[#allocation8 + $0x130] sm:$0xff]
        %v1081 = vld [vmem:[#allocation8 + $0x138] sm:$0xff]
        %v1082 = vld [vmem:[#allocation8 + $0x140] sm:$0xff]
        %v1083 = vld [vmem:[#allocation8 + $0x148] sm:$0xff]
        %v1084 = vld [vmem:[#allocation8 + $0x150] sm:$0xff]
        %v1085 = vld [vmem:[#allocation8 + $0x158] sm:$0xff]
        %v1086 = vld [vmem:[#allocation8 + $0x160] sm:$0xff]
        %v1087 = vld [vmem:[#allocation8 + $0x168] sm:$0xff]
        %v1088 = vld [vmem:[#allocation8 + $0x170] sm:$0xff]
        %v1089 = vld [vmem:[#allocation8 + $0x178] sm:$0xff]
        %v1090 = vld [vmem:[#allocation8 + $0x180] sm:$0xff]
        %v1091 = vld [vmem:[#allocation8 + $0x188] sm:$0xff]
        %v1092 = vld [vmem:[#allocation8 + $0x190] sm:$0xff]
        %v1093 = vld [vmem:[#allocation8 + $0x198] sm:$0xff]
        %v1094 = vld [vmem:[#allocation8 + $0x1a0] sm:$0xff]
        %v1095 = vld [vmem:[#allocation8 + $0x1a8] sm:$0xff]
        %v1096 = vld [vmem:[#allocation8 + $0x1b0] sm:$0xff]
        %v1097 = vld [vmem:[#allocation8 + $0x1b8] sm:$0xff]
        %v1098 = vld [vmem:[#allocation8 + $0x1c0] sm:$0xff]
        %v1099 = vld [vmem:[#allocation8 + $0x1c8] sm:$0xff]
        %v1100 = vld [vmem:[#allocation8 + $0x1d0] sm:$0xff]
        %v1101 = vld [vmem:[#allocation8 + $0x1d8] sm:$0xff]
        %v1102 = vld [vmem:[#allocation8 + $0x1e0] sm:$0xff]
        %v1103 = vld [vmem:[#allocation8 + $0x1e8] sm:$0xff]
        %v1104 = vld [vmem:[#allocation8 + $0x1f0] sm:$0xff]
        %v1105 = vld [vmem:[#allocation8 + $0x1f8] sm:$0xff]
        %v1106 = vld [vmem:[#allocation9] sm:$0xff]
        %v1107 = vld [vmem:[#allocation9 + $0x8] sm:$0xff]
        %v1108 = vld [vmem:[#allocation9 + $0x10] sm:$0xff]
        %v1109 = vld [vmem:[#allocation9 + $0x18] sm:$0xff]
        %v1110 = vld [vmem:[#allocation9 + $0x20] sm:$0xff]
        %v1111 = vld [vmem:[#allocation9 + $0x28] sm:$0xff]
        %v1112 = vld [vmem:[#allocation9 + $0x30] sm:$0xff]
        %v1113 = vld [vmem:[#allocation9 + $0x38] sm:$0xff]
        %v1114 = vld [vmem:[#allocation9 + $0x40] sm:$0xff]
        %v1115 = vld [vmem:[#allocation9 + $0x48] sm:$0xff]
        %v1116 = vld [vmem:[#allocation9 + $0x50] sm:$0xff]
        %v1117 = vld [vmem:[#allocation9 + $0x58] sm:$0xff]
        %v1118 = vld [vmem:[#allocation9 + $0x60] sm:$0xff]
        %v1119 = vld [vmem:[#allocation9 + $0x68] sm:$0xff]
        %v1120 = vld [vmem:[#allocation9 + $0x70] sm:$0xff]
        %v1121 = vld [vmem:[#allocation9 + $0x78] sm:$0xff]
        %v1122 = vld [vmem:[#allocation9 + $0x80] sm:$0xff]
        %v1123 = vld [vmem:[#allocation9 + $0x88] sm:$0xff]
        %v1124 = vld [vmem:[#allocation9 + $0x90] sm:$0xff]
        %v1125 = vld [vmem:[#allocation9 + $0x98] sm:$0xff]
        %v1126 = vld [vmem:[#allocation9 + $0xa0] sm:$0xff]
        %v1127 = vld [vmem:[#allocation9 + $0xa8] sm:$0xff]
        %v1128 = vld [vmem:[#allocation9 + $0xb0] sm:$0xff]
        %v1129 = vld [vmem:[#allocation9 + $0xb8] sm:$0xff]
        %v1130 = vld [vmem:[#allocation9 + $0xc0] sm:$0xff]
        %v1131 = vld [vmem:[#allocation9 + $0xc8] sm:$0xff]
        %v1132 = vld [vmem:[#allocation9 + $0xd0] sm:$0xff]
        %v1133 = vld [vmem:[#allocation9 + $0xd8] sm:$0xff]
        %v1134 = vld [vmem:[#allocation9 + $0xe0] sm:$0xff]
        %v1135 = vld [vmem:[#allocation9 + $0xe8] sm:$0xff]
        %v1136 = vld [vmem:[#allocation9 + $0xf0] sm:$0xff]
        %v1137 = vld [vmem:[#allocation9 + $0xf8] sm:$0xff]
        %v1138 = vld [vmem:[#allocation9 + $0x100] sm:$0xff]
        %v1139 = vld [vmem:[#allocation9 + $0x108] sm:$0xff]
        %v1140 = vld [vmem:[#allocation9 + $0x110] sm:$0xff]
        %v1141 = vld [vmem:[#allocation9 + $0x118] sm:$0xff]
        %v1142 = vld [vmem:[#allocation9 + $0x120] sm:$0xff]
        %v1143 = vld [vmem:[#allocation9 + $0x128] sm:$0xff]
        %v1144 = vld [vmem:[#allocation9 + $0x130] sm:$0xff]
        %v1145 = vld [vmem:[#allocation9 + $0x138] sm:$0xff]
        %v1146 = vld [vmem:[#allocation9 + $0x140] sm:$0xff]
        %v1147 = vld [vmem:[#allocation9 + $0x148] sm:$0xff]
        %v1148 = vld [vmem:[#allocation9 + $0x150] sm:$0xff]
        %v1149 = vld [vmem:[#allocation9 + $0x158] sm:$0xff]
        %v1150 = vld [vmem:[#allocation9 + $0x160] sm:$0xff]
        %v1151 = vld [vmem:[#allocation9 + $0x168] sm:$0xff]
        %v1152 = vld [vmem:[#allocation9 + $0x170] sm:$0xff]
        %v1153 = vld [vmem:[#allocation9 + $0x178] sm:$0xff]
        %v1154 = vld [vmem:[#allocation9 + $0x180] sm:$0xff]
        %v1155 = vld [vmem:[#allocation9 + $0x188] sm:$0xff]
        %v1156 = vld [vmem:[#allocation9 + $0x190] sm:$0xff]
        %v1157 = vld [vmem:[#allocation9 + $0x198] sm:$0xff]
        %v1158 = vld [vmem:[#allocation9 + $0x1a0] sm:$0xff]
        %v1159 = vld [vmem:[#allocation9 + $0x1a8] sm:$0xff]
        %v1160 = vld [vmem:[#allocation9 + $0x1b0] sm:$0xff]
        %v1161 = vld [vmem:[#allocation9 + $0x1b8] sm:$0xff]
        %v1162 = vld [vmem:[#allocation9 + $0x1c0] sm:$0xff]
        %v1163 = vld [vmem:[#allocation9 + $0x1c8] sm:$0xff]
        %v1164 = vld [vmem:[#allocation9 + $0x1d0] sm:$0xff]
        %v1165 = vld [vmem:[#allocation9 + $0x1d8] sm:$0xff]
        %v1166 = vld [vmem:[#allocation9 + $0x1e0] sm:$0xff]
        %v1167 = vld [vmem:[#allocation9 + $0x1e8] sm:$0xff]
        %v1168 = vld [vmem:[#allocation9 + $0x1f0] sm:$0xff]
        %v1169 = vld [vmem:[#allocation9 + $0x1f8] sm:$0xff]
        %v1170 = vld [vmem:[#allocation9 + $0x200] sm:$0xff]
        %v1171 = vld [vmem:[#allocation9 + $0x208] sm:$0xff]
        %v1172 = vld [vmem:[#allocation9 + $0x210] sm:$0xff]
        %v1173 = vld [vmem:[#allocation9 + $0x218] sm:$0xff]
        %v1174 = vld [vmem:[#allocation9 + $0x220] sm:$0xff]
        %v1175 = vld [vmem:[#allocation9 + $0x228] sm:$0xff]
        %v1176 = vld [vmem:[#allocation9 + $0x230] sm:$0xff]
        %v1177 = vld [vmem:[#allocation9 + $0x238] sm:$0xff]
        %v1178 = vld [vmem:[#allocation9 + $0x240] sm:$0xff]
        %v1179 = vld [vmem:[#allocation9 + $0x248] sm:$0xff]
        %v1180 = vld [vmem:[#allocation9 + $0x250] sm:$0xff]
        %v1181 = vld [vmem:[#allocation9 + $0x258] sm:$0xff]
        %v1182 = vld [vmem:[#allocation9 + $0x260] sm:$0xff]
        %v1183 = vld [vmem:[#allocation9 + $0x268] sm:$0xff]
        %v1184 = vld [vmem:[#allocation9 + $0x270] sm:$0xff]
        %v1185 = vld [vmem:[#allocation9 + $0x278] sm:$0xff]
        %v1186 = vld [vmem:[#allocation9 + $0x280] sm:$0xff]
        %v1187 = vld [vmem:[#allocation9 + $0x288] sm:$0xff]
        %v1188 = vld [vmem:[#allocation9 + $0x290] sm:$0xff]
        %v1189 = vld [vmem:[#allocation9 + $0x298] sm:$0xff]
        %v1190 = vld [vmem:[#allocation9 + $0x2a0] sm:$0xff]
        %v1191 = vld [vmem:[#allocation9 + $0x2a8] sm:$0xff]
        %v1192 = vld [vmem:[#allocation9 + $0x2b0] sm:$0xff]
        %v1193 = vld [vmem:[#allocation9 + $0x2b8] sm:$0xff]
        %v1194 = vld [vmem:[#allocation9 + $0x2c0] sm:$0xff]
        %v1195 = vld [vmem:[#allocation9 + $0x2c8] sm:$0xff]
        %v1196 = vld [vmem:[#allocation9 + $0x2d0] sm:$0xff]
        %v1197 = vld [vmem:[#allocation9 + $0x2d8] sm:$0xff]
        %v1198 = vld [vmem:[#allocation9 + $0x2e0] sm:$0xff]
        %v1199 = vld [vmem:[#allocation9 + $0x2e8] sm:$0xff]
        %v1200 = vld [vmem:[#allocation9 + $0x2f0] sm:$0xff]
        %v1201 = vld [vmem:[#allocation9 + $0x2f8] sm:$0xff]
        %v1202 = vld [vmem:[#allocation9 + $0x300] sm:$0xff]
        %v1203 = vld [vmem:[#allocation9 + $0x308] sm:$0xff]
        %v1204 = vld [vmem:[#allocation9 + $0x310] sm:$0xff]
        %v1205 = vld [vmem:[#allocation9 + $0x318] sm:$0xff]
        %v1206 = vld [vmem:[#allocation9 + $0x320] sm:$0xff]
        %v1207 = vld [vmem:[#allocation9 + $0x328] sm:$0xff]
        %v1208 = vld [vmem:[#allocation9 + $0x330] sm:$0xff]
        %v1209 = vld [vmem:[#allocation9 + $0x338] sm:$0xff]
        %v1210 = vld [vmem:[#allocation9 + $0x340] sm:$0xff]
        %v1211 = vld [vmem:[#allocation9 + $0x348] sm:$0xff]
        %v1212 = vld [vmem:[#allocation9 + $0x350] sm:$0xff]
        %v1213 = vld [vmem:[#allocation9 + $0x358] sm:$0xff]
        %v1214 = vld [vmem:[#allocation9 + $0x360] sm:$0xff]
        %v1215 = vld [vmem:[#allocation9 + $0x368] sm:$0xff]
        %v1216 = vld [vmem:[#allocation9 + $0x370] sm:$0xff]
        %v1217 = vld [vmem:[#allocation9 + $0x378] sm:$0xff]
        %v1218 = vld [vmem:[#allocation9 + $0x380] sm:$0xff]
        %v1219 = vld [vmem:[#allocation9 + $0x388] sm:$0xff]
        %v1220 = vld [vmem:[#allocation9 + $0x390] sm:$0xff]
        %v1221 = vld [vmem:[#allocation9 + $0x398] sm:$0xff]
        %v1222 = vld [vmem:[#allocation9 + $0x3a0] sm:$0xff]
        %v1223 = vld [vmem:[#allocation9 + $0x3a8] sm:$0xff]
        %v1224 = vld [vmem:[#allocation9 + $0x3b0] sm:$0xff]
        %v1225 = vld [vmem:[#allocation9 + $0x3b8] sm:$0xff]
        %v1226 = vld [vmem:[#allocation9 + $0x3c0] sm:$0xff]
        %v1227 = vld [vmem:[#allocation9 + $0x3c8] sm:$0xff]
        %v1228 = vld [vmem:[#allocation9 + $0x3d0] sm:$0xff]
        %v1229 = vld [vmem:[#allocation9 + $0x3d8] sm:$0xff]
        %v1230 = vld [vmem:[#allocation9 + $0x3e0] sm:$0xff]
        %v1231 = vld [vmem:[#allocation9 + $0x3e8] sm:$0xff]
        %v1232 = vld [vmem:[#allocation9 + $0x3f0] sm:$0xff]
        %v1233 = vld [vmem:[#allocation9 + $0x3f8] sm:$0xff]
        %v1234 = vld [vmem:[#allocation9 + $0x400] sm:$0xff]
        %v1235 = vld [vmem:[#allocation9 + $0x408] sm:$0xff]
        %v1236 = vld [vmem:[#allocation9 + $0x410] sm:$0xff]
        %v1237 = vld [vmem:[#allocation9 + $0x418] sm:$0xff]
        %v1238 = vld [vmem:[#allocation9 + $0x420] sm:$0xff]
        %v1239 = vld [vmem:[#allocation9 + $0x428] sm:$0xff]
        %v1240 = vld [vmem:[#allocation9 + $0x430] sm:$0xff]
        %v1241 = vld [vmem:[#allocation9 + $0x438] sm:$0xff]
        %v1242 = vld [vmem:[#allocation9 + $0x440] sm:$0xff]
        %v1243 = vld [vmem:[#allocation9 + $0x448] sm:$0xff]
        %v1244 = vld [vmem:[#allocation9 + $0x450] sm:$0xff]
        %v1245 = vld [vmem:[#allocation9 + $0x458] sm:$0xff]
        %v1246 = vld [vmem:[#allocation9 + $0x460] sm:$0xff]
        %v1247 = vld [vmem:[#allocation9 + $0x468] sm:$0xff]
        %v1248 = vld [vmem:[#allocation9 + $0x470] sm:$0xff]
        %v1249 = vld [vmem:[#allocation9 + $0x478] sm:$0xff]
        %v1250 = vld [vmem:[#allocation9 + $0x480] sm:$0xff]
        %v1251 = vld [vmem:[#allocation9 + $0x488] sm:$0xff]
        %v1252 = vld [vmem:[#allocation9 + $0x490] sm:$0xff]
        %v1253 = vld [vmem:[#allocation9 + $0x498] sm:$0xff]
        %v1254 = vld [vmem:[#allocation9 + $0x4a0] sm:$0xff]
        %v1255 = vld [vmem:[#allocation9 + $0x4a8] sm:$0xff]
        %v1256 = vld [vmem:[#allocation9 + $0x4b0] sm:$0xff]
        %v1257 = vld [vmem:[#allocation9 + $0x4b8] sm:$0xff]
        %v1258 = vld [vmem:[#allocation9 + $0x4c0] sm:$0xff]
        %v1259 = vld [vmem:[#allocation9 + $0x4c8] sm:$0xff]
        %v1260 = vld [vmem:[#allocation9 + $0x4d0] sm:$0xff]
        %v1261 = vld [vmem:[#allocation9 + $0x4d8] sm:$0xff]
        %v1262 = vld [vmem:[#allocation9 + $0x4e0] sm:$0xff]
        %v1263 = vld [vmem:[#allocation9 + $0x4e8] sm:$0xff]
        %v1264 = vld [vmem:[#allocation9 + $0x4f0] sm:$0xff]
        %v1265 = vld [vmem:[#allocation9 + $0x4f8] sm:$0xff]
        %v1266 = vld [vmem:[#allocation9 + $0x500] sm:$0xff]
        %v1267 = vld [vmem:[#allocation9 + $0x508] sm:$0xff]
        %v1268 = vld [vmem:[#allocation9 + $0x510] sm:$0xff]
        %v1269 = vld [vmem:[#allocation9 + $0x518] sm:$0xff]
        %v1270 = vld [vmem:[#allocation9 + $0x520] sm:$0xff]
        %v1271 = vld [vmem:[#allocation9 + $0x528] sm:$0xff]
        %v1272 = vld [vmem:[#allocation9 + $0x530] sm:$0xff]
        %v1273 = vld [vmem:[#allocation9 + $0x538] sm:$0xff]
        %v1274 = vld [vmem:[#allocation9 + $0x540] sm:$0xff]
        %v1275 = vld [vmem:[#allocation9 + $0x548] sm:$0xff]
        %v1276 = vld [vmem:[#allocation9 + $0x550] sm:$0xff]
        %v1277 = vld [vmem:[#allocation9 + $0x558] sm:$0xff]
        %v1278 = vld [vmem:[#allocation9 + $0x560] sm:$0xff]
        %v1279 = vld [vmem:[#allocation9 + $0x568] sm:$0xff]
        %v1280 = vld [vmem:[#allocation9 + $0x570] sm:$0xff]
        %v1281 = vld [vmem:[#allocation9 + $0x578] sm:$0xff]
        %v1282 = vld [vmem:[#allocation9 + $0x580] sm:$0xff]
        %v1283 = vld [vmem:[#allocation9 + $0x588] sm:$0xff]
        %v1284 = vld [vmem:[#allocation9 + $0x590] sm:$0xff]
        %v1285 = vld [vmem:[#allocation9 + $0x598] sm:$0xff]
        %v1286 = vld [vmem:[#allocation9 + $0x5a0] sm:$0xff]
        %v1287 = vld [vmem:[#allocation9 + $0x5a8] sm:$0xff]
        %v1288 = vld [vmem:[#allocation9 + $0x5b0] sm:$0xff]
        %v1289 = vld [vmem:[#allocation9 + $0x5b8] sm:$0xff]
        %v1290 = vld [vmem:[#allocation9 + $0x5c0] sm:$0xff]
        %v1291 = vld [vmem:[#allocation9 + $0x5c8] sm:$0xff]
        %v1292 = vld [vmem:[#allocation9 + $0x5d0] sm:$0xff]
        %v1293 = vld [vmem:[#allocation9 + $0x5d8] sm:$0xff]
        %v1294 = vld [vmem:[#allocation9 + $0x5e0] sm:$0xff]
        %v1295 = vld [vmem:[#allocation9 + $0x5e8] sm:$0xff]
        %v1296 = vld [vmem:[#allocation9 + $0x5f0] sm:$0xff]
        %v1297 = vld [vmem:[#allocation9 + $0x5f8] sm:$0xff]
        %v1298 = vld [vmem:[#allocation9 + $0x600] sm:$0xff]
        %v1299 = vld [vmem:[#allocation9 + $0x608] sm:$0xff]
        %v1300 = vld [vmem:[#allocation9 + $0x610] sm:$0xff]
        %v1301 = vld [vmem:[#allocation9 + $0x618] sm:$0xff]
        %v1302 = vld [vmem:[#allocation9 + $0x620] sm:$0xff]
        %v1303 = vld [vmem:[#allocation9 + $0x628] sm:$0xff]
        %v1304 = vld [vmem:[#allocation9 + $0x630] sm:$0xff]
        %v1305 = vld [vmem:[#allocation9 + $0x638] sm:$0xff]
        %v1306 = vld [vmem:[#allocation9 + $0x640] sm:$0xff]
        %v1307 = vld [vmem:[#allocation9 + $0x648] sm:$0xff]
        %v1308 = vld [vmem:[#allocation9 + $0x650] sm:$0xff]
        %v1309 = vld [vmem:[#allocation9 + $0x658] sm:$0xff]
        %v1310 = vld [vmem:[#allocation9 + $0x660] sm:$0xff]
        %v1311 = vld [vmem:[#allocation9 + $0x668] sm:$0xff]
        %v1312 = vld [vmem:[#allocation9 + $0x670] sm:$0xff]
        %v1313 = vld [vmem:[#allocation9 + $0x678] sm:$0xff]
        %v1314 = vld [vmem:[#allocation9 + $0x680] sm:$0xff]
        %v1315 = vld [vmem:[#allocation9 + $0x688] sm:$0xff]
        %v1316 = vld [vmem:[#allocation9 + $0x690] sm:$0xff]
        %v1317 = vld [vmem:[#allocation9 + $0x698] sm:$0xff]
        %v1318 = vld [vmem:[#allocation9 + $0x6a0] sm:$0xff]
        %v1319 = vld [vmem:[#allocation9 + $0x6a8] sm:$0xff]
        %v1320 = vld [vmem:[#allocation9 + $0x6b0] sm:$0xff]
        %v1321 = vld [vmem:[#allocation9 + $0x6b8] sm:$0xff]
        %v1322 = vld [vmem:[#allocation9 + $0x6c0] sm:$0xff]
        %v1323 = vld [vmem:[#allocation9 + $0x6c8] sm:$0xff]
        %v1324 = vld [vmem:[#allocation9 + $0x6d0] sm:$0xff]
        %v1325 = vld [vmem:[#allocation9 + $0x6d8] sm:$0xff]
        %v1326 = vld [vmem:[#allocation9 + $0x6e0] sm:$0xff]
        %v1327 = vld [vmem:[#allocation9 + $0x6e8] sm:$0xff]
        %v1328 = vld [vmem:[#allocation9 + $0x6f0] sm:$0xff]
        %v1329 = vld [vmem:[#allocation9 + $0x6f8] sm:$0xff]
        %v1330 = vld [vmem:[#allocation9 + $0x700] sm:$0xff]
        %v1331 = vld [vmem:[#allocation9 + $0x708] sm:$0xff]
        %v1332 = vld [vmem:[#allocation9 + $0x710] sm:$0xff]
        %v1333 = vld [vmem:[#allocation9 + $0x718] sm:$0xff]
        %v1334 = vld [vmem:[#allocation9 + $0x720] sm:$0xff]
        %v1335 = vld [vmem:[#allocation9 + $0x728] sm:$0xff]
        %v1336 = vld [vmem:[#allocation9 + $0x730] sm:$0xff]
        %v1337 = vld [vmem:[#allocation9 + $0x738] sm:$0xff]
        %v1338 = vld [vmem:[#allocation9 + $0x740] sm:$0xff]
        %v1339 = vld [vmem:[#allocation9 + $0x748] sm:$0xff]
        %v1340 = vld [vmem:[#allocation9 + $0x750] sm:$0xff]
        %v1341 = vld [vmem:[#allocation9 + $0x758] sm:$0xff]
        %v1342 = vld [vmem:[#allocation9 + $0x760] sm:$0xff]
        %v1343 = vld [vmem:[#allocation9 + $0x768] sm:$0xff]
        %v1344 = vld [vmem:[#allocation9 + $0x770] sm:$0xff]
        %v1345 = vld [vmem:[#allocation9 + $0x778] sm:$0xff]
        %v1346 = vld [vmem:[#allocation9 + $0x780] sm:$0xff]
        %v1347 = vld [vmem:[#allocation9 + $0x788] sm:$0xff]
        %v1348 = vld [vmem:[#allocation9 + $0x790] sm:$0xff]
        %v1349 = vld [vmem:[#allocation9 + $0x798] sm:$0xff]
        %v1350 = vld [vmem:[#allocation9 + $0x7a0] sm:$0xff]
        %v1351 = vld [vmem:[#allocation9 + $0x7a8] sm:$0xff]
        %v1352 = vld [vmem:[#allocation9 + $0x7b0] sm:$0xff]
        %v1353 = vld [vmem:[#allocation9 + $0x7b8] sm:$0xff]
        %v1354 = vld [vmem:[#allocation9 + $0x7c0] sm:$0xff]
        %v1355 = vld [vmem:[#allocation9 + $0x7c8] sm:$0xff]
        %v1356 = vld [vmem:[#allocation9 + $0x7d0] sm:$0xff]
        %v1357 = vld [vmem:[#allocation9 + $0x7d8] sm:$0xff]
        %v1358 = vld [vmem:[#allocation9 + $0x7e0] sm:$0xff]
        %v1359 = vld [vmem:[#allocation9 + $0x7e8] sm:$0xff]
        %v1360 = vld [vmem:[#allocation9 + $0x7f0] sm:$0xff]
        %v1361 = vld [vmem:[#allocation9 + $0x7f8] sm:$0xff]
        %v1362 = vld [vmem:[#allocation9 + $0x800] sm:$0xff]
        %v1363 = vld [vmem:[#allocation9 + $0x808] sm:$0xff]
        %v1364 = vld [vmem:[#allocation9 + $0x810] sm:$0xff]
        %v1365 = vld [vmem:[#allocation9 + $0x818] sm:$0xff]
        %v1366 = vld [vmem:[#allocation9 + $0x820] sm:$0xff]
        %v1367 = vld [vmem:[#allocation9 + $0x828] sm:$0xff]
        %v1368 = vld [vmem:[#allocation9 + $0x830] sm:$0xff]
        %v1369 = vld [vmem:[#allocation9 + $0x838] sm:$0xff]
        %v1370 = vld [vmem:[#allocation9 + $0x840] sm:$0xff]
        %v1371 = vld [vmem:[#allocation9 + $0x848] sm:$0xff]
        %v1372 = vld [vmem:[#allocation9 + $0x850] sm:$0xff]
        %v1373 = vld [vmem:[#allocation9 + $0x858] sm:$0xff]
        %v1374 = vld [vmem:[#allocation9 + $0x860] sm:$0xff]
        %v1375 = vld [vmem:[#allocation9 + $0x868] sm:$0xff]
        %v1376 = vld [vmem:[#allocation9 + $0x870] sm:$0xff]
        %v1377 = vld [vmem:[#allocation9 + $0x878] sm:$0xff]
        %v1378 = vld [vmem:[#allocation9 + $0x880] sm:$0xff]
        %v1379 = vld [vmem:[#allocation9 + $0x888] sm:$0xff]
        %v1380 = vld [vmem:[#allocation9 + $0x890] sm:$0xff]
        %v1381 = vld [vmem:[#allocation9 + $0x898] sm:$0xff]
        %v1382 = vld [vmem:[#allocation9 + $0x8a0] sm:$0xff]
        %v1383 = vld [vmem:[#allocation9 + $0x8a8] sm:$0xff]
        %v1384 = vld [vmem:[#allocation9 + $0x8b0] sm:$0xff]
        %v1385 = vld [vmem:[#allocation9 + $0x8b8] sm:$0xff]
        %v1386 = vld [vmem:[#allocation9 + $0x8c0] sm:$0xff]
        %v1387 = vld [vmem:[#allocation9 + $0x8c8] sm:$0xff]
        %v1388 = vld [vmem:[#allocation9 + $0x8d0] sm:$0xff]
        %v1389 = vld [vmem:[#allocation9 + $0x8d8] sm:$0xff]
        %v1390 = vld [vmem:[#allocation9 + $0x8e0] sm:$0xff]
        %v1391 = vld [vmem:[#allocation9 + $0x8e8] sm:$0xff]
        %v1392 = vld [vmem:[#allocation9 + $0x8f0] sm:$0xff]
        %v1393 = vld [vmem:[#allocation9 + $0x8f8] sm:$0xff]
        %v1394 = vld [vmem:[#allocation9 + $0x900] sm:$0xff]
        %v1395 = vld [vmem:[#allocation9 + $0x908] sm:$0xff]
        %v1396 = vld [vmem:[#allocation9 + $0x910] sm:$0xff]
        %v1397 = vld [vmem:[#allocation9 + $0x918] sm:$0xff]
        %v1398 = vld [vmem:[#allocation9 + $0x920] sm:$0xff]
        %v1399 = vld [vmem:[#allocation9 + $0x928] sm:$0xff]
        %v1400 = vld [vmem:[#allocation9 + $0x930] sm:$0xff]
        %v1401 = vld [vmem:[#allocation9 + $0x938] sm:$0xff]
        %v1402 = vld [vmem:[#allocation9 + $0x940] sm:$0xff]
        %v1403 = vld [vmem:[#allocation9 + $0x948] sm:$0xff]
        %v1404 = vld [vmem:[#allocation9 + $0x950] sm:$0xff]
        %v1405 = vld [vmem:[#allocation9 + $0x958] sm:$0xff]
        %v1406 = vld [vmem:[#allocation9 + $0x960] sm:$0xff]
        %v1407 = vld [vmem:[#allocation9 + $0x968] sm:$0xff]
        %v1408 = vld [vmem:[#allocation9 + $0x970] sm:$0xff]
        %v1409 = vld [vmem:[#allocation9 + $0x978] sm:$0xff]
        %v1410 = vld [vmem:[#allocation9 + $0x980] sm:$0xff]
        %v1411 = vld [vmem:[#allocation9 + $0x988] sm:$0xff]
        %v1412 = vld [vmem:[#allocation9 + $0x990] sm:$0xff]
        %v1413 = vld [vmem:[#allocation9 + $0x998] sm:$0xff]
        %v1414 = vld [vmem:[#allocation9 + $0x9a0] sm:$0xff]
        %v1415 = vld [vmem:[#allocation9 + $0x9a8] sm:$0xff]
        %v1416 = vld [vmem:[#allocation9 + $0x9b0] sm:$0xff]
        %v1417 = vld [vmem:[#allocation9 + $0x9b8] sm:$0xff]
        %v1418 = vld [vmem:[#allocation9 + $0x9c0] sm:$0xff]
        %v1419 = vld [vmem:[#allocation9 + $0x9c8] sm:$0xff]
        %v1420 = vld [vmem:[#allocation9 + $0x9d0] sm:$0xff]
        %v1421 = vld [vmem:[#allocation9 + $0x9d8] sm:$0xff]
        %v1422 = vld [vmem:[#allocation9 + $0x9e0] sm:$0xff]
        %v1423 = vld [vmem:[#allocation9 + $0x9e8] sm:$0xff]
        %v1424 = vld [vmem:[#allocation9 + $0x9f0] sm:$0xff]
        %v1425 = vld [vmem:[#allocation9 + $0x9f8] sm:$0xff]
        %v1426 = vld [vmem:[#allocation9 + $0xa00] sm:$0xff]
        %v1427 = vld [vmem:[#allocation9 + $0xa08] sm:$0xff]
        %v1428 = vld [vmem:[#allocation9 + $0xa10] sm:$0xff]
        %v1429 = vld [vmem:[#allocation9 + $0xa18] sm:$0xff]
        %v1430 = vld [vmem:[#allocation9 + $0xa20] sm:$0xff]
        %v1431 = vld [vmem:[#allocation9 + $0xa28] sm:$0xff]
        %v1432 = vld [vmem:[#allocation9 + $0xa30] sm:$0xff]
        %v1433 = vld [vmem:[#allocation9 + $0xa38] sm:$0xff]
        %v1434 = vld [vmem:[#allocation9 + $0xa40] sm:$0xff]
        %v1435 = vld [vmem:[#allocation9 + $0xa48] sm:$0xff]
        %v1436 = vld [vmem:[#allocation9 + $0xa50] sm:$0xff]
        %v1437 = vld [vmem:[#allocation9 + $0xa58] sm:$0xff]
        %v1438 = vld [vmem:[#allocation9 + $0xa60] sm:$0xff]
        %v1439 = vld [vmem:[#allocation9 + $0xa68] sm:$0xff]
        %v1440 = vld [vmem:[#allocation9 + $0xa70] sm:$0xff]
        %v1441 = vld [vmem:[#allocation9 + $0xa78] sm:$0xff]
        %v1442 = vld [vmem:[#allocation9 + $0xa80] sm:$0xff]
        %v1443 = vld [vmem:[#allocation9 + $0xa88] sm:$0xff]
        %v1444 = vld [vmem:[#allocation9 + $0xa90] sm:$0xff]
        %v1445 = vld [vmem:[#allocation9 + $0xa98] sm:$0xff]
        %v1446 = vld [vmem:[#allocation9 + $0xaa0] sm:$0xff]
        %v1447 = vld [vmem:[#allocation9 + $0xaa8] sm:$0xff]
        %v1448 = vld [vmem:[#allocation9 + $0xab0] sm:$0xff]
        %v1449 = vld [vmem:[#allocation9 + $0xab8] sm:$0xff]
        %v1450 = vld [vmem:[#allocation9 + $0xac0] sm:$0xff]
        %v1451 = vld [vmem:[#allocation9 + $0xac8] sm:$0xff]
        %v1452 = vld [vmem:[#allocation9 + $0xad0] sm:$0xff]
        %v1453 = vld [vmem:[#allocation9 + $0xad8] sm:$0xff]
        %v1454 = vld [vmem:[#allocation9 + $0xae0] sm:$0xff]
        %v1455 = vld [vmem:[#allocation9 + $0xae8] sm:$0xff]
        %v1456 = vld [vmem:[#allocation9 + $0xaf0] sm:$0xff]
        %v1457 = vld [vmem:[#allocation9 + $0xaf8] sm:$0xff]
        %v1458 = vld [vmem:[#allocation9 + $0xb00] sm:$0xff]
        %v1459 = vld [vmem:[#allocation9 + $0xb08] sm:$0xff]
        %v1460 = vld [vmem:[#allocation9 + $0xb10] sm:$0xff]
        %v1461 = vld [vmem:[#allocation9 + $0xb18] sm:$0xff]
        %v1462 = vld [vmem:[#allocation9 + $0xb20] sm:$0xff]
        %v1463 = vld [vmem:[#allocation9 + $0xb28] sm:$0xff]
        %v1464 = vld [vmem:[#allocation9 + $0xb30] sm:$0xff]
        %v1465 = vld [vmem:[#allocation9 + $0xb38] sm:$0xff]
        %v1466 = vld [vmem:[#allocation9 + $0xb40] sm:$0xff]
        %v1467 = vld [vmem:[#allocation9 + $0xb48] sm:$0xff]
        %v1468 = vld [vmem:[#allocation9 + $0xb50] sm:$0xff]
        %v1469 = vld [vmem:[#allocation9 + $0xb58] sm:$0xff]
        %v1470 = vld [vmem:[#allocation9 + $0xb60] sm:$0xff]
        %v1471 = vld [vmem:[#allocation9 + $0xb68] sm:$0xff]
        %v1472 = vld [vmem:[#allocation9 + $0xb70] sm:$0xff]
        %v1473 = vld [vmem:[#allocation9 + $0xb78] sm:$0xff]
        %v1474 = vld [vmem:[#allocation9 + $0xb80] sm:$0xff]
        %v1475 = vld [vmem:[#allocation9 + $0xb88] sm:$0xff]
        %v1476 = vld [vmem:[#allocation9 + $0xb90] sm:$0xff]
        %v1477 = vld [vmem:[#allocation9 + $0xb98] sm:$0xff]
        %v1478 = vld [vmem:[#allocation9 + $0xba0] sm:$0xff]
        %v1479 = vld [vmem:[#allocation9 + $0xba8] sm:$0xff]
        %v1480 = vld [vmem:[#allocation9 + $0xbb0] sm:$0xff]
        %v1481 = vld [vmem:[#allocation9 + $0xbb8] sm:$0xff]
        %v1482 = vld [vmem:[#allocation9 + $0xbc0] sm:$0xff]
        %v1483 = vld [vmem:[#allocation9 + $0xbc8] sm:$0xff]
        %v1484 = vld [vmem:[#allocation9 + $0xbd0] sm:$0xff]
        %v1485 = vld [vmem:[#allocation9 + $0xbd8] sm:$0xff]
        %v1486 = vld [vmem:[#allocation9 + $0xbe0] sm:$0xff]
        %v1487 = vld [vmem:[#allocation9 + $0xbe8] sm:$0xff]
        %v1488 = vld [vmem:[#allocation9 + $0xbf0] sm:$0xff]
        %v1489 = vld [vmem:[#allocation9 + $0xbf8] sm:$0xff]
        %v1490 = vld [vmem:[#allocation12] sm:$0xff]
        %v1491 = vld [vmem:[%s8] sm:$0xff]
        %1493 = vset.pattern.permute.xlu0 0
        %1494 = vperm.xlu0 %1493, %v1491
        %v1495 = vpop.permute.xlu0 %1494
        %vm1497 = vcmask 130048
        %v1499 = vsel %vm1497, %v1490, 0
        %1501 = vmatprep.subr.mxu0 0.0
        %1502 = vmatpush1.msra.mxu0 0.0
        %1503 = vmatprep.subr.mxu0 0.0
        %1504 = vmatpush1.msra.mxu0 0.0
        %1505 = vmatprep.subr.mxu0 0.0
        %1506 = vmatpush1.msra.mxu0 0.0
        %1507 = vmatprep.subr.mxu0 0.0
        %1508 = vmatpush1.msra.mxu0 0.0
        %1509 = vmatprep.subr.mxu0 0.0
        %1510 = vmatpush1.msra.mxu0 0.0
        %1511 = vmatprep.subr.mxu0 0.0
        %1512 = vmatpush1.msra.mxu0 0.0
        %1513 = vmatprep.subr.mxu0 0.0
        %1514 = vmatpush1.msra.mxu0 0.0
        %1515 = vmatprep.subr.mxu0 0.0
        %1516 = vmatpush1.msra.mxu0 0.0
        %1517 = vmatprep.subr.mxu0 0.0
        %1518 = vmatpush1.msra.mxu0 0.0
        %1519 = vmatprep.subr.mxu0 0.0
        %1520 = vmatpush1.msra.mxu0 0.0
        %1521 = vmatprep.subr.mxu0 0.0
        %1522 = vmatpush1.msra.mxu0 0.0
        %1523 = vmatprep.subr.mxu0 0.0
        %1524 = vmatpush1.msra.mxu0 0.0
        %1525 = vmatprep.subr.mxu0 0.0
        %1526 = vmatpush1.msra.mxu0 0.0
        %1527 = vmatprep.subr.mxu0 0.0
        %1528 = vmatpush1.msra.mxu0 0.0
        %1529 = vmatprep.subr.mxu0 %v951
        %1530 = vmatpush1.msra.mxu0 %v950
        %1531 = vmatprep.subr.mxu0 %v947
        %1532 = vmatpush1.msra.mxu0 %v946
        %1533 = vmatprep.subr.mxu0 0.0
        %1534 = vmatpush2.msra.mxu0 0.0
        %1535 = vmatprep.subr.mxu0 0.0
        %1536 = vmatpush2.msra.mxu0 0.0
        %1537 = vmatprep.subr.mxu0 0.0
        %1538 = vmatpush2.msra.mxu0 0.0
        %1539 = vmatprep.subr.mxu0 0.0
        %1540 = vmatpush2.msra.mxu0 0.0
        %1541 = vmatprep.subr.mxu0 0.0
        %1542 = vmatpush2.msra.mxu0 0.0
        %1543 = vmatprep.subr.mxu0 0.0
        %1544 = vmatpush2.msra.mxu0 0.0
        %1545 = vmatprep.subr.mxu0 0.0
        %1546 = vmatpush2.msra.mxu0 0.0
        %1547 = vmatprep.subr.mxu0 0.0
        %1548 = vmatpush2.msra.mxu0 0.0
        %1549 = vmatprep.subr.mxu0 0.0
        %1550 = vmatpush2.msra.mxu0 0.0
        %1551 = vmatprep.subr.mxu0 0.0
        %1552 = vmatpush2.msra.mxu0 0.0
        %1553 = vmatprep.subr.mxu0 0.0
        %1554 = vmatpush2.msra.mxu0 0.0
        %1555 = vmatprep.subr.mxu0 0.0
        %1556 = vmatpush2.msra.mxu0 0.0
        %1557 = vmatprep.subr.mxu0 0.0
        %1558 = vmatpush2.msra.mxu0 0.0
        %1559 = vmatprep.subr.mxu0 0.0
        %1560 = vmatpush2.msra.mxu0 0.0
        %1561 = vmatprep.subr.mxu0 0.0
        %1562 = vmatpush2.msra.mxu0 0.0
        %1563 = vmatprep.subr.mxu0 0.0
        %1564 = vmatpush2.msra.mxu0 0.0
        %1565 = vmatprep.mubr.f32.mxu0 0.0
        %1566 = vmatmul.mubr.f32.gmra.mxu0 %v1499
        %v1567 = vpop.f32.mrf.mxu0
        %v1568 = vadd.f32 %v1495, %v1567
        %v1569 = vpop.f32.mrf.mxu0
        %v1570 = vadd.f32 %v1495, %v1569
        %1571 = vdwg.mxu0
        %1572 = vmatprep.subr.mxu0 0.0
        %1573 = vmatpush1.msra.mxu0 0.0
        %1574 = vmatprep.subr.mxu0 0.0
        %1575 = vmatpush1.msra.mxu0 0.0
        %1576 = vmatprep.subr.mxu0 0.0
        %1577 = vmatpush1.msra.mxu0 0.0
        %1578 = vmatprep.subr.mxu0 0.0
        %1579 = vmatpush1.msra.mxu0 0.0
        %1580 = vmatprep.subr.mxu0 0.0
        %1581 = vmatpush1.msra.mxu0 0.0
        %1582 = vmatprep.subr.mxu0 0.0
        %1583 = vmatpush1.msra.mxu0 0.0
        %1584 = vmatprep.subr.mxu0 0.0
        %1585 = vmatpush1.msra.mxu0 0.0
        %1586 = vmatprep.subr.mxu0 0.0
        %1587 = vmatpush1.msra.mxu0 0.0
        %1588 = vmatprep.subr.mxu0 0.0
        %1589 = vmatpush1.msra.mxu0 0.0
        %1590 = vmatprep.subr.mxu0 0.0
        %1591 = vmatpush1.msra.mxu0 0.0
        %1592 = vmatprep.subr.mxu0 0.0
        %1593 = vmatpush1.msra.mxu0 0.0
        %1594 = vmatprep.subr.mxu0 0.0
        %1595 = vmatpush1.msra.mxu0 0.0
        %1596 = vmatprep.subr.mxu0 0.0
        %1597 = vmatpush1.msra.mxu0 0.0
        %1598 = vmatprep.subr.mxu0 0.0
        %1599 = vmatpush1.msra.mxu0 0.0
        %1600 = vmatprep.subr.mxu0 %v953
        %1601 = vmatpush1.msra.mxu0 %v952
        %1602 = vmatprep.subr.mxu0 %v949
        %1603 = vmatpush1.msra.mxu0 %v948
        %1604 = vmatprep.subr.mxu0 0.0
        %1605 = vmatpush2.msra.mxu0 0.0
        %1606 = vmatprep.subr.mxu0 0.0
        %1607 = vmatpush2.msra.mxu0 0.0
        %1608 = vmatprep.subr.mxu0 0.0
        %1609 = vmatpush2.msra.mxu0 0.0
        %1610 = vmatprep.subr.mxu0 0.0
        %1611 = vmatpush2.msra.mxu0 0.0
        %1612 = vmatprep.subr.mxu0 0.0
        %1613 = vmatpush2.msra.mxu0 0.0
        %1614 = vmatprep.subr.mxu0 0.0
        %1615 = vmatpush2.msra.mxu0 0.0
        %1616 = vmatprep.subr.mxu0 0.0
        %1617 = vmatpush2.msra.mxu0 0.0
        %1618 = vmatprep.subr.mxu0 0.0
        %1619 = vmatpush2.msra.mxu0 0.0
        %1620 = vmatprep.subr.mxu0 0.0
        %1621 = vmatpush2.msra.mxu0 0.0
        %1622 = vmatprep.subr.mxu0 0.0
        %1623 = vmatpush2.msra.mxu0 0.0
        %1624 = vmatprep.subr.mxu0 0.0
        %1625 = vmatpush2.msra.mxu0 0.0
        %1626 = vmatprep.subr.mxu0 0.0
        %1627 = vmatpush2.msra.mxu0 0.0
        %1628 = vmatprep.subr.mxu0 0.0
        %1629 = vmatpush2.msra.mxu0 0.0
        %1630 = vmatprep.subr.mxu0 0.0
        %1631 = vmatpush2.msra.mxu0 0.0
        %1632 = vmatprep.subr.mxu0 0.0
        %1633 = vmatpush2.msra.mxu0 0.0
        %1634 = vmatprep.subr.mxu0 0.0
        %1635 = vmatpush2.msra.mxu0 0.0
        %1636 = vmatprep.mubr.f32.mxu0 0.0
        %1637 = vmatmul.mubr.f32.gmra.mxu0 %v1499
        %v1638 = vpop.f32.mrf.mxu0
        %v1639 = vadd.f32 %v1495, %v1638
        %v1640 = vpop.f32.mrf.mxu0
        %v1641 = vadd.f32 %v1495, %v1640
        %1642 = vdwg.mxu0
        %v1643 = vld [vmem:[#allocation14] sm:$0xff]
        %v1644 = vld [vmem:[%s9] sm:$0xff]
        %1646 = vset.pattern.permute.xlu0 0
        %1647 = vperm.xlu0 %1646, %v1644
        %v1648 = vpop.permute.xlu0 %1647
        %v1651 = vsel %vm1497, %v1643, 0
        %1653 = vmatprep.subr.mxu0 0.0
        %1654 = vmatpush1.msra.mxu0 0.0
        %1655 = vmatprep.subr.mxu0 0.0
        %1656 = vmatpush1.msra.mxu0 0.0
        %1657 = vmatprep.subr.mxu0 0.0
        %1658 = vmatpush1.msra.mxu0 0.0
        %1659 = vmatprep.subr.mxu0 0.0
        %1660 = vmatpush1.msra.mxu0 0.0
        %1661 = vmatprep.subr.mxu0 0.0
        %1662 = vmatpush1.msra.mxu0 0.0
        %1663 = vmatprep.subr.mxu0 0.0
        %1664 = vmatpush1.msra.mxu0 0.0
        %1665 = vmatprep.subr.mxu0 0.0
        %1666 = vmatpush1.msra.mxu0 0.0
        %1667 = vmatprep.subr.mxu0 0.0
        %1668 = vmatpush1.msra.mxu0 0.0
        %1669 = vmatprep.subr.mxu0 0.0
        %1670 = vmatpush1.msra.mxu0 0.0
        %1671 = vmatprep.subr.mxu0 0.0
        %1672 = vmatpush1.msra.mxu0 0.0
        %1673 = vmatprep.subr.mxu0 0.0
        %1674 = vmatpush1.msra.mxu0 0.0
        %1675 = vmatprep.subr.mxu0 0.0
        %1676 = vmatpush1.msra.mxu0 0.0
        %1677 = vmatprep.subr.mxu0 0.0
        %1678 = vmatpush1.msra.mxu0 0.0
        %1679 = vmatprep.subr.mxu0 0.0
        %1680 = vmatpush1.msra.mxu0 0.0
        %1681 = vmatprep.subr.mxu0 %v959
        %1682 = vmatpush1.msra.mxu0 %v958
        %1683 = vmatprep.subr.mxu0 %v955
        %1684 = vmatpush1.msra.mxu0 %v954
        %1685 = vmatprep.subr.mxu0 0.0
        %1686 = vmatpush2.msra.mxu0 0.0
        %1687 = vmatprep.subr.mxu0 0.0
        %1688 = vmatpush2.msra.mxu0 0.0
        %1689 = vmatprep.subr.mxu0 0.0
        %1690 = vmatpush2.msra.mxu0 0.0
        %1691 = vmatprep.subr.mxu0 0.0
        %1692 = vmatpush2.msra.mxu0 0.0
        %1693 = vmatprep.subr.mxu0 0.0
        %1694 = vmatpush2.msra.mxu0 0.0
        %1695 = vmatprep.subr.mxu0 0.0
        %1696 = vmatpush2.msra.mxu0 0.0
        %1697 = vmatprep.subr.mxu0 0.0
        %1698 = vmatpush2.msra.mxu0 0.0
        %1699 = vmatprep.subr.mxu0 0.0
        %1700 = vmatpush2.msra.mxu0 0.0
        %1701 = vmatprep.subr.mxu0 0.0
        %1702 = vmatpush2.msra.mxu0 0.0
        %1703 = vmatprep.subr.mxu0 0.0
        %1704 = vmatpush2.msra.mxu0 0.0
        %1705 = vmatprep.subr.mxu0 0.0
        %1706 = vmatpush2.msra.mxu0 0.0
        %1707 = vmatprep.subr.mxu0 0.0
        %1708 = vmatpush2.msra.mxu0 0.0
        %1709 = vmatprep.subr.mxu0 0.0
        %1710 = vmatpush2.msra.mxu0 0.0
        %1711 = vmatprep.subr.mxu0 0.0
        %1712 = vmatpush2.msra.mxu0 0.0
        %1713 = vmatprep.subr.mxu0 0.0
        %1714 = vmatpush2.msra.mxu0 0.0
        %1715 = vmatprep.subr.mxu0 0.0
        %1716 = vmatpush2.msra.mxu0 0.0
        %1717 = vmatprep.mubr.f32.mxu0 0.0
        %1718 = vmatmul.mubr.f32.gmra.mxu0 %v1651
        %v1719 = vpop.f32.mrf.mxu0
        %v1720 = vadd.f32 %v1648, %v1719
        %v1721 = vpop.f32.mrf.mxu0
        %v1722 = vadd.f32 %v1648, %v1721
        %1723 = vdwg.mxu0
        %1724 = vmatprep.subr.mxu0 0.0
        %1725 = vmatpush1.msra.mxu0 0.0
        %1726 = vmatprep.subr.mxu0 0.0
        %1727 = vmatpush1.msra.mxu0 0.0
        %1728 = vmatprep.subr.mxu0 0.0
        %1729 = vmatpush1.msra.mxu0 0.0
        %1730 = vmatprep.subr.mxu0 0.0
        %1731 = vmatpush1.msra.mxu0 0.0
        %1732 = vmatprep.subr.mxu0 0.0
        %1733 = vmatpush1.msra.mxu0 0.0
        %1734 = vmatprep.subr.mxu0 0.0
        %1735 = vmatpush1.msra.mxu0 0.0
        %1736 = vmatprep.subr.mxu0 0.0
        %1737 = vmatpush1.msra.mxu0 0.0
        %1738 = vmatprep.subr.mxu0 0.0
        %1739 = vmatpush1.msra.mxu0 0.0
        %1740 = vmatprep.subr.mxu0 0.0
        %1741 = vmatpush1.msra.mxu0 0.0
        %1742 = vmatprep.subr.mxu0 0.0
        %1743 = vmatpush1.msra.mxu0 0.0
        %1744 = vmatprep.subr.mxu0 0.0
        %1745 = vmatpush1.msra.mxu0 0.0
        %1746 = vmatprep.subr.mxu0 0.0
        %1747 = vmatpush1.msra.mxu0 0.0
        %1748 = vmatprep.subr.mxu0 0.0
        %1749 = vmatpush1.msra.mxu0 0.0
        %1750 = vmatprep.subr.mxu0 0.0
        %1751 = vmatpush1.msra.mxu0 0.0
        %1752 = vmatprep.subr.mxu0 %v961
        %1753 = vmatpush1.msra.mxu0 %v960
        %1754 = vmatprep.subr.mxu0 %v957
        %1755 = vmatpush1.msra.mxu0 %v956
        %1756 = vmatprep.subr.mxu0 0.0
        %1757 = vmatpush2.msra.mxu0 0.0
        %1758 = vmatprep.subr.mxu0 0.0
        %1759 = vmatpush2.msra.mxu0 0.0
        %1760 = vmatprep.subr.mxu0 0.0
        %1761 = vmatpush2.msra.mxu0 0.0
        %1762 = vmatprep.subr.mxu0 0.0
        %1763 = vmatpush2.msra.mxu0 0.0
        %1764 = vmatprep.subr.mxu0 0.0
        %1765 = vmatpush2.msra.mxu0 0.0
        %1766 = vmatprep.subr.mxu0 0.0
        %1767 = vmatpush2.msra.mxu0 0.0
        %1768 = vmatprep.subr.mxu0 0.0
        %1769 = vmatpush2.msra.mxu0 0.0
        %1770 = vmatprep.subr.mxu0 0.0
        %1771 = vmatpush2.msra.mxu0 0.0
        %1772 = vmatprep.subr.mxu0 0.0
        %1773 = vmatpush2.msra.mxu0 0.0
        %1774 = vmatprep.subr.mxu0 0.0
        %1775 = vmatpush2.msra.mxu0 0.0
        %1776 = vmatprep.subr.mxu0 0.0
        %1777 = vmatpush2.msra.mxu0 0.0
        %1778 = vmatprep.subr.mxu0 0.0
        %1779 = vmatpush2.msra.mxu0 0.0
        %1780 = vmatprep.subr.mxu0 0.0
        %1781 = vmatpush2.msra.mxu0 0.0
        %1782 = vmatprep.subr.mxu0 0.0
        %1783 = vmatpush2.msra.mxu0 0.0
        %1784 = vmatprep.subr.mxu0 0.0
        %1785 = vmatpush2.msra.mxu0 0.0
        %1786 = vmatprep.subr.mxu0 0.0
        %1787 = vmatpush2.msra.mxu0 0.0
        %1788 = vmatprep.mubr.f32.mxu0 0.0
        %1789 = vmatmul.mubr.f32.gmra.mxu0 %v1651
        %v1790 = vpop.f32.mrf.mxu0
        %v1791 = vadd.f32 %v1648, %v1790
        %v1792 = vpop.f32.mrf.mxu0
        %v1793 = vadd.f32 %v1648, %v1792
        %1794 = vdwg.mxu0
        %v1799 = vcombine.low %v1568, %v1570
        %v1800 = vcombine.high %v1568, %v1570
        %v1801 = vcombine.low %v1639, %v1641
        %v1802 = vcombine.high %v1639, %v1641
        %v1804 = vunpack.c.l.s4 1966171168
        %v1805 = vunpack.c.0.s8 %v1804
        %v1806 = vlaneseq
        %v1807 = vshrl.u32 %v1806, 7
        %v1808 = vsub.s32 %v1805, %v1807
        %v1809 = vrot.slane %v1799, %v1808
        %v1811 = vunpack.c.l.s4 1966171168
        %v1812 = vunpack.c.0.s8 %v1811
        %v1813 = vlaneseq
        %v1814 = vshrl.u32 %v1813, 7
        %v1815 = vsub.s32 %v1812, %v1814
        %v1816 = vrot.slane %v1800, %v1815
        %v1818 = vunpack.c.l.s4 1966171168
        %v1819 = vunpack.c.0.s8 %v1818
        %v1820 = vlaneseq
        %v1821 = vshrl.u32 %v1820, 7
        %v1822 = vsub.s32 %v1819, %v1821
        %v1823 = vrot.slane %v1801, %v1822
        %v1825 = vunpack.c.l.s4 1966171168
        %v1826 = vunpack.c.0.s8 %v1825
        %v1827 = vlaneseq
        %v1828 = vshrl.u32 %v1827, 7
        %v1829 = vsub.s32 %v1826, %v1828
        %v1830 = vrot.slane %v1802, %v1829
        %v1831 = vcombine.low %v1809, %v1823
        %v1832 = vcombine.high %v1809, %v1823
        %v1833 = vcombine.low %v1816, %v1830
        %v1834 = vcombine.high %v1816, %v1830
        %v1836 = vunpack.c.l.s4 1966171168
        %v1837 = vunpack.c.0.s8 %v1836
        %v1838 = vlaneseq
        %v1839 = vshrl.u32 %v1838, 7
        %v1840 = vsub.s32 %v1837, %v1839
        %v1841 = vrot.slane %v1831, %v1840
        %v1843 = vunpack.c.l.s4 1966171168
        %v1844 = vunpack.c.0.s8 %v1843
        %v1845 = vlaneseq
        %v1846 = vshrl.u32 %v1845, 7
        %v1847 = vsub.s32 %v1844, %v1846
        %v1848 = vrot.slane %v1833, %v1847
        %v1850 = vunpack.c.l.s4 1966171168
        %v1851 = vunpack.c.0.s8 %v1850
        %v1852 = vlaneseq
        %v1853 = vshrl.u32 %v1852, 7
        %v1854 = vsub.s32 %v1851, %v1853
        %v1855 = vrot.slane %v1832, %v1854
        %v1857 = vunpack.c.l.s4 1966171168
        %v1858 = vunpack.c.0.s8 %v1857
        %v1859 = vlaneseq
        %v1860 = vshrl.u32 %v1859, 7
        %v1861 = vsub.s32 %v1858, %v1860
        %v1862 = vrot.slane %v1834, %v1861
        %v1863 = vcombine.high %v1841, %v1841
        %v1864 = vcombine.high %v1848, %v1848
        %v1865 = vcombine.high %v1855, %v1855
        %v1866 = vcombine.high %v1862, %v1862
        %v1867 = vlaneseq
        %v1868 = vshrl.u32 %v1867, 7
        %v1869 = vsub.s32 0, %v1868
        %v1870 = vrot.slane %v1841, %v1869
        %v1871 = vlaneseq
        %v1872 = vshrl.u32 %v1871, 7
        %v1873 = vsub.s32 1, %v1872
        %v1874 = vrot.slane %v1841, %v1873
        %v1875 = vlaneseq
        %v1876 = vshrl.u32 %v1875, 7
        %v1877 = vsub.s32 2, %v1876
        %v1878 = vrot.slane %v1841, %v1877
        %v1879 = vlaneseq
        %v1880 = vshrl.u32 %v1879, 7
        %v1881 = vsub.s32 3, %v1880
        %v1882 = vrot.slane %v1841, %v1881
        %v1883 = vlaneseq
        %v1884 = vshrl.u32 %v1883, 7
        %v1885 = vsub.s32 0, %v1884
        %v1886 = vrot.slane %v1855, %v1885
        %v1887 = vlaneseq
        %v1888 = vshrl.u32 %v1887, 7
        %v1889 = vsub.s32 1, %v1888
        %v1890 = vrot.slane %v1855, %v1889
        %v1891 = vlaneseq
        %v1892 = vshrl.u32 %v1891, 7
        %v1893 = vsub.s32 2, %v1892
        %v1894 = vrot.slane %v1855, %v1893
        %v1895 = vlaneseq
        %v1896 = vshrl.u32 %v1895, 7
        %v1897 = vsub.s32 3, %v1896
        %v1898 = vrot.slane %v1855, %v1897
        %v1899 = vlaneseq
        %v1900 = vshrl.u32 %v1899, 7
        %v1901 = vsub.s32 0, %v1900
        %v1902 = vrot.slane %v1863, %v1901
        %v1903 = vlaneseq
        %v1904 = vshrl.u32 %v1903, 7
        %v1905 = vsub.s32 1, %v1904
        %v1906 = vrot.slane %v1863, %v1905
        %v1907 = vlaneseq
        %v1908 = vshrl.u32 %v1907, 7
        %v1909 = vsub.s32 2, %v1908
        %v1910 = vrot.slane %v1863, %v1909
        %v1911 = vlaneseq
        %v1912 = vshrl.u32 %v1911, 7
        %v1913 = vsub.s32 3, %v1912
        %v1914 = vrot.slane %v1863, %v1913
        %v1915 = vlaneseq
        %v1916 = vshrl.u32 %v1915, 7
        %v1917 = vsub.s32 0, %v1916
        %v1918 = vrot.slane %v1865, %v1917
        %v1919 = vlaneseq
        %v1920 = vshrl.u32 %v1919, 7
        %v1921 = vsub.s32 1, %v1920
        %v1922 = vrot.slane %v1865, %v1921
        %v1923 = vlaneseq
        %v1924 = vshrl.u32 %v1923, 7
        %v1925 = vsub.s32 2, %v1924
        %v1926 = vrot.slane %v1865, %v1925
        %v1927 = vlaneseq
        %v1928 = vshrl.u32 %v1927, 7
        %v1929 = vsub.s32 3, %v1928
        %v1930 = vrot.slane %v1865, %v1929
        %v1931 = vlaneseq
        %v1932 = vshrl.u32 %v1931, 7
        %v1933 = vsub.s32 0, %v1932
        %v1934 = vrot.slane %v1848, %v1933
        %v1935 = vlaneseq
        %v1936 = vshrl.u32 %v1935, 7
        %v1937 = vsub.s32 1, %v1936
        %v1938 = vrot.slane %v1848, %v1937
        %v1939 = vlaneseq
        %v1940 = vshrl.u32 %v1939, 7
        %v1941 = vsub.s32 2, %v1940
        %v1942 = vrot.slane %v1848, %v1941
        %v1943 = vlaneseq
        %v1944 = vshrl.u32 %v1943, 7
        %v1945 = vsub.s32 3, %v1944
        %v1946 = vrot.slane %v1848, %v1945
        %v1947 = vlaneseq
        %v1948 = vshrl.u32 %v1947, 7
        %v1949 = vsub.s32 0, %v1948
        %v1950 = vrot.slane %v1862, %v1949
        %v1951 = vlaneseq
        %v1952 = vshrl.u32 %v1951, 7
        %v1953 = vsub.s32 1, %v1952
        %v1954 = vrot.slane %v1862, %v1953
        %v1955 = vlaneseq
        %v1956 = vshrl.u32 %v1955, 7
        %v1957 = vsub.s32 2, %v1956
        %v1958 = vrot.slane %v1862, %v1957
        %v1959 = vlaneseq
        %v1960 = vshrl.u32 %v1959, 7
        %v1961 = vsub.s32 3, %v1960
        %v1962 = vrot.slane %v1862, %v1961
        %v1963 = vlaneseq
        %v1964 = vshrl.u32 %v1963, 7
        %v1965 = vsub.s32 0, %v1964
        %v1966 = vrot.slane %v1864, %v1965
        %v1967 = vlaneseq
        %v1968 = vshrl.u32 %v1967, 7
        %v1969 = vsub.s32 1, %v1968
        %v1970 = vrot.slane %v1864, %v1969
        %v1971 = vlaneseq
        %v1972 = vshrl.u32 %v1971, 7
        %v1973 = vsub.s32 2, %v1972
        %v1974 = vrot.slane %v1864, %v1973
        %v1975 = vlaneseq
        %v1976 = vshrl.u32 %v1975, 7
        %v1977 = vsub.s32 3, %v1976
        %v1978 = vrot.slane %v1864, %v1977
        %v1979 = vlaneseq
        %v1980 = vshrl.u32 %v1979, 7
        %v1981 = vsub.s32 0, %v1980
        %v1982 = vrot.slane %v1866, %v1981
        %v1983 = vlaneseq
        %v1984 = vshrl.u32 %v1983, 7
        %v1985 = vsub.s32 1, %v1984
        %v1986 = vrot.slane %v1866, %v1985
        %v1987 = vlaneseq
        %v1988 = vshrl.u32 %v1987, 7
        %v1989 = vsub.s32 2, %v1988
        %v1990 = vrot.slane %v1866, %v1989
        %v1991 = vlaneseq
        %v1992 = vshrl.u32 %v1991, 7
        %v1993 = vsub.s32 3, %v1992
        %v1994 = vrot.slane %v1866, %v1993
        %v2031 = vcombine.low %v1720, %v1722
        %v2032 = vcombine.high %v1720, %v1722
        %v2033 = vcombine.low %v1791, %v1793
        %v2034 = vcombine.high %v1791, %v1793
        %v2036 = vunpack.c.l.s4 1966171168
        %v2037 = vunpack.c.0.s8 %v2036
        %v2038 = vlaneseq
        %v2039 = vshrl.u32 %v2038, 7
        %v2040 = vsub.s32 %v2037, %v2039
        %v2041 = vrot.slane %v2031, %v2040
        %v2043 = vunpack.c.l.s4 1966171168
        %v2044 = vunpack.c.0.s8 %v2043
        %v2045 = vlaneseq
        %v2046 = vshrl.u32 %v2045, 7
        %v2047 = vsub.s32 %v2044, %v2046
        %v2048 = vrot.slane %v2032, %v2047
        %v2050 = vunpack.c.l.s4 1966171168
        %v2051 = vunpack.c.0.s8 %v2050
        %v2052 = vlaneseq
        %v2053 = vshrl.u32 %v2052, 7
        %v2054 = vsub.s32 %v2051, %v2053
        %v2055 = vrot.slane %v2033, %v2054
        %v2057 = vunpack.c.l.s4 1966171168
        %v2058 = vunpack.c.0.s8 %v2057
        %v2059 = vlaneseq
        %v2060 = vshrl.u32 %v2059, 7
        %v2061 = vsub.s32 %v2058, %v2060
        %v2062 = vrot.slane %v2034, %v2061
        %v2063 = vcombine.low %v2041, %v2055
        %v2064 = vcombine.high %v2041, %v2055
        %v2065 = vcombine.low %v2048, %v2062
        %v2066 = vcombine.high %v2048, %v2062
        %v2068 = vunpack.c.l.s4 1966171168
        %v2069 = vunpack.c.0.s8 %v2068
        %v2070 = vlaneseq
        %v2071 = vshrl.u32 %v2070, 7
        %v2072 = vsub.s32 %v2069, %v2071
        %v2073 = vrot.slane %v2063, %v2072
        %v2075 = vunpack.c.l.s4 1966171168
        %v2076 = vunpack.c.0.s8 %v2075
        %v2077 = vlaneseq
        %v2078 = vshrl.u32 %v2077, 7
        %v2079 = vsub.s32 %v2076, %v2078
        %v2080 = vrot.slane %v2065, %v2079
        %v2082 = vunpack.c.l.s4 1966171168
        %v2083 = vunpack.c.0.s8 %v2082
        %v2084 = vlaneseq
        %v2085 = vshrl.u32 %v2084, 7
        %v2086 = vsub.s32 %v2083, %v2085
        %v2087 = vrot.slane %v2064, %v2086
        %v2089 = vunpack.c.l.s4 1966171168
        %v2090 = vunpack.c.0.s8 %v2089
        %v2091 = vlaneseq
        %v2092 = vshrl.u32 %v2091, 7
        %v2093 = vsub.s32 %v2090, %v2092
        %v2094 = vrot.slane %v2066, %v2093
        %v2095 = vcombine.high %v2073, %v2073
        %v2096 = vcombine.high %v2080, %v2080
        %v2097 = vcombine.high %v2087, %v2087
        %v2098 = vcombine.high %v2094, %v2094
        %v2099 = vlaneseq
        %v2100 = vshrl.u32 %v2099, 7
        %v2101 = vsub.s32 0, %v2100
        %v2102 = vrot.slane %v2073, %v2101
        %v2103 = vlaneseq
        %v2104 = vshrl.u32 %v2103, 7
        %v2105 = vsub.s32 1, %v2104
        %v2106 = vrot.slane %v2073, %v2105
        %v2107 = vlaneseq
        %v2108 = vshrl.u32 %v2107, 7
        %v2109 = vsub.s32 2, %v2108
        %v2110 = vrot.slane %v2073, %v2109
        %v2111 = vlaneseq
        %v2112 = vshrl.u32 %v2111, 7
        %v2113 = vsub.s32 3, %v2112
        %v2114 = vrot.slane %v2073, %v2113
        %v2115 = vlaneseq
        %v2116 = vshrl.u32 %v2115, 7
        %v2117 = vsub.s32 0, %v2116
        %v2118 = vrot.slane %v2087, %v2117
        %v2119 = vlaneseq
        %v2120 = vshrl.u32 %v2119, 7
        %v2121 = vsub.s32 1, %v2120
        %v2122 = vrot.slane %v2087, %v2121
        %v2123 = vlaneseq
        %v2124 = vshrl.u32 %v2123, 7
        %v2125 = vsub.s32 2, %v2124
        %v2126 = vrot.slane %v2087, %v2125
        %v2127 = vlaneseq
        %v2128 = vshrl.u32 %v2127, 7
        %v2129 = vsub.s32 3, %v2128
        %v2130 = vrot.slane %v2087, %v2129
        %v2131 = vlaneseq
        %v2132 = vshrl.u32 %v2131, 7
        %v2133 = vsub.s32 0, %v2132
        %v2134 = vrot.slane %v2095, %v2133
        %v2135 = vlaneseq
        %v2136 = vshrl.u32 %v2135, 7
        %v2137 = vsub.s32 1, %v2136
        %v2138 = vrot.slane %v2095, %v2137
        %v2139 = vlaneseq
        %v2140 = vshrl.u32 %v2139, 7
        %v2141 = vsub.s32 2, %v2140
        %v2142 = vrot.slane %v2095, %v2141
        %v2143 = vlaneseq
        %v2144 = vshrl.u32 %v2143, 7
        %v2145 = vsub.s32 3, %v2144
        %v2146 = vrot.slane %v2095, %v2145
        %v2147 = vlaneseq
        %v2148 = vshrl.u32 %v2147, 7
        %v2149 = vsub.s32 0, %v2148
        %v2150 = vrot.slane %v2097, %v2149
        %v2151 = vlaneseq
        %v2152 = vshrl.u32 %v2151, 7
        %v2153 = vsub.s32 1, %v2152
        %v2154 = vrot.slane %v2097, %v2153
        %v2155 = vlaneseq
        %v2156 = vshrl.u32 %v2155, 7
        %v2157 = vsub.s32 2, %v2156
        %v2158 = vrot.slane %v2097, %v2157
        %v2159 = vlaneseq
        %v2160 = vshrl.u32 %v2159, 7
        %v2161 = vsub.s32 3, %v2160
        %v2162 = vrot.slane %v2097, %v2161
        %v2163 = vlaneseq
        %v2164 = vshrl.u32 %v2163, 7
        %v2165 = vsub.s32 0, %v2164
        %v2166 = vrot.slane %v2080, %v2165
        %v2167 = vlaneseq
        %v2168 = vshrl.u32 %v2167, 7
        %v2169 = vsub.s32 1, %v2168
        %v2170 = vrot.slane %v2080, %v2169
        %v2171 = vlaneseq
        %v2172 = vshrl.u32 %v2171, 7
        %v2173 = vsub.s32 2, %v2172
        %v2174 = vrot.slane %v2080, %v2173
        %v2175 = vlaneseq
        %v2176 = vshrl.u32 %v2175, 7
        %v2177 = vsub.s32 3, %v2176
        %v2178 = vrot.slane %v2080, %v2177
        %v2179 = vlaneseq
        %v2180 = vshrl.u32 %v2179, 7
        %v2181 = vsub.s32 0, %v2180
        %v2182 = vrot.slane %v2094, %v2181
        %v2183 = vlaneseq
        %v2184 = vshrl.u32 %v2183, 7
        %v2185 = vsub.s32 1, %v2184
        %v2186 = vrot.slane %v2094, %v2185
        %v2187 = vlaneseq
        %v2188 = vshrl.u32 %v2187, 7
        %v2189 = vsub.s32 2, %v2188
        %v2190 = vrot.slane %v2094, %v2189
        %v2191 = vlaneseq
        %v2192 = vshrl.u32 %v2191, 7
        %v2193 = vsub.s32 3, %v2192
        %v2194 = vrot.slane %v2094, %v2193
        %v2195 = vlaneseq
        %v2196 = vshrl.u32 %v2195, 7
        %v2197 = vsub.s32 0, %v2196
        %v2198 = vrot.slane %v2096, %v2197
        %v2199 = vlaneseq
        %v2200 = vshrl.u32 %v2199, 7
        %v2201 = vsub.s32 1, %v2200
        %v2202 = vrot.slane %v2096, %v2201
        %v2203 = vlaneseq
        %v2204 = vshrl.u32 %v2203, 7
        %v2205 = vsub.s32 2, %v2204
        %v2206 = vrot.slane %v2096, %v2205
        %v2207 = vlaneseq
        %v2208 = vshrl.u32 %v2207, 7
        %v2209 = vsub.s32 3, %v2208
        %v2210 = vrot.slane %v2096, %v2209
        %v2211 = vlaneseq
        %v2212 = vshrl.u32 %v2211, 7
        %v2213 = vsub.s32 0, %v2212
        %v2214 = vrot.slane %v2098, %v2213
        %v2215 = vlaneseq
        %v2216 = vshrl.u32 %v2215, 7
        %v2217 = vsub.s32 1, %v2216
        %v2218 = vrot.slane %v2098, %v2217
        %v2219 = vlaneseq
        %v2220 = vshrl.u32 %v2219, 7
        %v2221 = vsub.s32 2, %v2220
        %v2222 = vrot.slane %v2098, %v2221
        %v2223 = vlaneseq
        %v2224 = vshrl.u32 %v2223, 7
        %v2225 = vsub.s32 3, %v2224
        %v2226 = vrot.slane %v2098, %v2225
        %v2259 = vmul.f32 %v2102, %v1042
        %v2260 = vmul.f32 %v2106, %v1043
        %v2261 = vmul.f32 %v2110, %v1044
        %v2262 = vmul.f32 %v2114, %v1045
        %v2263 = vmul.f32 %v2102, %v1046
        %v2264 = vmul.f32 %v2106, %v1047
        %v2265 = vmul.f32 %v2110, %v1048
        %v2266 = vmul.f32 %v2114, %v1049
        %v2267 = vmul.f32 %v2118, %v1050
        %v2268 = vmul.f32 %v2122, %v1051
        %v2269 = vmul.f32 %v2126, %v1052
        %v2270 = vmul.f32 %v2130, %v1053
        %v2271 = vmul.f32 %v2118, %v1054
        %v2272 = vmul.f32 %v2122, %v1055
        %v2273 = vmul.f32 %v2126, %v1056
        %v2274 = vmul.f32 %v2130, %v1057
        %v2275 = vmul.f32 %v2134, %v1058
        %v2276 = vmul.f32 %v2138, %v1059
        %v2277 = vmul.f32 %v2142, %v1060
        %v2278 = vmul.f32 %v2146, %v1061
        %v2279 = vmul.f32 %v2134, %v1062
        %v2280 = vmul.f32 %v2138, %v1063
        %v2281 = vmul.f32 %v2142, %v1064
        %v2282 = vmul.f32 %v2146, %v1065
        %v2283 = vmul.f32 %v2150, %v1066
        %v2284 = vmul.f32 %v2154, %v1067
        %v2285 = vmul.f32 %v2158, %v1068
        %v2286 = vmul.f32 %v2162, %v1069
        %v2287 = vmul.f32 %v2150, %v1070
        %v2288 = vmul.f32 %v2154, %v1071
        %v2289 = vmul.f32 %v2158, %v1072
        %v2290 = vmul.f32 %v2162, %v1073
        %v2291 = vmul.f32 %v2166, %v1074
        %v2292 = vmul.f32 %v2170, %v1075
        %v2293 = vmul.f32 %v2174, %v1076
        %v2294 = vmul.f32 %v2178, %v1077
        %v2295 = vmul.f32 %v2166, %v1078
        %v2296 = vmul.f32 %v2170, %v1079
        %v2297 = vmul.f32 %v2174, %v1080
        %v2298 = vmul.f32 %v2178, %v1081
        %v2299 = vmul.f32 %v2182, %v1082
        %v2300 = vmul.f32 %v2186, %v1083
        %v2301 = vmul.f32 %v2190, %v1084
        %v2302 = vmul.f32 %v2194, %v1085
        %v2303 = vmul.f32 %v2182, %v1086
        %v2304 = vmul.f32 %v2186, %v1087
        %v2305 = vmul.f32 %v2190, %v1088
        %v2306 = vmul.f32 %v2194, %v1089
        %v2307 = vmul.f32 %v2198, %v1090
        %v2308 = vmul.f32 %v2202, %v1091
        %v2309 = vmul.f32 %v2206, %v1092
        %v2310 = vmul.f32 %v2210, %v1093
        %v2311 = vmul.f32 %v2198, %v1094
        %v2312 = vmul.f32 %v2202, %v1095
        %v2313 = vmul.f32 %v2206, %v1096
        %v2314 = vmul.f32 %v2210, %v1097
        %v2315 = vmul.f32 %v2214, %v1098
        %v2316 = vmul.f32 %v2218, %v1099
        %v2317 = vmul.f32 %v2222, %v1100
        %v2318 = vmul.f32 %v2226, %v1101
        %v2319 = vmul.f32 %v2214, %v1102
        %v2320 = vmul.f32 %v2218, %v1103
        %v2321 = vmul.f32 %v2222, %v1104
        %v2322 = vmul.f32 %v2226, %v1105
        %2323 = vmatprep.subr.mxu0 0.0
        %2324 = vmatpush1.msra.mxu0 %v977
        %2325 = vmatprep.subr.mxu0 0.0
        %2326 = vmatpush1.msra.mxu0 %v976
        %2327 = vmatprep.subr.mxu0 0.0
        %2328 = vmatpush1.msra.mxu0 %v975
        %2329 = vmatprep.subr.mxu0 0.0
        %2330 = vmatpush1.msra.mxu0 %v974
        %2331 = vmatprep.subr.mxu0 0.0
        %2332 = vmatpush1.msra.mxu0 %v973
        %2333 = vmatprep.subr.mxu0 0.0
        %2334 = vmatpush1.msra.mxu0 %v972
        %2335 = vmatprep.subr.mxu0 0.0
        %2336 = vmatpush1.msra.mxu0 %v971
        %2337 = vmatprep.subr.mxu0 0.0
        %2338 = vmatpush1.msra.mxu0 %v970
        %2339 = vmatprep.subr.mxu0 0.0
        %2340 = vmatpush1.msra.mxu0 %v969
        %2341 = vmatprep.subr.mxu0 0.0
        %2342 = vmatpush1.msra.mxu0 %v968
        %2343 = vmatprep.subr.mxu0 0.0
        %2344 = vmatpush1.msra.mxu0 %v967
        %2345 = vmatprep.subr.mxu0 0.0
        %2346 = vmatpush1.msra.mxu0 %v966
        %2347 = vmatprep.subr.mxu0 0.0
        %2348 = vmatpush1.msra.mxu0 %v965
        %2349 = vmatprep.subr.mxu0 0.0
        %2350 = vmatpush1.msra.mxu0 %v964
        %2351 = vmatprep.subr.mxu0 0.0
        %2352 = vmatpush1.msra.mxu0 %v963
        %2353 = vmatprep.subr.mxu0 0.0
        %2354 = vmatpush1.msra.mxu0 %v962
        %2355 = vmatprep.subr.mxu0 0.0
        %2356 = vmatpush2.msra.mxu0 %v993
        %2357 = vmatprep.subr.mxu0 0.0
        %2358 = vmatpush2.msra.mxu0 %v992
        %2359 = vmatprep.subr.mxu0 0.0
        %2360 = vmatpush2.msra.mxu0 %v991
        %2361 = vmatprep.subr.mxu0 0.0
        %2362 = vmatpush2.msra.mxu0 %v990
        %2363 = vmatprep.subr.mxu0 0.0
        %2364 = vmatpush2.msra.mxu0 %v989
        %2365 = vmatprep.subr.mxu0 0.0
        %2366 = vmatpush2.msra.mxu0 %v988
        %2367 = vmatprep.subr.mxu0 0.0
        %2368 = vmatpush2.msra.mxu0 %v987
        %2369 = vmatprep.subr.mxu0 0.0
        %2370 = vmatpush2.msra.mxu0 %v986
        %2371 = vmatprep.subr.mxu0 0.0
        %2372 = vmatpush2.msra.mxu0 %v985
        %2373 = vmatprep.subr.mxu0 0.0
        %2374 = vmatpush2.msra.mxu0 %v984
        %2375 = vmatprep.subr.mxu0 0.0
        %2376 = vmatpush2.msra.mxu0 %v983
        %2377 = vmatprep.subr.mxu0 0.0
        %2378 = vmatpush2.msra.mxu0 %v982
        %2379 = vmatprep.subr.mxu0 0.0
        %2380 = vmatpush2.msra.mxu0 %v981
        %2381 = vmatprep.subr.mxu0 0.0
        %2382 = vmatpush2.msra.mxu0 %v980
        %2383 = vmatprep.subr.mxu0 0.0
        %2384 = vmatpush2.msra.mxu0 %v979
        %2385 = vmatprep.subr.mxu0 0.0
        %2386 = vmatpush2.msra.mxu0 %v978
        %2387 = vmatprep.mubr.f32.mxu0 %v2260
        %2388 = vmatmul.mubr.f32.gmra.mxu0 %v2259
        %v2389 = vpop.f32.mrf.mxu0
        %v2390 = vadd.f32 0.0, %v2389
        %v2391 = vpop.f32.mrf.mxu0
        %2392 = vmatprep.mubr.f32.mxu0 %v2264
        %2393 = vmatmul.mubr.f32.gmra.mxu0 %v2263
        %v2394 = vpop.f32.mrf.mxu0
        %v2395 = vadd.f32 0.0, %v2394
        %v2396 = vpop.f32.mrf.mxu0
        %2397 = vmatprep.mubr.f32.mxu0 %v2268
        %2398 = vmatmul.mubr.f32.gmra.mxu0 %v2267
        %v2399 = vpop.f32.mrf.mxu0
        %v2400 = vadd.f32 0.0, %v2399
        %v2401 = vpop.f32.mrf.mxu0
        %2402 = vmatprep.mubr.f32.mxu0 %v2272
        %2403 = vmatmul.mubr.f32.gmra.mxu0 %v2271
        %v2404 = vpop.f32.mrf.mxu0
        %v2405 = vadd.f32 0.0, %v2404
        %v2406 = vpop.f32.mrf.mxu0
        %2407 = vmatprep.mubr.f32.mxu0 %v2276
        %2408 = vmatmul.mubr.f32.gmra.mxu0 %v2275
        %v2409 = vpop.f32.mrf.mxu0
        %v2410 = vadd.f32 0.0, %v2409
        %v2411 = vpop.f32.mrf.mxu0
        %2412 = vmatprep.mubr.f32.mxu0 %v2280
        %2413 = vmatmul.mubr.f32.gmra.mxu0 %v2279
        %v2414 = vpop.f32.mrf.mxu0
        %v2415 = vadd.f32 0.0, %v2414
        %v2416 = vpop.f32.mrf.mxu0
        %2417 = vmatprep.mubr.f32.mxu0 %v2284
        %2418 = vmatmul.mubr.f32.gmra.mxu0 %v2283
        %v2419 = vpop.f32.mrf.mxu0
        %v2420 = vadd.f32 0.0, %v2419
        %v2421 = vpop.f32.mrf.mxu0
        %2422 = vmatprep.mubr.f32.mxu0 %v2288
        %2423 = vmatmul.mubr.f32.gmra.mxu0 %v2287
        %v2424 = vpop.f32.mrf.mxu0
        %v2425 = vadd.f32 0.0, %v2424
        %v2426 = vpop.f32.mrf.mxu0
        %2427 = vmatprep.mubr.f32.mxu0 %v2292
        %2428 = vmatmul.mubr.f32.gmra.mxu0 %v2291
        %v2429 = vpop.f32.mrf.mxu0
        %v2430 = vadd.f32 0.0, %v2429
        %v2431 = vpop.f32.mrf.mxu0
        %2432 = vmatprep.mubr.f32.mxu0 %v2296
        %2433 = vmatmul.mubr.f32.gmra.mxu0 %v2295
        %v2434 = vpop.f32.mrf.mxu0
        %v2435 = vadd.f32 0.0, %v2434
        %v2436 = vpop.f32.mrf.mxu0
        %2437 = vmatprep.mubr.f32.mxu0 %v2300
        %2438 = vmatmul.mubr.f32.gmra.mxu0 %v2299
        %v2439 = vpop.f32.mrf.mxu0
        %v2440 = vadd.f32 0.0, %v2439
        %v2441 = vpop.f32.mrf.mxu0
        %2442 = vmatprep.mubr.f32.mxu0 %v2304
        %2443 = vmatmul.mubr.f32.gmra.mxu0 %v2303
        %v2444 = vpop.f32.mrf.mxu0
        %v2445 = vadd.f32 0.0, %v2444
        %v2446 = vpop.f32.mrf.mxu0
        %2447 = vmatprep.mubr.f32.mxu0 %v2308
        %2448 = vmatmul.mubr.f32.gmra.mxu0 %v2307
        %v2449 = vpop.f32.mrf.mxu0
        %v2450 = vadd.f32 0.0, %v2449
        %v2451 = vpop.f32.mrf.mxu0
        %2452 = vmatprep.mubr.f32.mxu0 %v2312
        %2453 = vmatmul.mubr.f32.gmra.mxu0 %v2311
        %v2454 = vpop.f32.mrf.mxu0
        %v2455 = vadd.f32 0.0, %v2454
        %v2456 = vpop.f32.mrf.mxu0
        %2457 = vmatprep.mubr.f32.mxu0 %v2316
        %2458 = vmatmul.mubr.f32.gmra.mxu0 %v2315
        %v2459 = vpop.f32.mrf.mxu0
        %v2460 = vadd.f32 0.0, %v2459
        %v2461 = vpop.f32.mrf.mxu0
        %2462 = vmatprep.mubr.f32.mxu0 %v2320
        %2463 = vmatmul.mubr.f32.gmra.mxu0 %v2319
        %v2464 = vpop.f32.mrf.mxu0
        %v2465 = vadd.f32 0.0, %v2464
        %v2466 = vpop.f32.mrf.mxu0
        %2467 = vdwg.mxu0
        %2468 = vmatprep.subr.mxu0 0.0
        %2469 = vmatpush1.msra.mxu0 %v1009
        %2470 = vmatprep.subr.mxu0 0.0
        %2471 = vmatpush1.msra.mxu0 %v1008
        %2472 = vmatprep.subr.mxu0 0.0
        %2473 = vmatpush1.msra.mxu0 %v1007
        %2474 = vmatprep.subr.mxu0 0.0
        %2475 = vmatpush1.msra.mxu0 %v1006
        %2476 = vmatprep.subr.mxu0 0.0
        %2477 = vmatpush1.msra.mxu0 %v1005
        %2478 = vmatprep.subr.mxu0 0.0
        %2479 = vmatpush1.msra.mxu0 %v1004
        %2480 = vmatprep.subr.mxu0 0.0
        %2481 = vmatpush1.msra.mxu0 %v1003
        %2482 = vmatprep.subr.mxu0 0.0
        %2483 = vmatpush1.msra.mxu0 %v1002
        %2484 = vmatprep.subr.mxu0 0.0
        %2485 = vmatpush1.msra.mxu0 %v1001
        %2486 = vmatprep.subr.mxu0 0.0
        %2487 = vmatpush1.msra.mxu0 %v1000
        %2488 = vmatprep.subr.mxu0 0.0
        %2489 = vmatpush1.msra.mxu0 %v999
        %2490 = vmatprep.subr.mxu0 0.0
        %2491 = vmatpush1.msra.mxu0 %v998
        %2492 = vmatprep.subr.mxu0 0.0
        %2493 = vmatpush1.msra.mxu0 %v997
        %2494 = vmatprep.subr.mxu0 0.0
        %2495 = vmatpush1.msra.mxu0 %v996
        %2496 = vmatprep.subr.mxu0 0.0
        %2497 = vmatpush1.msra.mxu0 %v995
        %2498 = vmatprep.subr.mxu0 0.0
        %2499 = vmatpush1.msra.mxu0 %v994
        %2500 = vmatprep.subr.mxu0 0.0
        %2501 = vmatpush2.msra.mxu0 %v1025
        %2502 = vmatprep.subr.mxu0 0.0
        %2503 = vmatpush2.msra.mxu0 %v1024
        %2504 = vmatprep.subr.mxu0 0.0
        %2505 = vmatpush2.msra.mxu0 %v1023
        %2506 = vmatprep.subr.mxu0 0.0
        %2507 = vmatpush2.msra.mxu0 %v1022
        %2508 = vmatprep.subr.mxu0 0.0
        %2509 = vmatpush2.msra.mxu0 %v1021
        %2510 = vmatprep.subr.mxu0 0.0
        %2511 = vmatpush2.msra.mxu0 %v1020
        %2512 = vmatprep.subr.mxu0 0.0
        %2513 = vmatpush2.msra.mxu0 %v1019
        %2514 = vmatprep.subr.mxu0 0.0
        %2515 = vmatpush2.msra.mxu0 %v1018
        %2516 = vmatprep.subr.mxu0 0.0
        %2517 = vmatpush2.msra.mxu0 %v1017
        %2518 = vmatprep.subr.mxu0 0.0
        %2519 = vmatpush2.msra.mxu0 %v1016
        %2520 = vmatprep.subr.mxu0 0.0
        %2521 = vmatpush2.msra.mxu0 %v1015
        %2522 = vmatprep.subr.mxu0 0.0
        %2523 = vmatpush2.msra.mxu0 %v1014
        %2524 = vmatprep.subr.mxu0 0.0
        %2525 = vmatpush2.msra.mxu0 %v1013
        %2526 = vmatprep.subr.mxu0 0.0
        %2527 = vmatpush2.msra.mxu0 %v1012
        %2528 = vmatprep.subr.mxu0 0.0
        %2529 = vmatpush2.msra.mxu0 %v1011
        %2530 = vmatprep.subr.mxu0 0.0
        %2531 = vmatpush2.msra.mxu0 %v1010
        %2532 = vmatprep.mubr.f32.mxu0 %v2262
        %2533 = vmatmul.mubr.f32.gmra.mxu0 %v2261
        %v2534 = vpop.f32.mrf.mxu0
        %v2535 = vadd.f32 %v2390, %v2534
        %v2536 = vpop.f32.mrf.mxu0
        %2537 = vmatprep.mubr.f32.mxu0 %v2266
        %2538 = vmatmul.mubr.f32.gmra.mxu0 %v2265
        %v2539 = vpop.f32.mrf.mxu0
        %v2540 = vadd.f32 %v2395, %v2539
        %v2541 = vpop.f32.mrf.mxu0
        %2542 = vmatprep.mubr.f32.mxu0 %v2270
        %2543 = vmatmul.mubr.f32.gmra.mxu0 %v2269
        %v2544 = vpop.f32.mrf.mxu0
        %v2545 = vadd.f32 %v2400, %v2544
        %v2546 = vpop.f32.mrf.mxu0
        %2547 = vmatprep.mubr.f32.mxu0 %v2274
        %2548 = vmatmul.mubr.f32.gmra.mxu0 %v2273
        %v2549 = vpop.f32.mrf.mxu0
        %v2550 = vadd.f32 %v2405, %v2549
        %v2551 = vpop.f32.mrf.mxu0
        %2552 = vmatprep.mubr.f32.mxu0 %v2278
        %2553 = vmatmul.mubr.f32.gmra.mxu0 %v2277
        %v2554 = vpop.f32.mrf.mxu0
        %v2555 = vadd.f32 %v2410, %v2554
        %v2556 = vpop.f32.mrf.mxu0
        %2557 = vmatprep.mubr.f32.mxu0 %v2282
        %2558 = vmatmul.mubr.f32.gmra.mxu0 %v2281
        %v2559 = vpop.f32.mrf.mxu0
        %v2560 = vadd.f32 %v2415, %v2559
        %v2561 = vpop.f32.mrf.mxu0
        %2562 = vmatprep.mubr.f32.mxu0 %v2286
        %2563 = vmatmul.mubr.f32.gmra.mxu0 %v2285
        %v2564 = vpop.f32.mrf.mxu0
        %v2565 = vadd.f32 %v2420, %v2564
        %v2566 = vpop.f32.mrf.mxu0
        %2567 = vmatprep.mubr.f32.mxu0 %v2290
        %2568 = vmatmul.mubr.f32.gmra.mxu0 %v2289
        %v2569 = vpop.f32.mrf.mxu0
        %v2570 = vadd.f32 %v2425, %v2569
        %v2571 = vpop.f32.mrf.mxu0
        %2572 = vmatprep.mubr.f32.mxu0 %v2294
        %2573 = vmatmul.mubr.f32.gmra.mxu0 %v2293
        %v2574 = vpop.f32.mrf.mxu0
        %v2575 = vadd.f32 %v2430, %v2574
        %v2576 = vpop.f32.mrf.mxu0
        %2577 = vmatprep.mubr.f32.mxu0 %v2298
        %2578 = vmatmul.mubr.f32.gmra.mxu0 %v2297
        %v2579 = vpop.f32.mrf.mxu0
        %v2580 = vadd.f32 %v2435, %v2579
        %v2581 = vpop.f32.mrf.mxu0
        %2582 = vmatprep.mubr.f32.mxu0 %v2302
        %2583 = vmatmul.mubr.f32.gmra.mxu0 %v2301
        %v2584 = vpop.f32.mrf.mxu0
        %v2585 = vadd.f32 %v2440, %v2584
        %v2586 = vpop.f32.mrf.mxu0
        %2587 = vmatprep.mubr.f32.mxu0 %v2306
        %2588 = vmatmul.mubr.f32.gmra.mxu0 %v2305
        %v2589 = vpop.f32.mrf.mxu0
        %v2590 = vadd.f32 %v2445, %v2589
        %v2591 = vpop.f32.mrf.mxu0
        %2592 = vmatprep.mubr.f32.mxu0 %v2310
        %2593 = vmatmul.mubr.f32.gmra.mxu0 %v2309
        %v2594 = vpop.f32.mrf.mxu0
        %v2595 = vadd.f32 %v2450, %v2594
        %v2596 = vpop.f32.mrf.mxu0
        %2597 = vmatprep.mubr.f32.mxu0 %v2314
        %2598 = vmatmul.mubr.f32.gmra.mxu0 %v2313
        %v2599 = vpop.f32.mrf.mxu0
        %v2600 = vadd.f32 %v2455, %v2599
        %v2601 = vpop.f32.mrf.mxu0
        %2602 = vmatprep.mubr.f32.mxu0 %v2318
        %2603 = vmatmul.mubr.f32.gmra.mxu0 %v2317
        %v2604 = vpop.f32.mrf.mxu0
        %v2605 = vadd.f32 %v2460, %v2604
        %v2606 = vpop.f32.mrf.mxu0
        %2607 = vmatprep.mubr.f32.mxu0 %v2322
        %2608 = vmatmul.mubr.f32.gmra.mxu0 %v2321
        %v2609 = vpop.f32.mrf.mxu0
        %v2610 = vadd.f32 %v2465, %v2609
        %v2611 = vpop.f32.mrf.mxu0
        %2612 = vdwg.mxu0
        %vm2613 = vcmask 261120
        %v2615 = vsel %vm2613, %v2535, 0
        %v2618 = vsel %vm2613, %v2540, 0
        %v2621 = vsel %vm2613, %v2545, 0
        %v2624 = vsel %vm2613, %v2550, 0
        %v2627 = vsel %vm2613, %v2555, 0
        %v2630 = vsel %vm2613, %v2560, 0
        %v2633 = vsel %vm2613, %v2565, 0
        %v2636 = vsel %vm2613, %v2570, 0
        %v2639 = vsel %vm2613, %v2575, 0
        %v2642 = vsel %vm2613, %v2580, 0
        %v2645 = vsel %vm2613, %v2585, 0
        %v2648 = vsel %vm2613, %v2590, 0
        %v2651 = vsel %vm2613, %v2595, 0
        %v2654 = vsel %vm2613, %v2600, 0
        %v2657 = vsel %vm2613, %v2605, 0
        %v2660 = vsel %vm2613, %v2610, 0
        %2662 = vmatprep.subr.mxu0 0.0
        %2663 = vmatpush1.msra.mxu0 0.0
        %2664 = vmatprep.subr.mxu0 0.0
        %2665 = vmatpush1.msra.mxu0 0.0
        %2666 = vmatprep.subr.mxu0 0.0
        %2667 = vmatpush1.msra.mxu0 0.0
        %2668 = vmatprep.subr.mxu0 0.0
        %2669 = vmatpush1.msra.mxu0 0.0
        %2670 = vmatprep.subr.mxu0 0.0
        %2671 = vmatpush1.msra.mxu0 0.0
        %2672 = vmatprep.subr.mxu0 0.0
        %2673 = vmatpush1.msra.mxu0 0.0
        %2674 = vmatprep.subr.mxu0 0.0
        %2675 = vmatpush1.msra.mxu0 0.0
        %2676 = vmatprep.subr.mxu0 0.0
        %2677 = vmatpush1.msra.mxu0 0.0
        %2678 = vmatprep.subr.mxu0 0.0
        %2679 = vmatpush1.msra.mxu0 0.0
        %2680 = vmatprep.subr.mxu0 0.0
        %2681 = vmatpush1.msra.mxu0 0.0
        %2682 = vmatprep.subr.mxu0 0.0
        %2683 = vmatpush1.msra.mxu0 0.0
        %2684 = vmatprep.subr.mxu0 0.0
        %2685 = vmatpush1.msra.mxu0 0.0
        %2686 = vmatprep.subr.mxu0 %v1039
        %2687 = vmatpush1.msra.mxu0 %v1038
        %2688 = vmatprep.subr.mxu0 %v1035
        %2689 = vmatpush1.msra.mxu0 %v1034
        %2690 = vmatprep.subr.mxu0 %v1031
        %2691 = vmatpush1.msra.mxu0 %v1030
        %2692 = vmatprep.subr.mxu0 %v1027
        %2693 = vmatpush1.msra.mxu0 %v1026
        %2694 = vmatprep.subr.mxu0 0.0
        %2695 = vmatpush2.msra.mxu0 0.0
        %2696 = vmatprep.subr.mxu0 0.0
        %2697 = vmatpush2.msra.mxu0 0.0
        %2698 = vmatprep.subr.mxu0 0.0
        %2699 = vmatpush2.msra.mxu0 0.0
        %2700 = vmatprep.subr.mxu0 0.0
        %2701 = vmatpush2.msra.mxu0 0.0
        %2702 = vmatprep.subr.mxu0 0.0
        %2703 = vmatpush2.msra.mxu0 0.0
        %2704 = vmatprep.subr.mxu0 0.0
        %2705 = vmatpush2.msra.mxu0 0.0
        %2706 = vmatprep.subr.mxu0 0.0
        %2707 = vmatpush2.msra.mxu0 0.0
        %2708 = vmatprep.subr.mxu0 0.0
        %2709 = vmatpush2.msra.mxu0 0.0
        %2710 = vmatprep.subr.mxu0 0.0
        %2711 = vmatpush2.msra.mxu0 0.0
        %2712 = vmatprep.subr.mxu0 0.0
        %2713 = vmatpush2.msra.mxu0 0.0
        %2714 = vmatprep.subr.mxu0 0.0
        %2715 = vmatpush2.msra.mxu0 0.0
        %2716 = vmatprep.subr.mxu0 0.0
        %2717 = vmatpush2.msra.mxu0 0.0
        %2718 = vmatprep.subr.mxu0 0.0
        %2719 = vmatpush2.msra.mxu0 0.0
        %2720 = vmatprep.subr.mxu0 0.0
        %2721 = vmatpush2.msra.mxu0 0.0
        %2722 = vmatprep.subr.mxu0 0.0
        %2723 = vmatpush2.msra.mxu0 0.0
        %2724 = vmatprep.subr.mxu0 0.0
        %2725 = vmatpush2.msra.mxu0 0.0
        %2726 = vmatprep.mubr.f32.mxu0 0.0
        %2727 = vmatmul.mubr.f32.gmra.mxu0 %v2615
        %v2728 = vpop.f32.mrf.mxu0
        %v2729 = vadd.f32 0.0, %v2728
        %v2730 = vpop.f32.mrf.mxu0
        %v2731 = vadd.f32 0.0, %v2730
        %2732 = vmatprep.mubr.f32.mxu0 0.0
        %2733 = vmatmul.mubr.f32.gmra.mxu0 %v2618
        %v2734 = vpop.f32.mrf.mxu0
        %v2735 = vadd.f32 0.0, %v2734
        %v2736 = vpop.f32.mrf.mxu0
        %v2737 = vadd.f32 0.0, %v2736
        %2738 = vmatprep.mubr.f32.mxu0 0.0
        %2739 = vmatmul.mubr.f32.gmra.mxu0 %v2621
        %v2740 = vpop.f32.mrf.mxu0
        %v2741 = vadd.f32 0.0, %v2740
        %v2742 = vpop.f32.mrf.mxu0
        %v2743 = vadd.f32 0.0, %v2742
        %2744 = vmatprep.mubr.f32.mxu0 0.0
        %2745 = vmatmul.mubr.f32.gmra.mxu0 %v2624
        %v2746 = vpop.f32.mrf.mxu0
        %v2747 = vadd.f32 0.0, %v2746
        %v2748 = vpop.f32.mrf.mxu0
        %v2749 = vadd.f32 0.0, %v2748
        %2750 = vmatprep.mubr.f32.mxu0 0.0
        %2751 = vmatmul.mubr.f32.gmra.mxu0 %v2627
        %v2752 = vpop.f32.mrf.mxu0
        %v2753 = vadd.f32 0.0, %v2752
        %v2754 = vpop.f32.mrf.mxu0
        %v2755 = vadd.f32 0.0, %v2754
        %2756 = vmatprep.mubr.f32.mxu0 0.0
        %2757 = vmatmul.mubr.f32.gmra.mxu0 %v2630
        %v2758 = vpop.f32.mrf.mxu0
        %v2759 = vadd.f32 0.0, %v2758
        %v2760 = vpop.f32.mrf.mxu0
        %v2761 = vadd.f32 0.0, %v2760
        %2762 = vmatprep.mubr.f32.mxu0 0.0
        %2763 = vmatmul.mubr.f32.gmra.mxu0 %v2633
        %v2764 = vpop.f32.mrf.mxu0
        %v2765 = vadd.f32 0.0, %v2764
        %v2766 = vpop.f32.mrf.mxu0
        %v2767 = vadd.f32 0.0, %v2766
        %2768 = vmatprep.mubr.f32.mxu0 0.0
        %2769 = vmatmul.mubr.f32.gmra.mxu0 %v2636
        %v2770 = vpop.f32.mrf.mxu0
        %v2771 = vadd.f32 0.0, %v2770
        %v2772 = vpop.f32.mrf.mxu0
        %v2773 = vadd.f32 0.0, %v2772
        %2774 = vmatprep.mubr.f32.mxu0 0.0
        %2775 = vmatmul.mubr.f32.gmra.mxu0 %v2639
        %v2776 = vpop.f32.mrf.mxu0
        %v2777 = vadd.f32 0.0, %v2776
        %v2778 = vpop.f32.mrf.mxu0
        %v2779 = vadd.f32 0.0, %v2778
        %2780 = vmatprep.mubr.f32.mxu0 0.0
        %2781 = vmatmul.mubr.f32.gmra.mxu0 %v2642
        %v2782 = vpop.f32.mrf.mxu0
        %v2783 = vadd.f32 0.0, %v2782
        %v2784 = vpop.f32.mrf.mxu0
        %v2785 = vadd.f32 0.0, %v2784
        %2786 = vmatprep.mubr.f32.mxu0 0.0
        %2787 = vmatmul.mubr.f32.gmra.mxu0 %v2645
        %v2788 = vpop.f32.mrf.mxu0
        %v2789 = vadd.f32 0.0, %v2788
        %v2790 = vpop.f32.mrf.mxu0
        %v2791 = vadd.f32 0.0, %v2790
        %2792 = vmatprep.mubr.f32.mxu0 0.0
        %2793 = vmatmul.mubr.f32.gmra.mxu0 %v2648
        %v2794 = vpop.f32.mrf.mxu0
        %v2795 = vadd.f32 0.0, %v2794
        %v2796 = vpop.f32.mrf.mxu0
        %v2797 = vadd.f32 0.0, %v2796
        %2798 = vmatprep.mubr.f32.mxu0 0.0
        %2799 = vmatmul.mubr.f32.gmra.mxu0 %v2651
        %v2800 = vpop.f32.mrf.mxu0
        %v2801 = vadd.f32 0.0, %v2800
        %v2802 = vpop.f32.mrf.mxu0
        %v2803 = vadd.f32 0.0, %v2802
        %2804 = vmatprep.mubr.f32.mxu0 0.0
        %2805 = vmatmul.mubr.f32.gmra.mxu0 %v2654
        %v2806 = vpop.f32.mrf.mxu0
        %v2807 = vadd.f32 0.0, %v2806
        %v2808 = vpop.f32.mrf.mxu0
        %v2809 = vadd.f32 0.0, %v2808
        %2810 = vmatprep.mubr.f32.mxu0 0.0
        %2811 = vmatmul.mubr.f32.gmra.mxu0 %v2657
        %v2812 = vpop.f32.mrf.mxu0
        %v2813 = vadd.f32 0.0, %v2812
        %v2814 = vpop.f32.mrf.mxu0
        %v2815 = vadd.f32 0.0, %v2814
        %2816 = vmatprep.mubr.f32.mxu0 0.0
        %2817 = vmatmul.mubr.f32.gmra.mxu0 %v2660
        %v2818 = vpop.f32.mrf.mxu0
        %v2819 = vadd.f32 0.0, %v2818
        %v2820 = vpop.f32.mrf.mxu0
        %v2821 = vadd.f32 0.0, %v2820
        %2822 = vdwg.mxu0
        %2823 = vmatprep.subr.mxu0 0.0
        %2824 = vmatpush1.msra.mxu0 0.0
        %2825 = vmatprep.subr.mxu0 0.0
        %2826 = vmatpush1.msra.mxu0 0.0
        %2827 = vmatprep.subr.mxu0 0.0
        %2828 = vmatpush1.msra.mxu0 0.0
        %2829 = vmatprep.subr.mxu0 0.0
        %2830 = vmatpush1.msra.mxu0 0.0
        %2831 = vmatprep.subr.mxu0 0.0
        %2832 = vmatpush1.msra.mxu0 0.0
        %2833 = vmatprep.subr.mxu0 0.0
        %2834 = vmatpush1.msra.mxu0 0.0
        %2835 = vmatprep.subr.mxu0 0.0
        %2836 = vmatpush1.msra.mxu0 0.0
        %2837 = vmatprep.subr.mxu0 0.0
        %2838 = vmatpush1.msra.mxu0 0.0
        %2839 = vmatprep.subr.mxu0 0.0
        %2840 = vmatpush1.msra.mxu0 0.0
        %2841 = vmatprep.subr.mxu0 0.0
        %2842 = vmatpush1.msra.mxu0 0.0
        %2843 = vmatprep.subr.mxu0 0.0
        %2844 = vmatpush1.msra.mxu0 0.0
        %2845 = vmatprep.subr.mxu0 0.0
        %2846 = vmatpush1.msra.mxu0 0.0
        %2847 = vmatprep.subr.mxu0 %v1041
        %2848 = vmatpush1.msra.mxu0 %v1040
        %2849 = vmatprep.subr.mxu0 %v1037
        %2850 = vmatpush1.msra.mxu0 %v1036
        %2851 = vmatprep.subr.mxu0 %v1033
        %2852 = vmatpush1.msra.mxu0 %v1032
        %2853 = vmatprep.subr.mxu0 %v1029
        %2854 = vmatpush1.msra.mxu0 %v1028
        %2855 = vmatprep.subr.mxu0 0.0
        %2856 = vmatpush2.msra.mxu0 0.0
        %2857 = vmatprep.subr.mxu0 0.0
        %2858 = vmatpush2.msra.mxu0 0.0
        %2859 = vmatprep.subr.mxu0 0.0
        %2860 = vmatpush2.msra.mxu0 0.0
        %2861 = vmatprep.subr.mxu0 0.0
        %2862 = vmatpush2.msra.mxu0 0.0
        %2863 = vmatprep.subr.mxu0 0.0
        %2864 = vmatpush2.msra.mxu0 0.0
        %2865 = vmatprep.subr.mxu0 0.0
        %2866 = vmatpush2.msra.mxu0 0.0
        %2867 = vmatprep.subr.mxu0 0.0
        %2868 = vmatpush2.msra.mxu0 0.0
        %2869 = vmatprep.subr.mxu0 0.0
        %2870 = vmatpush2.msra.mxu0 0.0
        %2871 = vmatprep.subr.mxu0 0.0
        %2872 = vmatpush2.msra.mxu0 0.0
        %2873 = vmatprep.subr.mxu0 0.0
        %2874 = vmatpush2.msra.mxu0 0.0
        %2875 = vmatprep.subr.mxu0 0.0
        %2876 = vmatpush2.msra.mxu0 0.0
        %2877 = vmatprep.subr.mxu0 0.0
        %2878 = vmatpush2.msra.mxu0 0.0
        %2879 = vmatprep.subr.mxu0 0.0
        %2880 = vmatpush2.msra.mxu0 0.0
        %2881 = vmatprep.subr.mxu0 0.0
        %2882 = vmatpush2.msra.mxu0 0.0
        %2883 = vmatprep.subr.mxu0 0.0
        %2884 = vmatpush2.msra.mxu0 0.0
        %2885 = vmatprep.subr.mxu0 0.0
        %2886 = vmatpush2.msra.mxu0 0.0
        %2887 = vmatprep.mubr.f32.mxu0 0.0
        %2888 = vmatmul.mubr.f32.gmra.mxu0 %v2615
        %v2889 = vpop.f32.mrf.mxu0
        %v2890 = vadd.f32 0.0, %v2889
        %v2891 = vpop.f32.mrf.mxu0
        %v2892 = vadd.f32 0.0, %v2891
        %2893 = vmatprep.mubr.f32.mxu0 0.0
        %2894 = vmatmul.mubr.f32.gmra.mxu0 %v2618
        %v2895 = vpop.f32.mrf.mxu0
        %v2896 = vadd.f32 0.0, %v2895
        %v2897 = vpop.f32.mrf.mxu0
        %v2898 = vadd.f32 0.0, %v2897
        %2899 = vmatprep.mubr.f32.mxu0 0.0
        %2900 = vmatmul.mubr.f32.gmra.mxu0 %v2621
        %v2901 = vpop.f32.mrf.mxu0
        %v2902 = vadd.f32 0.0, %v2901
        %v2903 = vpop.f32.mrf.mxu0
        %v2904 = vadd.f32 0.0, %v2903
        %2905 = vmatprep.mubr.f32.mxu0 0.0
        %2906 = vmatmul.mubr.f32.gmra.mxu0 %v2624
        %v2907 = vpop.f32.mrf.mxu0
        %v2908 = vadd.f32 0.0, %v2907
        %v2909 = vpop.f32.mrf.mxu0
        %v2910 = vadd.f32 0.0, %v2909
        %2911 = vmatprep.mubr.f32.mxu0 0.0
        %2912 = vmatmul.mubr.f32.gmra.mxu0 %v2627
        %v2913 = vpop.f32.mrf.mxu0
        %v2914 = vadd.f32 0.0, %v2913
        %v2915 = vpop.f32.mrf.mxu0
        %v2916 = vadd.f32 0.0, %v2915
        %2917 = vmatprep.mubr.f32.mxu0 0.0
        %2918 = vmatmul.mubr.f32.gmra.mxu0 %v2630
        %v2919 = vpop.f32.mrf.mxu0
        %v2920 = vadd.f32 0.0, %v2919
        %v2921 = vpop.f32.mrf.mxu0
        %v2922 = vadd.f32 0.0, %v2921
        %2923 = vmatprep.mubr.f32.mxu0 0.0
        %2924 = vmatmul.mubr.f32.gmra.mxu0 %v2633
        %v2925 = vpop.f32.mrf.mxu0
        %v2926 = vadd.f32 0.0, %v2925
        %v2927 = vpop.f32.mrf.mxu0
        %v2928 = vadd.f32 0.0, %v2927
        %2929 = vmatprep.mubr.f32.mxu0 0.0
        %2930 = vmatmul.mubr.f32.gmra.mxu0 %v2636
        %v2931 = vpop.f32.mrf.mxu0
        %v2932 = vadd.f32 0.0, %v2931
        %v2933 = vpop.f32.mrf.mxu0
        %v2934 = vadd.f32 0.0, %v2933
        %2935 = vmatprep.mubr.f32.mxu0 0.0
        %2936 = vmatmul.mubr.f32.gmra.mxu0 %v2639
        %v2937 = vpop.f32.mrf.mxu0
        %v2938 = vadd.f32 0.0, %v2937
        %v2939 = vpop.f32.mrf.mxu0
        %v2940 = vadd.f32 0.0, %v2939
        %2941 = vmatprep.mubr.f32.mxu0 0.0
        %2942 = vmatmul.mubr.f32.gmra.mxu0 %v2642
        %v2943 = vpop.f32.mrf.mxu0
        %v2944 = vadd.f32 0.0, %v2943
        %v2945 = vpop.f32.mrf.mxu0
        %v2946 = vadd.f32 0.0, %v2945
        %2947 = vmatprep.mubr.f32.mxu0 0.0
        %2948 = vmatmul.mubr.f32.gmra.mxu0 %v2645
        %v2949 = vpop.f32.mrf.mxu0
        %v2950 = vadd.f32 0.0, %v2949
        %v2951 = vpop.f32.mrf.mxu0
        %v2952 = vadd.f32 0.0, %v2951
        %2953 = vmatprep.mubr.f32.mxu0 0.0
        %2954 = vmatmul.mubr.f32.gmra.mxu0 %v2648
        %v2955 = vpop.f32.mrf.mxu0
        %v2956 = vadd.f32 0.0, %v2955
        %v2957 = vpop.f32.mrf.mxu0
        %v2958 = vadd.f32 0.0, %v2957
        %2959 = vmatprep.mubr.f32.mxu0 0.0
        %2960 = vmatmul.mubr.f32.gmra.mxu0 %v2651
        %v2961 = vpop.f32.mrf.mxu0
        %v2962 = vadd.f32 0.0, %v2961
        %v2963 = vpop.f32.mrf.mxu0
        %v2964 = vadd.f32 0.0, %v2963
        %2965 = vmatprep.mubr.f32.mxu0 0.0
        %2966 = vmatmul.mubr.f32.gmra.mxu0 %v2654
        %v2967 = vpop.f32.mrf.mxu0
        %v2968 = vadd.f32 0.0, %v2967
        %v2969 = vpop.f32.mrf.mxu0
        %v2970 = vadd.f32 0.0, %v2969
        %2971 = vmatprep.mubr.f32.mxu0 0.0
        %2972 = vmatmul.mubr.f32.gmra.mxu0 %v2657
        %v2973 = vpop.f32.mrf.mxu0
        %v2974 = vadd.f32 0.0, %v2973
        %v2975 = vpop.f32.mrf.mxu0
        %v2976 = vadd.f32 0.0, %v2975
        %2977 = vmatprep.mubr.f32.mxu0 0.0
        %2978 = vmatmul.mubr.f32.gmra.mxu0 %v2660
        %v2979 = vpop.f32.mrf.mxu0
        %v2980 = vadd.f32 0.0, %v2979
        %v2981 = vpop.f32.mrf.mxu0
        %v2982 = vadd.f32 0.0, %v2981
        %2983 = vdwg.mxu0
        %v2984 = vadd.f32 %v1870, %v2729
        %v2985 = vadd.f32 %v1874, %v2731
        %v2986 = vadd.f32 %v1878, %v2890
        %v2987 = vadd.f32 %v1882, %v2892
        %v2988 = vadd.f32 %v1870, %v2735
        %v2989 = vadd.f32 %v1874, %v2737
        %v2990 = vadd.f32 %v1878, %v2896
        %v2991 = vadd.f32 %v1882, %v2898
        %v2992 = vadd.f32 %v1886, %v2741
        %v2993 = vadd.f32 %v1890, %v2743
        %v2994 = vadd.f32 %v1894, %v2902
        %v2995 = vadd.f32 %v1898, %v2904
        %v2996 = vadd.f32 %v1886, %v2747
        %v2997 = vadd.f32 %v1890, %v2749
        %v2998 = vadd.f32 %v1894, %v2908
        %v2999 = vadd.f32 %v1898, %v2910
        %v3000 = vadd.f32 %v1902, %v2753
        %v3001 = vadd.f32 %v1906, %v2755
        %v3002 = vadd.f32 %v1910, %v2914
        %v3003 = vadd.f32 %v1914, %v2916
        %v3004 = vadd.f32 %v1902, %v2759
        %v3005 = vadd.f32 %v1906, %v2761
        %v3006 = vadd.f32 %v1910, %v2920
        %v3007 = vadd.f32 %v1914, %v2922
        %v3008 = vadd.f32 %v1918, %v2765
        %v3009 = vadd.f32 %v1922, %v2767
        %v3010 = vadd.f32 %v1926, %v2926
        %v3011 = vadd.f32 %v1930, %v2928
        %v3012 = vadd.f32 %v1918, %v2771
        %v3013 = vadd.f32 %v1922, %v2773
        %v3014 = vadd.f32 %v1926, %v2932
        %v3015 = vadd.f32 %v1930, %v2934
        %v3016 = vadd.f32 %v1934, %v2777
        %v3017 = vadd.f32 %v1938, %v2779
        %v3018 = vadd.f32 %v1942, %v2938
        %v3019 = vadd.f32 %v1946, %v2940
        %v3020 = vadd.f32 %v1934, %v2783
        %v3021 = vadd.f32 %v1938, %v2785
        %v3022 = vadd.f32 %v1942, %v2944
        %v3023 = vadd.f32 %v1946, %v2946
        %v3024 = vadd.f32 %v1950, %v2789
        %v3025 = vadd.f32 %v1954, %v2791
        %v3026 = vadd.f32 %v1958, %v2950
        %v3027 = vadd.f32 %v1962, %v2952
        %v3028 = vadd.f32 %v1950, %v2795
        %v3029 = vadd.f32 %v1954, %v2797
        %v3030 = vadd.f32 %v1958, %v2956
        %v3031 = vadd.f32 %v1962, %v2958
        %v3032 = vadd.f32 %v1966, %v2801
        %v3033 = vadd.f32 %v1970, %v2803
        %v3034 = vadd.f32 %v1974, %v2962
        %v3035 = vadd.f32 %v1978, %v2964
        %v3036 = vadd.f32 %v1966, %v2807
        %v3037 = vadd.f32 %v1970, %v2809
        %v3038 = vadd.f32 %v1974, %v2968
        %v3039 = vadd.f32 %v1978, %v2970
        %v3040 = vadd.f32 %v1982, %v2813
        %v3041 = vadd.f32 %v1986, %v2815
        %v3042 = vadd.f32 %v1990, %v2974
        %v3043 = vadd.f32 %v1994, %v2976
        %v3044 = vadd.f32 %v1982, %v2819
        %v3045 = vadd.f32 %v1986, %v2821
        %v3046 = vadd.f32 %v1990, %v2980
        %v3047 = vadd.f32 %v1994, %v2982
        %v3048 = vmul.f32 %v2984, 0.33
        %v3049 = vmul.f32 %v2985, 0.33
        %v3050 = vmul.f32 %v2986, 0.33
        %v3051 = vmul.f32 %v2987, 0.33
        %v3052 = vmul.f32 %v2988, 0.33
        %v3053 = vmul.f32 %v2989, 0.33
        %v3054 = vmul.f32 %v2990, 0.33
        %v3055 = vmul.f32 %v2991, 0.33
        %v3056 = vmul.f32 %v2992, 0.33
        %v3057 = vmul.f32 %v2993, 0.33
        %v3058 = vmul.f32 %v2994, 0.33
        %v3059 = vmul.f32 %v2995, 0.33
        %v3060 = vmul.f32 %v2996, 0.33
        %v3061 = vmul.f32 %v2997, 0.33
        %v3062 = vmul.f32 %v2998, 0.33
        %v3063 = vmul.f32 %v2999, 0.33
        %v3064 = vmul.f32 %v3000, 0.33
        %v3065 = vmul.f32 %v3001, 0.33
        %v3066 = vmul.f32 %v3002, 0.33
        %v3067 = vmul.f32 %v3003, 0.33
        %v3068 = vmul.f32 %v3004, 0.33
        %v3069 = vmul.f32 %v3005, 0.33
        %v3070 = vmul.f32 %v3006, 0.33
        %v3071 = vmul.f32 %v3007, 0.33
        %v3072 = vmul.f32 %v3008, 0.33
        %v3073 = vmul.f32 %v3009, 0.33
        %v3074 = vmul.f32 %v3010, 0.33
        %v3075 = vmul.f32 %v3011, 0.33
        %v3076 = vmul.f32 %v3012, 0.33
        %v3077 = vmul.f32 %v3013, 0.33
        %v3078 = vmul.f32 %v3014, 0.33
        %v3079 = vmul.f32 %v3015, 0.33
        %v3080 = vmul.f32 %v3016, 0.33
        %v3081 = vmul.f32 %v3017, 0.33
        %v3082 = vmul.f32 %v3018, 0.33
        %v3083 = vmul.f32 %v3019, 0.33
        %v3084 = vmul.f32 %v3020, 0.33
        %v3085 = vmul.f32 %v3021, 0.33
        %v3086 = vmul.f32 %v3022, 0.33
        %v3087 = vmul.f32 %v3023, 0.33
        %v3088 = vmul.f32 %v3024, 0.33
        %v3089 = vmul.f32 %v3025, 0.33
        %v3090 = vmul.f32 %v3026, 0.33
        %v3091 = vmul.f32 %v3027, 0.33
        %v3092 = vmul.f32 %v3028, 0.33
        %v3093 = vmul.f32 %v3029, 0.33
        %v3094 = vmul.f32 %v3030, 0.33
        %v3095 = vmul.f32 %v3031, 0.33
        %v3096 = vmul.f32 %v3032, 0.33
        %v3097 = vmul.f32 %v3033, 0.33
        %v3098 = vmul.f32 %v3034, 0.33
        %v3099 = vmul.f32 %v3035, 0.33
        %v3100 = vmul.f32 %v3036, 0.33
        %v3101 = vmul.f32 %v3037, 0.33
        %v3102 = vmul.f32 %v3038, 0.33
        %v3103 = vmul.f32 %v3039, 0.33
        %v3104 = vmul.f32 %v3040, 0.33
        %v3105 = vmul.f32 %v3041, 0.33
        %v3106 = vmul.f32 %v3042, 0.33
        %v3107 = vmul.f32 %v3043, 0.33
        %v3108 = vmul.f32 %v3044, 0.33
        %v3109 = vmul.f32 %v3045, 0.33
        %v3110 = vmul.f32 %v3046, 0.33
        %v3111 = vmul.f32 %v3047, 0.33
        %v3112 = vmax.f32 %v2984, %v3048
        %v3113 = vmax.f32 %v2985, %v3049
        %v3114 = vmax.f32 %v2986, %v3050
        %v3115 = vmax.f32 %v2987, %v3051
        %v3116 = vmax.f32 %v2988, %v3052
        %v3117 = vmax.f32 %v2989, %v3053
        %v3118 = vmax.f32 %v2990, %v3054
        %v3119 = vmax.f32 %v2991, %v3055
        %v3120 = vmax.f32 %v2992, %v3056
        %v3121 = vmax.f32 %v2993, %v3057
        %v3122 = vmax.f32 %v2994, %v3058
        %v3123 = vmax.f32 %v2995, %v3059
        %v3124 = vmax.f32 %v2996, %v3060
        %v3125 = vmax.f32 %v2997, %v3061
        %v3126 = vmax.f32 %v2998, %v3062
        %v3127 = vmax.f32 %v2999, %v3063
        %v3128 = vmax.f32 %v3000, %v3064
        %v3129 = vmax.f32 %v3001, %v3065
        %v3130 = vmax.f32 %v3002, %v3066
        %v3131 = vmax.f32 %v3003, %v3067
        %v3132 = vmax.f32 %v3004, %v3068
        %v3133 = vmax.f32 %v3005, %v3069
        %v3134 = vmax.f32 %v3006, %v3070
        %v3135 = vmax.f32 %v3007, %v3071
        %v3136 = vmax.f32 %v3008, %v3072
        %v3137 = vmax.f32 %v3009, %v3073
        %v3138 = vmax.f32 %v3010, %v3074
        %v3139 = vmax.f32 %v3011, %v3075
        %v3140 = vmax.f32 %v3012, %v3076
        %v3141 = vmax.f32 %v3013, %v3077
        %v3142 = vmax.f32 %v3014, %v3078
        %v3143 = vmax.f32 %v3015, %v3079
        %v3144 = vmax.f32 %v3016, %v3080
        %v3145 = vmax.f32 %v3017, %v3081
        %v3146 = vmax.f32 %v3018, %v3082
        %v3147 = vmax.f32 %v3019, %v3083
        %v3148 = vmax.f32 %v3020, %v3084
        %v3149 = vmax.f32 %v3021, %v3085
        %v3150 = vmax.f32 %v3022, %v3086
        %v3151 = vmax.f32 %v3023, %v3087
        %v3152 = vmax.f32 %v3024, %v3088
        %v3153 = vmax.f32 %v3025, %v3089
        %v3154 = vmax.f32 %v3026, %v3090
        %v3155 = vmax.f32 %v3027, %v3091
        %v3156 = vmax.f32 %v3028, %v3092
        %v3157 = vmax.f32 %v3029, %v3093
        %v3158 = vmax.f32 %v3030, %v3094
        %v3159 = vmax.f32 %v3031, %v3095
        %v3160 = vmax.f32 %v3032, %v3096
        %v3161 = vmax.f32 %v3033, %v3097
        %v3162 = vmax.f32 %v3034, %v3098
        %v3163 = vmax.f32 %v3035, %v3099
        %v3164 = vmax.f32 %v3036, %v3100
        %v3165 = vmax.f32 %v3037, %v3101
        %v3166 = vmax.f32 %v3038, %v3102
        %v3167 = vmax.f32 %v3039, %v3103
        %v3168 = vmax.f32 %v3040, %v3104
        %v3169 = vmax.f32 %v3041, %v3105
        %v3170 = vmax.f32 %v3042, %v3106
        %v3171 = vmax.f32 %v3043, %v3107
        %v3172 = vmax.f32 %v3044, %v3108
        %v3173 = vmax.f32 %v3045, %v3109
        %v3174 = vmax.f32 %v3046, %v3110
        %v3175 = vmax.f32 %v3047, %v3111
        %v3176 = vmul.f32 %v1870, %v1042
        %v3177 = vmul.f32 %v1874, %v1043
        %v3178 = vmul.f32 %v1878, %v1044
        %v3179 = vmul.f32 %v1882, %v1045
        %v3180 = vmul.f32 %v1870, %v1046
        %v3181 = vmul.f32 %v1874, %v1047
        %v3182 = vmul.f32 %v1878, %v1048
        %v3183 = vmul.f32 %v1882, %v1049
        %v3184 = vmul.f32 %v1886, %v1050
        %v3185 = vmul.f32 %v1890, %v1051
        %v3186 = vmul.f32 %v1894, %v1052
        %v3187 = vmul.f32 %v1898, %v1053
        %v3188 = vmul.f32 %v1886, %v1054
        %v3189 = vmul.f32 %v1890, %v1055
        %v3190 = vmul.f32 %v1894, %v1056
        %v3191 = vmul.f32 %v1898, %v1057
        %v3192 = vmul.f32 %v1902, %v1058
        %v3193 = vmul.f32 %v1906, %v1059
        %v3194 = vmul.f32 %v1910, %v1060
        %v3195 = vmul.f32 %v1914, %v1061
        %v3196 = vmul.f32 %v1902, %v1062
        %v3197 = vmul.f32 %v1906, %v1063
        %v3198 = vmul.f32 %v1910, %v1064
        %v3199 = vmul.f32 %v1914, %v1065
        %v3200 = vmul.f32 %v1918, %v1066
        %v3201 = vmul.f32 %v1922, %v1067
        %v3202 = vmul.f32 %v1926, %v1068
        %v3203 = vmul.f32 %v1930, %v1069
        %v3204 = vmul.f32 %v1918, %v1070
        %v3205 = vmul.f32 %v1922, %v1071
        %v3206 = vmul.f32 %v1926, %v1072
        %v3207 = vmul.f32 %v1930, %v1073
        %v3208 = vmul.f32 %v1934, %v1074
        %v3209 = vmul.f32 %v1938, %v1075
        %v3210 = vmul.f32 %v1942, %v1076
        %v3211 = vmul.f32 %v1946, %v1077
        %v3212 = vmul.f32 %v1934, %v1078
        %v3213 = vmul.f32 %v1938, %v1079
        %v3214 = vmul.f32 %v1942, %v1080
        %v3215 = vmul.f32 %v1946, %v1081
        %v3216 = vmul.f32 %v1950, %v1082
        %v3217 = vmul.f32 %v1954, %v1083
        %v3218 = vmul.f32 %v1958, %v1084
        %v3219 = vmul.f32 %v1962, %v1085
        %v3220 = vmul.f32 %v1950, %v1086
        %v3221 = vmul.f32 %v1954, %v1087
        %v3222 = vmul.f32 %v1958, %v1088
        %v3223 = vmul.f32 %v1962, %v1089
        %v3224 = vmul.f32 %v1966, %v1090
        %v3225 = vmul.f32 %v1970, %v1091
        %v3226 = vmul.f32 %v1974, %v1092
        %v3227 = vmul.f32 %v1978, %v1093
        %v3228 = vmul.f32 %v1966, %v1094
        %v3229 = vmul.f32 %v1970, %v1095
        %v3230 = vmul.f32 %v1974, %v1096
        %v3231 = vmul.f32 %v1978, %v1097
        %v3232 = vmul.f32 %v1982, %v1098
        %v3233 = vmul.f32 %v1986, %v1099
        %v3234 = vmul.f32 %v1990, %v1100
        %v3235 = vmul.f32 %v1994, %v1101
        %v3236 = vmul.f32 %v1982, %v1102
        %v3237 = vmul.f32 %v1986, %v1103
        %v3238 = vmul.f32 %v1990, %v1104
        %v3239 = vmul.f32 %v1994, %v1105
        %3240 = vmatprep.subr.mxu0 0.0
        %3241 = vmatpush1.msra.mxu0 %v977
        %3242 = vmatprep.subr.mxu0 0.0
        %3243 = vmatpush1.msra.mxu0 %v976
        %3244 = vmatprep.subr.mxu0 0.0
        %3245 = vmatpush1.msra.mxu0 %v975
        %3246 = vmatprep.subr.mxu0 0.0
        %3247 = vmatpush1.msra.mxu0 %v974
        %3248 = vmatprep.subr.mxu0 0.0
        %3249 = vmatpush1.msra.mxu0 %v973
        %3250 = vmatprep.subr.mxu0 0.0
        %3251 = vmatpush1.msra.mxu0 %v972
        %3252 = vmatprep.subr.mxu0 0.0
        %3253 = vmatpush1.msra.mxu0 %v971
        %3254 = vmatprep.subr.mxu0 0.0
        %3255 = vmatpush1.msra.mxu0 %v970
        %3256 = vmatprep.subr.mxu0 0.0
        %3257 = vmatpush1.msra.mxu0 %v969
        %3258 = vmatprep.subr.mxu0 0.0
        %3259 = vmatpush1.msra.mxu0 %v968
        %3260 = vmatprep.subr.mxu0 0.0
        %3261 = vmatpush1.msra.mxu0 %v967
        %3262 = vmatprep.subr.mxu0 0.0
        %3263 = vmatpush1.msra.mxu0 %v966
        %3264 = vmatprep.subr.mxu0 0.0
        %3265 = vmatpush1.msra.mxu0 %v965
        %3266 = vmatprep.subr.mxu0 0.0
        %3267 = vmatpush1.msra.mxu0 %v964
        %3268 = vmatprep.subr.mxu0 0.0
        %3269 = vmatpush1.msra.mxu0 %v963
        %3270 = vmatprep.subr.mxu0 0.0
        %3271 = vmatpush1.msra.mxu0 %v962
        %3272 = vmatprep.subr.mxu0 0.0
        %3273 = vmatpush2.msra.mxu0 %v993
        %3274 = vmatprep.subr.mxu0 0.0
        %3275 = vmatpush2.msra.mxu0 %v992
        %3276 = vmatprep.subr.mxu0 0.0
        %3277 = vmatpush2.msra.mxu0 %v991
        %3278 = vmatprep.subr.mxu0 0.0
        %3279 = vmatpush2.msra.mxu0 %v990
        %3280 = vmatprep.subr.mxu0 0.0
        %3281 = vmatpush2.msra.mxu0 %v989
        %3282 = vmatprep.subr.mxu0 0.0
        %3283 = vmatpush2.msra.mxu0 %v988
        %3284 = vmatprep.subr.mxu0 0.0
        %3285 = vmatpush2.msra.mxu0 %v987
        %3286 = vmatprep.subr.mxu0 0.0
        %3287 = vmatpush2.msra.mxu0 %v986
        %3288 = vmatprep.subr.mxu0 0.0
        %3289 = vmatpush2.msra.mxu0 %v985
        %3290 = vmatprep.subr.mxu0 0.0
        %3291 = vmatpush2.msra.mxu0 %v984
        %3292 = vmatprep.subr.mxu0 0.0
        %3293 = vmatpush2.msra.mxu0 %v983
        %3294 = vmatprep.subr.mxu0 0.0
        %3295 = vmatpush2.msra.mxu0 %v982
        %3296 = vmatprep.subr.mxu0 0.0
        %3297 = vmatpush2.msra.mxu0 %v981
        %3298 = vmatprep.subr.mxu0 0.0
        %3299 = vmatpush2.msra.mxu0 %v980
        %3300 = vmatprep.subr.mxu0 0.0
        %3301 = vmatpush2.msra.mxu0 %v979
        %3302 = vmatprep.subr.mxu0 0.0
        %3303 = vmatpush2.msra.mxu0 %v978
        %3304 = vmatprep.mubr.f32.mxu0 %v3177
        %3305 = vmatmul.mubr.f32.gmra.mxu0 %v3176
        %v3306 = vpop.f32.mrf.mxu0
        %v3307 = vadd.f32 0.0, %v3306
        %v3308 = vpop.f32.mrf.mxu0
        %3309 = vmatprep.mubr.f32.mxu0 %v3181
        %3310 = vmatmul.mubr.f32.gmra.mxu0 %v3180
        %v3311 = vpop.f32.mrf.mxu0
        %v3312 = vadd.f32 0.0, %v3311
        %v3313 = vpop.f32.mrf.mxu0
        %3314 = vmatprep.mubr.f32.mxu0 %v3185
        %3315 = vmatmul.mubr.f32.gmra.mxu0 %v3184
        %v3316 = vpop.f32.mrf.mxu0
        %v3317 = vadd.f32 0.0, %v3316
        %v3318 = vpop.f32.mrf.mxu0
        %3319 = vmatprep.mubr.f32.mxu0 %v3189
        %3320 = vmatmul.mubr.f32.gmra.mxu0 %v3188
        %v3321 = vpop.f32.mrf.mxu0
        %v3322 = vadd.f32 0.0, %v3321
        %v3323 = vpop.f32.mrf.mxu0
        %3324 = vmatprep.mubr.f32.mxu0 %v3193
        %3325 = vmatmul.mubr.f32.gmra.mxu0 %v3192
        %v3326 = vpop.f32.mrf.mxu0
        %v3327 = vadd.f32 0.0, %v3326
        %v3328 = vpop.f32.mrf.mxu0
        %3329 = vmatprep.mubr.f32.mxu0 %v3197
        %3330 = vmatmul.mubr.f32.gmra.mxu0 %v3196
        %v3331 = vpop.f32.mrf.mxu0
        %v3332 = vadd.f32 0.0, %v3331
        %v3333 = vpop.f32.mrf.mxu0
        %3334 = vmatprep.mubr.f32.mxu0 %v3201
        %3335 = vmatmul.mubr.f32.gmra.mxu0 %v3200
        %v3336 = vpop.f32.mrf.mxu0
        %v3337 = vadd.f32 0.0, %v3336
        %v3338 = vpop.f32.mrf.mxu0
        %3339 = vmatprep.mubr.f32.mxu0 %v3205
        %3340 = vmatmul.mubr.f32.gmra.mxu0 %v3204
        %v3341 = vpop.f32.mrf.mxu0
        %v3342 = vadd.f32 0.0, %v3341
        %v3343 = vpop.f32.mrf.mxu0
        %3344 = vmatprep.mubr.f32.mxu0 %v3209
        %3345 = vmatmul.mubr.f32.gmra.mxu0 %v3208
        %v3346 = vpop.f32.mrf.mxu0
        %v3347 = vadd.f32 0.0, %v3346
        %v3348 = vpop.f32.mrf.mxu0
        %3349 = vmatprep.mubr.f32.mxu0 %v3213
        %3350 = vmatmul.mubr.f32.gmra.mxu0 %v3212
        %v3351 = vpop.f32.mrf.mxu0
        %v3352 = vadd.f32 0.0, %v3351
        %v3353 = vpop.f32.mrf.mxu0
        %3354 = vmatprep.mubr.f32.mxu0 %v3217
        %3355 = vmatmul.mubr.f32.gmra.mxu0 %v3216
        %v3356 = vpop.f32.mrf.mxu0
        %v3357 = vadd.f32 0.0, %v3356
        %v3358 = vpop.f32.mrf.mxu0
        %3359 = vmatprep.mubr.f32.mxu0 %v3221
        %3360 = vmatmul.mubr.f32.gmra.mxu0 %v3220
        %v3361 = vpop.f32.mrf.mxu0
        %v3362 = vadd.f32 0.0, %v3361
        %v3363 = vpop.f32.mrf.mxu0
        %3364 = vmatprep.mubr.f32.mxu0 %v3225
        %3365 = vmatmul.mubr.f32.gmra.mxu0 %v3224
        %v3366 = vpop.f32.mrf.mxu0
        %v3367 = vadd.f32 0.0, %v3366
        %v3368 = vpop.f32.mrf.mxu0
        %3369 = vmatprep.mubr.f32.mxu0 %v3229
        %3370 = vmatmul.mubr.f32.gmra.mxu0 %v3228
        %v3371 = vpop.f32.mrf.mxu0
        %v3372 = vadd.f32 0.0, %v3371
        %v3373 = vpop.f32.mrf.mxu0
        %3374 = vmatprep.mubr.f32.mxu0 %v3233
        %3375 = vmatmul.mubr.f32.gmra.mxu0 %v3232
        %v3376 = vpop.f32.mrf.mxu0
        %v3377 = vadd.f32 0.0, %v3376
        %v3378 = vpop.f32.mrf.mxu0
        %3379 = vmatprep.mubr.f32.mxu0 %v3237
        %3380 = vmatmul.mubr.f32.gmra.mxu0 %v3236
        %v3381 = vpop.f32.mrf.mxu0
        %v3382 = vadd.f32 0.0, %v3381
        %v3383 = vpop.f32.mrf.mxu0
        %3384 = vdwg.mxu0
        %3385 = vmatprep.subr.mxu0 0.0
        %3386 = vmatpush1.msra.mxu0 %v1009
        %3387 = vmatprep.subr.mxu0 0.0
        %3388 = vmatpush1.msra.mxu0 %v1008
        %3389 = vmatprep.subr.mxu0 0.0
        %3390 = vmatpush1.msra.mxu0 %v1007
        %3391 = vmatprep.subr.mxu0 0.0
        %3392 = vmatpush1.msra.mxu0 %v1006
        %3393 = vmatprep.subr.mxu0 0.0
        %3394 = vmatpush1.msra.mxu0 %v1005
        %3395 = vmatprep.subr.mxu0 0.0
        %3396 = vmatpush1.msra.mxu0 %v1004
        %3397 = vmatprep.subr.mxu0 0.0
        %3398 = vmatpush1.msra.mxu0 %v1003
        %3399 = vmatprep.subr.mxu0 0.0
        %3400 = vmatpush1.msra.mxu0 %v1002
        %3401 = vmatprep.subr.mxu0 0.0
        %3402 = vmatpush1.msra.mxu0 %v1001
        %3403 = vmatprep.subr.mxu0 0.0
        %3404 = vmatpush1.msra.mxu0 %v1000
        %3405 = vmatprep.subr.mxu0 0.0
        %3406 = vmatpush1.msra.mxu0 %v999
        %3407 = vmatprep.subr.mxu0 0.0
        %3408 = vmatpush1.msra.mxu0 %v998
        %3409 = vmatprep.subr.mxu0 0.0
        %3410 = vmatpush1.msra.mxu0 %v997
        %3411 = vmatprep.subr.mxu0 0.0
        %3412 = vmatpush1.msra.mxu0 %v996
        %3413 = vmatprep.subr.mxu0 0.0
        %3414 = vmatpush1.msra.mxu0 %v995
        %3415 = vmatprep.subr.mxu0 0.0
        %3416 = vmatpush1.msra.mxu0 %v994
        %3417 = vmatprep.subr.mxu0 0.0
        %3418 = vmatpush2.msra.mxu0 %v1025
        %3419 = vmatprep.subr.mxu0 0.0
        %3420 = vmatpush2.msra.mxu0 %v1024
        %3421 = vmatprep.subr.mxu0 0.0
        %3422 = vmatpush2.msra.mxu0 %v1023
        %3423 = vmatprep.subr.mxu0 0.0
        %3424 = vmatpush2.msra.mxu0 %v1022
        %3425 = vmatprep.subr.mxu0 0.0
        %3426 = vmatpush2.msra.mxu0 %v1021
        %3427 = vmatprep.subr.mxu0 0.0
        %3428 = vmatpush2.msra.mxu0 %v1020
        %3429 = vmatprep.subr.mxu0 0.0
        %3430 = vmatpush2.msra.mxu0 %v1019
        %3431 = vmatprep.subr.mxu0 0.0
        %3432 = vmatpush2.msra.mxu0 %v1018
        %3433 = vmatprep.subr.mxu0 0.0
        %3434 = vmatpush2.msra.mxu0 %v1017
        %3435 = vmatprep.subr.mxu0 0.0
        %3436 = vmatpush2.msra.mxu0 %v1016
        %3437 = vmatprep.subr.mxu0 0.0
        %3438 = vmatpush2.msra.mxu0 %v1015
        %3439 = vmatprep.subr.mxu0 0.0
        %3440 = vmatpush2.msra.mxu0 %v1014
        %3441 = vmatprep.subr.mxu0 0.0
        %3442 = vmatpush2.msra.mxu0 %v1013
        %3443 = vmatprep.subr.mxu0 0.0
        %3444 = vmatpush2.msra.mxu0 %v1012
        %3445 = vmatprep.subr.mxu0 0.0
        %3446 = vmatpush2.msra.mxu0 %v1011
        %3447 = vmatprep.subr.mxu0 0.0
        %3448 = vmatpush2.msra.mxu0 %v1010
        %3449 = vmatprep.mubr.f32.mxu0 %v3179
        %3450 = vmatmul.mubr.f32.gmra.mxu0 %v3178
        %v3451 = vpop.f32.mrf.mxu0
        %v3452 = vadd.f32 %v3307, %v3451
        %v3453 = vpop.f32.mrf.mxu0
        %3454 = vmatprep.mubr.f32.mxu0 %v3183
        %3455 = vmatmul.mubr.f32.gmra.mxu0 %v3182
        %v3456 = vpop.f32.mrf.mxu0
        %v3457 = vadd.f32 %v3312, %v3456
        %v3458 = vpop.f32.mrf.mxu0
        %3459 = vmatprep.mubr.f32.mxu0 %v3187
        %3460 = vmatmul.mubr.f32.gmra.mxu0 %v3186
        %v3461 = vpop.f32.mrf.mxu0
        %v3462 = vadd.f32 %v3317, %v3461
        %v3463 = vpop.f32.mrf.mxu0
        %3464 = vmatprep.mubr.f32.mxu0 %v3191
        %3465 = vmatmul.mubr.f32.gmra.mxu0 %v3190
        %v3466 = vpop.f32.mrf.mxu0
        %v3467 = vadd.f32 %v3322, %v3466
        %v3468 = vpop.f32.mrf.mxu0
        %3469 = vmatprep.mubr.f32.mxu0 %v3195
        %3470 = vmatmul.mubr.f32.gmra.mxu0 %v3194
        %v3471 = vpop.f32.mrf.mxu0
        %v3472 = vadd.f32 %v3327, %v3471
        %v3473 = vpop.f32.mrf.mxu0
        %3474 = vmatprep.mubr.f32.mxu0 %v3199
        %3475 = vmatmul.mubr.f32.gmra.mxu0 %v3198
        %v3476 = vpop.f32.mrf.mxu0
        %v3477 = vadd.f32 %v3332, %v3476
        %v3478 = vpop.f32.mrf.mxu0
        %3479 = vmatprep.mubr.f32.mxu0 %v3203
        %3480 = vmatmul.mubr.f32.gmra.mxu0 %v3202
        %v3481 = vpop.f32.mrf.mxu0
        %v3482 = vadd.f32 %v3337, %v3481
        %v3483 = vpop.f32.mrf.mxu0
        %3484 = vmatprep.mubr.f32.mxu0 %v3207
        %3485 = vmatmul.mubr.f32.gmra.mxu0 %v3206
        %v3486 = vpop.f32.mrf.mxu0
        %v3487 = vadd.f32 %v3342, %v3486
        %v3488 = vpop.f32.mrf.mxu0
        %3489 = vmatprep.mubr.f32.mxu0 %v3211
        %3490 = vmatmul.mubr.f32.gmra.mxu0 %v3210
        %v3491 = vpop.f32.mrf.mxu0
        %v3492 = vadd.f32 %v3347, %v3491
        %v3493 = vpop.f32.mrf.mxu0
        %3494 = vmatprep.mubr.f32.mxu0 %v3215
        %3495 = vmatmul.mubr.f32.gmra.mxu0 %v3214
        %v3496 = vpop.f32.mrf.mxu0
        %v3497 = vadd.f32 %v3352, %v3496
        %v3498 = vpop.f32.mrf.mxu0
        %3499 = vmatprep.mubr.f32.mxu0 %v3219
        %3500 = vmatmul.mubr.f32.gmra.mxu0 %v3218
        %v3501 = vpop.f32.mrf.mxu0
        %v3502 = vadd.f32 %v3357, %v3501
        %v3503 = vpop.f32.mrf.mxu0
        %3504 = vmatprep.mubr.f32.mxu0 %v3223
        %3505 = vmatmul.mubr.f32.gmra.mxu0 %v3222
        %v3506 = vpop.f32.mrf.mxu0
        %v3507 = vadd.f32 %v3362, %v3506
        %v3508 = vpop.f32.mrf.mxu0
        %3509 = vmatprep.mubr.f32.mxu0 %v3227
        %3510 = vmatmul.mubr.f32.gmra.mxu0 %v3226
        %v3511 = vpop.f32.mrf.mxu0
        %v3512 = vadd.f32 %v3367, %v3511
        %v3513 = vpop.f32.mrf.mxu0
        %3514 = vmatprep.mubr.f32.mxu0 %v3231
        %3515 = vmatmul.mubr.f32.gmra.mxu0 %v3230
        %v3516 = vpop.f32.mrf.mxu0
        %v3517 = vadd.f32 %v3372, %v3516
        %v3518 = vpop.f32.mrf.mxu0
        %3519 = vmatprep.mubr.f32.mxu0 %v3235
        %3520 = vmatmul.mubr.f32.gmra.mxu0 %v3234
        %v3521 = vpop.f32.mrf.mxu0
        %v3522 = vadd.f32 %v3377, %v3521
        %v3523 = vpop.f32.mrf.mxu0
        %3524 = vmatprep.mubr.f32.mxu0 %v3239
        %3525 = vmatmul.mubr.f32.gmra.mxu0 %v3238
        %v3526 = vpop.f32.mrf.mxu0
        %v3527 = vadd.f32 %v3382, %v3526
        %v3528 = vpop.f32.mrf.mxu0
        %3529 = vdwg.mxu0
        %v3531 = vsel %vm2613, %v3452, 0
        %v3534 = vsel %vm2613, %v3457, 0
        %v3537 = vsel %vm2613, %v3462, 0
        %v3540 = vsel %vm2613, %v3467, 0
        %v3543 = vsel %vm2613, %v3472, 0
        %v3546 = vsel %vm2613, %v3477, 0
        %v3549 = vsel %vm2613, %v3482, 0
        %v3552 = vsel %vm2613, %v3487, 0
        %v3555 = vsel %vm2613, %v3492, 0
        %v3558 = vsel %vm2613, %v3497, 0
        %v3561 = vsel %vm2613, %v3502, 0
        %v3564 = vsel %vm2613, %v3507, 0
        %v3567 = vsel %vm2613, %v3512, 0
        %v3570 = vsel %vm2613, %v3517, 0
        %v3573 = vsel %vm2613, %v3522, 0
        %v3576 = vsel %vm2613, %v3527, 0
        %3578 = vmatprep.subr.mxu0 0.0
        %3579 = vmatpush1.msra.mxu0 0.0
        %3580 = vmatprep.subr.mxu0 0.0
        %3581 = vmatpush1.msra.mxu0 0.0
        %3582 = vmatprep.subr.mxu0 0.0
        %3583 = vmatpush1.msra.mxu0 0.0
        %3584 = vmatprep.subr.mxu0 0.0
        %3585 = vmatpush1.msra.mxu0 0.0
        %3586 = vmatprep.subr.mxu0 0.0
        %3587 = vmatpush1.msra.mxu0 0.0
        %3588 = vmatprep.subr.mxu0 0.0
        %3589 = vmatpush1.msra.mxu0 0.0
        %3590 = vmatprep.subr.mxu0 0.0
        %3591 = vmatpush1.msra.mxu0 0.0
        %3592 = vmatprep.subr.mxu0 0.0
        %3593 = vmatpush1.msra.mxu0 0.0
        %3594 = vmatprep.subr.mxu0 0.0
        %3595 = vmatpush1.msra.mxu0 0.0
        %3596 = vmatprep.subr.mxu0 0.0
        %3597 = vmatpush1.msra.mxu0 0.0
        %3598 = vmatprep.subr.mxu0 0.0
        %3599 = vmatpush1.msra.mxu0 0.0
        %3600 = vmatprep.subr.mxu0 0.0
        %3601 = vmatpush1.msra.mxu0 0.0
        %3602 = vmatprep.subr.mxu0 %v1039
        %3603 = vmatpush1.msra.mxu0 %v1038
        %3604 = vmatprep.subr.mxu0 %v1035
        %3605 = vmatpush1.msra.mxu0 %v1034
        %3606 = vmatprep.subr.mxu0 %v1031
        %3607 = vmatpush1.msra.mxu0 %v1030
        %3608 = vmatprep.subr.mxu0 %v1027
        %3609 = vmatpush1.msra.mxu0 %v1026
        %3610 = vmatprep.subr.mxu0 0.0
        %3611 = vmatpush2.msra.mxu0 0.0
        %3612 = vmatprep.subr.mxu0 0.0
        %3613 = vmatpush2.msra.mxu0 0.0
        %3614 = vmatprep.subr.mxu0 0.0
        %3615 = vmatpush2.msra.mxu0 0.0
        %3616 = vmatprep.subr.mxu0 0.0
        %3617 = vmatpush2.msra.mxu0 0.0
        %3618 = vmatprep.subr.mxu0 0.0
        %3619 = vmatpush2.msra.mxu0 0.0
        %3620 = vmatprep.subr.mxu0 0.0
        %3621 = vmatpush2.msra.mxu0 0.0
        %3622 = vmatprep.subr.mxu0 0.0
        %3623 = vmatpush2.msra.mxu0 0.0
        %3624 = vmatprep.subr.mxu0 0.0
        %3625 = vmatpush2.msra.mxu0 0.0
        %3626 = vmatprep.subr.mxu0 0.0
        %3627 = vmatpush2.msra.mxu0 0.0
        %3628 = vmatprep.subr.mxu0 0.0
        %3629 = vmatpush2.msra.mxu0 0.0
        %3630 = vmatprep.subr.mxu0 0.0
        %3631 = vmatpush2.msra.mxu0 0.0
        %3632 = vmatprep.subr.mxu0 0.0
        %3633 = vmatpush2.msra.mxu0 0.0
        %3634 = vmatprep.subr.mxu0 0.0
        %3635 = vmatpush2.msra.mxu0 0.0
        %3636 = vmatprep.subr.mxu0 0.0
        %3637 = vmatpush2.msra.mxu0 0.0
        %3638 = vmatprep.subr.mxu0 0.0
        %3639 = vmatpush2.msra.mxu0 0.0
        %3640 = vmatprep.subr.mxu0 0.0
        %3641 = vmatpush2.msra.mxu0 0.0
        %3642 = vmatprep.mubr.f32.mxu0 0.0
        %3643 = vmatmul.mubr.f32.gmra.mxu0 %v3531
        %v3644 = vpop.f32.mrf.mxu0
        %v3645 = vadd.f32 %v2102, %v3644
        %v3646 = vpop.f32.mrf.mxu0
        %v3647 = vadd.f32 %v2106, %v3646
        %3648 = vmatprep.mubr.f32.mxu0 0.0
        %3649 = vmatmul.mubr.f32.gmra.mxu0 %v3534
        %v3650 = vpop.f32.mrf.mxu0
        %v3651 = vadd.f32 %v2102, %v3650
        %v3652 = vpop.f32.mrf.mxu0
        %v3653 = vadd.f32 %v2106, %v3652
        %3654 = vmatprep.mubr.f32.mxu0 0.0
        %3655 = vmatmul.mubr.f32.gmra.mxu0 %v3537
        %v3656 = vpop.f32.mrf.mxu0
        %v3657 = vadd.f32 %v2118, %v3656
        %v3658 = vpop.f32.mrf.mxu0
        %v3659 = vadd.f32 %v2122, %v3658
        %3660 = vmatprep.mubr.f32.mxu0 0.0
        %3661 = vmatmul.mubr.f32.gmra.mxu0 %v3540
        %v3662 = vpop.f32.mrf.mxu0
        %v3663 = vadd.f32 %v2118, %v3662
        %v3664 = vpop.f32.mrf.mxu0
        %v3665 = vadd.f32 %v2122, %v3664
        %3666 = vmatprep.mubr.f32.mxu0 0.0
        %3667 = vmatmul.mubr.f32.gmra.mxu0 %v3543
        %v3668 = vpop.f32.mrf.mxu0
        %v3669 = vadd.f32 %v2134, %v3668
        %v3670 = vpop.f32.mrf.mxu0
        %v3671 = vadd.f32 %v2138, %v3670
        %3672 = vmatprep.mubr.f32.mxu0 0.0
        %3673 = vmatmul.mubr.f32.gmra.mxu0 %v3546
        %v3674 = vpop.f32.mrf.mxu0
        %v3675 = vadd.f32 %v2134, %v3674
        %v3676 = vpop.f32.mrf.mxu0
        %v3677 = vadd.f32 %v2138, %v3676
        %3678 = vmatprep.mubr.f32.mxu0 0.0
        %3679 = vmatmul.mubr.f32.gmra.mxu0 %v3549
        %v3680 = vpop.f32.mrf.mxu0
        %v3681 = vadd.f32 %v2150, %v3680
        %v3682 = vpop.f32.mrf.mxu0
        %v3683 = vadd.f32 %v2154, %v3682
        %3684 = vmatprep.mubr.f32.mxu0 0.0
        %3685 = vmatmul.mubr.f32.gmra.mxu0 %v3552
        %v3686 = vpop.f32.mrf.mxu0
        %v3687 = vadd.f32 %v2150, %v3686
        %v3688 = vpop.f32.mrf.mxu0
        %v3689 = vadd.f32 %v2154, %v3688
        %3690 = vmatprep.mubr.f32.mxu0 0.0
        %3691 = vmatmul.mubr.f32.gmra.mxu0 %v3555
        %v3692 = vpop.f32.mrf.mxu0
        %v3693 = vadd.f32 %v2166, %v3692
        %v3694 = vpop.f32.mrf.mxu0
        %v3695 = vadd.f32 %v2170, %v3694
        %3696 = vmatprep.mubr.f32.mxu0 0.0
        %3697 = vmatmul.mubr.f32.gmra.mxu0 %v3558
        %v3698 = vpop.f32.mrf.mxu0
        %v3699 = vadd.f32 %v2166, %v3698
        %v3700 = vpop.f32.mrf.mxu0
        %v3701 = vadd.f32 %v2170, %v3700
        %3702 = vmatprep.mubr.f32.mxu0 0.0
        %3703 = vmatmul.mubr.f32.gmra.mxu0 %v3561
        %v3704 = vpop.f32.mrf.mxu0
        %v3705 = vadd.f32 %v2182, %v3704
        %v3706 = vpop.f32.mrf.mxu0
        %v3707 = vadd.f32 %v2186, %v3706
        %3708 = vmatprep.mubr.f32.mxu0 0.0
        %3709 = vmatmul.mubr.f32.gmra.mxu0 %v3564
        %v3710 = vpop.f32.mrf.mxu0
        %v3711 = vadd.f32 %v2182, %v3710
        %v3712 = vpop.f32.mrf.mxu0
        %v3713 = vadd.f32 %v2186, %v3712
        %3714 = vmatprep.mubr.f32.mxu0 0.0
        %3715 = vmatmul.mubr.f32.gmra.mxu0 %v3567
        %v3716 = vpop.f32.mrf.mxu0
        %v3717 = vadd.f32 %v2198, %v3716
        %v3718 = vpop.f32.mrf.mxu0
        %v3719 = vadd.f32 %v2202, %v3718
        %3720 = vmatprep.mubr.f32.mxu0 0.0
        %3721 = vmatmul.mubr.f32.gmra.mxu0 %v3570
        %v3722 = vpop.f32.mrf.mxu0
        %v3723 = vadd.f32 %v2198, %v3722
        %v3724 = vpop.f32.mrf.mxu0
        %v3725 = vadd.f32 %v2202, %v3724
        %3726 = vmatprep.mubr.f32.mxu0 0.0
        %3727 = vmatmul.mubr.f32.gmra.mxu0 %v3573
        %v3728 = vpop.f32.mrf.mxu0
        %v3729 = vadd.f32 %v2214, %v3728
        %v3730 = vpop.f32.mrf.mxu0
        %v3731 = vadd.f32 %v2218, %v3730
        %3732 = vmatprep.mubr.f32.mxu0 0.0
        %3733 = vmatmul.mubr.f32.gmra.mxu0 %v3576
        %v3734 = vpop.f32.mrf.mxu0
        %v3735 = vadd.f32 %v2214, %v3734
        %v3736 = vpop.f32.mrf.mxu0
        %v3737 = vadd.f32 %v2218, %v3736
        %3738 = vdwg.mxu0
        %3739 = vmatprep.subr.mxu0 0.0
        %3740 = vmatpush1.msra.mxu0 0.0
        %3741 = vmatprep.subr.mxu0 0.0
        %3742 = vmatpush1.msra.mxu0 0.0
        %3743 = vmatprep.subr.mxu0 0.0
        %3744 = vmatpush1.msra.mxu0 0.0
        %3745 = vmatprep.subr.mxu0 0.0
        %3746 = vmatpush1.msra.mxu0 0.0
        %3747 = vmatprep.subr.mxu0 0.0
        %3748 = vmatpush1.msra.mxu0 0.0
        %3749 = vmatprep.subr.mxu0 0.0
        %3750 = vmatpush1.msra.mxu0 0.0
        %3751 = vmatprep.subr.mxu0 0.0
        %3752 = vmatpush1.msra.mxu0 0.0
        %3753 = vmatprep.subr.mxu0 0.0
        %3754 = vmatpush1.msra.mxu0 0.0
        %3755 = vmatprep.subr.mxu0 0.0
        %3756 = vmatpush1.msra.mxu0 0.0
        %3757 = vmatprep.subr.mxu0 0.0
        %3758 = vmatpush1.msra.mxu0 0.0
        %3759 = vmatprep.subr.mxu0 0.0
        %3760 = vmatpush1.msra.mxu0 0.0
        %3761 = vmatprep.subr.mxu0 0.0
        %3762 = vmatpush1.msra.mxu0 0.0
        %3763 = vmatprep.subr.mxu0 %v1041
        %3764 = vmatpush1.msra.mxu0 %v1040
        %3765 = vmatprep.subr.mxu0 %v1037
        %3766 = vmatpush1.msra.mxu0 %v1036
        %3767 = vmatprep.subr.mxu0 %v1033
        %3768 = vmatpush1.msra.mxu0 %v1032
        %3769 = vmatprep.subr.mxu0 %v1029
        %3770 = vmatpush1.msra.mxu0 %v1028
        %3771 = vmatprep.subr.mxu0 0.0
        %3772 = vmatpush2.msra.mxu0 0.0
        %3773 = vmatprep.subr.mxu0 0.0
        %3774 = vmatpush2.msra.mxu0 0.0
        %3775 = vmatprep.subr.mxu0 0.0
        %3776 = vmatpush2.msra.mxu0 0.0
        %3777 = vmatprep.subr.mxu0 0.0
        %3778 = vmatpush2.msra.mxu0 0.0
        %3779 = vmatprep.subr.mxu0 0.0
        %3780 = vmatpush2.msra.mxu0 0.0
        %3781 = vmatprep.subr.mxu0 0.0
        %3782 = vmatpush2.msra.mxu0 0.0
        %3783 = vmatprep.subr.mxu0 0.0
        %3784 = vmatpush2.msra.mxu0 0.0
        %3785 = vmatprep.subr.mxu0 0.0
        %3786 = vmatpush2.msra.mxu0 0.0
        %3787 = vmatprep.subr.mxu0 0.0
        %3788 = vmatpush2.msra.mxu0 0.0
        %3789 = vmatprep.subr.mxu0 0.0
        %3790 = vmatpush2.msra.mxu0 0.0
        %3791 = vmatprep.subr.mxu0 0.0
        %3792 = vmatpush2.msra.mxu0 0.0
        %3793 = vmatprep.subr.mxu0 0.0
        %3794 = vmatpush2.msra.mxu0 0.0
        %3795 = vmatprep.subr.mxu0 0.0
        %3796 = vmatpush2.msra.mxu0 0.0
        %3797 = vmatprep.subr.mxu0 0.0
        %3798 = vmatpush2.msra.mxu0 0.0
        %3799 = vmatprep.subr.mxu0 0.0
        %3800 = vmatpush2.msra.mxu0 0.0
        %3801 = vmatprep.subr.mxu0 0.0
        %3802 = vmatpush2.msra.mxu0 0.0
        %3803 = vmatprep.mubr.f32.mxu0 0.0
        %3804 = vmatmul.mubr.f32.gmra.mxu0 %v3531
        %v3805 = vpop.f32.mrf.mxu0
        %v3806 = vadd.f32 %v2110, %v3805
        %v3807 = vpop.f32.mrf.mxu0
        %v3808 = vadd.f32 %v2114, %v3807
        %3809 = vmatprep.mubr.f32.mxu0 0.0
        %3810 = vmatmul.mubr.f32.gmra.mxu0 %v3534
        %v3811 = vpop.f32.mrf.mxu0
        %v3812 = vadd.f32 %v2110, %v3811
        %v3813 = vpop.f32.mrf.mxu0
        %v3814 = vadd.f32 %v2114, %v3813
        %3815 = vmatprep.mubr.f32.mxu0 0.0
        %3816 = vmatmul.mubr.f32.gmra.mxu0 %v3537
        %v3817 = vpop.f32.mrf.mxu0
        %v3818 = vadd.f32 %v2126, %v3817
        %v3819 = vpop.f32.mrf.mxu0
        %v3820 = vadd.f32 %v2130, %v3819
        %3821 = vmatprep.mubr.f32.mxu0 0.0
        %3822 = vmatmul.mubr.f32.gmra.mxu0 %v3540
        %v3823 = vpop.f32.mrf.mxu0
        %v3824 = vadd.f32 %v2126, %v3823
        %v3825 = vpop.f32.mrf.mxu0
        %v3826 = vadd.f32 %v2130, %v3825
        %3827 = vmatprep.mubr.f32.mxu0 0.0
        %3828 = vmatmul.mubr.f32.gmra.mxu0 %v3543
        %v3829 = vpop.f32.mrf.mxu0
        %v3830 = vadd.f32 %v2142, %v3829
        %v3831 = vpop.f32.mrf.mxu0
        %v3832 = vadd.f32 %v2146, %v3831
        %3833 = vmatprep.mubr.f32.mxu0 0.0
        %3834 = vmatmul.mubr.f32.gmra.mxu0 %v3546
        %v3835 = vpop.f32.mrf.mxu0
        %v3836 = vadd.f32 %v2142, %v3835
        %v3837 = vpop.f32.mrf.mxu0
        %v3838 = vadd.f32 %v2146, %v3837
        %3839 = vmatprep.mubr.f32.mxu0 0.0
        %3840 = vmatmul.mubr.f32.gmra.mxu0 %v3549
        %v3841 = vpop.f32.mrf.mxu0
        %v3842 = vadd.f32 %v2158, %v3841
        %v3843 = vpop.f32.mrf.mxu0
        %v3844 = vadd.f32 %v2162, %v3843
        %3845 = vmatprep.mubr.f32.mxu0 0.0
        %3846 = vmatmul.mubr.f32.gmra.mxu0 %v3552
        %v3847 = vpop.f32.mrf.mxu0
        %v3848 = vadd.f32 %v2158, %v3847
        %v3849 = vpop.f32.mrf.mxu0
        %v3850 = vadd.f32 %v2162, %v3849
        %3851 = vmatprep.mubr.f32.mxu0 0.0
        %3852 = vmatmul.mubr.f32.gmra.mxu0 %v3555
        %v3853 = vpop.f32.mrf.mxu0
        %v3854 = vadd.f32 %v2174, %v3853
        %v3855 = vpop.f32.mrf.mxu0
        %v3856 = vadd.f32 %v2178, %v3855
        %3857 = vmatprep.mubr.f32.mxu0 0.0
        %3858 = vmatmul.mubr.f32.gmra.mxu0 %v3558
        %v3859 = vpop.f32.mrf.mxu0
        %v3860 = vadd.f32 %v2174, %v3859
        %v3861 = vpop.f32.mrf.mxu0
        %v3862 = vadd.f32 %v2178, %v3861
        %3863 = vmatprep.mubr.f32.mxu0 0.0
        %3864 = vmatmul.mubr.f32.gmra.mxu0 %v3561
        %v3865 = vpop.f32.mrf.mxu0
        %v3866 = vadd.f32 %v2190, %v3865
        %v3867 = vpop.f32.mrf.mxu0
        %v3868 = vadd.f32 %v2194, %v3867
        %3869 = vmatprep.mubr.f32.mxu0 0.0
        %3870 = vmatmul.mubr.f32.gmra.mxu0 %v3564
        %v3871 = vpop.f32.mrf.mxu0
        %v3872 = vadd.f32 %v2190, %v3871
        %v3873 = vpop.f32.mrf.mxu0
        %v3874 = vadd.f32 %v2194, %v3873
        %3875 = vmatprep.mubr.f32.mxu0 0.0
        %3876 = vmatmul.mubr.f32.gmra.mxu0 %v3567
        %v3877 = vpop.f32.mrf.mxu0
        %v3878 = vadd.f32 %v2206, %v3877
        %v3879 = vpop.f32.mrf.mxu0
        %v3880 = vadd.f32 %v2210, %v3879
        %3881 = vmatprep.mubr.f32.mxu0 0.0
        %3882 = vmatmul.mubr.f32.gmra.mxu0 %v3570
        %v3883 = vpop.f32.mrf.mxu0
        %v3884 = vadd.f32 %v2206, %v3883
        %v3885 = vpop.f32.mrf.mxu0
        %v3886 = vadd.f32 %v2210, %v3885
        %3887 = vmatprep.mubr.f32.mxu0 0.0
        %3888 = vmatmul.mubr.f32.gmra.mxu0 %v3573
        %v3889 = vpop.f32.mrf.mxu0
        %v3890 = vadd.f32 %v2222, %v3889
        %v3891 = vpop.f32.mrf.mxu0
        %v3892 = vadd.f32 %v2226, %v3891
        %3893 = vmatprep.mubr.f32.mxu0 0.0
        %3894 = vmatmul.mubr.f32.gmra.mxu0 %v3576
        %v3895 = vpop.f32.mrf.mxu0
        %v3896 = vadd.f32 %v2222, %v3895
        %v3897 = vpop.f32.mrf.mxu0
        %v3898 = vadd.f32 %v2226, %v3897
        %3899 = vdwg.mxu0
        %v3900 = vmul.f32 %v3645, 0.33
        %v3901 = vmul.f32 %v3647, 0.33
        %v3902 = vmul.f32 %v3806, 0.33
        %v3903 = vmul.f32 %v3808, 0.33
        %v3904 = vmul.f32 %v3651, 0.33
        %v3905 = vmul.f32 %v3653, 0.33
        %v3906 = vmul.f32 %v3812, 0.33
        %v3907 = vmul.f32 %v3814, 0.33
        %v3908 = vmul.f32 %v3657, 0.33
        %v3909 = vmul.f32 %v3659, 0.33
        %v3910 = vmul.f32 %v3818, 0.33
        %v3911 = vmul.f32 %v3820, 0.33
        %v3912 = vmul.f32 %v3663, 0.33
        %v3913 = vmul.f32 %v3665, 0.33
        %v3914 = vmul.f32 %v3824, 0.33
        %v3915 = vmul.f32 %v3826, 0.33
        %v3916 = vmul.f32 %v3669, 0.33
        %v3917 = vmul.f32 %v3671, 0.33
        %v3918 = vmul.f32 %v3830, 0.33
        %v3919 = vmul.f32 %v3832, 0.33
        %v3920 = vmul.f32 %v3675, 0.33
        %v3921 = vmul.f32 %v3677, 0.33
        %v3922 = vmul.f32 %v3836, 0.33
        %v3923 = vmul.f32 %v3838, 0.33
        %v3924 = vmul.f32 %v3681, 0.33
        %v3925 = vmul.f32 %v3683, 0.33
        %v3926 = vmul.f32 %v3842, 0.33
        %v3927 = vmul.f32 %v3844, 0.33
        %v3928 = vmul.f32 %v3687, 0.33
        %v3929 = vmul.f32 %v3689, 0.33
        %v3930 = vmul.f32 %v3848, 0.33
        %v3931 = vmul.f32 %v3850, 0.33
        %v3932 = vmul.f32 %v3693, 0.33
        %v3933 = vmul.f32 %v3695, 0.33
        %v3934 = vmul.f32 %v3854, 0.33
        %v3935 = vmul.f32 %v3856, 0.33
        %v3936 = vmul.f32 %v3699, 0.33
        %v3937 = vmul.f32 %v3701, 0.33
        %v3938 = vmul.f32 %v3860, 0.33
        %v3939 = vmul.f32 %v3862, 0.33
        %v3940 = vmul.f32 %v3705, 0.33
        %v3941 = vmul.f32 %v3707, 0.33
        %v3942 = vmul.f32 %v3866, 0.33
        %v3943 = vmul.f32 %v3868, 0.33
        %v3944 = vmul.f32 %v3711, 0.33
        %v3945 = vmul.f32 %v3713, 0.33
        %v3946 = vmul.f32 %v3872, 0.33
        %v3947 = vmul.f32 %v3874, 0.33
        %v3948 = vmul.f32 %v3717, 0.33
        %v3949 = vmul.f32 %v3719, 0.33
        %v3950 = vmul.f32 %v3878, 0.33
        %v3951 = vmul.f32 %v3880, 0.33
        %v3952 = vmul.f32 %v3723, 0.33
        %v3953 = vmul.f32 %v3725, 0.33
        %v3954 = vmul.f32 %v3884, 0.33
        %v3955 = vmul.f32 %v3886, 0.33
        %v3956 = vmul.f32 %v3729, 0.33
        %v3957 = vmul.f32 %v3731, 0.33
        %v3958 = vmul.f32 %v3890, 0.33
        %v3959 = vmul.f32 %v3892, 0.33
        %v3960 = vmul.f32 %v3735, 0.33
        %v3961 = vmul.f32 %v3737, 0.33
        %v3962 = vmul.f32 %v3896, 0.33
        %v3963 = vmul.f32 %v3898, 0.33
        %v3964 = vmax.f32 %v3645, %v3900
        %v3965 = vmax.f32 %v3647, %v3901
        %v3966 = vmax.f32 %v3806, %v3902
        %v3967 = vmax.f32 %v3808, %v3903
        %v3968 = vmax.f32 %v3651, %v3904
        %v3969 = vmax.f32 %v3653, %v3905
        %v3970 = vmax.f32 %v3812, %v3906
        %v3971 = vmax.f32 %v3814, %v3907
        %v3972 = vmax.f32 %v3657, %v3908
        %v3973 = vmax.f32 %v3659, %v3909
        %v3974 = vmax.f32 %v3818, %v3910
        %v3975 = vmax.f32 %v3820, %v3911
        %v3976 = vmax.f32 %v3663, %v3912
        %v3977 = vmax.f32 %v3665, %v3913
        %v3978 = vmax.f32 %v3824, %v3914
        %v3979 = vmax.f32 %v3826, %v3915
        %v3980 = vmax.f32 %v3669, %v3916
        %v3981 = vmax.f32 %v3671, %v3917
        %v3982 = vmax.f32 %v3830, %v3918
        %v3983 = vmax.f32 %v3832, %v3919
        %v3984 = vmax.f32 %v3675, %v3920
        %v3985 = vmax.f32 %v3677, %v3921
        %v3986 = vmax.f32 %v3836, %v3922
        %v3987 = vmax.f32 %v3838, %v3923
        %v3988 = vmax.f32 %v3681, %v3924
        %v3989 = vmax.f32 %v3683, %v3925
        %v3990 = vmax.f32 %v3842, %v3926
        %v3991 = vmax.f32 %v3844, %v3927
        %v3992 = vmax.f32 %v3687, %v3928
        %v3993 = vmax.f32 %v3689, %v3929
        %v3994 = vmax.f32 %v3848, %v3930
        %v3995 = vmax.f32 %v3850, %v3931
        %v3996 = vmax.f32 %v3693, %v3932
        %v3997 = vmax.f32 %v3695, %v3933
        %v3998 = vmax.f32 %v3854, %v3934
        %v3999 = vmax.f32 %v3856, %v3935
        %v4000 = vmax.f32 %v3699, %v3936
        %v4001 = vmax.f32 %v3701, %v3937
        %v4002 = vmax.f32 %v3860, %v3938
        %v4003 = vmax.f32 %v3862, %v3939
        %v4004 = vmax.f32 %v3705, %v3940
        %v4005 = vmax.f32 %v3707, %v3941
        %v4006 = vmax.f32 %v3866, %v3942
        %v4007 = vmax.f32 %v3868, %v3943
        %v4008 = vmax.f32 %v3711, %v3944
        %v4009 = vmax.f32 %v3713, %v3945
        %v4010 = vmax.f32 %v3872, %v3946
        %v4011 = vmax.f32 %v3874, %v3947
        %v4012 = vmax.f32 %v3717, %v3948
        %v4013 = vmax.f32 %v3719, %v3949
        %v4014 = vmax.f32 %v3878, %v3950
        %v4015 = vmax.f32 %v3880, %v3951
        %v4016 = vmax.f32 %v3723, %v3952
        %v4017 = vmax.f32 %v3725, %v3953
        %v4018 = vmax.f32 %v3884, %v3954
        %v4019 = vmax.f32 %v3886, %v3955
        %v4020 = vmax.f32 %v3729, %v3956
        %v4021 = vmax.f32 %v3731, %v3957
        %v4022 = vmax.f32 %v3890, %v3958
        %v4023 = vmax.f32 %v3892, %v3959
        %v4024 = vmax.f32 %v3735, %v3960
        %v4025 = vmax.f32 %v3737, %v3961
        %v4026 = vmax.f32 %v3896, %v3962
        %v4027 = vmax.f32 %v3898, %v3963
        %v4028 = vld [vmem:[#allocation15] sm:$0xff]
        %v4029 = vld [vmem:[%s12] sm:$0xff]
        %4031 = vset.pattern.permute.xlu0 0
        %4032 = vperm.xlu0 %4031, %v4029
        %v4033 = vpop.permute.xlu0 %4032
        %4035 = vmatprep.subr.mxu0 %v3173
        %4036 = vmatpush1.msra.mxu0 %v3172
        %4037 = vmatprep.subr.mxu0 %v3169
        %4038 = vmatpush1.msra.mxu0 %v3168
        %4039 = vmatprep.subr.mxu0 %v3165
        %4040 = vmatpush1.msra.mxu0 %v3164
        %4041 = vmatprep.subr.mxu0 %v3161
        %4042 = vmatpush1.msra.mxu0 %v3160
        %4043 = vmatprep.subr.mxu0 %v3157
        %4044 = vmatpush1.msra.mxu0 %v3156
        %4045 = vmatprep.subr.mxu0 %v3153
        %4046 = vmatpush1.msra.mxu0 %v3152
        %4047 = vmatprep.subr.mxu0 %v3149
        %4048 = vmatpush1.msra.mxu0 %v3148
        %4049 = vmatprep.subr.mxu0 %v3145
        %4050 = vmatpush1.msra.mxu0 %v3144
        %4051 = vmatprep.subr.mxu0 %v3141
        %4052 = vmatpush1.msra.mxu0 %v3140
        %4053 = vmatprep.subr.mxu0 %v3137
        %4054 = vmatpush1.msra.mxu0 %v3136
        %4055 = vmatprep.subr.mxu0 %v3133
        %4056 = vmatpush1.msra.mxu0 %v3132
        %4057 = vmatprep.subr.mxu0 %v3129
        %4058 = vmatpush1.msra.mxu0 %v3128
        %4059 = vmatprep.subr.mxu0 %v3125
        %4060 = vmatpush1.msra.mxu0 %v3124
        %4061 = vmatprep.subr.mxu0 %v3121
        %4062 = vmatpush1.msra.mxu0 %v3120
        %4063 = vmatprep.subr.mxu0 %v3117
        %4064 = vmatpush1.msra.mxu0 %v3116
        %4065 = vmatprep.subr.mxu0 %v3113
        %4066 = vmatpush1.msra.mxu0 %v3112
        %4067 = vmatprep.subr.mxu0 0.0
        %4068 = vmatpush2.msra.mxu0 0.0
        %4069 = vmatprep.subr.mxu0 0.0
        %4070 = vmatpush2.msra.mxu0 0.0
        %4071 = vmatprep.subr.mxu0 0.0
        %4072 = vmatpush2.msra.mxu0 0.0
        %4073 = vmatprep.subr.mxu0 0.0
        %4074 = vmatpush2.msra.mxu0 0.0
        %4075 = vmatprep.subr.mxu0 0.0
        %4076 = vmatpush2.msra.mxu0 0.0
        %4077 = vmatprep.subr.mxu0 0.0
        %4078 = vmatpush2.msra.mxu0 0.0
        %4079 = vmatprep.subr.mxu0 0.0
        %4080 = vmatpush2.msra.mxu0 0.0
        %4081 = vmatprep.subr.mxu0 0.0
        %4082 = vmatpush2.msra.mxu0 0.0
        %4083 = vmatprep.subr.mxu0 0.0
        %4084 = vmatpush2.msra.mxu0 0.0
        %4085 = vmatprep.subr.mxu0 0.0
        %4086 = vmatpush2.msra.mxu0 0.0
        %4087 = vmatprep.subr.mxu0 0.0
        %4088 = vmatpush2.msra.mxu0 0.0
        %4089 = vmatprep.subr.mxu0 0.0
        %4090 = vmatpush2.msra.mxu0 0.0
        %4091 = vmatprep.subr.mxu0 0.0
        %4092 = vmatpush2.msra.mxu0 0.0
        %4093 = vmatprep.subr.mxu0 0.0
        %4094 = vmatpush2.msra.mxu0 0.0
        %4095 = vmatprep.subr.mxu0 0.0
        %4096 = vmatpush2.msra.mxu0 0.0
        %4097 = vmatprep.subr.mxu0 0.0
        %4098 = vmatpush2.msra.mxu0 0.0
        %4099 = vmatprep.mubr.f32.mxu0 0.0
        %4100 = vmatmul.mubr.f32.gmra.mxu0 %v4028
        %v4101 = vpop.f32.mrf.mxu0
        %v4102 = vadd.f32 %v4033, %v4101
        %v4103 = vpop.f32.mrf.mxu0
        %v4104 = vadd.f32 %v4033, %v4103
        %4105 = vdwg.mxu0
        %4106 = vmatprep.subr.mxu0 %v3175
        %4107 = vmatpush1.msra.mxu0 %v3174
        %4108 = vmatprep.subr.mxu0 %v3171
        %4109 = vmatpush1.msra.mxu0 %v3170
        %4110 = vmatprep.subr.mxu0 %v3167
        %4111 = vmatpush1.msra.mxu0 %v3166
        %4112 = vmatprep.subr.mxu0 %v3163
        %4113 = vmatpush1.msra.mxu0 %v3162
        %4114 = vmatprep.subr.mxu0 %v3159
        %4115 = vmatpush1.msra.mxu0 %v3158
        %4116 = vmatprep.subr.mxu0 %v3155
        %4117 = vmatpush1.msra.mxu0 %v3154
        %4118 = vmatprep.subr.mxu0 %v3151
        %4119 = vmatpush1.msra.mxu0 %v3150
        %4120 = vmatprep.subr.mxu0 %v3147
        %4121 = vmatpush1.msra.mxu0 %v3146
        %4122 = vmatprep.subr.mxu0 %v3143
        %4123 = vmatpush1.msra.mxu0 %v3142
        %4124 = vmatprep.subr.mxu0 %v3139
        %4125 = vmatpush1.msra.mxu0 %v3138
        %4126 = vmatprep.subr.mxu0 %v3135
        %4127 = vmatpush1.msra.mxu0 %v3134
        %4128 = vmatprep.subr.mxu0 %v3131
        %4129 = vmatpush1.msra.mxu0 %v3130
        %4130 = vmatprep.subr.mxu0 %v3127
        %4131 = vmatpush1.msra.mxu0 %v3126
        %4132 = vmatprep.subr.mxu0 %v3123
        %4133 = vmatpush1.msra.mxu0 %v3122
        %4134 = vmatprep.subr.mxu0 %v3119
        %4135 = vmatpush1.msra.mxu0 %v3118
        %4136 = vmatprep.subr.mxu0 %v3115
        %4137 = vmatpush1.msra.mxu0 %v3114
        %4138 = vmatprep.subr.mxu0 0.0
        %4139 = vmatpush2.msra.mxu0 0.0
        %4140 = vmatprep.subr.mxu0 0.0
        %4141 = vmatpush2.msra.mxu0 0.0
        %4142 = vmatprep.subr.mxu0 0.0
        %4143 = vmatpush2.msra.mxu0 0.0
        %4144 = vmatprep.subr.mxu0 0.0
        %4145 = vmatpush2.msra.mxu0 0.0
        %4146 = vmatprep.subr.mxu0 0.0
        %4147 = vmatpush2.msra.mxu0 0.0
        %4148 = vmatprep.subr.mxu0 0.0
        %4149 = vmatpush2.msra.mxu0 0.0
        %4150 = vmatprep.subr.mxu0 0.0
        %4151 = vmatpush2.msra.mxu0 0.0
        %4152 = vmatprep.subr.mxu0 0.0
        %4153 = vmatpush2.msra.mxu0 0.0
        %4154 = vmatprep.subr.mxu0 0.0
        %4155 = vmatpush2.msra.mxu0 0.0
        %4156 = vmatprep.subr.mxu0 0.0
        %4157 = vmatpush2.msra.mxu0 0.0
        %4158 = vmatprep.subr.mxu0 0.0
        %4159 = vmatpush2.msra.mxu0 0.0
        %4160 = vmatprep.subr.mxu0 0.0
        %4161 = vmatpush2.msra.mxu0 0.0
        %4162 = vmatprep.subr.mxu0 0.0
        %4163 = vmatpush2.msra.mxu0 0.0
        %4164 = vmatprep.subr.mxu0 0.0
        %4165 = vmatpush2.msra.mxu0 0.0
        %4166 = vmatprep.subr.mxu0 0.0
        %4167 = vmatpush2.msra.mxu0 0.0
        %4168 = vmatprep.subr.mxu0 0.0
        %4169 = vmatpush2.msra.mxu0 0.0
        %4170 = vmatprep.mubr.f32.mxu0 0.0
        %4171 = vmatmul.mubr.f32.gmra.mxu0 %v4028
        %v4172 = vpop.f32.mrf.mxu0
        %v4173 = vadd.f32 %v4033, %v4172
        %v4174 = vpop.f32.mrf.mxu0
        %v4175 = vadd.f32 %v4033, %v4174
        %4176 = vdwg.mxu0
        %v4177 = vld [vmem:[#allocation17] sm:$0xff]
        %v4178 = vld [vmem:[%s13] sm:$0xff]
        %4180 = vset.pattern.permute.xlu0 0
        %4181 = vperm.xlu0 %4180, %v4178
        %v4182 = vpop.permute.xlu0 %4181
        %4184 = vmatprep.subr.mxu0 %v4025
        %4185 = vmatpush1.msra.mxu0 %v4024
        %4186 = vmatprep.subr.mxu0 %v4021
        %4187 = vmatpush1.msra.mxu0 %v4020
        %4188 = vmatprep.subr.mxu0 %v4017
        %4189 = vmatpush1.msra.mxu0 %v4016
        %4190 = vmatprep.subr.mxu0 %v4013
        %4191 = vmatpush1.msra.mxu0 %v4012
        %4192 = vmatprep.subr.mxu0 %v4009
        %4193 = vmatpush1.msra.mxu0 %v4008
        %4194 = vmatprep.subr.mxu0 %v4005
        %4195 = vmatpush1.msra.mxu0 %v4004
        %4196 = vmatprep.subr.mxu0 %v4001
        %4197 = vmatpush1.msra.mxu0 %v4000
        %4198 = vmatprep.subr.mxu0 %v3997
        %4199 = vmatpush1.msra.mxu0 %v3996
        %4200 = vmatprep.subr.mxu0 %v3993
        %4201 = vmatpush1.msra.mxu0 %v3992
        %4202 = vmatprep.subr.mxu0 %v3989
        %4203 = vmatpush1.msra.mxu0 %v3988
        %4204 = vmatprep.subr.mxu0 %v3985
        %4205 = vmatpush1.msra.mxu0 %v3984
        %4206 = vmatprep.subr.mxu0 %v3981
        %4207 = vmatpush1.msra.mxu0 %v3980
        %4208 = vmatprep.subr.mxu0 %v3977
        %4209 = vmatpush1.msra.mxu0 %v3976
        %4210 = vmatprep.subr.mxu0 %v3973
        %4211 = vmatpush1.msra.mxu0 %v3972
        %4212 = vmatprep.subr.mxu0 %v3969
        %4213 = vmatpush1.msra.mxu0 %v3968
        %4214 = vmatprep.subr.mxu0 %v3965
        %4215 = vmatpush1.msra.mxu0 %v3964
        %4216 = vmatprep.subr.mxu0 0.0
        %4217 = vmatpush2.msra.mxu0 0.0
        %4218 = vmatprep.subr.mxu0 0.0
        %4219 = vmatpush2.msra.mxu0 0.0
        %4220 = vmatprep.subr.mxu0 0.0
        %4221 = vmatpush2.msra.mxu0 0.0
        %4222 = vmatprep.subr.mxu0 0.0
        %4223 = vmatpush2.msra.mxu0 0.0
        %4224 = vmatprep.subr.mxu0 0.0
        %4225 = vmatpush2.msra.mxu0 0.0
        %4226 = vmatprep.subr.mxu0 0.0
        %4227 = vmatpush2.msra.mxu0 0.0
        %4228 = vmatprep.subr.mxu0 0.0
        %4229 = vmatpush2.msra.mxu0 0.0
        %4230 = vmatprep.subr.mxu0 0.0
        %4231 = vmatpush2.msra.mxu0 0.0
        %4232 = vmatprep.subr.mxu0 0.0
        %4233 = vmatpush2.msra.mxu0 0.0
        %4234 = vmatprep.subr.mxu0 0.0
        %4235 = vmatpush2.msra.mxu0 0.0
        %4236 = vmatprep.subr.mxu0 0.0
        %4237 = vmatpush2.msra.mxu0 0.0
        %4238 = vmatprep.subr.mxu0 0.0
        %4239 = vmatpush2.msra.mxu0 0.0
        %4240 = vmatprep.subr.mxu0 0.0
        %4241 = vmatpush2.msra.mxu0 0.0
        %4242 = vmatprep.subr.mxu0 0.0
        %4243 = vmatpush2.msra.mxu0 0.0
        %4244 = vmatprep.subr.mxu0 0.0
        %4245 = vmatpush2.msra.mxu0 0.0
        %4246 = vmatprep.subr.mxu0 0.0
        %4247 = vmatpush2.msra.mxu0 0.0
        %4248 = vmatprep.mubr.f32.mxu0 0.0
        %4249 = vmatmul.mubr.f32.gmra.mxu0 %v4177
        %v4250 = vpop.f32.mrf.mxu0
        %v4251 = vadd.f32 %v4182, %v4250
        %v4252 = vpop.f32.mrf.mxu0
        %v4253 = vadd.f32 %v4182, %v4252
        %4254 = vdwg.mxu0
        %4255 = vmatprep.subr.mxu0 %v4027
        %4256 = vmatpush1.msra.mxu0 %v4026
        %4257 = vmatprep.subr.mxu0 %v4023
        %4258 = vmatpush1.msra.mxu0 %v4022
        %4259 = vmatprep.subr.mxu0 %v4019
        %4260 = vmatpush1.msra.mxu0 %v4018
        %4261 = vmatprep.subr.mxu0 %v4015
        %4262 = vmatpush1.msra.mxu0 %v4014
        %4263 = vmatprep.subr.mxu0 %v4011
        %4264 = vmatpush1.msra.mxu0 %v4010
        %4265 = vmatprep.subr.mxu0 %v4007
        %4266 = vmatpush1.msra.mxu0 %v4006
        %4267 = vmatprep.subr.mxu0 %v4003
        %4268 = vmatpush1.msra.mxu0 %v4002
        %4269 = vmatprep.subr.mxu0 %v3999
        %4270 = vmatpush1.msra.mxu0 %v3998
        %4271 = vmatprep.subr.mxu0 %v3995
        %4272 = vmatpush1.msra.mxu0 %v3994
        %4273 = vmatprep.subr.mxu0 %v3991
        %4274 = vmatpush1.msra.mxu0 %v3990
        %4275 = vmatprep.subr.mxu0 %v3987
        %4276 = vmatpush1.msra.mxu0 %v3986
        %4277 = vmatprep.subr.mxu0 %v3983
        %4278 = vmatpush1.msra.mxu0 %v3982
        %4279 = vmatprep.subr.mxu0 %v3979
        %4280 = vmatpush1.msra.mxu0 %v3978
        %4281 = vmatprep.subr.mxu0 %v3975
        %4282 = vmatpush1.msra.mxu0 %v3974
        %4283 = vmatprep.subr.mxu0 %v3971
        %4284 = vmatpush1.msra.mxu0 %v3970
        %4285 = vmatprep.subr.mxu0 %v3967
        %4286 = vmatpush1.msra.mxu0 %v3966
        %4287 = vmatprep.subr.mxu0 0.0
        %4288 = vmatpush2.msra.mxu0 0.0
        %4289 = vmatprep.subr.mxu0 0.0
        %4290 = vmatpush2.msra.mxu0 0.0
        %4291 = vmatprep.subr.mxu0 0.0
        %4292 = vmatpush2.msra.mxu0 0.0
        %4293 = vmatprep.subr.mxu0 0.0
        %4294 = vmatpush2.msra.mxu0 0.0
        %4295 = vmatprep.subr.mxu0 0.0
        %4296 = vmatpush2.msra.mxu0 0.0
        %4297 = vmatprep.subr.mxu0 0.0
        %4298 = vmatpush2.msra.mxu0 0.0
        %4299 = vmatprep.subr.mxu0 0.0
        %4300 = vmatpush2.msra.mxu0 0.0
        %4301 = vmatprep.subr.mxu0 0.0
        %4302 = vmatpush2.msra.mxu0 0.0
        %4303 = vmatprep.subr.mxu0 0.0
        %4304 = vmatpush2.msra.mxu0 0.0
        %4305 = vmatprep.subr.mxu0 0.0
        %4306 = vmatpush2.msra.mxu0 0.0
        %4307 = vmatprep.subr.mxu0 0.0
        %4308 = vmatpush2.msra.mxu0 0.0
        %4309 = vmatprep.subr.mxu0 0.0
        %4310 = vmatpush2.msra.mxu0 0.0
        %4311 = vmatprep.subr.mxu0 0.0
        %4312 = vmatpush2.msra.mxu0 0.0
        %4313 = vmatprep.subr.mxu0 0.0
        %4314 = vmatpush2.msra.mxu0 0.0
        %4315 = vmatprep.subr.mxu0 0.0
        %4316 = vmatpush2.msra.mxu0 0.0
        %4317 = vmatprep.subr.mxu0 0.0
        %4318 = vmatpush2.msra.mxu0 0.0
        %4319 = vmatprep.mubr.f32.mxu0 0.0
        %4320 = vmatmul.mubr.f32.gmra.mxu0 %v4177
        %v4321 = vpop.f32.mrf.mxu0
        %v4322 = vadd.f32 %v4182, %v4321
        %v4323 = vpop.f32.mrf.mxu0
        %v4324 = vadd.f32 %v4182, %v4323
        %4325 = vdwg.mxu0
        %v4330 = vcombine.low %v4102, %v4104
        %v4331 = vcombine.high %v4102, %v4104
        %v4332 = vcombine.low %v4173, %v4175
        %v4333 = vcombine.high %v4173, %v4175
        %v4335 = vunpack.c.l.s4 1966171168
        %v4336 = vunpack.c.0.s8 %v4335
        %v4337 = vlaneseq
        %v4338 = vshrl.u32 %v4337, 7
        %v4339 = vsub.s32 %v4336, %v4338
        %v4340 = vrot.slane %v4330, %v4339
        %v4342 = vunpack.c.l.s4 1966171168
        %v4343 = vunpack.c.0.s8 %v4342
        %v4344 = vlaneseq
        %v4345 = vshrl.u32 %v4344, 7
        %v4346 = vsub.s32 %v4343, %v4345
        %v4347 = vrot.slane %v4331, %v4346
        %v4349 = vunpack.c.l.s4 1966171168
        %v4350 = vunpack.c.0.s8 %v4349
        %v4351 = vlaneseq
        %v4352 = vshrl.u32 %v4351, 7
        %v4353 = vsub.s32 %v4350, %v4352
        %v4354 = vrot.slane %v4332, %v4353
        %v4356 = vunpack.c.l.s4 1966171168
        %v4357 = vunpack.c.0.s8 %v4356
        %v4358 = vlaneseq
        %v4359 = vshrl.u32 %v4358, 7
        %v4360 = vsub.s32 %v4357, %v4359
        %v4361 = vrot.slane %v4333, %v4360
        %v4362 = vcombine.low %v4340, %v4354
        %v4363 = vcombine.high %v4340, %v4354
        %v4364 = vcombine.low %v4347, %v4361
        %v4365 = vcombine.high %v4347, %v4361
        %v4367 = vunpack.c.l.s4 1966171168
        %v4368 = vunpack.c.0.s8 %v4367
        %v4369 = vlaneseq
        %v4370 = vshrl.u32 %v4369, 7
        %v4371 = vsub.s32 %v4368, %v4370
        %v4372 = vrot.slane %v4362, %v4371
        %v4374 = vunpack.c.l.s4 1966171168
        %v4375 = vunpack.c.0.s8 %v4374
        %v4376 = vlaneseq
        %v4377 = vshrl.u32 %v4376, 7
        %v4378 = vsub.s32 %v4375, %v4377
        %v4379 = vrot.slane %v4364, %v4378
        %v4381 = vunpack.c.l.s4 1966171168
        %v4382 = vunpack.c.0.s8 %v4381
        %v4383 = vlaneseq
        %v4384 = vshrl.u32 %v4383, 7
        %v4385 = vsub.s32 %v4382, %v4384
        %v4386 = vrot.slane %v4363, %v4385
        %v4388 = vunpack.c.l.s4 1966171168
        %v4389 = vunpack.c.0.s8 %v4388
        %v4390 = vlaneseq
        %v4391 = vshrl.u32 %v4390, 7
        %v4392 = vsub.s32 %v4389, %v4391
        %v4393 = vrot.slane %v4365, %v4392
        %v4394 = vcombine.high %v4372, %v4372
        %v4395 = vcombine.high %v4379, %v4379
        %v4396 = vcombine.high %v4386, %v4386
        %v4397 = vcombine.high %v4393, %v4393
        %v4398 = vlaneseq
        %v4399 = vshrl.u32 %v4398, 7
        %v4400 = vsub.s32 0, %v4399
        %v4401 = vrot.slane %v4372, %v4400
        %v4402 = vlaneseq
        %v4403 = vshrl.u32 %v4402, 7
        %v4404 = vsub.s32 1, %v4403
        %v4405 = vrot.slane %v4372, %v4404
        %v4406 = vlaneseq
        %v4407 = vshrl.u32 %v4406, 7
        %v4408 = vsub.s32 2, %v4407
        %v4409 = vrot.slane %v4372, %v4408
        %v4410 = vlaneseq
        %v4411 = vshrl.u32 %v4410, 7
        %v4412 = vsub.s32 3, %v4411
        %v4413 = vrot.slane %v4372, %v4412
        %v4414 = vlaneseq
        %v4415 = vshrl.u32 %v4414, 7
        %v4416 = vsub.s32 0, %v4415
        %v4417 = vrot.slane %v4386, %v4416
        %v4418 = vlaneseq
        %v4419 = vshrl.u32 %v4418, 7
        %v4420 = vsub.s32 1, %v4419
        %v4421 = vrot.slane %v4386, %v4420
        %v4422 = vlaneseq
        %v4423 = vshrl.u32 %v4422, 7
        %v4424 = vsub.s32 2, %v4423
        %v4425 = vrot.slane %v4386, %v4424
        %v4426 = vlaneseq
        %v4427 = vshrl.u32 %v4426, 7
        %v4428 = vsub.s32 3, %v4427
        %v4429 = vrot.slane %v4386, %v4428
        %v4430 = vlaneseq
        %v4431 = vshrl.u32 %v4430, 7
        %v4432 = vsub.s32 0, %v4431
        %v4433 = vrot.slane %v4394, %v4432
        %v4434 = vlaneseq
        %v4435 = vshrl.u32 %v4434, 7
        %v4436 = vsub.s32 1, %v4435
        %v4437 = vrot.slane %v4394, %v4436
        %v4438 = vlaneseq
        %v4439 = vshrl.u32 %v4438, 7
        %v4440 = vsub.s32 2, %v4439
        %v4441 = vrot.slane %v4394, %v4440
        %v4442 = vlaneseq
        %v4443 = vshrl.u32 %v4442, 7
        %v4444 = vsub.s32 3, %v4443
        %v4445 = vrot.slane %v4394, %v4444
        %v4446 = vlaneseq
        %v4447 = vshrl.u32 %v4446, 7
        %v4448 = vsub.s32 0, %v4447
        %v4449 = vrot.slane %v4396, %v4448
        %v4450 = vlaneseq
        %v4451 = vshrl.u32 %v4450, 7
        %v4452 = vsub.s32 1, %v4451
        %v4453 = vrot.slane %v4396, %v4452
        %v4454 = vlaneseq
        %v4455 = vshrl.u32 %v4454, 7
        %v4456 = vsub.s32 2, %v4455
        %v4457 = vrot.slane %v4396, %v4456
        %v4458 = vlaneseq
        %v4459 = vshrl.u32 %v4458, 7
        %v4460 = vsub.s32 3, %v4459
        %v4461 = vrot.slane %v4396, %v4460
        %v4462 = vlaneseq
        %v4463 = vshrl.u32 %v4462, 7
        %v4464 = vsub.s32 0, %v4463
        %v4465 = vrot.slane %v4379, %v4464
        %v4466 = vlaneseq
        %v4467 = vshrl.u32 %v4466, 7
        %v4468 = vsub.s32 1, %v4467
        %v4469 = vrot.slane %v4379, %v4468
        %v4470 = vlaneseq
        %v4471 = vshrl.u32 %v4470, 7
        %v4472 = vsub.s32 2, %v4471
        %v4473 = vrot.slane %v4379, %v4472
        %v4474 = vlaneseq
        %v4475 = vshrl.u32 %v4474, 7
        %v4476 = vsub.s32 3, %v4475
        %v4477 = vrot.slane %v4379, %v4476
        %v4478 = vlaneseq
        %v4479 = vshrl.u32 %v4478, 7
        %v4480 = vsub.s32 0, %v4479
        %v4481 = vrot.slane %v4393, %v4480
        %v4482 = vlaneseq
        %v4483 = vshrl.u32 %v4482, 7
        %v4484 = vsub.s32 1, %v4483
        %v4485 = vrot.slane %v4393, %v4484
        %v4486 = vlaneseq
        %v4487 = vshrl.u32 %v4486, 7
        %v4488 = vsub.s32 2, %v4487
        %v4489 = vrot.slane %v4393, %v4488
        %v4490 = vlaneseq
        %v4491 = vshrl.u32 %v4490, 7
        %v4492 = vsub.s32 3, %v4491
        %v4493 = vrot.slane %v4393, %v4492
        %v4494 = vlaneseq
        %v4495 = vshrl.u32 %v4494, 7
        %v4496 = vsub.s32 0, %v4495
        %v4497 = vrot.slane %v4395, %v4496
        %v4498 = vlaneseq
        %v4499 = vshrl.u32 %v4498, 7
        %v4500 = vsub.s32 1, %v4499
        %v4501 = vrot.slane %v4395, %v4500
        %v4502 = vlaneseq
        %v4503 = vshrl.u32 %v4502, 7
        %v4504 = vsub.s32 2, %v4503
        %v4505 = vrot.slane %v4395, %v4504
        %v4506 = vlaneseq
        %v4507 = vshrl.u32 %v4506, 7
        %v4508 = vsub.s32 3, %v4507
        %v4509 = vrot.slane %v4395, %v4508
        %v4510 = vlaneseq
        %v4511 = vshrl.u32 %v4510, 7
        %v4512 = vsub.s32 0, %v4511
        %v4513 = vrot.slane %v4397, %v4512
        %v4514 = vlaneseq
        %v4515 = vshrl.u32 %v4514, 7
        %v4516 = vsub.s32 1, %v4515
        %v4517 = vrot.slane %v4397, %v4516
        %v4518 = vlaneseq
        %v4519 = vshrl.u32 %v4518, 7
        %v4520 = vsub.s32 2, %v4519
        %v4521 = vrot.slane %v4397, %v4520
        %v4522 = vlaneseq
        %v4523 = vshrl.u32 %v4522, 7
        %v4524 = vsub.s32 3, %v4523
        %v4525 = vrot.slane %v4397, %v4524
        %v4558 = vmul.f32 %v4401, %v1042
        %v4559 = vmul.f32 %v4405, %v1043
        %v4560 = vmul.f32 %v4409, %v1044
        %v4561 = vmul.f32 %v4413, %v1045
        %v4562 = vmul.f32 %v4401, %v1046
        %v4563 = vmul.f32 %v4405, %v1047
        %v4564 = vmul.f32 %v4409, %v1048
        %v4565 = vmul.f32 %v4413, %v1049
        %v4566 = vmul.f32 %v4417, %v1050
        %v4567 = vmul.f32 %v4421, %v1051
        %v4568 = vmul.f32 %v4425, %v1052
        %v4569 = vmul.f32 %v4429, %v1053
        %v4570 = vmul.f32 %v4417, %v1054
        %v4571 = vmul.f32 %v4421, %v1055
        %v4572 = vmul.f32 %v4425, %v1056
        %v4573 = vmul.f32 %v4429, %v1057
        %v4574 = vmul.f32 %v4433, %v1058
        %v4575 = vmul.f32 %v4437, %v1059
        %v4576 = vmul.f32 %v4441, %v1060
        %v4577 = vmul.f32 %v4445, %v1061
        %v4578 = vmul.f32 %v4433, %v1062
        %v4579 = vmul.f32 %v4437, %v1063
        %v4580 = vmul.f32 %v4441, %v1064
        %v4581 = vmul.f32 %v4445, %v1065
        %v4582 = vmul.f32 %v4449, %v1066
        %v4583 = vmul.f32 %v4453, %v1067
        %v4584 = vmul.f32 %v4457, %v1068
        %v4585 = vmul.f32 %v4461, %v1069
        %v4586 = vmul.f32 %v4449, %v1070
        %v4587 = vmul.f32 %v4453, %v1071
        %v4588 = vmul.f32 %v4457, %v1072
        %v4589 = vmul.f32 %v4461, %v1073
        %v4590 = vmul.f32 %v4465, %v1074
        %v4591 = vmul.f32 %v4469, %v1075
        %v4592 = vmul.f32 %v4473, %v1076
        %v4593 = vmul.f32 %v4477, %v1077
        %v4594 = vmul.f32 %v4465, %v1078
        %v4595 = vmul.f32 %v4469, %v1079
        %v4596 = vmul.f32 %v4473, %v1080
        %v4597 = vmul.f32 %v4477, %v1081
        %v4598 = vmul.f32 %v4481, %v1082
        %v4599 = vmul.f32 %v4485, %v1083
        %v4600 = vmul.f32 %v4489, %v1084
        %v4601 = vmul.f32 %v4493, %v1085
        %v4602 = vmul.f32 %v4481, %v1086
        %v4603 = vmul.f32 %v4485, %v1087
        %v4604 = vmul.f32 %v4489, %v1088
        %v4605 = vmul.f32 %v4493, %v1089
        %v4606 = vmul.f32 %v4497, %v1090
        %v4607 = vmul.f32 %v4501, %v1091
        %v4608 = vmul.f32 %v4505, %v1092
        %v4609 = vmul.f32 %v4509, %v1093
        %v4610 = vmul.f32 %v4497, %v1094
        %v4611 = vmul.f32 %v4501, %v1095
        %v4612 = vmul.f32 %v4505, %v1096
        %v4613 = vmul.f32 %v4509, %v1097
        %v4614 = vmul.f32 %v4513, %v1098
        %v4615 = vmul.f32 %v4517, %v1099
        %v4616 = vmul.f32 %v4521, %v1100
        %v4617 = vmul.f32 %v4525, %v1101
        %v4618 = vmul.f32 %v4513, %v1102
        %v4619 = vmul.f32 %v4517, %v1103
        %v4620 = vmul.f32 %v4521, %v1104
        %v4621 = vmul.f32 %v4525, %v1105
        %4622 = vmatprep.subr.mxu0 0.0
        %4623 = vmatpush1.msra.mxu0 %v977
        %4624 = vmatprep.subr.mxu0 0.0
        %4625 = vmatpush1.msra.mxu0 %v976
        %4626 = vmatprep.subr.mxu0 0.0
        %4627 = vmatpush1.msra.mxu0 %v975
        %4628 = vmatprep.subr.mxu0 0.0
        %4629 = vmatpush1.msra.mxu0 %v974
        %4630 = vmatprep.subr.mxu0 0.0
        %4631 = vmatpush1.msra.mxu0 %v973
        %4632 = vmatprep.subr.mxu0 0.0
        %4633 = vmatpush1.msra.mxu0 %v972
        %4634 = vmatprep.subr.mxu0 0.0
        %4635 = vmatpush1.msra.mxu0 %v971
        %4636 = vmatprep.subr.mxu0 0.0
        %4637 = vmatpush1.msra.mxu0 %v970
        %4638 = vmatprep.subr.mxu0 0.0
        %4639 = vmatpush1.msra.mxu0 %v969
        %4640 = vmatprep.subr.mxu0 0.0
        %4641 = vmatpush1.msra.mxu0 %v968
        %4642 = vmatprep.subr.mxu0 0.0
        %4643 = vmatpush1.msra.mxu0 %v967
        %4644 = vmatprep.subr.mxu0 0.0
        %4645 = vmatpush1.msra.mxu0 %v966
        %4646 = vmatprep.subr.mxu0 0.0
        %4647 = vmatpush1.msra.mxu0 %v965
        %4648 = vmatprep.subr.mxu0 0.0
        %4649 = vmatpush1.msra.mxu0 %v964
        %4650 = vmatprep.subr.mxu0 0.0
        %4651 = vmatpush1.msra.mxu0 %v963
        %4652 = vmatprep.subr.mxu0 0.0
        %4653 = vmatpush1.msra.mxu0 %v962
        %4654 = vmatprep.subr.mxu0 0.0
        %4655 = vmatpush2.msra.mxu0 %v993
        %4656 = vmatprep.subr.mxu0 0.0
        %4657 = vmatpush2.msra.mxu0 %v992
        %4658 = vmatprep.subr.mxu0 0.0
        %4659 = vmatpush2.msra.mxu0 %v991
        %4660 = vmatprep.subr.mxu0 0.0
        %4661 = vmatpush2.msra.mxu0 %v990
        %4662 = vmatprep.subr.mxu0 0.0
        %4663 = vmatpush2.msra.mxu0 %v989
        %4664 = vmatprep.subr.mxu0 0.0
        %4665 = vmatpush2.msra.mxu0 %v988
        %4666 = vmatprep.subr.mxu0 0.0
        %4667 = vmatpush2.msra.mxu0 %v987
        %4668 = vmatprep.subr.mxu0 0.0
        %4669 = vmatpush2.msra.mxu0 %v986
        %4670 = vmatprep.subr.mxu0 0.0
        %4671 = vmatpush2.msra.mxu0 %v985
        %4672 = vmatprep.subr.mxu0 0.0
        %4673 = vmatpush2.msra.mxu0 %v984
        %4674 = vmatprep.subr.mxu0 0.0
        %4675 = vmatpush2.msra.mxu0 %v983
        %4676 = vmatprep.subr.mxu0 0.0
        %4677 = vmatpush2.msra.mxu0 %v982
        %4678 = vmatprep.subr.mxu0 0.0
        %4679 = vmatpush2.msra.mxu0 %v981
        %4680 = vmatprep.subr.mxu0 0.0
        %4681 = vmatpush2.msra.mxu0 %v980
        %4682 = vmatprep.subr.mxu0 0.0
        %4683 = vmatpush2.msra.mxu0 %v979
        %4684 = vmatprep.subr.mxu0 0.0
        %4685 = vmatpush2.msra.mxu0 %v978
        %4686 = vmatprep.mubr.f32.mxu0 %v4559
        %4687 = vmatmul.mubr.f32.gmra.mxu0 %v4558
        %v4688 = vpop.f32.mrf.mxu0
        %v4689 = vadd.f32 0.0, %v4688
        %v4690 = vpop.f32.mrf.mxu0
        %4691 = vmatprep.mubr.f32.mxu0 %v4563
        %4692 = vmatmul.mubr.f32.gmra.mxu0 %v4562
        %v4693 = vpop.f32.mrf.mxu0
        %v4694 = vadd.f32 0.0, %v4693
        %v4695 = vpop.f32.mrf.mxu0
        %4696 = vmatprep.mubr.f32.mxu0 %v4567
        %4697 = vmatmul.mubr.f32.gmra.mxu0 %v4566
        %v4698 = vpop.f32.mrf.mxu0
        %v4699 = vadd.f32 0.0, %v4698
        %v4700 = vpop.f32.mrf.mxu0
        %4701 = vmatprep.mubr.f32.mxu0 %v4571
        %4702 = vmatmul.mubr.f32.gmra.mxu0 %v4570
        %v4703 = vpop.f32.mrf.mxu0
        %v4704 = vadd.f32 0.0, %v4703
        %v4705 = vpop.f32.mrf.mxu0
        %4706 = vmatprep.mubr.f32.mxu0 %v4575
        %4707 = vmatmul.mubr.f32.gmra.mxu0 %v4574
        %v4708 = vpop.f32.mrf.mxu0
        %v4709 = vadd.f32 0.0, %v4708
        %v4710 = vpop.f32.mrf.mxu0
        %4711 = vmatprep.mubr.f32.mxu0 %v4579
        %4712 = vmatmul.mubr.f32.gmra.mxu0 %v4578
        %v4713 = vpop.f32.mrf.mxu0
        %v4714 = vadd.f32 0.0, %v4713
        %v4715 = vpop.f32.mrf.mxu0
        %4716 = vmatprep.mubr.f32.mxu0 %v4583
        %4717 = vmatmul.mubr.f32.gmra.mxu0 %v4582
        %v4718 = vpop.f32.mrf.mxu0
        %v4719 = vadd.f32 0.0, %v4718
        %v4720 = vpop.f32.mrf.mxu0
        %4721 = vmatprep.mubr.f32.mxu0 %v4587
        %4722 = vmatmul.mubr.f32.gmra.mxu0 %v4586
        %v4723 = vpop.f32.mrf.mxu0
        %v4724 = vadd.f32 0.0, %v4723
        %v4725 = vpop.f32.mrf.mxu0
        %4726 = vmatprep.mubr.f32.mxu0 %v4591
        %4727 = vmatmul.mubr.f32.gmra.mxu0 %v4590
        %v4728 = vpop.f32.mrf.mxu0
        %v4729 = vadd.f32 0.0, %v4728
        %v4730 = vpop.f32.mrf.mxu0
        %4731 = vmatprep.mubr.f32.mxu0 %v4595
        %4732 = vmatmul.mubr.f32.gmra.mxu0 %v4594
        %v4733 = vpop.f32.mrf.mxu0
        %v4734 = vadd.f32 0.0, %v4733
        %v4735 = vpop.f32.mrf.mxu0
        %4736 = vmatprep.mubr.f32.mxu0 %v4599
        %4737 = vmatmul.mubr.f32.gmra.mxu0 %v4598
        %v4738 = vpop.f32.mrf.mxu0
        %v4739 = vadd.f32 0.0, %v4738
        %v4740 = vpop.f32.mrf.mxu0
        %4741 = vmatprep.mubr.f32.mxu0 %v4603
        %4742 = vmatmul.mubr.f32.gmra.mxu0 %v4602
        %v4743 = vpop.f32.mrf.mxu0
        %v4744 = vadd.f32 0.0, %v4743
        %v4745 = vpop.f32.mrf.mxu0
        %4746 = vmatprep.mubr.f32.mxu0 %v4607
        %4747 = vmatmul.mubr.f32.gmra.mxu0 %v4606
        %v4748 = vpop.f32.mrf.mxu0
        %v4749 = vadd.f32 0.0, %v4748
        %v4750 = vpop.f32.mrf.mxu0
        %4751 = vmatprep.mubr.f32.mxu0 %v4611
        %4752 = vmatmul.mubr.f32.gmra.mxu0 %v4610
        %v4753 = vpop.f32.mrf.mxu0
        %v4754 = vadd.f32 0.0, %v4753
        %v4755 = vpop.f32.mrf.mxu0
        %4756 = vmatprep.mubr.f32.mxu0 %v4615
        %4757 = vmatmul.mubr.f32.gmra.mxu0 %v4614
        %v4758 = vpop.f32.mrf.mxu0
        %v4759 = vadd.f32 0.0, %v4758
        %v4760 = vpop.f32.mrf.mxu0
        %4761 = vmatprep.mubr.f32.mxu0 %v4619
        %4762 = vmatmul.mubr.f32.gmra.mxu0 %v4618
        %v4763 = vpop.f32.mrf.mxu0
        %v4764 = vadd.f32 0.0, %v4763
        %v4765 = vpop.f32.mrf.mxu0
        %4766 = vdwg.mxu0
        %4767 = vmatprep.subr.mxu0 0.0
        %4768 = vmatpush1.msra.mxu0 %v1009
        %4769 = vmatprep.subr.mxu0 0.0
        %4770 = vmatpush1.msra.mxu0 %v1008
        %4771 = vmatprep.subr.mxu0 0.0
        %4772 = vmatpush1.msra.mxu0 %v1007
        %4773 = vmatprep.subr.mxu0 0.0
        %4774 = vmatpush1.msra.mxu0 %v1006
        %4775 = vmatprep.subr.mxu0 0.0
        %4776 = vmatpush1.msra.mxu0 %v1005
        %4777 = vmatprep.subr.mxu0 0.0
        %4778 = vmatpush1.msra.mxu0 %v1004
        %4779 = vmatprep.subr.mxu0 0.0
        %4780 = vmatpush1.msra.mxu0 %v1003
        %4781 = vmatprep.subr.mxu0 0.0
        %4782 = vmatpush1.msra.mxu0 %v1002
        %4783 = vmatprep.subr.mxu0 0.0
        %4784 = vmatpush1.msra.mxu0 %v1001
        %4785 = vmatprep.subr.mxu0 0.0
        %4786 = vmatpush1.msra.mxu0 %v1000
        %4787 = vmatprep.subr.mxu0 0.0
        %4788 = vmatpush1.msra.mxu0 %v999
        %4789 = vmatprep.subr.mxu0 0.0
        %4790 = vmatpush1.msra.mxu0 %v998
        %4791 = vmatprep.subr.mxu0 0.0
        %4792 = vmatpush1.msra.mxu0 %v997
        %4793 = vmatprep.subr.mxu0 0.0
        %4794 = vmatpush1.msra.mxu0 %v996
        %4795 = vmatprep.subr.mxu0 0.0
        %4796 = vmatpush1.msra.mxu0 %v995
        %4797 = vmatprep.subr.mxu0 0.0
        %4798 = vmatpush1.msra.mxu0 %v994
        %4799 = vmatprep.subr.mxu0 0.0
        %4800 = vmatpush2.msra.mxu0 %v1025
        %4801 = vmatprep.subr.mxu0 0.0
        %4802 = vmatpush2.msra.mxu0 %v1024
        %4803 = vmatprep.subr.mxu0 0.0
        %4804 = vmatpush2.msra.mxu0 %v1023
        %4805 = vmatprep.subr.mxu0 0.0
        %4806 = vmatpush2.msra.mxu0 %v1022
        %4807 = vmatprep.subr.mxu0 0.0
        %4808 = vmatpush2.msra.mxu0 %v1021
        %4809 = vmatprep.subr.mxu0 0.0
        %4810 = vmatpush2.msra.mxu0 %v1020
        %4811 = vmatprep.subr.mxu0 0.0
        %4812 = vmatpush2.msra.mxu0 %v1019
        %4813 = vmatprep.subr.mxu0 0.0
        %4814 = vmatpush2.msra.mxu0 %v1018
        %4815 = vmatprep.subr.mxu0 0.0
        %4816 = vmatpush2.msra.mxu0 %v1017
        %4817 = vmatprep.subr.mxu0 0.0
        %4818 = vmatpush2.msra.mxu0 %v1016
        %4819 = vmatprep.subr.mxu0 0.0
        %4820 = vmatpush2.msra.mxu0 %v1015
        %4821 = vmatprep.subr.mxu0 0.0
        %4822 = vmatpush2.msra.mxu0 %v1014
        %4823 = vmatprep.subr.mxu0 0.0
        %4824 = vmatpush2.msra.mxu0 %v1013
        %4825 = vmatprep.subr.mxu0 0.0
        %4826 = vmatpush2.msra.mxu0 %v1012
        %4827 = vmatprep.subr.mxu0 0.0
        %4828 = vmatpush2.msra.mxu0 %v1011
        %4829 = vmatprep.subr.mxu0 0.0
        %4830 = vmatpush2.msra.mxu0 %v1010
        %4831 = vmatprep.mubr.f32.mxu0 %v4561
        %4832 = vmatmul.mubr.f32.gmra.mxu0 %v4560
        %v4833 = vpop.f32.mrf.mxu0
        %v4834 = vadd.f32 %v4689, %v4833
        %v4835 = vpop.f32.mrf.mxu0
        %4836 = vmatprep.mubr.f32.mxu0 %v4565
        %4837 = vmatmul.mubr.f32.gmra.mxu0 %v4564
        %v4838 = vpop.f32.mrf.mxu0
        %v4839 = vadd.f32 %v4694, %v4838
        %v4840 = vpop.f32.mrf.mxu0
        %4841 = vmatprep.mubr.f32.mxu0 %v4569
        %4842 = vmatmul.mubr.f32.gmra.mxu0 %v4568
        %v4843 = vpop.f32.mrf.mxu0
        %v4844 = vadd.f32 %v4699, %v4843
        %v4845 = vpop.f32.mrf.mxu0
        %4846 = vmatprep.mubr.f32.mxu0 %v4573
        %4847 = vmatmul.mubr.f32.gmra.mxu0 %v4572
        %v4848 = vpop.f32.mrf.mxu0
        %v4849 = vadd.f32 %v4704, %v4848
        %v4850 = vpop.f32.mrf.mxu0
        %4851 = vmatprep.mubr.f32.mxu0 %v4577
        %4852 = vmatmul.mubr.f32.gmra.mxu0 %v4576
        %v4853 = vpop.f32.mrf.mxu0
        %v4854 = vadd.f32 %v4709, %v4853
        %v4855 = vpop.f32.mrf.mxu0
        %4856 = vmatprep.mubr.f32.mxu0 %v4581
        %4857 = vmatmul.mubr.f32.gmra.mxu0 %v4580
        %v4858 = vpop.f32.mrf.mxu0
        %v4859 = vadd.f32 %v4714, %v4858
        %v4860 = vpop.f32.mrf.mxu0
        %4861 = vmatprep.mubr.f32.mxu0 %v4585
        %4862 = vmatmul.mubr.f32.gmra.mxu0 %v4584
        %v4863 = vpop.f32.mrf.mxu0
        %v4864 = vadd.f32 %v4719, %v4863
        %v4865 = vpop.f32.mrf.mxu0
        %4866 = vmatprep.mubr.f32.mxu0 %v4589
        %4867 = vmatmul.mubr.f32.gmra.mxu0 %v4588
        %v4868 = vpop.f32.mrf.mxu0
        %v4869 = vadd.f32 %v4724, %v4868
        %v4870 = vpop.f32.mrf.mxu0
        %4871 = vmatprep.mubr.f32.mxu0 %v4593
        %4872 = vmatmul.mubr.f32.gmra.mxu0 %v4592
        %v4873 = vpop.f32.mrf.mxu0
        %v4874 = vadd.f32 %v4729, %v4873
        %v4875 = vpop.f32.mrf.mxu0
        %4876 = vmatprep.mubr.f32.mxu0 %v4597
        %4877 = vmatmul.mubr.f32.gmra.mxu0 %v4596
        %v4878 = vpop.f32.mrf.mxu0
        %v4879 = vadd.f32 %v4734, %v4878
        %v4880 = vpop.f32.mrf.mxu0
        %4881 = vmatprep.mubr.f32.mxu0 %v4601
        %4882 = vmatmul.mubr.f32.gmra.mxu0 %v4600
        %v4883 = vpop.f32.mrf.mxu0
        %v4884 = vadd.f32 %v4739, %v4883
        %v4885 = vpop.f32.mrf.mxu0
        %4886 = vmatprep.mubr.f32.mxu0 %v4605
        %4887 = vmatmul.mubr.f32.gmra.mxu0 %v4604
        %v4888 = vpop.f32.mrf.mxu0
        %v4889 = vadd.f32 %v4744, %v4888
        %v4890 = vpop.f32.mrf.mxu0
        %4891 = vmatprep.mubr.f32.mxu0 %v4609
        %4892 = vmatmul.mubr.f32.gmra.mxu0 %v4608
        %v4893 = vpop.f32.mrf.mxu0
        %v4894 = vadd.f32 %v4749, %v4893
        %v4895 = vpop.f32.mrf.mxu0
        %4896 = vmatprep.mubr.f32.mxu0 %v4613
        %4897 = vmatmul.mubr.f32.gmra.mxu0 %v4612
        %v4898 = vpop.f32.mrf.mxu0
        %v4899 = vadd.f32 %v4754, %v4898
        %v4900 = vpop.f32.mrf.mxu0
        %4901 = vmatprep.mubr.f32.mxu0 %v4617
        %4902 = vmatmul.mubr.f32.gmra.mxu0 %v4616
        %v4903 = vpop.f32.mrf.mxu0
        %v4904 = vadd.f32 %v4759, %v4903
        %v4905 = vpop.f32.mrf.mxu0
        %4906 = vmatprep.mubr.f32.mxu0 %v4621
        %4907 = vmatmul.mubr.f32.gmra.mxu0 %v4620
        %v4908 = vpop.f32.mrf.mxu0
        %v4909 = vadd.f32 %v4764, %v4908
        %v4910 = vpop.f32.mrf.mxu0
        %4911 = vdwg.mxu0
        %v4916 = vcombine.low %v4251, %v4253
        %v4917 = vcombine.high %v4251, %v4253
        %v4918 = vcombine.low %v4322, %v4324
        %v4919 = vcombine.high %v4322, %v4324
        %v4921 = vunpack.c.l.s4 1966171168
        %v4922 = vunpack.c.0.s8 %v4921
        %v4923 = vlaneseq
        %v4924 = vshrl.u32 %v4923, 7
        %v4925 = vsub.s32 %v4922, %v4924
        %v4926 = vrot.slane %v4916, %v4925
        %v4928 = vunpack.c.l.s4 1966171168
        %v4929 = vunpack.c.0.s8 %v4928
        %v4930 = vlaneseq
        %v4931 = vshrl.u32 %v4930, 7
        %v4932 = vsub.s32 %v4929, %v4931
        %v4933 = vrot.slane %v4917, %v4932
        %v4935 = vunpack.c.l.s4 1966171168
        %v4936 = vunpack.c.0.s8 %v4935
        %v4937 = vlaneseq
        %v4938 = vshrl.u32 %v4937, 7
        %v4939 = vsub.s32 %v4936, %v4938
        %v4940 = vrot.slane %v4918, %v4939
        %v4942 = vunpack.c.l.s4 1966171168
        %v4943 = vunpack.c.0.s8 %v4942
        %v4944 = vlaneseq
        %v4945 = vshrl.u32 %v4944, 7
        %v4946 = vsub.s32 %v4943, %v4945
        %v4947 = vrot.slane %v4919, %v4946
        %v4948 = vcombine.low %v4926, %v4940
        %v4949 = vcombine.high %v4926, %v4940
        %v4950 = vcombine.low %v4933, %v4947
        %v4951 = vcombine.high %v4933, %v4947
        %v4953 = vunpack.c.l.s4 1966171168
        %v4954 = vunpack.c.0.s8 %v4953
        %v4955 = vlaneseq
        %v4956 = vshrl.u32 %v4955, 7
        %v4957 = vsub.s32 %v4954, %v4956
        %v4958 = vrot.slane %v4948, %v4957
        %v4960 = vunpack.c.l.s4 1966171168
        %v4961 = vunpack.c.0.s8 %v4960
        %v4962 = vlaneseq
        %v4963 = vshrl.u32 %v4962, 7
        %v4964 = vsub.s32 %v4961, %v4963
        %v4965 = vrot.slane %v4950, %v4964
        %v4967 = vunpack.c.l.s4 1966171168
        %v4968 = vunpack.c.0.s8 %v4967
        %v4969 = vlaneseq
        %v4970 = vshrl.u32 %v4969, 7
        %v4971 = vsub.s32 %v4968, %v4970
        %v4972 = vrot.slane %v4949, %v4971
        %v4974 = vunpack.c.l.s4 1966171168
        %v4975 = vunpack.c.0.s8 %v4974
        %v4976 = vlaneseq
        %v4977 = vshrl.u32 %v4976, 7
        %v4978 = vsub.s32 %v4975, %v4977
        %v4979 = vrot.slane %v4951, %v4978
        %v4980 = vcombine.high %v4958, %v4958
        %v4981 = vcombine.high %v4965, %v4965
        %v4982 = vcombine.high %v4972, %v4972
        %v4983 = vcombine.high %v4979, %v4979
        %v4984 = vlaneseq
        %v4985 = vshrl.u32 %v4984, 7
        %v4986 = vsub.s32 0, %v4985
        %v4987 = vrot.slane %v4958, %v4986
        %v4988 = vlaneseq
        %v4989 = vshrl.u32 %v4988, 7
        %v4990 = vsub.s32 1, %v4989
        %v4991 = vrot.slane %v4958, %v4990
        %v4992 = vlaneseq
        %v4993 = vshrl.u32 %v4992, 7
        %v4994 = vsub.s32 2, %v4993
        %v4995 = vrot.slane %v4958, %v4994
        %v4996 = vlaneseq
        %v4997 = vshrl.u32 %v4996, 7
        %v4998 = vsub.s32 3, %v4997
        %v4999 = vrot.slane %v4958, %v4998
        %v5000 = vlaneseq
        %v5001 = vshrl.u32 %v5000, 7
        %v5002 = vsub.s32 0, %v5001
        %v5003 = vrot.slane %v4972, %v5002
        %v5004 = vlaneseq
        %v5005 = vshrl.u32 %v5004, 7
        %v5006 = vsub.s32 1, %v5005
        %v5007 = vrot.slane %v4972, %v5006
        %v5008 = vlaneseq
        %v5009 = vshrl.u32 %v5008, 7
        %v5010 = vsub.s32 2, %v5009
        %v5011 = vrot.slane %v4972, %v5010
        %v5012 = vlaneseq
        %v5013 = vshrl.u32 %v5012, 7
        %v5014 = vsub.s32 3, %v5013
        %v5015 = vrot.slane %v4972, %v5014
        %v5016 = vlaneseq
        %v5017 = vshrl.u32 %v5016, 7
        %v5018 = vsub.s32 0, %v5017
        %v5019 = vrot.slane %v4980, %v5018
        %v5020 = vlaneseq
        %v5021 = vshrl.u32 %v5020, 7
        %v5022 = vsub.s32 1, %v5021
        %v5023 = vrot.slane %v4980, %v5022
        %v5024 = vlaneseq
        %v5025 = vshrl.u32 %v5024, 7
        %v5026 = vsub.s32 2, %v5025
        %v5027 = vrot.slane %v4980, %v5026
        %v5028 = vlaneseq
        %v5029 = vshrl.u32 %v5028, 7
        %v5030 = vsub.s32 3, %v5029
        %v5031 = vrot.slane %v4980, %v5030
        %v5032 = vlaneseq
        %v5033 = vshrl.u32 %v5032, 7
        %v5034 = vsub.s32 0, %v5033
        %v5035 = vrot.slane %v4982, %v5034
        %v5036 = vlaneseq
        %v5037 = vshrl.u32 %v5036, 7
        %v5038 = vsub.s32 1, %v5037
        %v5039 = vrot.slane %v4982, %v5038
        %v5040 = vlaneseq
        %v5041 = vshrl.u32 %v5040, 7
        %v5042 = vsub.s32 2, %v5041
        %v5043 = vrot.slane %v4982, %v5042
        %v5044 = vlaneseq
        %v5045 = vshrl.u32 %v5044, 7
        %v5046 = vsub.s32 3, %v5045
        %v5047 = vrot.slane %v4982, %v5046
        %v5048 = vlaneseq
        %v5049 = vshrl.u32 %v5048, 7
        %v5050 = vsub.s32 0, %v5049
        %v5051 = vrot.slane %v4965, %v5050
        %v5052 = vlaneseq
        %v5053 = vshrl.u32 %v5052, 7
        %v5054 = vsub.s32 1, %v5053
        %v5055 = vrot.slane %v4965, %v5054
        %v5056 = vlaneseq
        %v5057 = vshrl.u32 %v5056, 7
        %v5058 = vsub.s32 2, %v5057
        %v5059 = vrot.slane %v4965, %v5058
        %v5060 = vlaneseq
        %v5061 = vshrl.u32 %v5060, 7
        %v5062 = vsub.s32 3, %v5061
        %v5063 = vrot.slane %v4965, %v5062
        %v5064 = vlaneseq
        %v5065 = vshrl.u32 %v5064, 7
        %v5066 = vsub.s32 0, %v5065
        %v5067 = vrot.slane %v4979, %v5066
        %v5068 = vlaneseq
        %v5069 = vshrl.u32 %v5068, 7
        %v5070 = vsub.s32 1, %v5069
        %v5071 = vrot.slane %v4979, %v5070
        %v5072 = vlaneseq
        %v5073 = vshrl.u32 %v5072, 7
        %v5074 = vsub.s32 2, %v5073
        %v5075 = vrot.slane %v4979, %v5074
        %v5076 = vlaneseq
        %v5077 = vshrl.u32 %v5076, 7
        %v5078 = vsub.s32 3, %v5077
        %v5079 = vrot.slane %v4979, %v5078
        %v5080 = vlaneseq
        %v5081 = vshrl.u32 %v5080, 7
        %v5082 = vsub.s32 0, %v5081
        %v5083 = vrot.slane %v4981, %v5082
        %v5084 = vlaneseq
        %v5085 = vshrl.u32 %v5084, 7
        %v5086 = vsub.s32 1, %v5085
        %v5087 = vrot.slane %v4981, %v5086
        %v5088 = vlaneseq
        %v5089 = vshrl.u32 %v5088, 7
        %v5090 = vsub.s32 2, %v5089
        %v5091 = vrot.slane %v4981, %v5090
        %v5092 = vlaneseq
        %v5093 = vshrl.u32 %v5092, 7
        %v5094 = vsub.s32 3, %v5093
        %v5095 = vrot.slane %v4981, %v5094
        %v5096 = vlaneseq
        %v5097 = vshrl.u32 %v5096, 7
        %v5098 = vsub.s32 0, %v5097
        %v5099 = vrot.slane %v4983, %v5098
        %v5100 = vlaneseq
        %v5101 = vshrl.u32 %v5100, 7
        %v5102 = vsub.s32 1, %v5101
        %v5103 = vrot.slane %v4983, %v5102
        %v5104 = vlaneseq
        %v5105 = vshrl.u32 %v5104, 7
        %v5106 = vsub.s32 2, %v5105
        %v5107 = vrot.slane %v4983, %v5106
        %v5108 = vlaneseq
        %v5109 = vshrl.u32 %v5108, 7
        %v5110 = vsub.s32 3, %v5109
        %v5111 = vrot.slane %v4983, %v5110
        %v5145 = vsel %vm2613, %v4834, 0
        %v5148 = vsel %vm2613, %v4839, 0
        %v5151 = vsel %vm2613, %v4844, 0
        %v5154 = vsel %vm2613, %v4849, 0
        %v5157 = vsel %vm2613, %v4854, 0
        %v5160 = vsel %vm2613, %v4859, 0
        %v5163 = vsel %vm2613, %v4864, 0
        %v5166 = vsel %vm2613, %v4869, 0
        %v5169 = vsel %vm2613, %v4874, 0
        %v5172 = vsel %vm2613, %v4879, 0
        %v5175 = vsel %vm2613, %v4884, 0
        %v5178 = vsel %vm2613, %v4889, 0
        %v5181 = vsel %vm2613, %v4894, 0
        %v5184 = vsel %vm2613, %v4899, 0
        %v5187 = vsel %vm2613, %v4904, 0
        %v5190 = vsel %vm2613, %v4909, 0
        %5192 = vmatprep.subr.mxu0 0.0
        %5193 = vmatpush1.msra.mxu0 0.0
        %5194 = vmatprep.subr.mxu0 0.0
        %5195 = vmatpush1.msra.mxu0 0.0
        %5196 = vmatprep.subr.mxu0 0.0
        %5197 = vmatpush1.msra.mxu0 0.0
        %5198 = vmatprep.subr.mxu0 0.0
        %5199 = vmatpush1.msra.mxu0 0.0
        %5200 = vmatprep.subr.mxu0 0.0
        %5201 = vmatpush1.msra.mxu0 0.0
        %5202 = vmatprep.subr.mxu0 0.0
        %5203 = vmatpush1.msra.mxu0 0.0
        %5204 = vmatprep.subr.mxu0 0.0
        %5205 = vmatpush1.msra.mxu0 0.0
        %5206 = vmatprep.subr.mxu0 0.0
        %5207 = vmatpush1.msra.mxu0 0.0
        %5208 = vmatprep.subr.mxu0 0.0
        %5209 = vmatpush1.msra.mxu0 0.0
        %5210 = vmatprep.subr.mxu0 0.0
        %5211 = vmatpush1.msra.mxu0 0.0
        %5212 = vmatprep.subr.mxu0 0.0
        %5213 = vmatpush1.msra.mxu0 0.0
        %5214 = vmatprep.subr.mxu0 0.0
        %5215 = vmatpush1.msra.mxu0 0.0
        %5216 = vmatprep.subr.mxu0 %v1039
        %5217 = vmatpush1.msra.mxu0 %v1038
        %5218 = vmatprep.subr.mxu0 %v1035
        %5219 = vmatpush1.msra.mxu0 %v1034
        %5220 = vmatprep.subr.mxu0 %v1031
        %5221 = vmatpush1.msra.mxu0 %v1030
        %5222 = vmatprep.subr.mxu0 %v1027
        %5223 = vmatpush1.msra.mxu0 %v1026
        %5224 = vmatprep.subr.mxu0 0.0
        %5225 = vmatpush2.msra.mxu0 0.0
        %5226 = vmatprep.subr.mxu0 0.0
        %5227 = vmatpush2.msra.mxu0 0.0
        %5228 = vmatprep.subr.mxu0 0.0
        %5229 = vmatpush2.msra.mxu0 0.0
        %5230 = vmatprep.subr.mxu0 0.0
        %5231 = vmatpush2.msra.mxu0 0.0
        %5232 = vmatprep.subr.mxu0 0.0
        %5233 = vmatpush2.msra.mxu0 0.0
        %5234 = vmatprep.subr.mxu0 0.0
        %5235 = vmatpush2.msra.mxu0 0.0
        %5236 = vmatprep.subr.mxu0 0.0
        %5237 = vmatpush2.msra.mxu0 0.0
        %5238 = vmatprep.subr.mxu0 0.0
        %5239 = vmatpush2.msra.mxu0 0.0
        %5240 = vmatprep.subr.mxu0 0.0
        %5241 = vmatpush2.msra.mxu0 0.0
        %5242 = vmatprep.subr.mxu0 0.0
        %5243 = vmatpush2.msra.mxu0 0.0
        %5244 = vmatprep.subr.mxu0 0.0
        %5245 = vmatpush2.msra.mxu0 0.0
        %5246 = vmatprep.subr.mxu0 0.0
        %5247 = vmatpush2.msra.mxu0 0.0
        %5248 = vmatprep.subr.mxu0 0.0
        %5249 = vmatpush2.msra.mxu0 0.0
        %5250 = vmatprep.subr.mxu0 0.0
        %5251 = vmatpush2.msra.mxu0 0.0
        %5252 = vmatprep.subr.mxu0 0.0
        %5253 = vmatpush2.msra.mxu0 0.0
        %5254 = vmatprep.subr.mxu0 0.0
        %5255 = vmatpush2.msra.mxu0 0.0
        %5256 = vmatprep.mubr.f32.mxu0 0.0
        %5257 = vmatmul.mubr.f32.gmra.mxu0 %v5145
        %v5258 = vpop.f32.mrf.mxu0
        %v5259 = vadd.f32 %v4987, %v5258
        %v5260 = vpop.f32.mrf.mxu0
        %v5261 = vadd.f32 %v4991, %v5260
        %5262 = vmatprep.mubr.f32.mxu0 0.0
        %5263 = vmatmul.mubr.f32.gmra.mxu0 %v5148
        %v5264 = vpop.f32.mrf.mxu0
        %v5265 = vadd.f32 %v4987, %v5264
        %v5266 = vpop.f32.mrf.mxu0
        %v5267 = vadd.f32 %v4991, %v5266
        %5268 = vmatprep.mubr.f32.mxu0 0.0
        %5269 = vmatmul.mubr.f32.gmra.mxu0 %v5151
        %v5270 = vpop.f32.mrf.mxu0
        %v5271 = vadd.f32 %v5003, %v5270
        %v5272 = vpop.f32.mrf.mxu0
        %v5273 = vadd.f32 %v5007, %v5272
        %5274 = vmatprep.mubr.f32.mxu0 0.0
        %5275 = vmatmul.mubr.f32.gmra.mxu0 %v5154
        %v5276 = vpop.f32.mrf.mxu0
        %v5277 = vadd.f32 %v5003, %v5276
        %v5278 = vpop.f32.mrf.mxu0
        %v5279 = vadd.f32 %v5007, %v5278
        %5280 = vmatprep.mubr.f32.mxu0 0.0
        %5281 = vmatmul.mubr.f32.gmra.mxu0 %v5157
        %v5282 = vpop.f32.mrf.mxu0
        %v5283 = vadd.f32 %v5019, %v5282
        %v5284 = vpop.f32.mrf.mxu0
        %v5285 = vadd.f32 %v5023, %v5284
        %5286 = vmatprep.mubr.f32.mxu0 0.0
        %5287 = vmatmul.mubr.f32.gmra.mxu0 %v5160
        %v5288 = vpop.f32.mrf.mxu0
        %v5289 = vadd.f32 %v5019, %v5288
        %v5290 = vpop.f32.mrf.mxu0
        %v5291 = vadd.f32 %v5023, %v5290
        %5292 = vmatprep.mubr.f32.mxu0 0.0
        %5293 = vmatmul.mubr.f32.gmra.mxu0 %v5163
        %v5294 = vpop.f32.mrf.mxu0
        %v5295 = vadd.f32 %v5035, %v5294
        %v5296 = vpop.f32.mrf.mxu0
        %v5297 = vadd.f32 %v5039, %v5296
        %5298 = vmatprep.mubr.f32.mxu0 0.0
        %5299 = vmatmul.mubr.f32.gmra.mxu0 %v5166
        %v5300 = vpop.f32.mrf.mxu0
        %v5301 = vadd.f32 %v5035, %v5300
        %v5302 = vpop.f32.mrf.mxu0
        %v5303 = vadd.f32 %v5039, %v5302
        %5304 = vmatprep.mubr.f32.mxu0 0.0
        %5305 = vmatmul.mubr.f32.gmra.mxu0 %v5169
        %v5306 = vpop.f32.mrf.mxu0
        %v5307 = vadd.f32 %v5051, %v5306
        %v5308 = vpop.f32.mrf.mxu0
        %v5309 = vadd.f32 %v5055, %v5308
        %5310 = vmatprep.mubr.f32.mxu0 0.0
        %5311 = vmatmul.mubr.f32.gmra.mxu0 %v5172
        %v5312 = vpop.f32.mrf.mxu0
        %v5313 = vadd.f32 %v5051, %v5312
        %v5314 = vpop.f32.mrf.mxu0
        %v5315 = vadd.f32 %v5055, %v5314
        %5316 = vmatprep.mubr.f32.mxu0 0.0
        %5317 = vmatmul.mubr.f32.gmra.mxu0 %v5175
        %v5318 = vpop.f32.mrf.mxu0
        %v5319 = vadd.f32 %v5067, %v5318
        %v5320 = vpop.f32.mrf.mxu0
        %v5321 = vadd.f32 %v5071, %v5320
        %5322 = vmatprep.mubr.f32.mxu0 0.0
        %5323 = vmatmul.mubr.f32.gmra.mxu0 %v5178
        %v5324 = vpop.f32.mrf.mxu0
        %v5325 = vadd.f32 %v5067, %v5324
        %v5326 = vpop.f32.mrf.mxu0
        %v5327 = vadd.f32 %v5071, %v5326
        %5328 = vmatprep.mubr.f32.mxu0 0.0
        %5329 = vmatmul.mubr.f32.gmra.mxu0 %v5181
        %v5330 = vpop.f32.mrf.mxu0
        %v5331 = vadd.f32 %v5083, %v5330
        %v5332 = vpop.f32.mrf.mxu0
        %v5333 = vadd.f32 %v5087, %v5332
        %5334 = vmatprep.mubr.f32.mxu0 0.0
        %5335 = vmatmul.mubr.f32.gmra.mxu0 %v5184
        %v5336 = vpop.f32.mrf.mxu0
        %v5337 = vadd.f32 %v5083, %v5336
        %v5338 = vpop.f32.mrf.mxu0
        %v5339 = vadd.f32 %v5087, %v5338
        %5340 = vmatprep.mubr.f32.mxu0 0.0
        %5341 = vmatmul.mubr.f32.gmra.mxu0 %v5187
        %v5342 = vpop.f32.mrf.mxu0
        %v5343 = vadd.f32 %v5099, %v5342
        %v5344 = vpop.f32.mrf.mxu0
        %v5345 = vadd.f32 %v5103, %v5344
        %5346 = vmatprep.mubr.f32.mxu0 0.0
        %5347 = vmatmul.mubr.f32.gmra.mxu0 %v5190
        %v5348 = vpop.f32.mrf.mxu0
        %v5349 = vadd.f32 %v5099, %v5348
        %v5350 = vpop.f32.mrf.mxu0
        %v5351 = vadd.f32 %v5103, %v5350
        %5352 = vdwg.mxu0
        %5353 = vmatprep.subr.mxu0 0.0
        %5354 = vmatpush1.msra.mxu0 0.0
        %5355 = vmatprep.subr.mxu0 0.0
        %5356 = vmatpush1.msra.mxu0 0.0
        %5357 = vmatprep.subr.mxu0 0.0
        %5358 = vmatpush1.msra.mxu0 0.0
        %5359 = vmatprep.subr.mxu0 0.0
        %5360 = vmatpush1.msra.mxu0 0.0
        %5361 = vmatprep.subr.mxu0 0.0
        %5362 = vmatpush1.msra.mxu0 0.0
        %5363 = vmatprep.subr.mxu0 0.0
        %5364 = vmatpush1.msra.mxu0 0.0
        %5365 = vmatprep.subr.mxu0 0.0
        %5366 = vmatpush1.msra.mxu0 0.0
        %5367 = vmatprep.subr.mxu0 0.0
        %5368 = vmatpush1.msra.mxu0 0.0
        %5369 = vmatprep.subr.mxu0 0.0
        %5370 = vmatpush1.msra.mxu0 0.0
        %5371 = vmatprep.subr.mxu0 0.0
        %5372 = vmatpush1.msra.mxu0 0.0
        %5373 = vmatprep.subr.mxu0 0.0
        %5374 = vmatpush1.msra.mxu0 0.0
        %5375 = vmatprep.subr.mxu0 0.0
        %5376 = vmatpush1.msra.mxu0 0.0
        %5377 = vmatprep.subr.mxu0 %v1041
        %5378 = vmatpush1.msra.mxu0 %v1040
        %5379 = vmatprep.subr.mxu0 %v1037
        %5380 = vmatpush1.msra.mxu0 %v1036
        %5381 = vmatprep.subr.mxu0 %v1033
        %5382 = vmatpush1.msra.mxu0 %v1032
        %5383 = vmatprep.subr.mxu0 %v1029
        %5384 = vmatpush1.msra.mxu0 %v1028
        %5385 = vmatprep.subr.mxu0 0.0
        %5386 = vmatpush2.msra.mxu0 0.0
        %5387 = vmatprep.subr.mxu0 0.0
        %5388 = vmatpush2.msra.mxu0 0.0
        %5389 = vmatprep.subr.mxu0 0.0
        %5390 = vmatpush2.msra.mxu0 0.0
        %5391 = vmatprep.subr.mxu0 0.0
        %5392 = vmatpush2.msra.mxu0 0.0
        %5393 = vmatprep.subr.mxu0 0.0
        %5394 = vmatpush2.msra.mxu0 0.0
        %5395 = vmatprep.subr.mxu0 0.0
        %5396 = vmatpush2.msra.mxu0 0.0
        %5397 = vmatprep.subr.mxu0 0.0
        %5398 = vmatpush2.msra.mxu0 0.0
        %5399 = vmatprep.subr.mxu0 0.0
        %5400 = vmatpush2.msra.mxu0 0.0
        %5401 = vmatprep.subr.mxu0 0.0
        %5402 = vmatpush2.msra.mxu0 0.0
        %5403 = vmatprep.subr.mxu0 0.0
        %5404 = vmatpush2.msra.mxu0 0.0
        %5405 = vmatprep.subr.mxu0 0.0
        %5406 = vmatpush2.msra.mxu0 0.0
        %5407 = vmatprep.subr.mxu0 0.0
        %5408 = vmatpush2.msra.mxu0 0.0
        %5409 = vmatprep.subr.mxu0 0.0
        %5410 = vmatpush2.msra.mxu0 0.0
        %5411 = vmatprep.subr.mxu0 0.0
        %5412 = vmatpush2.msra.mxu0 0.0
        %5413 = vmatprep.subr.mxu0 0.0
        %5414 = vmatpush2.msra.mxu0 0.0
        %5415 = vmatprep.subr.mxu0 0.0
        %5416 = vmatpush2.msra.mxu0 0.0
        %5417 = vmatprep.mubr.f32.mxu0 0.0
        %5418 = vmatmul.mubr.f32.gmra.mxu0 %v5145
        %v5419 = vpop.f32.mrf.mxu0
        %v5420 = vadd.f32 %v4995, %v5419
        %v5421 = vpop.f32.mrf.mxu0
        %v5422 = vadd.f32 %v4999, %v5421
        %5423 = vmatprep.mubr.f32.mxu0 0.0
        %5424 = vmatmul.mubr.f32.gmra.mxu0 %v5148
        %v5425 = vpop.f32.mrf.mxu0
        %v5426 = vadd.f32 %v4995, %v5425
        %v5427 = vpop.f32.mrf.mxu0
        %v5428 = vadd.f32 %v4999, %v5427
        %5429 = vmatprep.mubr.f32.mxu0 0.0
        %5430 = vmatmul.mubr.f32.gmra.mxu0 %v5151
        %v5431 = vpop.f32.mrf.mxu0
        %v5432 = vadd.f32 %v5011, %v5431
        %v5433 = vpop.f32.mrf.mxu0
        %v5434 = vadd.f32 %v5015, %v5433
        %5435 = vmatprep.mubr.f32.mxu0 0.0
        %5436 = vmatmul.mubr.f32.gmra.mxu0 %v5154
        %v5437 = vpop.f32.mrf.mxu0
        %v5438 = vadd.f32 %v5011, %v5437
        %v5439 = vpop.f32.mrf.mxu0
        %v5440 = vadd.f32 %v5015, %v5439
        %5441 = vmatprep.mubr.f32.mxu0 0.0
        %5442 = vmatmul.mubr.f32.gmra.mxu0 %v5157
        %v5443 = vpop.f32.mrf.mxu0
        %v5444 = vadd.f32 %v5027, %v5443
        %v5445 = vpop.f32.mrf.mxu0
        %v5446 = vadd.f32 %v5031, %v5445
        %5447 = vmatprep.mubr.f32.mxu0 0.0
        %5448 = vmatmul.mubr.f32.gmra.mxu0 %v5160
        %v5449 = vpop.f32.mrf.mxu0
        %v5450 = vadd.f32 %v5027, %v5449
        %v5451 = vpop.f32.mrf.mxu0
        %v5452 = vadd.f32 %v5031, %v5451
        %5453 = vmatprep.mubr.f32.mxu0 0.0
        %5454 = vmatmul.mubr.f32.gmra.mxu0 %v5163
        %v5455 = vpop.f32.mrf.mxu0
        %v5456 = vadd.f32 %v5043, %v5455
        %v5457 = vpop.f32.mrf.mxu0
        %v5458 = vadd.f32 %v5047, %v5457
        %5459 = vmatprep.mubr.f32.mxu0 0.0
        %5460 = vmatmul.mubr.f32.gmra.mxu0 %v5166
        %v5461 = vpop.f32.mrf.mxu0
        %v5462 = vadd.f32 %v5043, %v5461
        %v5463 = vpop.f32.mrf.mxu0
        %v5464 = vadd.f32 %v5047, %v5463
        %5465 = vmatprep.mubr.f32.mxu0 0.0
        %5466 = vmatmul.mubr.f32.gmra.mxu0 %v5169
        %v5467 = vpop.f32.mrf.mxu0
        %v5468 = vadd.f32 %v5059, %v5467
        %v5469 = vpop.f32.mrf.mxu0
        %v5470 = vadd.f32 %v5063, %v5469
        %5471 = vmatprep.mubr.f32.mxu0 0.0
        %5472 = vmatmul.mubr.f32.gmra.mxu0 %v5172
        %v5473 = vpop.f32.mrf.mxu0
        %v5474 = vadd.f32 %v5059, %v5473
        %v5475 = vpop.f32.mrf.mxu0
        %v5476 = vadd.f32 %v5063, %v5475
        %5477 = vmatprep.mubr.f32.mxu0 0.0
        %5478 = vmatmul.mubr.f32.gmra.mxu0 %v5175
        %v5479 = vpop.f32.mrf.mxu0
        %v5480 = vadd.f32 %v5075, %v5479
        %v5481 = vpop.f32.mrf.mxu0
        %v5482 = vadd.f32 %v5079, %v5481
        %5483 = vmatprep.mubr.f32.mxu0 0.0
        %5484 = vmatmul.mubr.f32.gmra.mxu0 %v5178
        %v5485 = vpop.f32.mrf.mxu0
        %v5486 = vadd.f32 %v5075, %v5485
        %v5487 = vpop.f32.mrf.mxu0
        %v5488 = vadd.f32 %v5079, %v5487
        %5489 = vmatprep.mubr.f32.mxu0 0.0
        %5490 = vmatmul.mubr.f32.gmra.mxu0 %v5181
        %v5491 = vpop.f32.mrf.mxu0
        %v5492 = vadd.f32 %v5091, %v5491
        %v5493 = vpop.f32.mrf.mxu0
        %v5494 = vadd.f32 %v5095, %v5493
        %5495 = vmatprep.mubr.f32.mxu0 0.0
        %5496 = vmatmul.mubr.f32.gmra.mxu0 %v5184
        %v5497 = vpop.f32.mrf.mxu0
        %v5498 = vadd.f32 %v5091, %v5497
        %v5499 = vpop.f32.mrf.mxu0
        %v5500 = vadd.f32 %v5095, %v5499
        %5501 = vmatprep.mubr.f32.mxu0 0.0
        %5502 = vmatmul.mubr.f32.gmra.mxu0 %v5187
        %v5503 = vpop.f32.mrf.mxu0
        %v5504 = vadd.f32 %v5107, %v5503
        %v5505 = vpop.f32.mrf.mxu0
        %v5506 = vadd.f32 %v5111, %v5505
        %5507 = vmatprep.mubr.f32.mxu0 0.0
        %5508 = vmatmul.mubr.f32.gmra.mxu0 %v5190
        %v5509 = vpop.f32.mrf.mxu0
        %v5510 = vadd.f32 %v5107, %v5509
        %v5511 = vpop.f32.mrf.mxu0
        %v5512 = vadd.f32 %v5111, %v5511
        %5513 = vdwg.mxu0
        %v5514 = vmul.f32 %v5259, 0.33
        %v5515 = vmul.f32 %v5261, 0.33
        %v5516 = vmul.f32 %v5420, 0.33
        %v5517 = vmul.f32 %v5422, 0.33
        %v5518 = vmul.f32 %v5265, 0.33
        %v5519 = vmul.f32 %v5267, 0.33
        %v5520 = vmul.f32 %v5426, 0.33
        %v5521 = vmul.f32 %v5428, 0.33
        %v5522 = vmul.f32 %v5271, 0.33
        %v5523 = vmul.f32 %v5273, 0.33
        %v5524 = vmul.f32 %v5432, 0.33
        %v5525 = vmul.f32 %v5434, 0.33
        %v5526 = vmul.f32 %v5277, 0.33
        %v5527 = vmul.f32 %v5279, 0.33
        %v5528 = vmul.f32 %v5438, 0.33
        %v5529 = vmul.f32 %v5440, 0.33
        %v5530 = vmul.f32 %v5283, 0.33
        %v5531 = vmul.f32 %v5285, 0.33
        %v5532 = vmul.f32 %v5444, 0.33
        %v5533 = vmul.f32 %v5446, 0.33
        %v5534 = vmul.f32 %v5289, 0.33
        %v5535 = vmul.f32 %v5291, 0.33
        %v5536 = vmul.f32 %v5450, 0.33
        %v5537 = vmul.f32 %v5452, 0.33
        %v5538 = vmul.f32 %v5295, 0.33
        %v5539 = vmul.f32 %v5297, 0.33
        %v5540 = vmul.f32 %v5456, 0.33
        %v5541 = vmul.f32 %v5458, 0.33
        %v5542 = vmul.f32 %v5301, 0.33
        %v5543 = vmul.f32 %v5303, 0.33
        %v5544 = vmul.f32 %v5462, 0.33
        %v5545 = vmul.f32 %v5464, 0.33
        %v5546 = vmul.f32 %v5307, 0.33
        %v5547 = vmul.f32 %v5309, 0.33
        %v5548 = vmul.f32 %v5468, 0.33
        %v5549 = vmul.f32 %v5470, 0.33
        %v5550 = vmul.f32 %v5313, 0.33
        %v5551 = vmul.f32 %v5315, 0.33
        %v5552 = vmul.f32 %v5474, 0.33
        %v5553 = vmul.f32 %v5476, 0.33
        %v5554 = vmul.f32 %v5319, 0.33
        %v5555 = vmul.f32 %v5321, 0.33
        %v5556 = vmul.f32 %v5480, 0.33
        %v5557 = vmul.f32 %v5482, 0.33
        %v5558 = vmul.f32 %v5325, 0.33
        %v5559 = vmul.f32 %v5327, 0.33
        %v5560 = vmul.f32 %v5486, 0.33
        %v5561 = vmul.f32 %v5488, 0.33
        %v5562 = vmul.f32 %v5331, 0.33
        %v5563 = vmul.f32 %v5333, 0.33
        %v5564 = vmul.f32 %v5492, 0.33
        %v5565 = vmul.f32 %v5494, 0.33
        %v5566 = vmul.f32 %v5337, 0.33
        %v5567 = vmul.f32 %v5339, 0.33
        %v5568 = vmul.f32 %v5498, 0.33
        %v5569 = vmul.f32 %v5500, 0.33
        %v5570 = vmul.f32 %v5343, 0.33
        %v5571 = vmul.f32 %v5345, 0.33
        %v5572 = vmul.f32 %v5504, 0.33
        %v5573 = vmul.f32 %v5506, 0.33
        %v5574 = vmul.f32 %v5349, 0.33
        %v5575 = vmul.f32 %v5351, 0.33
        %v5576 = vmul.f32 %v5510, 0.33
        %v5577 = vmul.f32 %v5512, 0.33
        %v5578 = vmax.f32 %v5259, %v5514
        %v5579 = vmax.f32 %v5261, %v5515
        %v5580 = vmax.f32 %v5420, %v5516
        %v5581 = vmax.f32 %v5422, %v5517
        %v5582 = vmax.f32 %v5265, %v5518
        %v5583 = vmax.f32 %v5267, %v5519
        %v5584 = vmax.f32 %v5426, %v5520
        %v5585 = vmax.f32 %v5428, %v5521
        %v5586 = vmax.f32 %v5271, %v5522
        %v5587 = vmax.f32 %v5273, %v5523
        %v5588 = vmax.f32 %v5432, %v5524
        %v5589 = vmax.f32 %v5434, %v5525
        %v5590 = vmax.f32 %v5277, %v5526
        %v5591 = vmax.f32 %v5279, %v5527
        %v5592 = vmax.f32 %v5438, %v5528
        %v5593 = vmax.f32 %v5440, %v5529
        %v5594 = vmax.f32 %v5283, %v5530
        %v5595 = vmax.f32 %v5285, %v5531
        %v5596 = vmax.f32 %v5444, %v5532
        %v5597 = vmax.f32 %v5446, %v5533
        %v5598 = vmax.f32 %v5289, %v5534
        %v5599 = vmax.f32 %v5291, %v5535
        %v5600 = vmax.f32 %v5450, %v5536
        %v5601 = vmax.f32 %v5452, %v5537
        %v5602 = vmax.f32 %v5295, %v5538
        %v5603 = vmax.f32 %v5297, %v5539
        %v5604 = vmax.f32 %v5456, %v5540
        %v5605 = vmax.f32 %v5458, %v5541
        %v5606 = vmax.f32 %v5301, %v5542
        %v5607 = vmax.f32 %v5303, %v5543
        %v5608 = vmax.f32 %v5462, %v5544
        %v5609 = vmax.f32 %v5464, %v5545
        %v5610 = vmax.f32 %v5307, %v5546
        %v5611 = vmax.f32 %v5309, %v5547
        %v5612 = vmax.f32 %v5468, %v5548
        %v5613 = vmax.f32 %v5470, %v5549
        %v5614 = vmax.f32 %v5313, %v5550
        %v5615 = vmax.f32 %v5315, %v5551
        %v5616 = vmax.f32 %v5474, %v5552
        %v5617 = vmax.f32 %v5476, %v5553
        %v5618 = vmax.f32 %v5319, %v5554
        %v5619 = vmax.f32 %v5321, %v5555
        %v5620 = vmax.f32 %v5480, %v5556
        %v5621 = vmax.f32 %v5482, %v5557
        %v5622 = vmax.f32 %v5325, %v5558
        %v5623 = vmax.f32 %v5327, %v5559
        %v5624 = vmax.f32 %v5486, %v5560
        %v5625 = vmax.f32 %v5488, %v5561
        %v5626 = vmax.f32 %v5331, %v5562
        %v5627 = vmax.f32 %v5333, %v5563
        %v5628 = vmax.f32 %v5492, %v5564
        %v5629 = vmax.f32 %v5494, %v5565
        %v5630 = vmax.f32 %v5337, %v5566
        %v5631 = vmax.f32 %v5339, %v5567
        %v5632 = vmax.f32 %v5498, %v5568
        %v5633 = vmax.f32 %v5500, %v5569
        %v5634 = vmax.f32 %v5343, %v5570
        %v5635 = vmax.f32 %v5345, %v5571
        %v5636 = vmax.f32 %v5504, %v5572
        %v5637 = vmax.f32 %v5506, %v5573
        %v5638 = vmax.f32 %v5349, %v5574
        %v5639 = vmax.f32 %v5351, %v5575
        %v5640 = vmax.f32 %v5510, %v5576
        %v5641 = vmax.f32 %v5512, %v5577
        %v5642 = vld [vmem:[#allocation18] sm:$0xff]
        %v5643 = vld [vmem:[#allocation18 + $0x8] sm:$0xff]
        %v5644 = vld [vmem:[#allocation18 + $0x10] sm:$0xff]
        %v5645 = vld [vmem:[#allocation18 + $0x18] sm:$0xff]
        %v5646 = vld [vmem:[#allocation18 + $0x20] sm:$0xff]
        %v5647 = vld [vmem:[#allocation18 + $0x28] sm:$0xff]
        %v5648 = vld [vmem:[%s15] sm:$0xff]
        %v5649 = vld [vmem:[%s15 + $0x8] sm:$0xff]
        %v5650 = vld [vmem:[%s15 + $0x10] sm:$0xff]
        %v5651 = vld [vmem:[%s15 + $0x18] sm:$0xff]
        %v5652 = vld [vmem:[%s15 + $0x20] sm:$0xff]
        %v5653 = vld [vmem:[%s15 + $0x28] sm:$0xff]
        %5655 = vset.pattern.permute.xlu0 0
        %5656 = vperm.xlu0 %5655, %v5648
        %v5657 = vpop.permute.xlu0 %5656
        %5660 = vset.pattern.permute.xlu0 0
        %5661 = vperm.xlu0 %5660, %v5649
        %v5662 = vpop.permute.xlu0 %5661
        %5665 = vset.pattern.permute.xlu0 0
        %5666 = vperm.xlu0 %5665, %v5650
        %v5667 = vpop.permute.xlu0 %5666
        %5670 = vset.pattern.permute.xlu0 0
        %5671 = vperm.xlu0 %5670, %v5651
        %v5672 = vpop.permute.xlu0 %5671
        %5675 = vset.pattern.permute.xlu0 0
        %5676 = vperm.xlu0 %5675, %v5652
        %v5677 = vpop.permute.xlu0 %5676
        %5680 = vset.pattern.permute.xlu0 0
        %5681 = vperm.xlu0 %5680, %v5653
        %v5682 = vpop.permute.xlu0 %5681
        %5684 = vmatprep.subr.mxu0 %v5639
        %5685 = vmatpush1.msra.mxu0 %v5638
        %5686 = vmatprep.subr.mxu0 %v5635
        %5687 = vmatpush1.msra.mxu0 %v5634
        %5688 = vmatprep.subr.mxu0 %v5631
        %5689 = vmatpush1.msra.mxu0 %v5630
        %5690 = vmatprep.subr.mxu0 %v5627
        %5691 = vmatpush1.msra.mxu0 %v5626
        %5692 = vmatprep.subr.mxu0 %v5623
        %5693 = vmatpush1.msra.mxu0 %v5622
        %5694 = vmatprep.subr.mxu0 %v5619
        %5695 = vmatpush1.msra.mxu0 %v5618
        %5696 = vmatprep.subr.mxu0 %v5615
        %5697 = vmatpush1.msra.mxu0 %v5614
        %5698 = vmatprep.subr.mxu0 %v5611
        %5699 = vmatpush1.msra.mxu0 %v5610
        %5700 = vmatprep.subr.mxu0 %v5607
        %5701 = vmatpush1.msra.mxu0 %v5606
        %5702 = vmatprep.subr.mxu0 %v5603
        %5703 = vmatpush1.msra.mxu0 %v5602
        %5704 = vmatprep.subr.mxu0 %v5599
        %5705 = vmatpush1.msra.mxu0 %v5598
        %5706 = vmatprep.subr.mxu0 %v5595
        %5707 = vmatpush1.msra.mxu0 %v5594
        %5708 = vmatprep.subr.mxu0 %v5591
        %5709 = vmatpush1.msra.mxu0 %v5590
        %5710 = vmatprep.subr.mxu0 %v5587
        %5711 = vmatpush1.msra.mxu0 %v5586
        %5712 = vmatprep.subr.mxu0 %v5583
        %5713 = vmatpush1.msra.mxu0 %v5582
        %5714 = vmatprep.subr.mxu0 %v5579
        %5715 = vmatpush1.msra.mxu0 %v5578
        %5716 = vmatprep.subr.mxu0 0.0
        %5717 = vmatpush2.msra.mxu0 0.0
        %5718 = vmatprep.subr.mxu0 0.0
        %5719 = vmatpush2.msra.mxu0 0.0
        %5720 = vmatprep.subr.mxu0 0.0
        %5721 = vmatpush2.msra.mxu0 0.0
        %5722 = vmatprep.subr.mxu0 0.0
        %5723 = vmatpush2.msra.mxu0 0.0
        %5724 = vmatprep.subr.mxu0 0.0
        %5725 = vmatpush2.msra.mxu0 0.0
        %5726 = vmatprep.subr.mxu0 0.0
        %5727 = vmatpush2.msra.mxu0 0.0
        %5728 = vmatprep.subr.mxu0 0.0
        %5729 = vmatpush2.msra.mxu0 0.0
        %5730 = vmatprep.subr.mxu0 0.0
        %5731 = vmatpush2.msra.mxu0 0.0
        %5732 = vmatprep.subr.mxu0 0.0
        %5733 = vmatpush2.msra.mxu0 0.0
        %5734 = vmatprep.subr.mxu0 0.0
        %5735 = vmatpush2.msra.mxu0 0.0
        %5736 = vmatprep.subr.mxu0 0.0
        %5737 = vmatpush2.msra.mxu0 0.0
        %5738 = vmatprep.subr.mxu0 0.0
        %5739 = vmatpush2.msra.mxu0 0.0
        %5740 = vmatprep.subr.mxu0 0.0
        %5741 = vmatpush2.msra.mxu0 0.0
        %5742 = vmatprep.subr.mxu0 0.0
        %5743 = vmatpush2.msra.mxu0 0.0
        %5744 = vmatprep.subr.mxu0 0.0
        %5745 = vmatpush2.msra.mxu0 0.0
        %5746 = vmatprep.subr.mxu0 0.0
        %5747 = vmatpush2.msra.mxu0 0.0
        %5748 = vmatprep.mubr.f32.mxu0 0.0
        %5749 = vmatmul.mubr.f32.gmra.mxu0 %v5642
        %v5750 = vpop.f32.mrf.mxu0
        %v5751 = vadd.f32 %v5657, %v5750
        %v5752 = vpop.f32.mrf.mxu0
        %v5753 = vadd.f32 %v5657, %v5752
        %5754 = vmatprep.mubr.f32.mxu0 0.0
        %5755 = vmatmul.mubr.f32.gmra.mxu0 %v5643
        %v5756 = vpop.f32.mrf.mxu0
        %v5757 = vadd.f32 %v5662, %v5756
        %v5758 = vpop.f32.mrf.mxu0
        %v5759 = vadd.f32 %v5662, %v5758
        %5760 = vmatprep.mubr.f32.mxu0 0.0
        %5761 = vmatmul.mubr.f32.gmra.mxu0 %v5644
        %v5762 = vpop.f32.mrf.mxu0
        %v5763 = vadd.f32 %v5667, %v5762
        %v5764 = vpop.f32.mrf.mxu0
        %v5765 = vadd.f32 %v5667, %v5764
        %5766 = vmatprep.mubr.f32.mxu0 0.0
        %5767 = vmatmul.mubr.f32.gmra.mxu0 %v5645
        %v5768 = vpop.f32.mrf.mxu0
        %v5769 = vadd.f32 %v5672, %v5768
        %v5770 = vpop.f32.mrf.mxu0
        %v5771 = vadd.f32 %v5672, %v5770
        %5772 = vmatprep.mubr.f32.mxu0 0.0
        %5773 = vmatmul.mubr.f32.gmra.mxu0 %v5646
        %v5774 = vpop.f32.mrf.mxu0
        %v5775 = vadd.f32 %v5677, %v5774
        %v5776 = vpop.f32.mrf.mxu0
        %v5777 = vadd.f32 %v5677, %v5776
        %5778 = vmatprep.mubr.f32.mxu0 0.0
        %5779 = vmatmul.mubr.f32.gmra.mxu0 %v5647
        %v5780 = vpop.f32.mrf.mxu0
        %v5781 = vadd.f32 %v5682, %v5780
        %v5782 = vpop.f32.mrf.mxu0
        %v5783 = vadd.f32 %v5682, %v5782
        %5784 = vdwg.mxu0
        %5785 = vmatprep.subr.mxu0 %v5641
        %5786 = vmatpush1.msra.mxu0 %v5640
        %5787 = vmatprep.subr.mxu0 %v5637
        %5788 = vmatpush1.msra.mxu0 %v5636
        %5789 = vmatprep.subr.mxu0 %v5633
        %5790 = vmatpush1.msra.mxu0 %v5632
        %5791 = vmatprep.subr.mxu0 %v5629
        %5792 = vmatpush1.msra.mxu0 %v5628
        %5793 = vmatprep.subr.mxu0 %v5625
        %5794 = vmatpush1.msra.mxu0 %v5624
        %5795 = vmatprep.subr.mxu0 %v5621
        %5796 = vmatpush1.msra.mxu0 %v5620
        %5797 = vmatprep.subr.mxu0 %v5617
        %5798 = vmatpush1.msra.mxu0 %v5616
        %5799 = vmatprep.subr.mxu0 %v5613
        %5800 = vmatpush1.msra.mxu0 %v5612
        %5801 = vmatprep.subr.mxu0 %v5609
        %5802 = vmatpush1.msra.mxu0 %v5608
        %5803 = vmatprep.subr.mxu0 %v5605
        %5804 = vmatpush1.msra.mxu0 %v5604
        %5805 = vmatprep.subr.mxu0 %v5601
        %5806 = vmatpush1.msra.mxu0 %v5600
        %5807 = vmatprep.subr.mxu0 %v5597
        %5808 = vmatpush1.msra.mxu0 %v5596
        %5809 = vmatprep.subr.mxu0 %v5593
        %5810 = vmatpush1.msra.mxu0 %v5592
        %5811 = vmatprep.subr.mxu0 %v5589
        %5812 = vmatpush1.msra.mxu0 %v5588
        %5813 = vmatprep.subr.mxu0 %v5585
        %5814 = vmatpush1.msra.mxu0 %v5584
        %5815 = vmatprep.subr.mxu0 %v5581
        %5816 = vmatpush1.msra.mxu0 %v5580
        %5817 = vmatprep.subr.mxu0 0.0
        %5818 = vmatpush2.msra.mxu0 0.0
        %5819 = vmatprep.subr.mxu0 0.0
        %5820 = vmatpush2.msra.mxu0 0.0
        %5821 = vmatprep.subr.mxu0 0.0
        %5822 = vmatpush2.msra.mxu0 0.0
        %5823 = vmatprep.subr.mxu0 0.0
        %5824 = vmatpush2.msra.mxu0 0.0
        %5825 = vmatprep.subr.mxu0 0.0
        %5826 = vmatpush2.msra.mxu0 0.0
        %5827 = vmatprep.subr.mxu0 0.0
        %5828 = vmatpush2.msra.mxu0 0.0
        %5829 = vmatprep.subr.mxu0 0.0
        %5830 = vmatpush2.msra.mxu0 0.0
        %5831 = vmatprep.subr.mxu0 0.0
        %5832 = vmatpush2.msra.mxu0 0.0
        %5833 = vmatprep.subr.mxu0 0.0
        %5834 = vmatpush2.msra.mxu0 0.0
        %5835 = vmatprep.subr.mxu0 0.0
        %5836 = vmatpush2.msra.mxu0 0.0
        %5837 = vmatprep.subr.mxu0 0.0
        %5838 = vmatpush2.msra.mxu0 0.0
        %5839 = vmatprep.subr.mxu0 0.0
        %5840 = vmatpush2.msra.mxu0 0.0
        %5841 = vmatprep.subr.mxu0 0.0
        %5842 = vmatpush2.msra.mxu0 0.0
        %5843 = vmatprep.subr.mxu0 0.0
        %5844 = vmatpush2.msra.mxu0 0.0
        %5845 = vmatprep.subr.mxu0 0.0
        %5846 = vmatpush2.msra.mxu0 0.0
        %5847 = vmatprep.subr.mxu0 0.0
        %5848 = vmatpush2.msra.mxu0 0.0
        %5849 = vmatprep.mubr.f32.mxu0 0.0
        %5850 = vmatmul.mubr.f32.gmra.mxu0 %v5642
        %v5851 = vpop.f32.mrf.mxu0
        %v5852 = vadd.f32 %v5657, %v5851
        %v5853 = vpop.f32.mrf.mxu0
        %v5854 = vadd.f32 %v5657, %v5853
        %5855 = vmatprep.mubr.f32.mxu0 0.0
        %5856 = vmatmul.mubr.f32.gmra.mxu0 %v5643
        %v5857 = vpop.f32.mrf.mxu0
        %v5858 = vadd.f32 %v5662, %v5857
        %v5859 = vpop.f32.mrf.mxu0
        %v5860 = vadd.f32 %v5662, %v5859
        %5861 = vmatprep.mubr.f32.mxu0 0.0
        %5862 = vmatmul.mubr.f32.gmra.mxu0 %v5644
        %v5863 = vpop.f32.mrf.mxu0
        %v5864 = vadd.f32 %v5667, %v5863
        %v5865 = vpop.f32.mrf.mxu0
        %v5866 = vadd.f32 %v5667, %v5865
        %5867 = vmatprep.mubr.f32.mxu0 0.0
        %5868 = vmatmul.mubr.f32.gmra.mxu0 %v5645
        %v5869 = vpop.f32.mrf.mxu0
        %v5870 = vadd.f32 %v5672, %v5869
        %v5871 = vpop.f32.mrf.mxu0
        %v5872 = vadd.f32 %v5672, %v5871
        %5873 = vmatprep.mubr.f32.mxu0 0.0
        %5874 = vmatmul.mubr.f32.gmra.mxu0 %v5646
        %v5875 = vpop.f32.mrf.mxu0
        %v5876 = vadd.f32 %v5677, %v5875
        %v5877 = vpop.f32.mrf.mxu0
        %v5878 = vadd.f32 %v5677, %v5877
        %5879 = vmatprep.mubr.f32.mxu0 0.0
        %5880 = vmatmul.mubr.f32.gmra.mxu0 %v5647
        %v5881 = vpop.f32.mrf.mxu0
        %v5882 = vadd.f32 %v5682, %v5881
        %v5883 = vpop.f32.mrf.mxu0
        %v5884 = vadd.f32 %v5682, %v5883
        %5885 = vdwg.mxu0
        %v5886 = vmul.f32 %v5751, 0.33
        %v5887 = vmul.f32 %v5753, 0.33
        %v5888 = vmul.f32 %v5852, 0.33
        %v5889 = vmul.f32 %v5854, 0.33
        %v5890 = vmul.f32 %v5757, 0.33
        %v5891 = vmul.f32 %v5759, 0.33
        %v5892 = vmul.f32 %v5858, 0.33
        %v5893 = vmul.f32 %v5860, 0.33
        %v5894 = vmul.f32 %v5763, 0.33
        %v5895 = vmul.f32 %v5765, 0.33
        %v5896 = vmul.f32 %v5864, 0.33
        %v5897 = vmul.f32 %v5866, 0.33
        %v5898 = vmul.f32 %v5769, 0.33
        %v5899 = vmul.f32 %v5771, 0.33
        %v5900 = vmul.f32 %v5870, 0.33
        %v5901 = vmul.f32 %v5872, 0.33
        %v5902 = vmul.f32 %v5775, 0.33
        %v5903 = vmul.f32 %v5777, 0.33
        %v5904 = vmul.f32 %v5876, 0.33
        %v5905 = vmul.f32 %v5878, 0.33
        %v5906 = vmul.f32 %v5781, 0.33
        %v5907 = vmul.f32 %v5783, 0.33
        %v5908 = vmul.f32 %v5882, 0.33
        %v5909 = vmul.f32 %v5884, 0.33
        %v5910 = vmax.f32 %v5751, %v5886
        %v5911 = vmax.f32 %v5753, %v5887
        %v5912 = vmax.f32 %v5852, %v5888
        %v5913 = vmax.f32 %v5854, %v5889
        %v5914 = vmax.f32 %v5757, %v5890
        %v5915 = vmax.f32 %v5759, %v5891
        %v5916 = vmax.f32 %v5858, %v5892
        %v5917 = vmax.f32 %v5860, %v5893
        %v5918 = vmax.f32 %v5763, %v5894
        %v5919 = vmax.f32 %v5765, %v5895
        %v5920 = vmax.f32 %v5864, %v5896
        %v5921 = vmax.f32 %v5866, %v5897
        %v5922 = vmax.f32 %v5769, %v5898
        %v5923 = vmax.f32 %v5771, %v5899
        %v5924 = vmax.f32 %v5870, %v5900
        %v5925 = vmax.f32 %v5872, %v5901
        %v5926 = vmax.f32 %v5775, %v5902
        %v5927 = vmax.f32 %v5777, %v5903
        %v5928 = vmax.f32 %v5876, %v5904
        %v5929 = vmax.f32 %v5878, %v5905
        %v5930 = vmax.f32 %v5781, %v5906
        %v5931 = vmax.f32 %v5783, %v5907
        %v5932 = vmax.f32 %v5882, %v5908
        %v5933 = vmax.f32 %v5884, %v5909
        %v5958 = vcombine.low %v5910, %v5911
        %v5959 = vcombine.high %v5910, %v5911
        %v5960 = vcombine.low %v5912, %v5913
        %v5961 = vcombine.high %v5912, %v5913
        %v5963 = vunpack.c.l.s4 1966171168
        %v5964 = vunpack.c.0.s8 %v5963
        %v5965 = vlaneseq
        %v5966 = vshrl.u32 %v5965, 7
        %v5967 = vsub.s32 %v5964, %v5966
        %v5968 = vrot.slane %v5958, %v5967
        %v5970 = vunpack.c.l.s4 1966171168
        %v5971 = vunpack.c.0.s8 %v5970
        %v5972 = vlaneseq
        %v5973 = vshrl.u32 %v5972, 7
        %v5974 = vsub.s32 %v5971, %v5973
        %v5975 = vrot.slane %v5959, %v5974
        %v5977 = vunpack.c.l.s4 1966171168
        %v5978 = vunpack.c.0.s8 %v5977
        %v5979 = vlaneseq
        %v5980 = vshrl.u32 %v5979, 7
        %v5981 = vsub.s32 %v5978, %v5980
        %v5982 = vrot.slane %v5960, %v5981
        %v5984 = vunpack.c.l.s4 1966171168
        %v5985 = vunpack.c.0.s8 %v5984
        %v5986 = vlaneseq
        %v5987 = vshrl.u32 %v5986, 7
        %v5988 = vsub.s32 %v5985, %v5987
        %v5989 = vrot.slane %v5961, %v5988
        %v5990 = vcombine.low %v5968, %v5982
        %v5991 = vcombine.high %v5968, %v5982
        %v5992 = vcombine.low %v5975, %v5989
        %v5993 = vcombine.high %v5975, %v5989
        %v5995 = vunpack.c.l.s4 1966171168
        %v5996 = vunpack.c.0.s8 %v5995
        %v5997 = vlaneseq
        %v5998 = vshrl.u32 %v5997, 7
        %v5999 = vsub.s32 %v5996, %v5998
        %v6000 = vrot.slane %v5990, %v5999
        %v6002 = vunpack.c.l.s4 1966171168
        %v6003 = vunpack.c.0.s8 %v6002
        %v6004 = vlaneseq
        %v6005 = vshrl.u32 %v6004, 7
        %v6006 = vsub.s32 %v6003, %v6005
        %v6007 = vrot.slane %v5992, %v6006
        %v6009 = vunpack.c.l.s4 1966171168
        %v6010 = vunpack.c.0.s8 %v6009
        %v6011 = vlaneseq
        %v6012 = vshrl.u32 %v6011, 7
        %v6013 = vsub.s32 %v6010, %v6012
        %v6014 = vrot.slane %v5991, %v6013
        %v6016 = vunpack.c.l.s4 1966171168
        %v6017 = vunpack.c.0.s8 %v6016
        %v6018 = vlaneseq
        %v6019 = vshrl.u32 %v6018, 7
        %v6020 = vsub.s32 %v6017, %v6019
        %v6021 = vrot.slane %v5993, %v6020
        %v6022 = vcombine.high %v6000, %v6000
        %v6023 = vcombine.high %v6007, %v6007
        %v6024 = vcombine.high %v6014, %v6014
        %v6025 = vcombine.high %v6021, %v6021
        %v6026 = vcombine.low %v5914, %v5915
        %v6027 = vcombine.high %v5914, %v5915
        %v6028 = vcombine.low %v5916, %v5917
        %v6029 = vcombine.high %v5916, %v5917
        %v6031 = vunpack.c.l.s4 1966171168
        %v6032 = vunpack.c.0.s8 %v6031
        %v6033 = vlaneseq
        %v6034 = vshrl.u32 %v6033, 7
        %v6035 = vsub.s32 %v6032, %v6034
        %v6036 = vrot.slane %v6026, %v6035
        %v6038 = vunpack.c.l.s4 1966171168
        %v6039 = vunpack.c.0.s8 %v6038
        %v6040 = vlaneseq
        %v6041 = vshrl.u32 %v6040, 7
        %v6042 = vsub.s32 %v6039, %v6041
        %v6043 = vrot.slane %v6027, %v6042
        %v6045 = vunpack.c.l.s4 1966171168
        %v6046 = vunpack.c.0.s8 %v6045
        %v6047 = vlaneseq
        %v6048 = vshrl.u32 %v6047, 7
        %v6049 = vsub.s32 %v6046, %v6048
        %v6050 = vrot.slane %v6028, %v6049
        %v6052 = vunpack.c.l.s4 1966171168
        %v6053 = vunpack.c.0.s8 %v6052
        %v6054 = vlaneseq
        %v6055 = vshrl.u32 %v6054, 7
        %v6056 = vsub.s32 %v6053, %v6055
        %v6057 = vrot.slane %v6029, %v6056
        %v6058 = vcombine.low %v6036, %v6050
        %v6059 = vcombine.high %v6036, %v6050
        %v6060 = vcombine.low %v6043, %v6057
        %v6061 = vcombine.high %v6043, %v6057
        %v6063 = vunpack.c.l.s4 1966171168
        %v6064 = vunpack.c.0.s8 %v6063
        %v6065 = vlaneseq
        %v6066 = vshrl.u32 %v6065, 7
        %v6067 = vsub.s32 %v6064, %v6066
        %v6068 = vrot.slane %v6058, %v6067
        %v6070 = vunpack.c.l.s4 1966171168
        %v6071 = vunpack.c.0.s8 %v6070
        %v6072 = vlaneseq
        %v6073 = vshrl.u32 %v6072, 7
        %v6074 = vsub.s32 %v6071, %v6073
        %v6075 = vrot.slane %v6060, %v6074
        %v6077 = vunpack.c.l.s4 1966171168
        %v6078 = vunpack.c.0.s8 %v6077
        %v6079 = vlaneseq
        %v6080 = vshrl.u32 %v6079, 7
        %v6081 = vsub.s32 %v6078, %v6080
        %v6082 = vrot.slane %v6059, %v6081
        %v6084 = vunpack.c.l.s4 1966171168
        %v6085 = vunpack.c.0.s8 %v6084
        %v6086 = vlaneseq
        %v6087 = vshrl.u32 %v6086, 7
        %v6088 = vsub.s32 %v6085, %v6087
        %v6089 = vrot.slane %v6061, %v6088
        %v6090 = vcombine.high %v6068, %v6068
        %v6091 = vcombine.high %v6075, %v6075
        %v6092 = vcombine.high %v6082, %v6082
        %v6093 = vcombine.high %v6089, %v6089
        %v6094 = vcombine.low %v5918, %v5919
        %v6095 = vcombine.high %v5918, %v5919
        %v6096 = vcombine.low %v5920, %v5921
        %v6097 = vcombine.high %v5920, %v5921
        %v6099 = vunpack.c.l.s4 1966171168
        %v6100 = vunpack.c.0.s8 %v6099
        %v6101 = vlaneseq
        %v6102 = vshrl.u32 %v6101, 7
        %v6103 = vsub.s32 %v6100, %v6102
        %v6104 = vrot.slane %v6094, %v6103
        %v6106 = vunpack.c.l.s4 1966171168
        %v6107 = vunpack.c.0.s8 %v6106
        %v6108 = vlaneseq
        %v6109 = vshrl.u32 %v6108, 7
        %v6110 = vsub.s32 %v6107, %v6109
        %v6111 = vrot.slane %v6095, %v6110
        %v6113 = vunpack.c.l.s4 1966171168
        %v6114 = vunpack.c.0.s8 %v6113
        %v6115 = vlaneseq
        %v6116 = vshrl.u32 %v6115, 7
        %v6117 = vsub.s32 %v6114, %v6116
        %v6118 = vrot.slane %v6096, %v6117
        %v6120 = vunpack.c.l.s4 1966171168
        %v6121 = vunpack.c.0.s8 %v6120
        %v6122 = vlaneseq
        %v6123 = vshrl.u32 %v6122, 7
        %v6124 = vsub.s32 %v6121, %v6123
        %v6125 = vrot.slane %v6097, %v6124
        %v6126 = vcombine.low %v6104, %v6118
        %v6127 = vcombine.high %v6104, %v6118
        %v6128 = vcombine.low %v6111, %v6125
        %v6129 = vcombine.high %v6111, %v6125
        %v6131 = vunpack.c.l.s4 1966171168
        %v6132 = vunpack.c.0.s8 %v6131
        %v6133 = vlaneseq
        %v6134 = vshrl.u32 %v6133, 7
        %v6135 = vsub.s32 %v6132, %v6134
        %v6136 = vrot.slane %v6126, %v6135
        %v6138 = vunpack.c.l.s4 1966171168
        %v6139 = vunpack.c.0.s8 %v6138
        %v6140 = vlaneseq
        %v6141 = vshrl.u32 %v6140, 7
        %v6142 = vsub.s32 %v6139, %v6141
        %v6143 = vrot.slane %v6128, %v6142
        %v6145 = vunpack.c.l.s4 1966171168
        %v6146 = vunpack.c.0.s8 %v6145
        %v6147 = vlaneseq
        %v6148 = vshrl.u32 %v6147, 7
        %v6149 = vsub.s32 %v6146, %v6148
        %v6150 = vrot.slane %v6127, %v6149
        %v6152 = vunpack.c.l.s4 1966171168
        %v6153 = vunpack.c.0.s8 %v6152
        %v6154 = vlaneseq
        %v6155 = vshrl.u32 %v6154, 7
        %v6156 = vsub.s32 %v6153, %v6155
        %v6157 = vrot.slane %v6129, %v6156
        %v6158 = vcombine.high %v6136, %v6136
        %v6159 = vcombine.high %v6143, %v6143
        %v6160 = vcombine.high %v6150, %v6150
        %v6161 = vcombine.high %v6157, %v6157
        %v6162 = vcombine.low %v5922, %v5923
        %v6163 = vcombine.high %v5922, %v5923
        %v6164 = vcombine.low %v5924, %v5925
        %v6165 = vcombine.high %v5924, %v5925
        %v6167 = vunpack.c.l.s4 1966171168
        %v6168 = vunpack.c.0.s8 %v6167
        %v6169 = vlaneseq
        %v6170 = vshrl.u32 %v6169, 7
        %v6171 = vsub.s32 %v6168, %v6170
        %v6172 = vrot.slane %v6162, %v6171
        %v6174 = vunpack.c.l.s4 1966171168
        %v6175 = vunpack.c.0.s8 %v6174
        %v6176 = vlaneseq
        %v6177 = vshrl.u32 %v6176, 7
        %v6178 = vsub.s32 %v6175, %v6177
        %v6179 = vrot.slane %v6163, %v6178
        %v6181 = vunpack.c.l.s4 1966171168
        %v6182 = vunpack.c.0.s8 %v6181
        %v6183 = vlaneseq
        %v6184 = vshrl.u32 %v6183, 7
        %v6185 = vsub.s32 %v6182, %v6184
        %v6186 = vrot.slane %v6164, %v6185
        %v6188 = vunpack.c.l.s4 1966171168
        %v6189 = vunpack.c.0.s8 %v6188
        %v6190 = vlaneseq
        %v6191 = vshrl.u32 %v6190, 7
        %v6192 = vsub.s32 %v6189, %v6191
        %v6193 = vrot.slane %v6165, %v6192
        %v6194 = vcombine.low %v6172, %v6186
        %v6195 = vcombine.high %v6172, %v6186
        %v6196 = vcombine.low %v6179, %v6193
        %v6197 = vcombine.high %v6179, %v6193
        %v6199 = vunpack.c.l.s4 1966171168
        %v6200 = vunpack.c.0.s8 %v6199
        %v6201 = vlaneseq
        %v6202 = vshrl.u32 %v6201, 7
        %v6203 = vsub.s32 %v6200, %v6202
        %v6204 = vrot.slane %v6194, %v6203
        %v6206 = vunpack.c.l.s4 1966171168
        %v6207 = vunpack.c.0.s8 %v6206
        %v6208 = vlaneseq
        %v6209 = vshrl.u32 %v6208, 7
        %v6210 = vsub.s32 %v6207, %v6209
        %v6211 = vrot.slane %v6196, %v6210
        %v6213 = vunpack.c.l.s4 1966171168
        %v6214 = vunpack.c.0.s8 %v6213
        %v6215 = vlaneseq
        %v6216 = vshrl.u32 %v6215, 7
        %v6217 = vsub.s32 %v6214, %v6216
        %v6218 = vrot.slane %v6195, %v6217
        %v6220 = vunpack.c.l.s4 1966171168
        %v6221 = vunpack.c.0.s8 %v6220
        %v6222 = vlaneseq
        %v6223 = vshrl.u32 %v6222, 7
        %v6224 = vsub.s32 %v6221, %v6223
        %v6225 = vrot.slane %v6197, %v6224
        %v6226 = vcombine.high %v6204, %v6204
        %v6227 = vcombine.high %v6211, %v6211
        %v6228 = vcombine.high %v6218, %v6218
        %v6229 = vcombine.high %v6225, %v6225
        %v6230 = vcombine.low %v5926, %v5927
        %v6231 = vcombine.high %v5926, %v5927
        %v6232 = vcombine.low %v5928, %v5929
        %v6233 = vcombine.high %v5928, %v5929
        %v6235 = vunpack.c.l.s4 1966171168
        %v6236 = vunpack.c.0.s8 %v6235
        %v6237 = vlaneseq
        %v6238 = vshrl.u32 %v6237, 7
        %v6239 = vsub.s32 %v6236, %v6238
        %v6240 = vrot.slane %v6230, %v6239
        %v6242 = vunpack.c.l.s4 1966171168
        %v6243 = vunpack.c.0.s8 %v6242
        %v6244 = vlaneseq
        %v6245 = vshrl.u32 %v6244, 7
        %v6246 = vsub.s32 %v6243, %v6245
        %v6247 = vrot.slane %v6231, %v6246
        %v6249 = vunpack.c.l.s4 1966171168
        %v6250 = vunpack.c.0.s8 %v6249
        %v6251 = vlaneseq
        %v6252 = vshrl.u32 %v6251, 7
        %v6253 = vsub.s32 %v6250, %v6252
        %v6254 = vrot.slane %v6232, %v6253
        %v6256 = vunpack.c.l.s4 1966171168
        %v6257 = vunpack.c.0.s8 %v6256
        %v6258 = vlaneseq
        %v6259 = vshrl.u32 %v6258, 7
        %v6260 = vsub.s32 %v6257, %v6259
        %v6261 = vrot.slane %v6233, %v6260
        %v6262 = vcombine.low %v6240, %v6254
        %v6263 = vcombine.high %v6240, %v6254
        %v6264 = vcombine.low %v6247, %v6261
        %v6265 = vcombine.high %v6247, %v6261
        %v6267 = vunpack.c.l.s4 1966171168
        %v6268 = vunpack.c.0.s8 %v6267
        %v6269 = vlaneseq
        %v6270 = vshrl.u32 %v6269, 7
        %v6271 = vsub.s32 %v6268, %v6270
        %v6272 = vrot.slane %v6262, %v6271
        %v6274 = vunpack.c.l.s4 1966171168
        %v6275 = vunpack.c.0.s8 %v6274
        %v6276 = vlaneseq
        %v6277 = vshrl.u32 %v6276, 7
        %v6278 = vsub.s32 %v6275, %v6277
        %v6279 = vrot.slane %v6264, %v6278
        %v6281 = vunpack.c.l.s4 1966171168
        %v6282 = vunpack.c.0.s8 %v6281
        %v6283 = vlaneseq
        %v6284 = vshrl.u32 %v6283, 7
        %v6285 = vsub.s32 %v6282, %v6284
        %v6286 = vrot.slane %v6263, %v6285
        %v6288 = vunpack.c.l.s4 1966171168
        %v6289 = vunpack.c.0.s8 %v6288
        %v6290 = vlaneseq
        %v6291 = vshrl.u32 %v6290, 7
        %v6292 = vsub.s32 %v6289, %v6291
        %v6293 = vrot.slane %v6265, %v6292
        %v6294 = vcombine.high %v6272, %v6272
        %v6295 = vcombine.high %v6279, %v6279
        %v6296 = vcombine.high %v6286, %v6286
        %v6297 = vcombine.high %v6293, %v6293
        %v6298 = vcombine.low %v5930, %v5931
        %v6299 = vcombine.high %v5930, %v5931
        %v6300 = vcombine.low %v5932, %v5933
        %v6301 = vcombine.high %v5932, %v5933
        %v6303 = vunpack.c.l.s4 1966171168
        %v6304 = vunpack.c.0.s8 %v6303
        %v6305 = vlaneseq
        %v6306 = vshrl.u32 %v6305, 7
        %v6307 = vsub.s32 %v6304, %v6306
        %v6308 = vrot.slane %v6298, %v6307
        %v6310 = vunpack.c.l.s4 1966171168
        %v6311 = vunpack.c.0.s8 %v6310
        %v6312 = vlaneseq
        %v6313 = vshrl.u32 %v6312, 7
        %v6314 = vsub.s32 %v6311, %v6313
        %v6315 = vrot.slane %v6299, %v6314
        %v6317 = vunpack.c.l.s4 1966171168
        %v6318 = vunpack.c.0.s8 %v6317
        %v6319 = vlaneseq
        %v6320 = vshrl.u32 %v6319, 7
        %v6321 = vsub.s32 %v6318, %v6320
        %v6322 = vrot.slane %v6300, %v6321
        %v6324 = vunpack.c.l.s4 1966171168
        %v6325 = vunpack.c.0.s8 %v6324
        %v6326 = vlaneseq
        %v6327 = vshrl.u32 %v6326, 7
        %v6328 = vsub.s32 %v6325, %v6327
        %v6329 = vrot.slane %v6301, %v6328
        %v6330 = vcombine.low %v6308, %v6322
        %v6331 = vcombine.high %v6308, %v6322
        %v6332 = vcombine.low %v6315, %v6329
        %v6333 = vcombine.high %v6315, %v6329
        %v6335 = vunpack.c.l.s4 1966171168
        %v6336 = vunpack.c.0.s8 %v6335
        %v6337 = vlaneseq
        %v6338 = vshrl.u32 %v6337, 7
        %v6339 = vsub.s32 %v6336, %v6338
        %v6340 = vrot.slane %v6330, %v6339
        %v6342 = vunpack.c.l.s4 1966171168
        %v6343 = vunpack.c.0.s8 %v6342
        %v6344 = vlaneseq
        %v6345 = vshrl.u32 %v6344, 7
        %v6346 = vsub.s32 %v6343, %v6345
        %v6347 = vrot.slane %v6332, %v6346
        %v6349 = vunpack.c.l.s4 1966171168
        %v6350 = vunpack.c.0.s8 %v6349
        %v6351 = vlaneseq
        %v6352 = vshrl.u32 %v6351, 7
        %v6353 = vsub.s32 %v6350, %v6352
        %v6354 = vrot.slane %v6331, %v6353
        %v6356 = vunpack.c.l.s4 1966171168
        %v6357 = vunpack.c.0.s8 %v6356
        %v6358 = vlaneseq
        %v6359 = vshrl.u32 %v6358, 7
        %v6360 = vsub.s32 %v6357, %v6359
        %v6361 = vrot.slane %v6333, %v6360
        %v6362 = vcombine.high %v6340, %v6340
        %v6363 = vcombine.high %v6347, %v6347
        %v6364 = vcombine.high %v6354, %v6354
        %v6365 = vcombine.high %v6361, %v6361
        %v6366 = vlaneseq
        %v6367 = vshrl.u32 %v6366, 7
        %v6368 = vsub.s32 0, %v6367
        %v6369 = vrot.slane %v6000, %v6368
        %v6370 = vlaneseq
        %v6371 = vshrl.u32 %v6370, 7
        %v6372 = vsub.s32 1, %v6371
        %v6373 = vrot.slane %v6000, %v6372
        %v6374 = vlaneseq
        %v6375 = vshrl.u32 %v6374, 7
        %v6376 = vsub.s32 2, %v6375
        %v6377 = vrot.slane %v6000, %v6376
        %v6378 = vlaneseq
        %v6379 = vshrl.u32 %v6378, 7
        %v6380 = vsub.s32 3, %v6379
        %v6381 = vrot.slane %v6000, %v6380
        %v6382 = vlaneseq
        %v6383 = vshrl.u32 %v6382, 7
        %v6384 = vsub.s32 0, %v6383
        %v6385 = vrot.slane %v6014, %v6384
        %v6386 = vlaneseq
        %v6387 = vshrl.u32 %v6386, 7
        %v6388 = vsub.s32 1, %v6387
        %v6389 = vrot.slane %v6014, %v6388
        %v6390 = vlaneseq
        %v6391 = vshrl.u32 %v6390, 7
        %v6392 = vsub.s32 2, %v6391
        %v6393 = vrot.slane %v6014, %v6392
        %v6394 = vlaneseq
        %v6395 = vshrl.u32 %v6394, 7
        %v6396 = vsub.s32 3, %v6395
        %v6397 = vrot.slane %v6014, %v6396
        %v6398 = vlaneseq
        %v6399 = vshrl.u32 %v6398, 7
        %v6400 = vsub.s32 0, %v6399
        %v6401 = vrot.slane %v6022, %v6400
        %v6402 = vlaneseq
        %v6403 = vshrl.u32 %v6402, 7
        %v6404 = vsub.s32 1, %v6403
        %v6405 = vrot.slane %v6022, %v6404
        %v6406 = vlaneseq
        %v6407 = vshrl.u32 %v6406, 7
        %v6408 = vsub.s32 2, %v6407
        %v6409 = vrot.slane %v6022, %v6408
        %v6410 = vlaneseq
        %v6411 = vshrl.u32 %v6410, 7
        %v6412 = vsub.s32 3, %v6411
        %v6413 = vrot.slane %v6022, %v6412
        %v6414 = vlaneseq
        %v6415 = vshrl.u32 %v6414, 7
        %v6416 = vsub.s32 0, %v6415
        %v6417 = vrot.slane %v6024, %v6416
        %v6418 = vlaneseq
        %v6419 = vshrl.u32 %v6418, 7
        %v6420 = vsub.s32 1, %v6419
        %v6421 = vrot.slane %v6024, %v6420
        %v6422 = vlaneseq
        %v6423 = vshrl.u32 %v6422, 7
        %v6424 = vsub.s32 2, %v6423
        %v6425 = vrot.slane %v6024, %v6424
        %v6426 = vlaneseq
        %v6427 = vshrl.u32 %v6426, 7
        %v6428 = vsub.s32 3, %v6427
        %v6429 = vrot.slane %v6024, %v6428
        %v6430 = vlaneseq
        %v6431 = vshrl.u32 %v6430, 7
        %v6432 = vsub.s32 0, %v6431
        %v6433 = vrot.slane %v6007, %v6432
        %v6434 = vlaneseq
        %v6435 = vshrl.u32 %v6434, 7
        %v6436 = vsub.s32 1, %v6435
        %v6437 = vrot.slane %v6007, %v6436
        %v6438 = vlaneseq
        %v6439 = vshrl.u32 %v6438, 7
        %v6440 = vsub.s32 2, %v6439
        %v6441 = vrot.slane %v6007, %v6440
        %v6442 = vlaneseq
        %v6443 = vshrl.u32 %v6442, 7
        %v6444 = vsub.s32 3, %v6443
        %v6445 = vrot.slane %v6007, %v6444
        %v6446 = vlaneseq
        %v6447 = vshrl.u32 %v6446, 7
        %v6448 = vsub.s32 0, %v6447
        %v6449 = vrot.slane %v6021, %v6448
        %v6450 = vlaneseq
        %v6451 = vshrl.u32 %v6450, 7
        %v6452 = vsub.s32 1, %v6451
        %v6453 = vrot.slane %v6021, %v6452
        %v6454 = vlaneseq
        %v6455 = vshrl.u32 %v6454, 7
        %v6456 = vsub.s32 2, %v6455
        %v6457 = vrot.slane %v6021, %v6456
        %v6458 = vlaneseq
        %v6459 = vshrl.u32 %v6458, 7
        %v6460 = vsub.s32 3, %v6459
        %v6461 = vrot.slane %v6021, %v6460
        %v6462 = vlaneseq
        %v6463 = vshrl.u32 %v6462, 7
        %v6464 = vsub.s32 0, %v6463
        %v6465 = vrot.slane %v6023, %v6464
        %v6466 = vlaneseq
        %v6467 = vshrl.u32 %v6466, 7
        %v6468 = vsub.s32 1, %v6467
        %v6469 = vrot.slane %v6023, %v6468
        %v6470 = vlaneseq
        %v6471 = vshrl.u32 %v6470, 7
        %v6472 = vsub.s32 2, %v6471
        %v6473 = vrot.slane %v6023, %v6472
        %v6474 = vlaneseq
        %v6475 = vshrl.u32 %v6474, 7
        %v6476 = vsub.s32 3, %v6475
        %v6477 = vrot.slane %v6023, %v6476
        %v6478 = vlaneseq
        %v6479 = vshrl.u32 %v6478, 7
        %v6480 = vsub.s32 0, %v6479
        %v6481 = vrot.slane %v6025, %v6480
        %v6482 = vlaneseq
        %v6483 = vshrl.u32 %v6482, 7
        %v6484 = vsub.s32 1, %v6483
        %v6485 = vrot.slane %v6025, %v6484
        %v6486 = vlaneseq
        %v6487 = vshrl.u32 %v6486, 7
        %v6488 = vsub.s32 2, %v6487
        %v6489 = vrot.slane %v6025, %v6488
        %v6490 = vlaneseq
        %v6491 = vshrl.u32 %v6490, 7
        %v6492 = vsub.s32 3, %v6491
        %v6493 = vrot.slane %v6025, %v6492
        %v6494 = vlaneseq
        %v6495 = vshrl.u32 %v6494, 7
        %v6496 = vsub.s32 0, %v6495
        %v6497 = vrot.slane %v6068, %v6496
        %v6498 = vlaneseq
        %v6499 = vshrl.u32 %v6498, 7
        %v6500 = vsub.s32 1, %v6499
        %v6501 = vrot.slane %v6068, %v6500
        %v6502 = vlaneseq
        %v6503 = vshrl.u32 %v6502, 7
        %v6504 = vsub.s32 2, %v6503
        %v6505 = vrot.slane %v6068, %v6504
        %v6506 = vlaneseq
        %v6507 = vshrl.u32 %v6506, 7
        %v6508 = vsub.s32 3, %v6507
        %v6509 = vrot.slane %v6068, %v6508
        %v6510 = vlaneseq
        %v6511 = vshrl.u32 %v6510, 7
        %v6512 = vsub.s32 0, %v6511
        %v6513 = vrot.slane %v6082, %v6512
        %v6514 = vlaneseq
        %v6515 = vshrl.u32 %v6514, 7
        %v6516 = vsub.s32 1, %v6515
        %v6517 = vrot.slane %v6082, %v6516
        %v6518 = vlaneseq
        %v6519 = vshrl.u32 %v6518, 7
        %v6520 = vsub.s32 2, %v6519
        %v6521 = vrot.slane %v6082, %v6520
        %v6522 = vlaneseq
        %v6523 = vshrl.u32 %v6522, 7
        %v6524 = vsub.s32 3, %v6523
        %v6525 = vrot.slane %v6082, %v6524
        %v6526 = vlaneseq
        %v6527 = vshrl.u32 %v6526, 7
        %v6528 = vsub.s32 0, %v6527
        %v6529 = vrot.slane %v6090, %v6528
        %v6530 = vlaneseq
        %v6531 = vshrl.u32 %v6530, 7
        %v6532 = vsub.s32 1, %v6531
        %v6533 = vrot.slane %v6090, %v6532
        %v6534 = vlaneseq
        %v6535 = vshrl.u32 %v6534, 7
        %v6536 = vsub.s32 2, %v6535
        %v6537 = vrot.slane %v6090, %v6536
        %v6538 = vlaneseq
        %v6539 = vshrl.u32 %v6538, 7
        %v6540 = vsub.s32 3, %v6539
        %v6541 = vrot.slane %v6090, %v6540
        %v6542 = vlaneseq
        %v6543 = vshrl.u32 %v6542, 7
        %v6544 = vsub.s32 0, %v6543
        %v6545 = vrot.slane %v6092, %v6544
        %v6546 = vlaneseq
        %v6547 = vshrl.u32 %v6546, 7
        %v6548 = vsub.s32 1, %v6547
        %v6549 = vrot.slane %v6092, %v6548
        %v6550 = vlaneseq
        %v6551 = vshrl.u32 %v6550, 7
        %v6552 = vsub.s32 2, %v6551
        %v6553 = vrot.slane %v6092, %v6552
        %v6554 = vlaneseq
        %v6555 = vshrl.u32 %v6554, 7
        %v6556 = vsub.s32 3, %v6555
        %v6557 = vrot.slane %v6092, %v6556
        %v6558 = vlaneseq
        %v6559 = vshrl.u32 %v6558, 7
        %v6560 = vsub.s32 0, %v6559
        %v6561 = vrot.slane %v6075, %v6560
        %v6562 = vlaneseq
        %v6563 = vshrl.u32 %v6562, 7
        %v6564 = vsub.s32 1, %v6563
        %v6565 = vrot.slane %v6075, %v6564
        %v6566 = vlaneseq
        %v6567 = vshrl.u32 %v6566, 7
        %v6568 = vsub.s32 2, %v6567
        %v6569 = vrot.slane %v6075, %v6568
        %v6570 = vlaneseq
        %v6571 = vshrl.u32 %v6570, 7
        %v6572 = vsub.s32 3, %v6571
        %v6573 = vrot.slane %v6075, %v6572
        %v6574 = vlaneseq
        %v6575 = vshrl.u32 %v6574, 7
        %v6576 = vsub.s32 0, %v6575
        %v6577 = vrot.slane %v6089, %v6576
        %v6578 = vlaneseq
        %v6579 = vshrl.u32 %v6578, 7
        %v6580 = vsub.s32 1, %v6579
        %v6581 = vrot.slane %v6089, %v6580
        %v6582 = vlaneseq
        %v6583 = vshrl.u32 %v6582, 7
        %v6584 = vsub.s32 2, %v6583
        %v6585 = vrot.slane %v6089, %v6584
        %v6586 = vlaneseq
        %v6587 = vshrl.u32 %v6586, 7
        %v6588 = vsub.s32 3, %v6587
        %v6589 = vrot.slane %v6089, %v6588
        %v6590 = vlaneseq
        %v6591 = vshrl.u32 %v6590, 7
        %v6592 = vsub.s32 0, %v6591
        %v6593 = vrot.slane %v6091, %v6592
        %v6594 = vlaneseq
        %v6595 = vshrl.u32 %v6594, 7
        %v6596 = vsub.s32 1, %v6595
        %v6597 = vrot.slane %v6091, %v6596
        %v6598 = vlaneseq
        %v6599 = vshrl.u32 %v6598, 7
        %v6600 = vsub.s32 2, %v6599
        %v6601 = vrot.slane %v6091, %v6600
        %v6602 = vlaneseq
        %v6603 = vshrl.u32 %v6602, 7
        %v6604 = vsub.s32 3, %v6603
        %v6605 = vrot.slane %v6091, %v6604
        %v6606 = vlaneseq
        %v6607 = vshrl.u32 %v6606, 7
        %v6608 = vsub.s32 0, %v6607
        %v6609 = vrot.slane %v6093, %v6608
        %v6610 = vlaneseq
        %v6611 = vshrl.u32 %v6610, 7
        %v6612 = vsub.s32 1, %v6611
        %v6613 = vrot.slane %v6093, %v6612
        %v6614 = vlaneseq
        %v6615 = vshrl.u32 %v6614, 7
        %v6616 = vsub.s32 2, %v6615
        %v6617 = vrot.slane %v6093, %v6616
        %v6618 = vlaneseq
        %v6619 = vshrl.u32 %v6618, 7
        %v6620 = vsub.s32 3, %v6619
        %v6621 = vrot.slane %v6093, %v6620
        %v6622 = vlaneseq
        %v6623 = vshrl.u32 %v6622, 7
        %v6624 = vsub.s32 0, %v6623
        %v6625 = vrot.slane %v6136, %v6624
        %v6626 = vlaneseq
        %v6627 = vshrl.u32 %v6626, 7
        %v6628 = vsub.s32 1, %v6627
        %v6629 = vrot.slane %v6136, %v6628
        %v6630 = vlaneseq
        %v6631 = vshrl.u32 %v6630, 7
        %v6632 = vsub.s32 2, %v6631
        %v6633 = vrot.slane %v6136, %v6632
        %v6634 = vlaneseq
        %v6635 = vshrl.u32 %v6634, 7
        %v6636 = vsub.s32 3, %v6635
        %v6637 = vrot.slane %v6136, %v6636
        %v6638 = vlaneseq
        %v6639 = vshrl.u32 %v6638, 7
        %v6640 = vsub.s32 0, %v6639
        %v6641 = vrot.slane %v6150, %v6640
        %v6642 = vlaneseq
        %v6643 = vshrl.u32 %v6642, 7
        %v6644 = vsub.s32 1, %v6643
        %v6645 = vrot.slane %v6150, %v6644
        %v6646 = vlaneseq
        %v6647 = vshrl.u32 %v6646, 7
        %v6648 = vsub.s32 2, %v6647
        %v6649 = vrot.slane %v6150, %v6648
        %v6650 = vlaneseq
        %v6651 = vshrl.u32 %v6650, 7
        %v6652 = vsub.s32 3, %v6651
        %v6653 = vrot.slane %v6150, %v6652
        %v6654 = vlaneseq
        %v6655 = vshrl.u32 %v6654, 7
        %v6656 = vsub.s32 0, %v6655
        %v6657 = vrot.slane %v6158, %v6656
        %v6658 = vlaneseq
        %v6659 = vshrl.u32 %v6658, 7
        %v6660 = vsub.s32 1, %v6659
        %v6661 = vrot.slane %v6158, %v6660
        %v6662 = vlaneseq
        %v6663 = vshrl.u32 %v6662, 7
        %v6664 = vsub.s32 2, %v6663
        %v6665 = vrot.slane %v6158, %v6664
        %v6666 = vlaneseq
        %v6667 = vshrl.u32 %v6666, 7
        %v6668 = vsub.s32 3, %v6667
        %v6669 = vrot.slane %v6158, %v6668
        %v6670 = vlaneseq
        %v6671 = vshrl.u32 %v6670, 7
        %v6672 = vsub.s32 0, %v6671
        %v6673 = vrot.slane %v6160, %v6672
        %v6674 = vlaneseq
        %v6675 = vshrl.u32 %v6674, 7
        %v6676 = vsub.s32 1, %v6675
        %v6677 = vrot.slane %v6160, %v6676
        %v6678 = vlaneseq
        %v6679 = vshrl.u32 %v6678, 7
        %v6680 = vsub.s32 2, %v6679
        %v6681 = vrot.slane %v6160, %v6680
        %v6682 = vlaneseq
        %v6683 = vshrl.u32 %v6682, 7
        %v6684 = vsub.s32 3, %v6683
        %v6685 = vrot.slane %v6160, %v6684
        %v6686 = vlaneseq
        %v6687 = vshrl.u32 %v6686, 7
        %v6688 = vsub.s32 0, %v6687
        %v6689 = vrot.slane %v6143, %v6688
        %v6690 = vlaneseq
        %v6691 = vshrl.u32 %v6690, 7
        %v6692 = vsub.s32 1, %v6691
        %v6693 = vrot.slane %v6143, %v6692
        %v6694 = vlaneseq
        %v6695 = vshrl.u32 %v6694, 7
        %v6696 = vsub.s32 2, %v6695
        %v6697 = vrot.slane %v6143, %v6696
        %v6698 = vlaneseq
        %v6699 = vshrl.u32 %v6698, 7
        %v6700 = vsub.s32 3, %v6699
        %v6701 = vrot.slane %v6143, %v6700
        %v6702 = vlaneseq
        %v6703 = vshrl.u32 %v6702, 7
        %v6704 = vsub.s32 0, %v6703
        %v6705 = vrot.slane %v6157, %v6704
        %v6706 = vlaneseq
        %v6707 = vshrl.u32 %v6706, 7
        %v6708 = vsub.s32 1, %v6707
        %v6709 = vrot.slane %v6157, %v6708
        %v6710 = vlaneseq
        %v6711 = vshrl.u32 %v6710, 7
        %v6712 = vsub.s32 2, %v6711
        %v6713 = vrot.slane %v6157, %v6712
        %v6714 = vlaneseq
        %v6715 = vshrl.u32 %v6714, 7
        %v6716 = vsub.s32 3, %v6715
        %v6717 = vrot.slane %v6157, %v6716
        %v6718 = vlaneseq
        %v6719 = vshrl.u32 %v6718, 7
        %v6720 = vsub.s32 0, %v6719
        %v6721 = vrot.slane %v6159, %v6720
        %v6722 = vlaneseq
        %v6723 = vshrl.u32 %v6722, 7
        %v6724 = vsub.s32 1, %v6723
        %v6725 = vrot.slane %v6159, %v6724
        %v6726 = vlaneseq
        %v6727 = vshrl.u32 %v6726, 7
        %v6728 = vsub.s32 2, %v6727
        %v6729 = vrot.slane %v6159, %v6728
        %v6730 = vlaneseq
        %v6731 = vshrl.u32 %v6730, 7
        %v6732 = vsub.s32 3, %v6731
        %v6733 = vrot.slane %v6159, %v6732
        %v6734 = vlaneseq
        %v6735 = vshrl.u32 %v6734, 7
        %v6736 = vsub.s32 0, %v6735
        %v6737 = vrot.slane %v6161, %v6736
        %v6738 = vlaneseq
        %v6739 = vshrl.u32 %v6738, 7
        %v6740 = vsub.s32 1, %v6739
        %v6741 = vrot.slane %v6161, %v6740
        %v6742 = vlaneseq
        %v6743 = vshrl.u32 %v6742, 7
        %v6744 = vsub.s32 2, %v6743
        %v6745 = vrot.slane %v6161, %v6744
        %v6746 = vlaneseq
        %v6747 = vshrl.u32 %v6746, 7
        %v6748 = vsub.s32 3, %v6747
        %v6749 = vrot.slane %v6161, %v6748
        %v6750 = vlaneseq
        %v6751 = vshrl.u32 %v6750, 7
        %v6752 = vsub.s32 0, %v6751
        %v6753 = vrot.slane %v6204, %v6752
        %v6754 = vlaneseq
        %v6755 = vshrl.u32 %v6754, 7
        %v6756 = vsub.s32 1, %v6755
        %v6757 = vrot.slane %v6204, %v6756
        %v6758 = vlaneseq
        %v6759 = vshrl.u32 %v6758, 7
        %v6760 = vsub.s32 2, %v6759
        %v6761 = vrot.slane %v6204, %v6760
        %v6762 = vlaneseq
        %v6763 = vshrl.u32 %v6762, 7
        %v6764 = vsub.s32 3, %v6763
        %v6765 = vrot.slane %v6204, %v6764
        %v6766 = vlaneseq
        %v6767 = vshrl.u32 %v6766, 7
        %v6768 = vsub.s32 0, %v6767
        %v6769 = vrot.slane %v6218, %v6768
        %v6770 = vlaneseq
        %v6771 = vshrl.u32 %v6770, 7
        %v6772 = vsub.s32 1, %v6771
        %v6773 = vrot.slane %v6218, %v6772
        %v6774 = vlaneseq
        %v6775 = vshrl.u32 %v6774, 7
        %v6776 = vsub.s32 2, %v6775
        %v6777 = vrot.slane %v6218, %v6776
        %v6778 = vlaneseq
        %v6779 = vshrl.u32 %v6778, 7
        %v6780 = vsub.s32 3, %v6779
        %v6781 = vrot.slane %v6218, %v6780
        %v6782 = vlaneseq
        %v6783 = vshrl.u32 %v6782, 7
        %v6784 = vsub.s32 0, %v6783
        %v6785 = vrot.slane %v6226, %v6784
        %v6786 = vlaneseq
        %v6787 = vshrl.u32 %v6786, 7
        %v6788 = vsub.s32 1, %v6787
        %v6789 = vrot.slane %v6226, %v6788
        %v6790 = vlaneseq
        %v6791 = vshrl.u32 %v6790, 7
        %v6792 = vsub.s32 2, %v6791
        %v6793 = vrot.slane %v6226, %v6792
        %v6794 = vlaneseq
        %v6795 = vshrl.u32 %v6794, 7
        %v6796 = vsub.s32 3, %v6795
        %v6797 = vrot.slane %v6226, %v6796
        %v6798 = vlaneseq
        %v6799 = vshrl.u32 %v6798, 7
        %v6800 = vsub.s32 0, %v6799
        %v6801 = vrot.slane %v6228, %v6800
        %v6802 = vlaneseq
        %v6803 = vshrl.u32 %v6802, 7
        %v6804 = vsub.s32 1, %v6803
        %v6805 = vrot.slane %v6228, %v6804
        %v6806 = vlaneseq
        %v6807 = vshrl.u32 %v6806, 7
        %v6808 = vsub.s32 2, %v6807
        %v6809 = vrot.slane %v6228, %v6808
        %v6810 = vlaneseq
        %v6811 = vshrl.u32 %v6810, 7
        %v6812 = vsub.s32 3, %v6811
        %v6813 = vrot.slane %v6228, %v6812
        %v6814 = vlaneseq
        %v6815 = vshrl.u32 %v6814, 7
        %v6816 = vsub.s32 0, %v6815
        %v6817 = vrot.slane %v6211, %v6816
        %v6818 = vlaneseq
        %v6819 = vshrl.u32 %v6818, 7
        %v6820 = vsub.s32 1, %v6819
        %v6821 = vrot.slane %v6211, %v6820
        %v6822 = vlaneseq
        %v6823 = vshrl.u32 %v6822, 7
        %v6824 = vsub.s32 2, %v6823
        %v6825 = vrot.slane %v6211, %v6824
        %v6826 = vlaneseq
        %v6827 = vshrl.u32 %v6826, 7
        %v6828 = vsub.s32 3, %v6827
        %v6829 = vrot.slane %v6211, %v6828
        %v6830 = vlaneseq
        %v6831 = vshrl.u32 %v6830, 7
        %v6832 = vsub.s32 0, %v6831
        %v6833 = vrot.slane %v6225, %v6832
        %v6834 = vlaneseq
        %v6835 = vshrl.u32 %v6834, 7
        %v6836 = vsub.s32 1, %v6835
        %v6837 = vrot.slane %v6225, %v6836
        %v6838 = vlaneseq
        %v6839 = vshrl.u32 %v6838, 7
        %v6840 = vsub.s32 2, %v6839
        %v6841 = vrot.slane %v6225, %v6840
        %v6842 = vlaneseq
        %v6843 = vshrl.u32 %v6842, 7
        %v6844 = vsub.s32 3, %v6843
        %v6845 = vrot.slane %v6225, %v6844
        %v6846 = vlaneseq
        %v6847 = vshrl.u32 %v6846, 7
        %v6848 = vsub.s32 0, %v6847
        %v6849 = vrot.slane %v6227, %v6848
        %v6850 = vlaneseq
        %v6851 = vshrl.u32 %v6850, 7
        %v6852 = vsub.s32 1, %v6851
        %v6853 = vrot.slane %v6227, %v6852
        %v6854 = vlaneseq
        %v6855 = vshrl.u32 %v6854, 7
        %v6856 = vsub.s32 2, %v6855
        %v6857 = vrot.slane %v6227, %v6856
        %v6858 = vlaneseq
        %v6859 = vshrl.u32 %v6858, 7
        %v6860 = vsub.s32 3, %v6859
        %v6861 = vrot.slane %v6227, %v6860
        %v6862 = vlaneseq
        %v6863 = vshrl.u32 %v6862, 7
        %v6864 = vsub.s32 0, %v6863
        %v6865 = vrot.slane %v6229, %v6864
        %v6866 = vlaneseq
        %v6867 = vshrl.u32 %v6866, 7
        %v6868 = vsub.s32 1, %v6867
        %v6869 = vrot.slane %v6229, %v6868
        %v6870 = vlaneseq
        %v6871 = vshrl.u32 %v6870, 7
        %v6872 = vsub.s32 2, %v6871
        %v6873 = vrot.slane %v6229, %v6872
        %v6874 = vlaneseq
        %v6875 = vshrl.u32 %v6874, 7
        %v6876 = vsub.s32 3, %v6875
        %v6877 = vrot.slane %v6229, %v6876
        %v6878 = vlaneseq
        %v6879 = vshrl.u32 %v6878, 7
        %v6880 = vsub.s32 0, %v6879
        %v6881 = vrot.slane %v6272, %v6880
        %v6882 = vlaneseq
        %v6883 = vshrl.u32 %v6882, 7
        %v6884 = vsub.s32 1, %v6883
        %v6885 = vrot.slane %v6272, %v6884
        %v6886 = vlaneseq
        %v6887 = vshrl.u32 %v6886, 7
        %v6888 = vsub.s32 2, %v6887
        %v6889 = vrot.slane %v6272, %v6888
        %v6890 = vlaneseq
        %v6891 = vshrl.u32 %v6890, 7
        %v6892 = vsub.s32 3, %v6891
        %v6893 = vrot.slane %v6272, %v6892
        %v6894 = vlaneseq
        %v6895 = vshrl.u32 %v6894, 7
        %v6896 = vsub.s32 0, %v6895
        %v6897 = vrot.slane %v6286, %v6896
        %v6898 = vlaneseq
        %v6899 = vshrl.u32 %v6898, 7
        %v6900 = vsub.s32 1, %v6899
        %v6901 = vrot.slane %v6286, %v6900
        %v6902 = vlaneseq
        %v6903 = vshrl.u32 %v6902, 7
        %v6904 = vsub.s32 2, %v6903
        %v6905 = vrot.slane %v6286, %v6904
        %v6906 = vlaneseq
        %v6907 = vshrl.u32 %v6906, 7
        %v6908 = vsub.s32 3, %v6907
        %v6909 = vrot.slane %v6286, %v6908
        %v6910 = vlaneseq
        %v6911 = vshrl.u32 %v6910, 7
        %v6912 = vsub.s32 0, %v6911
        %v6913 = vrot.slane %v6294, %v6912
        %v6914 = vlaneseq
        %v6915 = vshrl.u32 %v6914, 7
        %v6916 = vsub.s32 1, %v6915
        %v6917 = vrot.slane %v6294, %v6916
        %v6918 = vlaneseq
        %v6919 = vshrl.u32 %v6918, 7
        %v6920 = vsub.s32 2, %v6919
        %v6921 = vrot.slane %v6294, %v6920
        %v6922 = vlaneseq
        %v6923 = vshrl.u32 %v6922, 7
        %v6924 = vsub.s32 3, %v6923
        %v6925 = vrot.slane %v6294, %v6924
        %v6926 = vlaneseq
        %v6927 = vshrl.u32 %v6926, 7
        %v6928 = vsub.s32 0, %v6927
        %v6929 = vrot.slane %v6296, %v6928
        %v6930 = vlaneseq
        %v6931 = vshrl.u32 %v6930, 7
        %v6932 = vsub.s32 1, %v6931
        %v6933 = vrot.slane %v6296, %v6932
        %v6934 = vlaneseq
        %v6935 = vshrl.u32 %v6934, 7
        %v6936 = vsub.s32 2, %v6935
        %v6937 = vrot.slane %v6296, %v6936
        %v6938 = vlaneseq
        %v6939 = vshrl.u32 %v6938, 7
        %v6940 = vsub.s32 3, %v6939
        %v6941 = vrot.slane %v6296, %v6940
        %v6942 = vlaneseq
        %v6943 = vshrl.u32 %v6942, 7
        %v6944 = vsub.s32 0, %v6943
        %v6945 = vrot.slane %v6279, %v6944
        %v6946 = vlaneseq
        %v6947 = vshrl.u32 %v6946, 7
        %v6948 = vsub.s32 1, %v6947
        %v6949 = vrot.slane %v6279, %v6948
        %v6950 = vlaneseq
        %v6951 = vshrl.u32 %v6950, 7
        %v6952 = vsub.s32 2, %v6951
        %v6953 = vrot.slane %v6279, %v6952
        %v6954 = vlaneseq
        %v6955 = vshrl.u32 %v6954, 7
        %v6956 = vsub.s32 3, %v6955
        %v6957 = vrot.slane %v6279, %v6956
        %v6958 = vlaneseq
        %v6959 = vshrl.u32 %v6958, 7
        %v6960 = vsub.s32 0, %v6959
        %v6961 = vrot.slane %v6293, %v6960
        %v6962 = vlaneseq
        %v6963 = vshrl.u32 %v6962, 7
        %v6964 = vsub.s32 1, %v6963
        %v6965 = vrot.slane %v6293, %v6964
        %v6966 = vlaneseq
        %v6967 = vshrl.u32 %v6966, 7
        %v6968 = vsub.s32 2, %v6967
        %v6969 = vrot.slane %v6293, %v6968
        %v6970 = vlaneseq
        %v6971 = vshrl.u32 %v6970, 7
        %v6972 = vsub.s32 3, %v6971
        %v6973 = vrot.slane %v6293, %v6972
        %v6974 = vlaneseq
        %v6975 = vshrl.u32 %v6974, 7
        %v6976 = vsub.s32 0, %v6975
        %v6977 = vrot.slane %v6295, %v6976
        %v6978 = vlaneseq
        %v6979 = vshrl.u32 %v6978, 7
        %v6980 = vsub.s32 1, %v6979
        %v6981 = vrot.slane %v6295, %v6980
        %v6982 = vlaneseq
        %v6983 = vshrl.u32 %v6982, 7
        %v6984 = vsub.s32 2, %v6983
        %v6985 = vrot.slane %v6295, %v6984
        %v6986 = vlaneseq
        %v6987 = vshrl.u32 %v6986, 7
        %v6988 = vsub.s32 3, %v6987
        %v6989 = vrot.slane %v6295, %v6988
        %v6990 = vlaneseq
        %v6991 = vshrl.u32 %v6990, 7
        %v6992 = vsub.s32 0, %v6991
        %v6993 = vrot.slane %v6297, %v6992
        %v6994 = vlaneseq
        %v6995 = vshrl.u32 %v6994, 7
        %v6996 = vsub.s32 1, %v6995
        %v6997 = vrot.slane %v6297, %v6996
        %v6998 = vlaneseq
        %v6999 = vshrl.u32 %v6998, 7
        %v7000 = vsub.s32 2, %v6999
        %v7001 = vrot.slane %v6297, %v7000
        %v7002 = vlaneseq
        %v7003 = vshrl.u32 %v7002, 7
        %v7004 = vsub.s32 3, %v7003
        %v7005 = vrot.slane %v6297, %v7004
        %v7006 = vlaneseq
        %v7007 = vshrl.u32 %v7006, 7
        %v7008 = vsub.s32 0, %v7007
        %v7009 = vrot.slane %v6340, %v7008
        %v7010 = vlaneseq
        %v7011 = vshrl.u32 %v7010, 7
        %v7012 = vsub.s32 1, %v7011
        %v7013 = vrot.slane %v6340, %v7012
        %v7014 = vlaneseq
        %v7015 = vshrl.u32 %v7014, 7
        %v7016 = vsub.s32 2, %v7015
        %v7017 = vrot.slane %v6340, %v7016
        %v7018 = vlaneseq
        %v7019 = vshrl.u32 %v7018, 7
        %v7020 = vsub.s32 3, %v7019
        %v7021 = vrot.slane %v6340, %v7020
        %v7022 = vlaneseq
        %v7023 = vshrl.u32 %v7022, 7
        %v7024 = vsub.s32 0, %v7023
        %v7025 = vrot.slane %v6354, %v7024
        %v7026 = vlaneseq
        %v7027 = vshrl.u32 %v7026, 7
        %v7028 = vsub.s32 1, %v7027
        %v7029 = vrot.slane %v6354, %v7028
        %v7030 = vlaneseq
        %v7031 = vshrl.u32 %v7030, 7
        %v7032 = vsub.s32 2, %v7031
        %v7033 = vrot.slane %v6354, %v7032
        %v7034 = vlaneseq
        %v7035 = vshrl.u32 %v7034, 7
        %v7036 = vsub.s32 3, %v7035
        %v7037 = vrot.slane %v6354, %v7036
        %v7038 = vlaneseq
        %v7039 = vshrl.u32 %v7038, 7
        %v7040 = vsub.s32 0, %v7039
        %v7041 = vrot.slane %v6362, %v7040
        %v7042 = vlaneseq
        %v7043 = vshrl.u32 %v7042, 7
        %v7044 = vsub.s32 1, %v7043
        %v7045 = vrot.slane %v6362, %v7044
        %v7046 = vlaneseq
        %v7047 = vshrl.u32 %v7046, 7
        %v7048 = vsub.s32 2, %v7047
        %v7049 = vrot.slane %v6362, %v7048
        %v7050 = vlaneseq
        %v7051 = vshrl.u32 %v7050, 7
        %v7052 = vsub.s32 3, %v7051
        %v7053 = vrot.slane %v6362, %v7052
        %v7054 = vlaneseq
        %v7055 = vshrl.u32 %v7054, 7
        %v7056 = vsub.s32 0, %v7055
        %v7057 = vrot.slane %v6364, %v7056
        %v7058 = vlaneseq
        %v7059 = vshrl.u32 %v7058, 7
        %v7060 = vsub.s32 1, %v7059
        %v7061 = vrot.slane %v6364, %v7060
        %v7062 = vlaneseq
        %v7063 = vshrl.u32 %v7062, 7
        %v7064 = vsub.s32 2, %v7063
        %v7065 = vrot.slane %v6364, %v7064
        %v7066 = vlaneseq
        %v7067 = vshrl.u32 %v7066, 7
        %v7068 = vsub.s32 3, %v7067
        %v7069 = vrot.slane %v6364, %v7068
        %v7070 = vlaneseq
        %v7071 = vshrl.u32 %v7070, 7
        %v7072 = vsub.s32 0, %v7071
        %v7073 = vrot.slane %v6347, %v7072
        %v7074 = vlaneseq
        %v7075 = vshrl.u32 %v7074, 7
        %v7076 = vsub.s32 1, %v7075
        %v7077 = vrot.slane %v6347, %v7076
        %v7078 = vlaneseq
        %v7079 = vshrl.u32 %v7078, 7
        %v7080 = vsub.s32 2, %v7079
        %v7081 = vrot.slane %v6347, %v7080
        %v7082 = vlaneseq
        %v7083 = vshrl.u32 %v7082, 7
        %v7084 = vsub.s32 3, %v7083
        %v7085 = vrot.slane %v6347, %v7084
        %v7086 = vlaneseq
        %v7087 = vshrl.u32 %v7086, 7
        %v7088 = vsub.s32 0, %v7087
        %v7089 = vrot.slane %v6361, %v7088
        %v7090 = vlaneseq
        %v7091 = vshrl.u32 %v7090, 7
        %v7092 = vsub.s32 1, %v7091
        %v7093 = vrot.slane %v6361, %v7092
        %v7094 = vlaneseq
        %v7095 = vshrl.u32 %v7094, 7
        %v7096 = vsub.s32 2, %v7095
        %v7097 = vrot.slane %v6361, %v7096
        %v7098 = vlaneseq
        %v7099 = vshrl.u32 %v7098, 7
        %v7100 = vsub.s32 3, %v7099
        %v7101 = vrot.slane %v6361, %v7100
        %v7102 = vlaneseq
        %v7103 = vshrl.u32 %v7102, 7
        %v7104 = vsub.s32 0, %v7103
        %v7105 = vrot.slane %v6363, %v7104
        %v7106 = vlaneseq
        %v7107 = vshrl.u32 %v7106, 7
        %v7108 = vsub.s32 1, %v7107
        %v7109 = vrot.slane %v6363, %v7108
        %v7110 = vlaneseq
        %v7111 = vshrl.u32 %v7110, 7
        %v7112 = vsub.s32 2, %v7111
        %v7113 = vrot.slane %v6363, %v7112
        %v7114 = vlaneseq
        %v7115 = vshrl.u32 %v7114, 7
        %v7116 = vsub.s32 3, %v7115
        %v7117 = vrot.slane %v6363, %v7116
        %v7118 = vlaneseq
        %v7119 = vshrl.u32 %v7118, 7
        %v7120 = vsub.s32 0, %v7119
        %v7121 = vrot.slane %v6365, %v7120
        %v7122 = vlaneseq
        %v7123 = vshrl.u32 %v7122, 7
        %v7124 = vsub.s32 1, %v7123
        %v7125 = vrot.slane %v6365, %v7124
        %v7126 = vlaneseq
        %v7127 = vshrl.u32 %v7126, 7
        %v7128 = vsub.s32 2, %v7127
        %v7129 = vrot.slane %v6365, %v7128
        %v7130 = vlaneseq
        %v7131 = vshrl.u32 %v7130, 7
        %v7132 = vsub.s32 3, %v7131
        %v7133 = vrot.slane %v6365, %v7132
        %v7326 = vmul.f32 %v6369, %v1106
        %v7327 = vmul.f32 %v6373, %v1107
        %v7328 = vmul.f32 %v6377, %v1108
        %v7329 = vmul.f32 %v6381, %v1109
        %v7330 = vmul.f32 %v6369, %v1110
        %v7331 = vmul.f32 %v6373, %v1111
        %v7332 = vmul.f32 %v6377, %v1112
        %v7333 = vmul.f32 %v6381, %v1113
        %v7334 = vmul.f32 %v6385, %v1114
        %v7335 = vmul.f32 %v6389, %v1115
        %v7336 = vmul.f32 %v6393, %v1116
        %v7337 = vmul.f32 %v6397, %v1117
        %v7338 = vmul.f32 %v6385, %v1118
        %v7339 = vmul.f32 %v6389, %v1119
        %v7340 = vmul.f32 %v6393, %v1120
        %v7341 = vmul.f32 %v6397, %v1121
        %v7342 = vmul.f32 %v6401, %v1122
        %v7343 = vmul.f32 %v6405, %v1123
        %v7344 = vmul.f32 %v6409, %v1124
        %v7345 = vmul.f32 %v6413, %v1125
        %v7346 = vmul.f32 %v6401, %v1126
        %v7347 = vmul.f32 %v6405, %v1127
        %v7348 = vmul.f32 %v6409, %v1128
        %v7349 = vmul.f32 %v6413, %v1129
        %v7350 = vmul.f32 %v6417, %v1130
        %v7351 = vmul.f32 %v6421, %v1131
        %v7352 = vmul.f32 %v6425, %v1132
        %v7353 = vmul.f32 %v6429, %v1133
        %v7354 = vmul.f32 %v6417, %v1134
        %v7355 = vmul.f32 %v6421, %v1135
        %v7356 = vmul.f32 %v6425, %v1136
        %v7357 = vmul.f32 %v6429, %v1137
        %v7358 = vmul.f32 %v6433, %v1138
        %v7359 = vmul.f32 %v6437, %v1139
        %v7360 = vmul.f32 %v6441, %v1140
        %v7361 = vmul.f32 %v6445, %v1141
        %v7362 = vmul.f32 %v6433, %v1142
        %v7363 = vmul.f32 %v6437, %v1143
        %v7364 = vmul.f32 %v6441, %v1144
        %v7365 = vmul.f32 %v6445, %v1145
        %v7366 = vmul.f32 %v6449, %v1146
        %v7367 = vmul.f32 %v6453, %v1147
        %v7368 = vmul.f32 %v6457, %v1148
        %v7369 = vmul.f32 %v6461, %v1149
        %v7370 = vmul.f32 %v6449, %v1150
        %v7371 = vmul.f32 %v6453, %v1151
        %v7372 = vmul.f32 %v6457, %v1152
        %v7373 = vmul.f32 %v6461, %v1153
        %v7374 = vmul.f32 %v6465, %v1154
        %v7375 = vmul.f32 %v6469, %v1155
        %v7376 = vmul.f32 %v6473, %v1156
        %v7377 = vmul.f32 %v6477, %v1157
        %v7378 = vmul.f32 %v6465, %v1158
        %v7379 = vmul.f32 %v6469, %v1159
        %v7380 = vmul.f32 %v6473, %v1160
        %v7381 = vmul.f32 %v6477, %v1161
        %v7382 = vmul.f32 %v6481, %v1162
        %v7383 = vmul.f32 %v6485, %v1163
        %v7384 = vmul.f32 %v6489, %v1164
        %v7385 = vmul.f32 %v6493, %v1165
        %v7386 = vmul.f32 %v6481, %v1166
        %v7387 = vmul.f32 %v6485, %v1167
        %v7388 = vmul.f32 %v6489, %v1168
        %v7389 = vmul.f32 %v6493, %v1169
        %v7390 = vmul.f32 %v6497, %v1170
        %v7391 = vmul.f32 %v6501, %v1171
        %v7392 = vmul.f32 %v6505, %v1172
        %v7393 = vmul.f32 %v6509, %v1173
        %v7394 = vmul.f32 %v6497, %v1174
        %v7395 = vmul.f32 %v6501, %v1175
        %v7396 = vmul.f32 %v6505, %v1176
        %v7397 = vmul.f32 %v6509, %v1177
        %v7398 = vmul.f32 %v6513, %v1178
        %v7399 = vmul.f32 %v6517, %v1179
        %v7400 = vmul.f32 %v6521, %v1180
        %v7401 = vmul.f32 %v6525, %v1181
        %v7402 = vmul.f32 %v6513, %v1182
        %v7403 = vmul.f32 %v6517, %v1183
        %v7404 = vmul.f32 %v6521, %v1184
        %v7405 = vmul.f32 %v6525, %v1185
        %v7406 = vmul.f32 %v6529, %v1186
        %v7407 = vmul.f32 %v6533, %v1187
        %v7408 = vmul.f32 %v6537, %v1188
        %v7409 = vmul.f32 %v6541, %v1189
        %v7410 = vmul.f32 %v6529, %v1190
        %v7411 = vmul.f32 %v6533, %v1191
        %v7412 = vmul.f32 %v6537, %v1192
        %v7413 = vmul.f32 %v6541, %v1193
        %v7414 = vmul.f32 %v6545, %v1194
        %v7415 = vmul.f32 %v6549, %v1195
        %v7416 = vmul.f32 %v6553, %v1196
        %v7417 = vmul.f32 %v6557, %v1197
        %v7418 = vmul.f32 %v6545, %v1198
        %v7419 = vmul.f32 %v6549, %v1199
        %v7420 = vmul.f32 %v6553, %v1200
        %v7421 = vmul.f32 %v6557, %v1201
        %v7422 = vmul.f32 %v6561, %v1202
        %v7423 = vmul.f32 %v6565, %v1203
        %v7424 = vmul.f32 %v6569, %v1204
        %v7425 = vmul.f32 %v6573, %v1205
        %v7426 = vmul.f32 %v6561, %v1206
        %v7427 = vmul.f32 %v6565, %v1207
        %v7428 = vmul.f32 %v6569, %v1208
        %v7429 = vmul.f32 %v6573, %v1209
        %v7430 = vmul.f32 %v6577, %v1210
        %v7431 = vmul.f32 %v6581, %v1211
        %v7432 = vmul.f32 %v6585, %v1212
        %v7433 = vmul.f32 %v6589, %v1213
        %v7434 = vmul.f32 %v6577, %v1214
        %v7435 = vmul.f32 %v6581, %v1215
        %v7436 = vmul.f32 %v6585, %v1216
        %v7437 = vmul.f32 %v6589, %v1217
        %v7438 = vmul.f32 %v6593, %v1218
        %v7439 = vmul.f32 %v6597, %v1219
        %v7440 = vmul.f32 %v6601, %v1220
        %v7441 = vmul.f32 %v6605, %v1221
        %v7442 = vmul.f32 %v6593, %v1222
        %v7443 = vmul.f32 %v6597, %v1223
        %v7444 = vmul.f32 %v6601, %v1224
        %v7445 = vmul.f32 %v6605, %v1225
        %v7446 = vmul.f32 %v6609, %v1226
        %v7447 = vmul.f32 %v6613, %v1227
        %v7448 = vmul.f32 %v6617, %v1228
        %v7449 = vmul.f32 %v6621, %v1229
        %v7450 = vmul.f32 %v6609, %v1230
        %v7451 = vmul.f32 %v6613, %v1231
        %v7452 = vmul.f32 %v6617, %v1232
        %v7453 = vmul.f32 %v6621, %v1233
        %v7454 = vmul.f32 %v6625, %v1234
        %v7455 = vmul.f32 %v6629, %v1235
        %v7456 = vmul.f32 %v6633, %v1236
        %v7457 = vmul.f32 %v6637, %v1237
        %v7458 = vmul.f32 %v6625, %v1238
        %v7459 = vmul.f32 %v6629, %v1239
        %v7460 = vmul.f32 %v6633, %v1240
        %v7461 = vmul.f32 %v6637, %v1241
        %v7462 = vmul.f32 %v6641, %v1242
        %v7463 = vmul.f32 %v6645, %v1243
        %v7464 = vmul.f32 %v6649, %v1244
        %v7465 = vmul.f32 %v6653, %v1245
        %v7466 = vmul.f32 %v6641, %v1246
        %v7467 = vmul.f32 %v6645, %v1247
        %v7468 = vmul.f32 %v6649, %v1248
        %v7469 = vmul.f32 %v6653, %v1249
        %v7470 = vmul.f32 %v6657, %v1250
        %v7471 = vmul.f32 %v6661, %v1251
        %v7472 = vmul.f32 %v6665, %v1252
        %v7473 = vmul.f32 %v6669, %v1253
        %v7474 = vmul.f32 %v6657, %v1254
        %v7475 = vmul.f32 %v6661, %v1255
        %v7476 = vmul.f32 %v6665, %v1256
        %v7477 = vmul.f32 %v6669, %v1257
        %v7478 = vmul.f32 %v6673, %v1258
        %v7479 = vmul.f32 %v6677, %v1259
        %v7480 = vmul.f32 %v6681, %v1260
        %v7481 = vmul.f32 %v6685, %v1261
        %v7482 = vmul.f32 %v6673, %v1262
        %v7483 = vmul.f32 %v6677, %v1263
        %v7484 = vmul.f32 %v6681, %v1264
        %v7485 = vmul.f32 %v6685, %v1265
        %v7486 = vmul.f32 %v6689, %v1266
        %v7487 = vmul.f32 %v6693, %v1267
        %v7488 = vmul.f32 %v6697, %v1268
        %v7489 = vmul.f32 %v6701, %v1269
        %v7490 = vmul.f32 %v6689, %v1270
        %v7491 = vmul.f32 %v6693, %v1271
        %v7492 = vmul.f32 %v6697, %v1272
        %v7493 = vmul.f32 %v6701, %v1273
        %v7494 = vmul.f32 %v6705, %v1274
        %v7495 = vmul.f32 %v6709, %v1275
        %v7496 = vmul.f32 %v6713, %v1276
        %v7497 = vmul.f32 %v6717, %v1277
        %v7498 = vmul.f32 %v6705, %v1278
        %v7499 = vmul.f32 %v6709, %v1279
        %v7500 = vmul.f32 %v6713, %v1280
        %v7501 = vmul.f32 %v6717, %v1281
        %v7502 = vmul.f32 %v6721, %v1282
        %v7503 = vmul.f32 %v6725, %v1283
        %v7504 = vmul.f32 %v6729, %v1284
        %v7505 = vmul.f32 %v6733, %v1285
        %v7506 = vmul.f32 %v6721, %v1286
        %v7507 = vmul.f32 %v6725, %v1287
        %v7508 = vmul.f32 %v6729, %v1288
        %v7509 = vmul.f32 %v6733, %v1289
        %v7510 = vmul.f32 %v6737, %v1290
        %v7511 = vmul.f32 %v6741, %v1291
        %v7512 = vmul.f32 %v6745, %v1292
        %v7513 = vmul.f32 %v6749, %v1293
        %v7514 = vmul.f32 %v6737, %v1294
        %v7515 = vmul.f32 %v6741, %v1295
        %v7516 = vmul.f32 %v6745, %v1296
        %v7517 = vmul.f32 %v6749, %v1297
        %v7518 = vmul.f32 %v6753, %v1298
        %v7519 = vmul.f32 %v6757, %v1299
        %v7520 = vmul.f32 %v6761, %v1300
        %v7521 = vmul.f32 %v6765, %v1301
        %v7522 = vmul.f32 %v6753, %v1302
        %v7523 = vmul.f32 %v6757, %v1303
        %v7524 = vmul.f32 %v6761, %v1304
        %v7525 = vmul.f32 %v6765, %v1305
        %v7526 = vmul.f32 %v6769, %v1306
        %v7527 = vmul.f32 %v6773, %v1307
        %v7528 = vmul.f32 %v6777, %v1308
        %v7529 = vmul.f32 %v6781, %v1309
        %v7530 = vmul.f32 %v6769, %v1310
        %v7531 = vmul.f32 %v6773, %v1311
        %v7532 = vmul.f32 %v6777, %v1312
        %v7533 = vmul.f32 %v6781, %v1313
        %v7534 = vmul.f32 %v6785, %v1314
        %v7535 = vmul.f32 %v6789, %v1315
        %v7536 = vmul.f32 %v6793, %v1316
        %v7537 = vmul.f32 %v6797, %v1317
        %v7538 = vmul.f32 %v6785, %v1318
        %v7539 = vmul.f32 %v6789, %v1319
        %v7540 = vmul.f32 %v6793, %v1320
        %v7541 = vmul.f32 %v6797, %v1321
        %v7542 = vmul.f32 %v6801, %v1322
        %v7543 = vmul.f32 %v6805, %v1323
        %v7544 = vmul.f32 %v6809, %v1324
        %v7545 = vmul.f32 %v6813, %v1325
        %v7546 = vmul.f32 %v6801, %v1326
        %v7547 = vmul.f32 %v6805, %v1327
        %v7548 = vmul.f32 %v6809, %v1328
        %v7549 = vmul.f32 %v6813, %v1329
        %v7550 = vmul.f32 %v6817, %v1330
        %v7551 = vmul.f32 %v6821, %v1331
        %v7552 = vmul.f32 %v6825, %v1332
        %v7553 = vmul.f32 %v6829, %v1333
        %v7554 = vmul.f32 %v6817, %v1334
        %v7555 = vmul.f32 %v6821, %v1335
        %v7556 = vmul.f32 %v6825, %v1336
        %v7557 = vmul.f32 %v6829, %v1337
        %v7558 = vmul.f32 %v6833, %v1338
        %v7559 = vmul.f32 %v6837, %v1339
        %v7560 = vmul.f32 %v6841, %v1340
        %v7561 = vmul.f32 %v6845, %v1341
        %v7562 = vmul.f32 %v6833, %v1342
        %v7563 = vmul.f32 %v6837, %v1343
        %v7564 = vmul.f32 %v6841, %v1344
        %v7565 = vmul.f32 %v6845, %v1345
        %v7566 = vmul.f32 %v6849, %v1346
        %v7567 = vmul.f32 %v6853, %v1347
        %v7568 = vmul.f32 %v6857, %v1348
        %v7569 = vmul.f32 %v6861, %v1349
        %v7570 = vmul.f32 %v6849, %v1350
        %v7571 = vmul.f32 %v6853, %v1351
        %v7572 = vmul.f32 %v6857, %v1352
        %v7573 = vmul.f32 %v6861, %v1353
        %v7574 = vmul.f32 %v6865, %v1354
        %v7575 = vmul.f32 %v6869, %v1355
        %v7576 = vmul.f32 %v6873, %v1356
        %v7577 = vmul.f32 %v6877, %v1357
        %v7578 = vmul.f32 %v6865, %v1358
        %v7579 = vmul.f32 %v6869, %v1359
        %v7580 = vmul.f32 %v6873, %v1360
        %v7581 = vmul.f32 %v6877, %v1361
        %v7582 = vmul.f32 %v6881, %v1362
        %v7583 = vmul.f32 %v6885, %v1363
        %v7584 = vmul.f32 %v6889, %v1364
        %v7585 = vmul.f32 %v6893, %v1365
        %v7586 = vmul.f32 %v6881, %v1366
        %v7587 = vmul.f32 %v6885, %v1367
        %v7588 = vmul.f32 %v6889, %v1368
        %v7589 = vmul.f32 %v6893, %v1369
        %v7590 = vmul.f32 %v6897, %v1370
        %v7591 = vmul.f32 %v6901, %v1371
        %v7592 = vmul.f32 %v6905, %v1372
        %v7593 = vmul.f32 %v6909, %v1373
        %v7594 = vmul.f32 %v6897, %v1374
        %v7595 = vmul.f32 %v6901, %v1375
        %v7596 = vmul.f32 %v6905, %v1376
        %v7597 = vmul.f32 %v6909, %v1377
        %v7598 = vmul.f32 %v6913, %v1378
        %v7599 = vmul.f32 %v6917, %v1379
        %v7600 = vmul.f32 %v6921, %v1380
        %v7601 = vmul.f32 %v6925, %v1381
        %v7602 = vmul.f32 %v6913, %v1382
        %v7603 = vmul.f32 %v6917, %v1383
        %v7604 = vmul.f32 %v6921, %v1384
        %v7605 = vmul.f32 %v6925, %v1385
        %v7606 = vmul.f32 %v6929, %v1386
        %v7607 = vmul.f32 %v6933, %v1387
        %v7608 = vmul.f32 %v6937, %v1388
        %v7609 = vmul.f32 %v6941, %v1389
        %v7610 = vmul.f32 %v6929, %v1390
        %v7611 = vmul.f32 %v6933, %v1391
        %v7612 = vmul.f32 %v6937, %v1392
        %v7613 = vmul.f32 %v6941, %v1393
        %v7614 = vmul.f32 %v6945, %v1394
        %v7615 = vmul.f32 %v6949, %v1395
        %v7616 = vmul.f32 %v6953, %v1396
        %v7617 = vmul.f32 %v6957, %v1397
        %v7618 = vmul.f32 %v6945, %v1398
        %v7619 = vmul.f32 %v6949, %v1399
        %v7620 = vmul.f32 %v6953, %v1400
        %v7621 = vmul.f32 %v6957, %v1401
        %v7622 = vmul.f32 %v6961, %v1402
        %v7623 = vmul.f32 %v6965, %v1403
        %v7624 = vmul.f32 %v6969, %v1404
        %v7625 = vmul.f32 %v6973, %v1405
        %v7626 = vmul.f32 %v6961, %v1406
        %v7627 = vmul.f32 %v6965, %v1407
        %v7628 = vmul.f32 %v6969, %v1408
        %v7629 = vmul.f32 %v6973, %v1409
        %v7630 = vmul.f32 %v6977, %v1410
        %v7631 = vmul.f32 %v6981, %v1411
        %v7632 = vmul.f32 %v6985, %v1412
        %v7633 = vmul.f32 %v6989, %v1413
        %v7634 = vmul.f32 %v6977, %v1414
        %v7635 = vmul.f32 %v6981, %v1415
        %v7636 = vmul.f32 %v6985, %v1416
        %v7637 = vmul.f32 %v6989, %v1417
        %v7638 = vmul.f32 %v6993, %v1418
        %v7639 = vmul.f32 %v6997, %v1419
        %v7640 = vmul.f32 %v7001, %v1420
        %v7641 = vmul.f32 %v7005, %v1421
        %v7642 = vmul.f32 %v6993, %v1422
        %v7643 = vmul.f32 %v6997, %v1423
        %v7644 = vmul.f32 %v7001, %v1424
        %v7645 = vmul.f32 %v7005, %v1425
        %v7646 = vmul.f32 %v7009, %v1426
        %v7647 = vmul.f32 %v7013, %v1427
        %v7648 = vmul.f32 %v7017, %v1428
        %v7649 = vmul.f32 %v7021, %v1429
        %v7650 = vmul.f32 %v7009, %v1430
        %v7651 = vmul.f32 %v7013, %v1431
        %v7652 = vmul.f32 %v7017, %v1432
        %v7653 = vmul.f32 %v7021, %v1433
        %v7654 = vmul.f32 %v7025, %v1434
        %v7655 = vmul.f32 %v7029, %v1435
        %v7656 = vmul.f32 %v7033, %v1436
        %v7657 = vmul.f32 %v7037, %v1437
        %v7658 = vmul.f32 %v7025, %v1438
        %v7659 = vmul.f32 %v7029, %v1439
        %v7660 = vmul.f32 %v7033, %v1440
        %v7661 = vmul.f32 %v7037, %v1441
        %v7662 = vmul.f32 %v7041, %v1442
        %v7663 = vmul.f32 %v7045, %v1443
        %v7664 = vmul.f32 %v7049, %v1444
        %v7665 = vmul.f32 %v7053, %v1445
        %v7666 = vmul.f32 %v7041, %v1446
        %v7667 = vmul.f32 %v7045, %v1447
        %v7668 = vmul.f32 %v7049, %v1448
        %v7669 = vmul.f32 %v7053, %v1449
        %v7670 = vmul.f32 %v7057, %v1450
        %v7671 = vmul.f32 %v7061, %v1451
        %v7672 = vmul.f32 %v7065, %v1452
        %v7673 = vmul.f32 %v7069, %v1453
        %v7674 = vmul.f32 %v7057, %v1454
        %v7675 = vmul.f32 %v7061, %v1455
        %v7676 = vmul.f32 %v7065, %v1456
        %v7677 = vmul.f32 %v7069, %v1457
        %v7678 = vmul.f32 %v7073, %v1458
        %v7679 = vmul.f32 %v7077, %v1459
        %v7680 = vmul.f32 %v7081, %v1460
        %v7681 = vmul.f32 %v7085, %v1461
        %v7682 = vmul.f32 %v7073, %v1462
        %v7683 = vmul.f32 %v7077, %v1463
        %v7684 = vmul.f32 %v7081, %v1464
        %v7685 = vmul.f32 %v7085, %v1465
        %v7686 = vmul.f32 %v7089, %v1466
        %v7687 = vmul.f32 %v7093, %v1467
        %v7688 = vmul.f32 %v7097, %v1468
        %v7689 = vmul.f32 %v7101, %v1469
        %v7690 = vmul.f32 %v7089, %v1470
        %v7691 = vmul.f32 %v7093, %v1471
        %v7692 = vmul.f32 %v7097, %v1472
        %v7693 = vmul.f32 %v7101, %v1473
        %v7694 = vmul.f32 %v7105, %v1474
        %v7695 = vmul.f32 %v7109, %v1475
        %v7696 = vmul.f32 %v7113, %v1476
        %v7697 = vmul.f32 %v7117, %v1477
        %v7698 = vmul.f32 %v7105, %v1478
        %v7699 = vmul.f32 %v7109, %v1479
        %v7700 = vmul.f32 %v7113, %v1480
        %v7701 = vmul.f32 %v7117, %v1481
        %v7702 = vmul.f32 %v7121, %v1482
        %v7703 = vmul.f32 %v7125, %v1483
        %v7704 = vmul.f32 %v7129, %v1484
        %v7705 = vmul.f32 %v7133, %v1485
        %v7706 = vmul.f32 %v7121, %v1486
        %v7707 = vmul.f32 %v7125, %v1487
        %v7708 = vmul.f32 %v7129, %v1488
        %v7709 = vmul.f32 %v7133, %v1489
        %v7710 = vld [vmem:[#allocation20] sm:$0xff]
        %v7711 = vld [vmem:[#allocation20 + $0x8] sm:$0xff]
        %v7712 = vld [vmem:[#allocation20 + $0x10] sm:$0xff]
        %v7713 = vld [vmem:[#allocation20 + $0x18] sm:$0xff]
        %v7714 = vld [vmem:[#allocation20 + $0x20] sm:$0xff]
        %v7715 = vld [vmem:[#allocation20 + $0x28] sm:$0xff]
        %v7716 = vld [vmem:[#allocation20 + $0x30] sm:$0xff]
        %v7717 = vld [vmem:[#allocation20 + $0x38] sm:$0xff]
        %v7718 = vld [vmem:[#allocation20 + $0x40] sm:$0xff]
        %v7719 = vld [vmem:[#allocation20 + $0x48] sm:$0xff]
        %v7720 = vld [vmem:[#allocation20 + $0x50] sm:$0xff]
        %v7721 = vld [vmem:[#allocation20 + $0x58] sm:$0xff]
        %7722 = vmatprep.subr.mxu0 %v7387
        %7723 = vmatpush1.msra.mxu0 %v7386
        %7724 = vmatprep.subr.mxu0 %v7383
        %7725 = vmatpush1.msra.mxu0 %v7382
        %7726 = vmatprep.subr.mxu0 %v7379
        %7727 = vmatpush1.msra.mxu0 %v7378
        %7728 = vmatprep.subr.mxu0 %v7375
        %7729 = vmatpush1.msra.mxu0 %v7374
        %7730 = vmatprep.subr.mxu0 %v7371
        %7731 = vmatpush1.msra.mxu0 %v7370
        %7732 = vmatprep.subr.mxu0 %v7367
        %7733 = vmatpush1.msra.mxu0 %v7366
        %7734 = vmatprep.subr.mxu0 %v7363
        %7735 = vmatpush1.msra.mxu0 %v7362
        %7736 = vmatprep.subr.mxu0 %v7359
        %7737 = vmatpush1.msra.mxu0 %v7358
        %7738 = vmatprep.subr.mxu0 %v7355
        %7739 = vmatpush1.msra.mxu0 %v7354
        %7740 = vmatprep.subr.mxu0 %v7351
        %7741 = vmatpush1.msra.mxu0 %v7350
        %7742 = vmatprep.subr.mxu0 %v7347
        %7743 = vmatpush1.msra.mxu0 %v7346
        %7744 = vmatprep.subr.mxu0 %v7343
        %7745 = vmatpush1.msra.mxu0 %v7342
        %7746 = vmatprep.subr.mxu0 %v7339
        %7747 = vmatpush1.msra.mxu0 %v7338
        %7748 = vmatprep.subr.mxu0 %v7335
        %7749 = vmatpush1.msra.mxu0 %v7334
        %7750 = vmatprep.subr.mxu0 %v7331
        %7751 = vmatpush1.msra.mxu0 %v7330
        %7752 = vmatprep.subr.mxu0 %v7327
        %7753 = vmatpush1.msra.mxu0 %v7326
        %7754 = vmatprep.subr.mxu0 %v7451
        %7755 = vmatpush2.msra.mxu0 %v7450
        %7756 = vmatprep.subr.mxu0 %v7447
        %7757 = vmatpush2.msra.mxu0 %v7446
        %7758 = vmatprep.subr.mxu0 %v7443
        %7759 = vmatpush2.msra.mxu0 %v7442
        %7760 = vmatprep.subr.mxu0 %v7439
        %7761 = vmatpush2.msra.mxu0 %v7438
        %7762 = vmatprep.subr.mxu0 %v7435
        %7763 = vmatpush2.msra.mxu0 %v7434
        %7764 = vmatprep.subr.mxu0 %v7431
        %7765 = vmatpush2.msra.mxu0 %v7430
        %7766 = vmatprep.subr.mxu0 %v7427
        %7767 = vmatpush2.msra.mxu0 %v7426
        %7768 = vmatprep.subr.mxu0 %v7423
        %7769 = vmatpush2.msra.mxu0 %v7422
        %7770 = vmatprep.subr.mxu0 %v7419
        %7771 = vmatpush2.msra.mxu0 %v7418
        %7772 = vmatprep.subr.mxu0 %v7415
        %7773 = vmatpush2.msra.mxu0 %v7414
        %7774 = vmatprep.subr.mxu0 %v7411
        %7775 = vmatpush2.msra.mxu0 %v7410
        %7776 = vmatprep.subr.mxu0 %v7407
        %7777 = vmatpush2.msra.mxu0 %v7406
        %7778 = vmatprep.subr.mxu0 %v7403
        %7779 = vmatpush2.msra.mxu0 %v7402
        %7780 = vmatprep.subr.mxu0 %v7399
        %7781 = vmatpush2.msra.mxu0 %v7398
        %7782 = vmatprep.subr.mxu0 %v7395
        %7783 = vmatpush2.msra.mxu0 %v7394
        %7784 = vmatprep.subr.mxu0 %v7391
        %7785 = vmatpush2.msra.mxu0 %v7390
        %7786 = vmatprep.mubr.f32.mxu0 %v7711
        %7787 = vmatmul.mubr.f32.gmra.mxu0 %v7710
        %v7788 = vpop.f32.mrf.mxu0
        %v7789 = vadd.f32 0.0, %v7788
        %v7790 = vpop.f32.mrf.mxu0
        %v7791 = vadd.f32 0.0, %v7790
        %7792 = vmatprep.mubr.f32.mxu0 %v7717
        %7793 = vmatmul.mubr.f32.gmra.mxu0 %v7716
        %v7794 = vpop.f32.mrf.mxu0
        %v7795 = vadd.f32 0.0, %v7794
        %v7796 = vpop.f32.mrf.mxu0
        %v7797 = vadd.f32 0.0, %v7796
        %7798 = vdwg.mxu0
        %7799 = vmatprep.subr.mxu0 %v7515
        %7800 = vmatpush1.msra.mxu0 %v7514
        %7801 = vmatprep.subr.mxu0 %v7511
        %7802 = vmatpush1.msra.mxu0 %v7510
        %7803 = vmatprep.subr.mxu0 %v7507
        %7804 = vmatpush1.msra.mxu0 %v7506
        %7805 = vmatprep.subr.mxu0 %v7503
        %7806 = vmatpush1.msra.mxu0 %v7502
        %7807 = vmatprep.subr.mxu0 %v7499
        %7808 = vmatpush1.msra.mxu0 %v7498
        %7809 = vmatprep.subr.mxu0 %v7495
        %7810 = vmatpush1.msra.mxu0 %v7494
        %7811 = vmatprep.subr.mxu0 %v7491
        %7812 = vmatpush1.msra.mxu0 %v7490
        %7813 = vmatprep.subr.mxu0 %v7487
        %7814 = vmatpush1.msra.mxu0 %v7486
        %7815 = vmatprep.subr.mxu0 %v7483
        %7816 = vmatpush1.msra.mxu0 %v7482
        %7817 = vmatprep.subr.mxu0 %v7479
        %7818 = vmatpush1.msra.mxu0 %v7478
        %7819 = vmatprep.subr.mxu0 %v7475
        %7820 = vmatpush1.msra.mxu0 %v7474
        %7821 = vmatprep.subr.mxu0 %v7471
        %7822 = vmatpush1.msra.mxu0 %v7470
        %7823 = vmatprep.subr.mxu0 %v7467
        %7824 = vmatpush1.msra.mxu0 %v7466
        %7825 = vmatprep.subr.mxu0 %v7463
        %7826 = vmatpush1.msra.mxu0 %v7462
        %7827 = vmatprep.subr.mxu0 %v7459
        %7828 = vmatpush1.msra.mxu0 %v7458
        %7829 = vmatprep.subr.mxu0 %v7455
        %7830 = vmatpush1.msra.mxu0 %v7454
        %7831 = vmatprep.subr.mxu0 %v7579
        %7832 = vmatpush2.msra.mxu0 %v7578
        %7833 = vmatprep.subr.mxu0 %v7575
        %7834 = vmatpush2.msra.mxu0 %v7574
        %7835 = vmatprep.subr.mxu0 %v7571
        %7836 = vmatpush2.msra.mxu0 %v7570
        %7837 = vmatprep.subr.mxu0 %v7567
        %7838 = vmatpush2.msra.mxu0 %v7566
        %7839 = vmatprep.subr.mxu0 %v7563
        %7840 = vmatpush2.msra.mxu0 %v7562
        %7841 = vmatprep.subr.mxu0 %v7559
        %7842 = vmatpush2.msra.mxu0 %v7558
        %7843 = vmatprep.subr.mxu0 %v7555
        %7844 = vmatpush2.msra.mxu0 %v7554
        %7845 = vmatprep.subr.mxu0 %v7551
        %7846 = vmatpush2.msra.mxu0 %v7550
        %7847 = vmatprep.subr.mxu0 %v7547
        %7848 = vmatpush2.msra.mxu0 %v7546
        %7849 = vmatprep.subr.mxu0 %v7543
        %7850 = vmatpush2.msra.mxu0 %v7542
        %7851 = vmatprep.subr.mxu0 %v7539
        %7852 = vmatpush2.msra.mxu0 %v7538
        %7853 = vmatprep.subr.mxu0 %v7535
        %7854 = vmatpush2.msra.mxu0 %v7534
        %7855 = vmatprep.subr.mxu0 %v7531
        %7856 = vmatpush2.msra.mxu0 %v7530
        %7857 = vmatprep.subr.mxu0 %v7527
        %7858 = vmatpush2.msra.mxu0 %v7526
        %7859 = vmatprep.subr.mxu0 %v7523
        %7860 = vmatpush2.msra.mxu0 %v7522
        %7861 = vmatprep.subr.mxu0 %v7519
        %7862 = vmatpush2.msra.mxu0 %v7518
        %7863 = vmatprep.mubr.f32.mxu0 %v7713
        %7864 = vmatmul.mubr.f32.gmra.mxu0 %v7712
        %v7865 = vpop.f32.mrf.mxu0
        %v7866 = vadd.f32 %v7789, %v7865
        %v7867 = vpop.f32.mrf.mxu0
        %v7868 = vadd.f32 %v7791, %v7867
        %7869 = vmatprep.mubr.f32.mxu0 %v7719
        %7870 = vmatmul.mubr.f32.gmra.mxu0 %v7718
        %v7871 = vpop.f32.mrf.mxu0
        %v7872 = vadd.f32 %v7795, %v7871
        %v7873 = vpop.f32.mrf.mxu0
        %v7874 = vadd.f32 %v7797, %v7873
        %7875 = vdwg.mxu0
        %7876 = vmatprep.subr.mxu0 %v7643
        %7877 = vmatpush1.msra.mxu0 %v7642
        %7878 = vmatprep.subr.mxu0 %v7639
        %7879 = vmatpush1.msra.mxu0 %v7638
        %7880 = vmatprep.subr.mxu0 %v7635
        %7881 = vmatpush1.msra.mxu0 %v7634
        %7882 = vmatprep.subr.mxu0 %v7631
        %7883 = vmatpush1.msra.mxu0 %v7630
        %7884 = vmatprep.subr.mxu0 %v7627
        %7885 = vmatpush1.msra.mxu0 %v7626
        %7886 = vmatprep.subr.mxu0 %v7623
        %7887 = vmatpush1.msra.mxu0 %v7622
        %7888 = vmatprep.subr.mxu0 %v7619
        %7889 = vmatpush1.msra.mxu0 %v7618
        %7890 = vmatprep.subr.mxu0 %v7615
        %7891 = vmatpush1.msra.mxu0 %v7614
        %7892 = vmatprep.subr.mxu0 %v7611
        %7893 = vmatpush1.msra.mxu0 %v7610
        %7894 = vmatprep.subr.mxu0 %v7607
        %7895 = vmatpush1.msra.mxu0 %v7606
        %7896 = vmatprep.subr.mxu0 %v7603
        %7897 = vmatpush1.msra.mxu0 %v7602
        %7898 = vmatprep.subr.mxu0 %v7599
        %7899 = vmatpush1.msra.mxu0 %v7598
        %7900 = vmatprep.subr.mxu0 %v7595
        %7901 = vmatpush1.msra.mxu0 %v7594
        %7902 = vmatprep.subr.mxu0 %v7591
        %7903 = vmatpush1.msra.mxu0 %v7590
        %7904 = vmatprep.subr.mxu0 %v7587
        %7905 = vmatpush1.msra.mxu0 %v7586
        %7906 = vmatprep.subr.mxu0 %v7583
        %7907 = vmatpush1.msra.mxu0 %v7582
        %7908 = vmatprep.subr.mxu0 %v7707
        %7909 = vmatpush2.msra.mxu0 %v7706
        %7910 = vmatprep.subr.mxu0 %v7703
        %7911 = vmatpush2.msra.mxu0 %v7702
        %7912 = vmatprep.subr.mxu0 %v7699
        %7913 = vmatpush2.msra.mxu0 %v7698
        %7914 = vmatprep.subr.mxu0 %v7695
        %7915 = vmatpush2.msra.mxu0 %v7694
        %7916 = vmatprep.subr.mxu0 %v7691
        %7917 = vmatpush2.msra.mxu0 %v7690
        %7918 = vmatprep.subr.mxu0 %v7687
        %7919 = vmatpush2.msra.mxu0 %v7686
        %7920 = vmatprep.subr.mxu0 %v7683
        %7921 = vmatpush2.msra.mxu0 %v7682
        %7922 = vmatprep.subr.mxu0 %v7679
        %7923 = vmatpush2.msra.mxu0 %v7678
        %7924 = vmatprep.subr.mxu0 %v7675
        %7925 = vmatpush2.msra.mxu0 %v7674
        %7926 = vmatprep.subr.mxu0 %v7671
        %7927 = vmatpush2.msra.mxu0 %v7670
        %7928 = vmatprep.subr.mxu0 %v7667
        %7929 = vmatpush2.msra.mxu0 %v7666
        %7930 = vmatprep.subr.mxu0 %v7663
        %7931 = vmatpush2.msra.mxu0 %v7662
        %7932 = vmatprep.subr.mxu0 %v7659
        %7933 = vmatpush2.msra.mxu0 %v7658
        %7934 = vmatprep.subr.mxu0 %v7655
        %7935 = vmatpush2.msra.mxu0 %v7654
        %7936 = vmatprep.subr.mxu0 %v7651
        %7937 = vmatpush2.msra.mxu0 %v7650
        %7938 = vmatprep.subr.mxu0 %v7647
        %7939 = vmatpush2.msra.mxu0 %v7646
        %7940 = vmatprep.mubr.f32.mxu0 %v7715
        %7941 = vmatmul.mubr.f32.gmra.mxu0 %v7714
        %v7942 = vpop.f32.mrf.mxu0
        %v7943 = vadd.f32 %v7866, %v7942
        %v7944 = vpop.f32.mrf.mxu0
        %v7945 = vadd.f32 %v7868, %v7944
        %7946 = vmatprep.mubr.f32.mxu0 %v7721
        %7947 = vmatmul.mubr.f32.gmra.mxu0 %v7720
        %v7948 = vpop.f32.mrf.mxu0
        %v7949 = vadd.f32 %v7872, %v7948
        %v7950 = vpop.f32.mrf.mxu0
        %v7951 = vadd.f32 %v7874, %v7950
        %7952 = vdwg.mxu0
        %7953 = vmatprep.subr.mxu0 %v7389
        %7954 = vmatpush1.msra.mxu0 %v7388
        %7955 = vmatprep.subr.mxu0 %v7385
        %7956 = vmatpush1.msra.mxu0 %v7384
        %7957 = vmatprep.subr.mxu0 %v7381
        %7958 = vmatpush1.msra.mxu0 %v7380
        %7959 = vmatprep.subr.mxu0 %v7377
        %7960 = vmatpush1.msra.mxu0 %v7376
        %7961 = vmatprep.subr.mxu0 %v7373
        %7962 = vmatpush1.msra.mxu0 %v7372
        %7963 = vmatprep.subr.mxu0 %v7369
        %7964 = vmatpush1.msra.mxu0 %v7368
        %7965 = vmatprep.subr.mxu0 %v7365
        %7966 = vmatpush1.msra.mxu0 %v7364
        %7967 = vmatprep.subr.mxu0 %v7361
        %7968 = vmatpush1.msra.mxu0 %v7360
        %7969 = vmatprep.subr.mxu0 %v7357
        %7970 = vmatpush1.msra.mxu0 %v7356
        %7971 = vmatprep.subr.mxu0 %v7353
        %7972 = vmatpush1.msra.mxu0 %v7352
        %7973 = vmatprep.subr.mxu0 %v7349
        %7974 = vmatpush1.msra.mxu0 %v7348
        %7975 = vmatprep.subr.mxu0 %v7345
        %7976 = vmatpush1.msra.mxu0 %v7344
        %7977 = vmatprep.subr.mxu0 %v7341
        %7978 = vmatpush1.msra.mxu0 %v7340
        %7979 = vmatprep.subr.mxu0 %v7337
        %7980 = vmatpush1.msra.mxu0 %v7336
        %7981 = vmatprep.subr.mxu0 %v7333
        %7982 = vmatpush1.msra.mxu0 %v7332
        %7983 = vmatprep.subr.mxu0 %v7329
        %7984 = vmatpush1.msra.mxu0 %v7328
        %7985 = vmatprep.subr.mxu0 %v7453
        %7986 = vmatpush2.msra.mxu0 %v7452
        %7987 = vmatprep.subr.mxu0 %v7449
        %7988 = vmatpush2.msra.mxu0 %v7448
        %7989 = vmatprep.subr.mxu0 %v7445
        %7990 = vmatpush2.msra.mxu0 %v7444
        %7991 = vmatprep.subr.mxu0 %v7441
        %7992 = vmatpush2.msra.mxu0 %v7440
        %7993 = vmatprep.subr.mxu0 %v7437
        %7994 = vmatpush2.msra.mxu0 %v7436
        %7995 = vmatprep.subr.mxu0 %v7433
        %7996 = vmatpush2.msra.mxu0 %v7432
        %7997 = vmatprep.subr.mxu0 %v7429
        %7998 = vmatpush2.msra.mxu0 %v7428
        %7999 = vmatprep.subr.mxu0 %v7425
        %8000 = vmatpush2.msra.mxu0 %v7424
        %8001 = vmatprep.subr.mxu0 %v7421
        %8002 = vmatpush2.msra.mxu0 %v7420
        %8003 = vmatprep.subr.mxu0 %v7417
        %8004 = vmatpush2.msra.mxu0 %v7416
        %8005 = vmatprep.subr.mxu0 %v7413
        %8006 = vmatpush2.msra.mxu0 %v7412
        %8007 = vmatprep.subr.mxu0 %v7409
        %8008 = vmatpush2.msra.mxu0 %v7408
        %8009 = vmatprep.subr.mxu0 %v7405
        %8010 = vmatpush2.msra.mxu0 %v7404
        %8011 = vmatprep.subr.mxu0 %v7401
        %8012 = vmatpush2.msra.mxu0 %v7400
        %8013 = vmatprep.subr.mxu0 %v7397
        %8014 = vmatpush2.msra.mxu0 %v7396
        %8015 = vmatprep.subr.mxu0 %v7393
        %8016 = vmatpush2.msra.mxu0 %v7392
        %8017 = vmatprep.mubr.f32.mxu0 %v7711
        %8018 = vmatmul.mubr.f32.gmra.mxu0 %v7710
        %v8019 = vpop.f32.mrf.mxu0
        %v8020 = vadd.f32 0.0, %v8019
        %v8021 = vpop.f32.mrf.mxu0
        %v8022 = vadd.f32 0.0, %v8021
        %8023 = vmatprep.mubr.f32.mxu0 %v7717
        %8024 = vmatmul.mubr.f32.gmra.mxu0 %v7716
        %v8025 = vpop.f32.mrf.mxu0
        %v8026 = vadd.f32 0.0, %v8025
        %v8027 = vpop.f32.mrf.mxu0
        %v8028 = vadd.f32 0.0, %v8027
        %8029 = vdwg.mxu0
        %8030 = vmatprep.subr.mxu0 %v7517
        %8031 = vmatpush1.msra.mxu0 %v7516
        %8032 = vmatprep.subr.mxu0 %v7513
        %8033 = vmatpush1.msra.mxu0 %v7512
        %8034 = vmatprep.subr.mxu0 %v7509
        %8035 = vmatpush1.msra.mxu0 %v7508
        %8036 = vmatprep.subr.mxu0 %v7505
        %8037 = vmatpush1.msra.mxu0 %v7504
        %8038 = vmatprep.subr.mxu0 %v7501
        %8039 = vmatpush1.msra.mxu0 %v7500
        %8040 = vmatprep.subr.mxu0 %v7497
        %8041 = vmatpush1.msra.mxu0 %v7496
        %8042 = vmatprep.subr.mxu0 %v7493
        %8043 = vmatpush1.msra.mxu0 %v7492
        %8044 = vmatprep.subr.mxu0 %v7489
        %8045 = vmatpush1.msra.mxu0 %v7488
        %8046 = vmatprep.subr.mxu0 %v7485
        %8047 = vmatpush1.msra.mxu0 %v7484
        %8048 = vmatprep.subr.mxu0 %v7481
        %8049 = vmatpush1.msra.mxu0 %v7480
        %8050 = vmatprep.subr.mxu0 %v7477
        %8051 = vmatpush1.msra.mxu0 %v7476
        %8052 = vmatprep.subr.mxu0 %v7473
        %8053 = vmatpush1.msra.mxu0 %v7472
        %8054 = vmatprep.subr.mxu0 %v7469
        %8055 = vmatpush1.msra.mxu0 %v7468
        %8056 = vmatprep.subr.mxu0 %v7465
        %8057 = vmatpush1.msra.mxu0 %v7464
        %8058 = vmatprep.subr.mxu0 %v7461
        %8059 = vmatpush1.msra.mxu0 %v7460
        %8060 = vmatprep.subr.mxu0 %v7457
        %8061 = vmatpush1.msra.mxu0 %v7456
        %8062 = vmatprep.subr.mxu0 %v7581
        %8063 = vmatpush2.msra.mxu0 %v7580
        %8064 = vmatprep.subr.mxu0 %v7577
        %8065 = vmatpush2.msra.mxu0 %v7576
        %8066 = vmatprep.subr.mxu0 %v7573
        %8067 = vmatpush2.msra.mxu0 %v7572
        %8068 = vmatprep.subr.mxu0 %v7569
        %8069 = vmatpush2.msra.mxu0 %v7568
        %8070 = vmatprep.subr.mxu0 %v7565
        %8071 = vmatpush2.msra.mxu0 %v7564
        %8072 = vmatprep.subr.mxu0 %v7561
        %8073 = vmatpush2.msra.mxu0 %v7560
        %8074 = vmatprep.subr.mxu0 %v7557
        %8075 = vmatpush2.msra.mxu0 %v7556
        %8076 = vmatprep.subr.mxu0 %v7553
        %8077 = vmatpush2.msra.mxu0 %v7552
        %8078 = vmatprep.subr.mxu0 %v7549
        %8079 = vmatpush2.msra.mxu0 %v7548
        %8080 = vmatprep.subr.mxu0 %v7545
        %8081 = vmatpush2.msra.mxu0 %v7544
        %8082 = vmatprep.subr.mxu0 %v7541
        %8083 = vmatpush2.msra.mxu0 %v7540
        %8084 = vmatprep.subr.mxu0 %v7537
        %8085 = vmatpush2.msra.mxu0 %v7536
        %8086 = vmatprep.subr.mxu0 %v7533
        %8087 = vmatpush2.msra.mxu0 %v7532
        %8088 = vmatprep.subr.mxu0 %v7529
        %8089 = vmatpush2.msra.mxu0 %v7528
        %8090 = vmatprep.subr.mxu0 %v7525
        %8091 = vmatpush2.msra.mxu0 %v7524
        %8092 = vmatprep.subr.mxu0 %v7521
        %8093 = vmatpush2.msra.mxu0 %v7520
        %8094 = vmatprep.mubr.f32.mxu0 %v7713
        %8095 = vmatmul.mubr.f32.gmra.mxu0 %v7712
        %v8096 = vpop.f32.mrf.mxu0
        %v8097 = vadd.f32 %v8020, %v8096
        %v8098 = vpop.f32.mrf.mxu0
        %v8099 = vadd.f32 %v8022, %v8098
        %8100 = vmatprep.mubr.f32.mxu0 %v7719
        %8101 = vmatmul.mubr.f32.gmra.mxu0 %v7718
        %v8102 = vpop.f32.mrf.mxu0
        %v8103 = vadd.f32 %v8026, %v8102
        %v8104 = vpop.f32.mrf.mxu0
        %v8105 = vadd.f32 %v8028, %v8104
        %8106 = vdwg.mxu0
        %8107 = vmatprep.subr.mxu0 %v7645
        %8108 = vmatpush1.msra.mxu0 %v7644
        %8109 = vmatprep.subr.mxu0 %v7641
        %8110 = vmatpush1.msra.mxu0 %v7640
        %8111 = vmatprep.subr.mxu0 %v7637
        %8112 = vmatpush1.msra.mxu0 %v7636
        %8113 = vmatprep.subr.mxu0 %v7633
        %8114 = vmatpush1.msra.mxu0 %v7632
        %8115 = vmatprep.subr.mxu0 %v7629
        %8116 = vmatpush1.msra.mxu0 %v7628
        %8117 = vmatprep.subr.mxu0 %v7625
        %8118 = vmatpush1.msra.mxu0 %v7624
        %8119 = vmatprep.subr.mxu0 %v7621
        %8120 = vmatpush1.msra.mxu0 %v7620
        %8121 = vmatprep.subr.mxu0 %v7617
        %8122 = vmatpush1.msra.mxu0 %v7616
        %8123 = vmatprep.subr.mxu0 %v7613
        %8124 = vmatpush1.msra.mxu0 %v7612
        %8125 = vmatprep.subr.mxu0 %v7609
        %8126 = vmatpush1.msra.mxu0 %v7608
        %8127 = vmatprep.subr.mxu0 %v7605
        %8128 = vmatpush1.msra.mxu0 %v7604
        %8129 = vmatprep.subr.mxu0 %v7601
        %8130 = vmatpush1.msra.mxu0 %v7600
        %8131 = vmatprep.subr.mxu0 %v7597
        %8132 = vmatpush1.msra.mxu0 %v7596
        %8133 = vmatprep.subr.mxu0 %v7593
        %8134 = vmatpush1.msra.mxu0 %v7592
        %8135 = vmatprep.subr.mxu0 %v7589
        %8136 = vmatpush1.msra.mxu0 %v7588
        %8137 = vmatprep.subr.mxu0 %v7585
        %8138 = vmatpush1.msra.mxu0 %v7584
        %8139 = vmatprep.subr.mxu0 %v7709
        %8140 = vmatpush2.msra.mxu0 %v7708
        %8141 = vmatprep.subr.mxu0 %v7705
        %8142 = vmatpush2.msra.mxu0 %v7704
        %8143 = vmatprep.subr.mxu0 %v7701
        %8144 = vmatpush2.msra.mxu0 %v7700
        %8145 = vmatprep.subr.mxu0 %v7697
        %8146 = vmatpush2.msra.mxu0 %v7696
        %8147 = vmatprep.subr.mxu0 %v7693
        %8148 = vmatpush2.msra.mxu0 %v7692
        %8149 = vmatprep.subr.mxu0 %v7689
        %8150 = vmatpush2.msra.mxu0 %v7688
        %8151 = vmatprep.subr.mxu0 %v7685
        %8152 = vmatpush2.msra.mxu0 %v7684
        %8153 = vmatprep.subr.mxu0 %v7681
        %8154 = vmatpush2.msra.mxu0 %v7680
        %8155 = vmatprep.subr.mxu0 %v7677
        %8156 = vmatpush2.msra.mxu0 %v7676
        %8157 = vmatprep.subr.mxu0 %v7673
        %8158 = vmatpush2.msra.mxu0 %v7672
        %8159 = vmatprep.subr.mxu0 %v7669
        %8160 = vmatpush2.msra.mxu0 %v7668
        %8161 = vmatprep.subr.mxu0 %v7665
        %8162 = vmatpush2.msra.mxu0 %v7664
        %8163 = vmatprep.subr.mxu0 %v7661
        %8164 = vmatpush2.msra.mxu0 %v7660
        %8165 = vmatprep.subr.mxu0 %v7657
        %8166 = vmatpush2.msra.mxu0 %v7656
        %8167 = vmatprep.subr.mxu0 %v7653
        %8168 = vmatpush2.msra.mxu0 %v7652
        %8169 = vmatprep.subr.mxu0 %v7649
        %8170 = vmatpush2.msra.mxu0 %v7648
        %8171 = vmatprep.mubr.f32.mxu0 %v7715
        %8172 = vmatmul.mubr.f32.gmra.mxu0 %v7714
        %v8173 = vpop.f32.mrf.mxu0
        %v8174 = vadd.f32 %v8097, %v8173
        %v8175 = vpop.f32.mrf.mxu0
        %v8176 = vadd.f32 %v8099, %v8175
        %8177 = vmatprep.mubr.f32.mxu0 %v7721
        %8178 = vmatmul.mubr.f32.gmra.mxu0 %v7720
        %v8179 = vpop.f32.mrf.mxu0
        %v8180 = vadd.f32 %v8103, %v8179
        %v8181 = vpop.f32.mrf.mxu0
        %v8182 = vadd.f32 %v8105, %v8181
        %8183 = vdwg.mxu0
        %v8184 = vld [vmem:[%s17] sm:$0xff]
        %v8185 = vld [vmem:[%s17 + $0x8] sm:$0xff]
        %8187 = vset.pattern.permute.xlu0 0
        %8188 = vperm.xlu0 %8187, %v8184
        %v8189 = vpop.permute.xlu0 %8188
        %8192 = vset.pattern.permute.xlu0 0
        %8193 = vperm.xlu0 %8192, %v8185
        %v8194 = vpop.permute.xlu0 %8193
        %8196 = vmatprep.subr.mxu0 0.0
        %8197 = vmatpush1.msra.mxu0 %v977
        %8198 = vmatprep.subr.mxu0 0.0
        %8199 = vmatpush1.msra.mxu0 %v976
        %8200 = vmatprep.subr.mxu0 0.0
        %8201 = vmatpush1.msra.mxu0 %v975
        %8202 = vmatprep.subr.mxu0 0.0
        %8203 = vmatpush1.msra.mxu0 %v974
        %8204 = vmatprep.subr.mxu0 0.0
        %8205 = vmatpush1.msra.mxu0 %v973
        %8206 = vmatprep.subr.mxu0 0.0
        %8207 = vmatpush1.msra.mxu0 %v972
        %8208 = vmatprep.subr.mxu0 0.0
        %8209 = vmatpush1.msra.mxu0 %v971
        %8210 = vmatprep.subr.mxu0 0.0
        %8211 = vmatpush1.msra.mxu0 %v970
        %8212 = vmatprep.subr.mxu0 0.0
        %8213 = vmatpush1.msra.mxu0 %v969
        %8214 = vmatprep.subr.mxu0 0.0
        %8215 = vmatpush1.msra.mxu0 %v968
        %8216 = vmatprep.subr.mxu0 0.0
        %8217 = vmatpush1.msra.mxu0 %v967
        %8218 = vmatprep.subr.mxu0 0.0
        %8219 = vmatpush1.msra.mxu0 %v966
        %8220 = vmatprep.subr.mxu0 0.0
        %8221 = vmatpush1.msra.mxu0 %v965
        %8222 = vmatprep.subr.mxu0 0.0
        %8223 = vmatpush1.msra.mxu0 %v964
        %8224 = vmatprep.subr.mxu0 0.0
        %8225 = vmatpush1.msra.mxu0 %v963
        %8226 = vmatprep.subr.mxu0 0.0
        %8227 = vmatpush1.msra.mxu0 %v962
        %8228 = vmatprep.subr.mxu0 0.0
        %8229 = vmatpush2.msra.mxu0 %v993
        %8230 = vmatprep.subr.mxu0 0.0
        %8231 = vmatpush2.msra.mxu0 %v992
        %8232 = vmatprep.subr.mxu0 0.0
        %8233 = vmatpush2.msra.mxu0 %v991
        %8234 = vmatprep.subr.mxu0 0.0
        %8235 = vmatpush2.msra.mxu0 %v990
        %8236 = vmatprep.subr.mxu0 0.0
        %8237 = vmatpush2.msra.mxu0 %v989
        %8238 = vmatprep.subr.mxu0 0.0
        %8239 = vmatpush2.msra.mxu0 %v988
        %8240 = vmatprep.subr.mxu0 0.0
        %8241 = vmatpush2.msra.mxu0 %v987
        %8242 = vmatprep.subr.mxu0 0.0
        %8243 = vmatpush2.msra.mxu0 %v986
        %8244 = vmatprep.subr.mxu0 0.0
        %8245 = vmatpush2.msra.mxu0 %v985
        %8246 = vmatprep.subr.mxu0 0.0
        %8247 = vmatpush2.msra.mxu0 %v984
        %8248 = vmatprep.subr.mxu0 0.0
        %8249 = vmatpush2.msra.mxu0 %v983
        %8250 = vmatprep.subr.mxu0 0.0
        %8251 = vmatpush2.msra.mxu0 %v982
        %8252 = vmatprep.subr.mxu0 0.0
        %8253 = vmatpush2.msra.mxu0 %v981
        %8254 = vmatprep.subr.mxu0 0.0
        %8255 = vmatpush2.msra.mxu0 %v980
        %8256 = vmatprep.subr.mxu0 0.0
        %8257 = vmatpush2.msra.mxu0 %v979
        %8258 = vmatprep.subr.mxu0 0.0
        %8259 = vmatpush2.msra.mxu0 %v978
        %8260 = vmatprep.mubr.f32.mxu0 %v7945
        %8261 = vmatmul.mubr.f32.gmra.mxu0 %v7943
        %v8262 = vpop.f32.mrf.mxu0
        %v8263 = vadd.f32 %v8189, %v8262
        %v8264 = vpop.f32.mrf.mxu0
        %8265 = vmatprep.mubr.f32.mxu0 %v7951
        %8266 = vmatmul.mubr.f32.gmra.mxu0 %v7949
        %v8267 = vpop.f32.mrf.mxu0
        %v8268 = vadd.f32 %v8194, %v8267
        %v8269 = vpop.f32.mrf.mxu0
        %8270 = vdwg.mxu0
        %8271 = vmatprep.subr.mxu0 0.0
        %8272 = vmatpush1.msra.mxu0 %v1009
        %8273 = vmatprep.subr.mxu0 0.0
        %8274 = vmatpush1.msra.mxu0 %v1008
        %8275 = vmatprep.subr.mxu0 0.0
        %8276 = vmatpush1.msra.mxu0 %v1007
        %8277 = vmatprep.subr.mxu0 0.0
        %8278 = vmatpush1.msra.mxu0 %v1006
        %8279 = vmatprep.subr.mxu0 0.0
        %8280 = vmatpush1.msra.mxu0 %v1005
        %8281 = vmatprep.subr.mxu0 0.0
        %8282 = vmatpush1.msra.mxu0 %v1004
        %8283 = vmatprep.subr.mxu0 0.0
        %8284 = vmatpush1.msra.mxu0 %v1003
        %8285 = vmatprep.subr.mxu0 0.0
        %8286 = vmatpush1.msra.mxu0 %v1002
        %8287 = vmatprep.subr.mxu0 0.0
        %8288 = vmatpush1.msra.mxu0 %v1001
        %8289 = vmatprep.subr.mxu0 0.0
        %8290 = vmatpush1.msra.mxu0 %v1000
        %8291 = vmatprep.subr.mxu0 0.0
        %8292 = vmatpush1.msra.mxu0 %v999
        %8293 = vmatprep.subr.mxu0 0.0
        %8294 = vmatpush1.msra.mxu0 %v998
        %8295 = vmatprep.subr.mxu0 0.0
        %8296 = vmatpush1.msra.mxu0 %v997
        %8297 = vmatprep.subr.mxu0 0.0
        %8298 = vmatpush1.msra.mxu0 %v996
        %8299 = vmatprep.subr.mxu0 0.0
        %8300 = vmatpush1.msra.mxu0 %v995
        %8301 = vmatprep.subr.mxu0 0.0
        %8302 = vmatpush1.msra.mxu0 %v994
        %8303 = vmatprep.subr.mxu0 0.0
        %8304 = vmatpush2.msra.mxu0 %v1025
        %8305 = vmatprep.subr.mxu0 0.0
        %8306 = vmatpush2.msra.mxu0 %v1024
        %8307 = vmatprep.subr.mxu0 0.0
        %8308 = vmatpush2.msra.mxu0 %v1023
        %8309 = vmatprep.subr.mxu0 0.0
        %8310 = vmatpush2.msra.mxu0 %v1022
        %8311 = vmatprep.subr.mxu0 0.0
        %8312 = vmatpush2.msra.mxu0 %v1021
        %8313 = vmatprep.subr.mxu0 0.0
        %8314 = vmatpush2.msra.mxu0 %v1020
        %8315 = vmatprep.subr.mxu0 0.0
        %8316 = vmatpush2.msra.mxu0 %v1019
        %8317 = vmatprep.subr.mxu0 0.0
        %8318 = vmatpush2.msra.mxu0 %v1018
        %8319 = vmatprep.subr.mxu0 0.0
        %8320 = vmatpush2.msra.mxu0 %v1017
        %8321 = vmatprep.subr.mxu0 0.0
        %8322 = vmatpush2.msra.mxu0 %v1016
        %8323 = vmatprep.subr.mxu0 0.0
        %8324 = vmatpush2.msra.mxu0 %v1015
        %8325 = vmatprep.subr.mxu0 0.0
        %8326 = vmatpush2.msra.mxu0 %v1014
        %8327 = vmatprep.subr.mxu0 0.0
        %8328 = vmatpush2.msra.mxu0 %v1013
        %8329 = vmatprep.subr.mxu0 0.0
        %8330 = vmatpush2.msra.mxu0 %v1012
        %8331 = vmatprep.subr.mxu0 0.0
        %8332 = vmatpush2.msra.mxu0 %v1011
        %8333 = vmatprep.subr.mxu0 0.0
        %8334 = vmatpush2.msra.mxu0 %v1010
        %8335 = vmatprep.mubr.f32.mxu0 %v8176
        %8336 = vmatmul.mubr.f32.gmra.mxu0 %v8174
        %v8337 = vpop.f32.mrf.mxu0
        %v8338 = vadd.f32 %v8263, %v8337
        %v8339 = vpop.f32.mrf.mxu0
        %8340 = vmatprep.mubr.f32.mxu0 %v8182
        %8341 = vmatmul.mubr.f32.gmra.mxu0 %v8180
        %v8342 = vpop.f32.mrf.mxu0
        %v8343 = vadd.f32 %v8268, %v8342
        %v8344 = vpop.f32.mrf.mxu0
        %8345 = vdwg.mxu0
        %v8346 = vmul.f32 %v8338, 0.33
        %v8347 = vmul.f32 %v8343, 0.33
        %v8348 = vmax.f32 %v8338, %v8346
        %v8349 = vmax.f32 %v8343, %v8347
        %v8350 = vld [vmem:[%s18] sm:$0xff]
        %v8351 = vld [vmem:[%s18 + $0x8] sm:$0xff]
        %v8352 = vld [vmem:[%s18 + $0x10] sm:$0xff]
        %v8353 = vld [vmem:[%s18 + $0x18] sm:$0xff]
        %v8354 = vld [vmem:[%s18 + $0x20] sm:$0xff]
        %v8355 = vld [vmem:[%s18 + $0x28] sm:$0xff]
        %v8356 = vld [vmem:[%s18 + $0x30] sm:$0xff]
        %v8357 = vld [vmem:[%s18 + $0x38] sm:$0xff]
        %v8358 = vld [vmem:[%s19] sm:$0xff]
        %v8359 = vld [vmem:[%s19 + $0x8] sm:$0xff]
        %v8360 = vld [vmem:[%s19 + $0x10] sm:$0xff]
        %v8361 = vld [vmem:[%s19 + $0x18] sm:$0xff]
        %v8362 = vld [vmem:[%s19 + $0x20] sm:$0xff]
        %v8363 = vld [vmem:[%s19 + $0x28] sm:$0xff]
        %v8364 = vld [vmem:[%s19 + $0x30] sm:$0xff]
        %v8365 = vld [vmem:[%s19 + $0x38] sm:$0xff]
        %8367 = vset.pattern.permute.xlu0 0
        %8368 = vperm.xlu0 %8367, %v8358
        %v8369 = vpop.permute.xlu0 %8368
        %8372 = vset.pattern.permute.xlu0 0
        %8373 = vperm.xlu0 %8372, %v8359
        %v8374 = vpop.permute.xlu0 %8373
        %8377 = vset.pattern.permute.xlu0 0
        %8378 = vperm.xlu0 %8377, %v8360
        %v8379 = vpop.permute.xlu0 %8378
        %8382 = vset.pattern.permute.xlu0 0
        %8383 = vperm.xlu0 %8382, %v8361
        %v8384 = vpop.permute.xlu0 %8383
        %8387 = vset.pattern.permute.xlu0 0
        %8388 = vperm.xlu0 %8387, %v8362
        %v8389 = vpop.permute.xlu0 %8388
        %8392 = vset.pattern.permute.xlu0 0
        %8393 = vperm.xlu0 %8392, %v8363
        %v8394 = vpop.permute.xlu0 %8393
        %8397 = vset.pattern.permute.xlu0 0
        %8398 = vperm.xlu0 %8397, %v8364
        %v8399 = vpop.permute.xlu0 %8398
        %8402 = vset.pattern.permute.xlu0 0
        %8403 = vperm.xlu0 %8402, %v8365
        %v8404 = vpop.permute.xlu0 %8403
        %v8407 = vsel %vm1497, %v8350, 0
        %v8410 = vsel %vm1497, %v8351, 0
        %v8413 = vsel %vm1497, %v8352, 0
        %v8416 = vsel %vm1497, %v8353, 0
        %v8419 = vsel %vm1497, %v8354, 0
        %v8422 = vsel %vm1497, %v8355, 0
        %v8425 = vsel %vm1497, %v8356, 0
        %v8428 = vsel %vm1497, %v8357, 0
        %8430 = vmatprep.subr.mxu0 0.0
        %8431 = vmatpush1.msra.mxu0 0.0
        %8432 = vmatprep.subr.mxu0 0.0
        %8433 = vmatpush1.msra.mxu0 0.0
        %8434 = vmatprep.subr.mxu0 0.0
        %8435 = vmatpush1.msra.mxu0 0.0
        %8436 = vmatprep.subr.mxu0 0.0
        %8437 = vmatpush1.msra.mxu0 0.0
        %8438 = vmatprep.subr.mxu0 0.0
        %8439 = vmatpush1.msra.mxu0 0.0
        %8440 = vmatprep.subr.mxu0 0.0
        %8441 = vmatpush1.msra.mxu0 0.0
        %8442 = vmatprep.subr.mxu0 0.0
        %8443 = vmatpush1.msra.mxu0 0.0
        %8444 = vmatprep.subr.mxu0 0.0
        %8445 = vmatpush1.msra.mxu0 0.0
        %8446 = vmatprep.subr.mxu0 0.0
        %8447 = vmatpush1.msra.mxu0 0.0
        %8448 = vmatprep.subr.mxu0 0.0
        %8449 = vmatpush1.msra.mxu0 0.0
        %8450 = vmatprep.subr.mxu0 0.0
        %8451 = vmatpush1.msra.mxu0 0.0
        %8452 = vmatprep.subr.mxu0 0.0
        %8453 = vmatpush1.msra.mxu0 0.0
        %8454 = vmatprep.subr.mxu0 0.0
        %8455 = vmatpush1.msra.mxu0 0.0
        %8456 = vmatprep.subr.mxu0 0.0
        %8457 = vmatpush1.msra.mxu0 0.0
        %8458 = vmatprep.subr.mxu0 0.0
        %8459 = vmatpush1.msra.mxu0 %v8349
        %8460 = vmatprep.subr.mxu0 0.0
        %8461 = vmatpush1.msra.mxu0 %v8348
        %8462 = vmatprep.subr.mxu0 0.0
        %8463 = vmatpush2.msra.mxu0 0.0
        %8464 = vmatprep.subr.mxu0 0.0
        %8465 = vmatpush2.msra.mxu0 0.0
        %8466 = vmatprep.subr.mxu0 0.0
        %8467 = vmatpush2.msra.mxu0 0.0
        %8468 = vmatprep.subr.mxu0 0.0
        %8469 = vmatpush2.msra.mxu0 0.0
        %8470 = vmatprep.subr.mxu0 0.0
        %8471 = vmatpush2.msra.mxu0 0.0
        %8472 = vmatprep.subr.mxu0 0.0
        %8473 = vmatpush2.msra.mxu0 0.0
        %8474 = vmatprep.subr.mxu0 0.0
        %8475 = vmatpush2.msra.mxu0 0.0
        %8476 = vmatprep.subr.mxu0 0.0
        %8477 = vmatpush2.msra.mxu0 0.0
        %8478 = vmatprep.subr.mxu0 0.0
        %8479 = vmatpush2.msra.mxu0 0.0
        %8480 = vmatprep.subr.mxu0 0.0
        %8481 = vmatpush2.msra.mxu0 0.0
        %8482 = vmatprep.subr.mxu0 0.0
        %8483 = vmatpush2.msra.mxu0 0.0
        %8484 = vmatprep.subr.mxu0 0.0
        %8485 = vmatpush2.msra.mxu0 0.0
        %8486 = vmatprep.subr.mxu0 0.0
        %8487 = vmatpush2.msra.mxu0 0.0
        %8488 = vmatprep.subr.mxu0 0.0
        %8489 = vmatpush2.msra.mxu0 0.0
        %8490 = vmatprep.subr.mxu0 0.0
        %8491 = vmatpush2.msra.mxu0 0.0
        %8492 = vmatprep.subr.mxu0 0.0
        %8493 = vmatpush2.msra.mxu0 0.0
        %8494 = vmatprep.mubr.f32.mxu0 0.0
        %8495 = vmatmul.mubr.f32.gmra.mxu0 %v8407
        %v8496 = vpop.f32.mrf.mxu0
        %v8497 = vadd.f32 %v8369, %v8496
        %v8498 = vpop.f32.mrf.mxu0
        %8499 = vmatprep.mubr.f32.mxu0 0.0
        %8500 = vmatmul.mubr.f32.gmra.mxu0 %v8410
        %v8501 = vpop.f32.mrf.mxu0
        %v8502 = vadd.f32 %v8374, %v8501
        %v8503 = vpop.f32.mrf.mxu0
        %8504 = vmatprep.mubr.f32.mxu0 0.0
        %8505 = vmatmul.mubr.f32.gmra.mxu0 %v8413
        %v8506 = vpop.f32.mrf.mxu0
        %v8507 = vadd.f32 %v8379, %v8506
        %v8508 = vpop.f32.mrf.mxu0
        %8509 = vmatprep.mubr.f32.mxu0 0.0
        %8510 = vmatmul.mubr.f32.gmra.mxu0 %v8416
        %v8511 = vpop.f32.mrf.mxu0
        %v8512 = vadd.f32 %v8384, %v8511
        %v8513 = vpop.f32.mrf.mxu0
        %8514 = vmatprep.mubr.f32.mxu0 0.0
        %8515 = vmatmul.mubr.f32.gmra.mxu0 %v8419
        %v8516 = vpop.f32.mrf.mxu0
        %v8517 = vadd.f32 %v8389, %v8516
        %v8518 = vpop.f32.mrf.mxu0
        %8519 = vmatprep.mubr.f32.mxu0 0.0
        %8520 = vmatmul.mubr.f32.gmra.mxu0 %v8422
        %v8521 = vpop.f32.mrf.mxu0
        %v8522 = vadd.f32 %v8394, %v8521
        %v8523 = vpop.f32.mrf.mxu0
        %8524 = vmatprep.mubr.f32.mxu0 0.0
        %8525 = vmatmul.mubr.f32.gmra.mxu0 %v8425
        %v8526 = vpop.f32.mrf.mxu0
        %v8527 = vadd.f32 %v8399, %v8526
        %v8528 = vpop.f32.mrf.mxu0
        %8529 = vmatprep.mubr.f32.mxu0 0.0
        %8530 = vmatmul.mubr.f32.gmra.mxu0 %v8428
        %v8531 = vpop.f32.mrf.mxu0
        %v8532 = vadd.f32 %v8404, %v8531
        %v8533 = vpop.f32.mrf.mxu0
        %8534 = vdwg.mxu0
        %v8535 = vmul.f32 %v8497, 0.33
        %v8536 = vmul.f32 %v8502, 0.33
        %v8537 = vmul.f32 %v8507, 0.33
        %v8538 = vmul.f32 %v8512, 0.33
        %v8539 = vmul.f32 %v8517, 0.33
        %v8540 = vmul.f32 %v8522, 0.33
        %v8541 = vmul.f32 %v8527, 0.33
        %v8542 = vmul.f32 %v8532, 0.33
        %v8543 = vmax.f32 %v8497, %v8535
        %v8544 = vmax.f32 %v8502, %v8536
        %v8545 = vmax.f32 %v8507, %v8537
        %v8546 = vmax.f32 %v8512, %v8538
        %v8547 = vmax.f32 %v8517, %v8539
        %v8548 = vmax.f32 %v8522, %v8540
        %v8549 = vmax.f32 %v8527, %v8541
        %v8550 = vmax.f32 %v8532, %v8542
        %v8551 = vld [vmem:[#allocation21] sm:$0xff]
        %v8552 = vld [vmem:[#allocation21 + $0x8] sm:$0x3]
        %v8553 = vld [vmem:[%s21] sm:$0xff]
        %v8554 = vld [vmem:[%s21 + $0x8] sm:$0x3]
        %8556 = vset.pattern.permute.xlu0 0
        %8557 = vperm.xlu0 %8556, %v8553
        %v8558 = vpop.permute.xlu0 %8557
        %8561 = vset.pattern.permute.xlu0 0
        %8562 = vperm.xlu0 %8561, %v8554
        %v8563 = vpop.permute.xlu0 %8562
        %vm8565 = vcmask 523264
        %v8567 = vsel %vm8565, %v8551, 0
        %v8570 = vsel %vm8565, %v8552, 0
        %8572 = vmatprep.subr.mxu0 0.0
        %8573 = vmatpush1.msra.mxu0 0.0
        %8574 = vmatprep.subr.mxu0 0.0
        %8575 = vmatpush1.msra.mxu0 0.0
        %8576 = vmatprep.subr.mxu0 0.0
        %8577 = vmatpush1.msra.mxu0 0.0
        %8578 = vmatprep.subr.mxu0 0.0
        %8579 = vmatpush1.msra.mxu0 0.0
        %8580 = vmatprep.subr.mxu0 0.0
        %8581 = vmatpush1.msra.mxu0 0.0
        %8582 = vmatprep.subr.mxu0 0.0
        %8583 = vmatpush1.msra.mxu0 0.0
        %8584 = vmatprep.subr.mxu0 0.0
        %8585 = vmatpush1.msra.mxu0 0.0
        %8586 = vmatprep.subr.mxu0 0.0
        %8587 = vmatpush1.msra.mxu0 0.0
        %8588 = vmatprep.subr.mxu0 0.0
        %8589 = vmatpush1.msra.mxu0 %v8550
        %8590 = vmatprep.subr.mxu0 0.0
        %8591 = vmatpush1.msra.mxu0 %v8549
        %8592 = vmatprep.subr.mxu0 0.0
        %8593 = vmatpush1.msra.mxu0 %v8548
        %8594 = vmatprep.subr.mxu0 0.0
        %8595 = vmatpush1.msra.mxu0 %v8547
        %8596 = vmatprep.subr.mxu0 0.0
        %8597 = vmatpush1.msra.mxu0 %v8546
        %8598 = vmatprep.subr.mxu0 0.0
        %8599 = vmatpush1.msra.mxu0 %v8545
        %8600 = vmatprep.subr.mxu0 0.0
        %8601 = vmatpush1.msra.mxu0 %v8544
        %8602 = vmatprep.subr.mxu0 0.0
        %8603 = vmatpush1.msra.mxu0 %v8543
        %8604 = vmatprep.subr.mxu0 0.0
        %8605 = vmatpush2.msra.mxu0 0.0
        %8606 = vmatprep.subr.mxu0 0.0
        %8607 = vmatpush2.msra.mxu0 0.0
        %8608 = vmatprep.subr.mxu0 0.0
        %8609 = vmatpush2.msra.mxu0 0.0
        %8610 = vmatprep.subr.mxu0 0.0
        %8611 = vmatpush2.msra.mxu0 0.0
        %8612 = vmatprep.subr.mxu0 0.0
        %8613 = vmatpush2.msra.mxu0 0.0
        %8614 = vmatprep.subr.mxu0 0.0
        %8615 = vmatpush2.msra.mxu0 0.0
        %8616 = vmatprep.subr.mxu0 0.0
        %8617 = vmatpush2.msra.mxu0 0.0
        %8618 = vmatprep.subr.mxu0 0.0
        %8619 = vmatpush2.msra.mxu0 0.0
        %8620 = vmatprep.subr.mxu0 0.0
        %8621 = vmatpush2.msra.mxu0 0.0
        %8622 = vmatprep.subr.mxu0 0.0
        %8623 = vmatpush2.msra.mxu0 0.0
        %8624 = vmatprep.subr.mxu0 0.0
        %8625 = vmatpush2.msra.mxu0 0.0
        %8626 = vmatprep.subr.mxu0 0.0
        %8627 = vmatpush2.msra.mxu0 0.0
        %8628 = vmatprep.subr.mxu0 0.0
        %8629 = vmatpush2.msra.mxu0 0.0
        %8630 = vmatprep.subr.mxu0 0.0
        %8631 = vmatpush2.msra.mxu0 0.0
        %8632 = vmatprep.subr.mxu0 0.0
        %8633 = vmatpush2.msra.mxu0 0.0
        %8634 = vmatprep.subr.mxu0 0.0
        %8635 = vmatpush2.msra.mxu0 0.0
        %8636 = vmatprep.mubr.f32.mxu0 0.0
        %8637 = vmatmul.mubr.f32.gmra.mxu0 %v8567
        %v8638 = vpop.f32.mrf.mxu0
        %v8639 = vadd.f32 %v8558, %v8638
        %v8640 = vpop.f32.mrf.mxu0
        %8641 = vmatprep.mubr.f32.mxu0 0.0
        %8642 = vmatmul.mubr.f32.gmra.mxu0 %v8570
        %v8643 = vpop.f32.mrf.mxu0
        %v8644 = vadd.f32 %v8563, %v8643
        %v8645 = vpop.f32.mrf.mxu0
        %8646 = vdwg.mxu0
        %v8647 = vmul.f32 %v8639, 0.33
        %v8648 = vmul.f32 %v8644, 0.33
        %v8649 = vmax.f32 %v8639, %v8647
        %v8650 = vmax.f32 %v8644, %v8648
        %v8651 = vld [vmem:[#allocation23] sm:$0x1]
        %v8652 = vld [vmem:[#allocation2] sm:$0x1]
        %8654 = vset.pattern.permute.xlu0 0
        %8655 = vperm.xlu0 %8654, %v8652
        %v8656 = vpop.permute.xlu0 %8655
        %v8658 = vlaneseq
        %v8659 = vshrl.u32 %v8658, 7
        %v8660 = vsub.s32 0, %v8659
        %v8661 = vrot.slane %v8656, %v8660
        %vm8662 = vcmask 80896
        %v8664 = vsel %vm8662, %v8651, 0
        %vm8666 = vcmask 1041408
        %v8668 = vsel %vm8666, %v8650, 0
        %8670 = vmatprep.subr.mxu0 0.0
        %8671 = vmatpush1.msra.mxu0 0.0
        %8672 = vmatprep.subr.mxu0 0.0
        %8673 = vmatpush1.msra.mxu0 0.0
        %8674 = vmatprep.subr.mxu0 0.0
        %8675 = vmatpush1.msra.mxu0 0.0
        %8676 = vmatprep.subr.mxu0 0.0
        %8677 = vmatpush1.msra.mxu0 0.0
        %8678 = vmatprep.subr.mxu0 0.0
        %8679 = vmatpush1.msra.mxu0 0.0
        %8680 = vmatprep.subr.mxu0 0.0
        %8681 = vmatpush1.msra.mxu0 0.0
        %8682 = vmatprep.subr.mxu0 0.0
        %8683 = vmatpush1.msra.mxu0 0.0
        %8684 = vmatprep.subr.mxu0 0.0
        %8685 = vmatpush1.msra.mxu0 0.0
        %8686 = vmatprep.subr.mxu0 0.0
        %8687 = vmatpush1.msra.mxu0 0.0
        %8688 = vmatprep.subr.mxu0 0.0
        %8689 = vmatpush1.msra.mxu0 0.0
        %8690 = vmatprep.subr.mxu0 0.0
        %8691 = vmatpush1.msra.mxu0 0.0
        %8692 = vmatprep.subr.mxu0 0.0
        %8693 = vmatpush1.msra.mxu0 0.0
        %8694 = vmatprep.subr.mxu0 0.0
        %8695 = vmatpush1.msra.mxu0 0.0
        %8696 = vmatprep.subr.mxu0 0.0
        %8697 = vmatpush1.msra.mxu0 0.0
        %8698 = vmatprep.subr.mxu0 0.0
        %8699 = vmatpush1.msra.mxu0 %v8668
        %8700 = vmatprep.subr.mxu0 0.0
        %8701 = vmatpush1.msra.mxu0 %v8649
        %8702 = vmatprep.subr.mxu0 0.0
        %8703 = vmatpush2.msra.mxu0 0.0
        %8704 = vmatprep.subr.mxu0 0.0
        %8705 = vmatpush2.msra.mxu0 0.0
        %8706 = vmatprep.subr.mxu0 0.0
        %8707 = vmatpush2.msra.mxu0 0.0
        %8708 = vmatprep.subr.mxu0 0.0
        %8709 = vmatpush2.msra.mxu0 0.0
        %8710 = vmatprep.subr.mxu0 0.0
        %8711 = vmatpush2.msra.mxu0 0.0
        %8712 = vmatprep.subr.mxu0 0.0
        %8713 = vmatpush2.msra.mxu0 0.0
        %8714 = vmatprep.subr.mxu0 0.0
        %8715 = vmatpush2.msra.mxu0 0.0
        %8716 = vmatprep.subr.mxu0 0.0
        %8717 = vmatpush2.msra.mxu0 0.0
        %8718 = vmatprep.subr.mxu0 0.0
        %8719 = vmatpush2.msra.mxu0 0.0
        %8720 = vmatprep.subr.mxu0 0.0
        %8721 = vmatpush2.msra.mxu0 0.0
        %8722 = vmatprep.subr.mxu0 0.0
        %8723 = vmatpush2.msra.mxu0 0.0
        %8724 = vmatprep.subr.mxu0 0.0
        %8725 = vmatpush2.msra.mxu0 0.0
        %8726 = vmatprep.subr.mxu0 0.0
        %8727 = vmatpush2.msra.mxu0 0.0
        %8728 = vmatprep.subr.mxu0 0.0
        %8729 = vmatpush2.msra.mxu0 0.0
        %8730 = vmatprep.subr.mxu0 0.0
        %8731 = vmatpush2.msra.mxu0 0.0
        %8732 = vmatprep.subr.mxu0 0.0
        %8733 = vmatpush2.msra.mxu0 0.0
        %8734 = vmatprep.mubr.f32.mxu0 0.0
        %8735 = vmatmul.mubr.f32.gmra.mxu0 %v8664
        %v8736 = vpop.f32.mrf.mxu0
        %v8737 = vadd.f32 %v8661, %v8736
        %v8738 = vpop.f32.mrf.mxu0
        %8739 = vdwg.mxu0
        %vm8740 = vcmask 253952
        %8741 = vst.msk [vmem:[%s945] sm:$0x1] %vm8740, %v8737
        %s8742 = sand.u32 %s573, 1
        %s8743 = scalar_lea.sflag [#allocation5], %s8742
        %s8744 = sand.u32 %s573, 1
        %s8745 = scalar_lea.vmem [#allocation24], %s8744
        // Predicated region
        $region169: #{tpu_custom_call.1} parent=115 // pred_check
          %p8746 = pneg %p583
        $region170: #{tpu_custom_call.1} parent=115 // pred_check_branch
          %8748 = sbr.rel (%p8746) target = $region172
        $region171: #{tpu_custom_call.1} parent=115 // pred_region
          %s8750 = ssub.s32 16, 16
          %8751 = vsyncadd %s8743, %s8750
          %s8752 = smul.addr %s51, 16
          %s8753 = scalar_lea.hbm %s24, %s8752
          %s8755 = sshll.u32 %s8745, 4
          %s8756 = int_to_ptr.vmem [resolvable:$true] %s8755
          %8758 = dma.vmem_to_hbm [thread:$0]  %s8756, 16, %s8753, %s8743
        $region172: #{tpu_custom_call.1} parent=115 // pred_fallthru
          _
      $region116: #{tpu_custom_call.1} parent=5 // pred_fallthru
        _
      %p8759 = scmp.le.s32.totalorder 2, %s46
      // Predicated region
      $region173: #{tpu_custom_call.1} parent=5 // pred_check
        %p8760 = pneg %p8759
      $region174: #{tpu_custom_call.1} parent=5 // pred_check_branch
        %8762 = sbr.rel (%p8760) target = $region176
      $region175: #{tpu_custom_call.1} parent=5 // pred_region
        %s8763 = ssub.s32 %s46, 2
        // Predicated region
        $region177: #{tpu_custom_call.1} parent=175 // pred_check
          %p8764 = pneg %p589
        $region178: #{tpu_custom_call.1} parent=175 // pred_check_branch
          %8766 = sbr.rel (%p8764) target = $region180
        $region179: #{tpu_custom_call.1} parent=175 // pred_region
          %s8767 = sand.u32 %s574, 1
          %s8768 = scalar_lea.sflag [#allocation5], %s8767
          %s8769 = sand.u32 %s574, 1
          %s8770 = scalar_lea.vmem [#allocation24], %s8769
          %8771 = dma.done %s8768, 16
        $region180: #{tpu_custom_call.1} parent=175 // pred_fallthru
          _
      $region176: #{tpu_custom_call.1} parent=5 // pred_fallthru
        _
    $region6: #{tpu_custom_call.1} parent=1 // loop_footer
      %s50 = sadd.s32 1, %s46
    $region7: #{tpu_custom_call.1} parent=1 // loop_footer_branch
      %45 = sbr.rel target = $region3
    $region8: #{tpu_custom_call.1} parent=1 // loop_exit
      _
    %8772 = vsyncpa [#allocation4], 1
    %s8773 = scalar_lea.sflag [#allocation4], 1
    %8774 = vsyncpa %s8773, 1
    %8775 = vsyncpa [#allocation7], 1
    %s8776 = scalar_lea.sflag [#allocation7], 1
    %8777 = vsyncpa %s8776, 1
    %8778 = vsyncpa [#allocation10], 1
    %8779 = vsyncpa [#allocation13], 1
    %8780 = vsyncpa [#allocation16], 1
    %8781 = vsyncpa [#allocation19], 1
    %8782 = vsyncpa [#allocation22], 1
    %8783 = vsyncpa [#allocation5], 1
    %s8784 = scalar_lea.sflag [#allocation5], 1
    %8785 = vsyncpa %s8784, 1

</llo_original>
